<compile_context>
chip_gen: v7x
topology: tpu7x:2x2x1
jax: 0.10.0
libtpu: 0.0.40
codegen_flags: <defaults>
</compile_context>

<pallas_src>
import functools

import jax
import jax.numpy as jnp
from jax import lax
from jax.experimental import pallas as pl
from jax.experimental.pallas import tpu as pltpu


# ----------------------------------------------------------------------------
# Fused Pallas kernel: all branches, both ConvLayers each, one batch element
# per grid step.  Layout inside the kernel is NHWC (C on lanes).
# ----------------------------------------------------------------------------
def _fused_multiblock_kernel(*refs, ks_list, H, W, cin, cout, instance_norm):
    n_branch = len(ks_list)
    x_ref = refs[0]
    w_refs = refs[1:1 + 2 * n_branch]          # wa_0, wb_0, wa_1, wb_1, ...
    idx = 1 + 2 * n_branch
    bias_ref = refs[idx]
    idx += 1
    if instance_norm:
        gamma_ref = refs[idx]
        beta_ref = refs[idx + 1]
        idx += 2
    o_ref = refs[idx]

    x = x_ref[0]                                # (H, W, cin) bf16
    bias_all = bias_ref[...]                    # (n_branch, 2, cout) f32
    if instance_norm:
        gamma_all = gamma_ref[...]
        beta_all = beta_ref[...]

    def reflect_pad_hw(v, p):
        # v: (h, w, c).  Reflection pad of p rows/cols on each side using only
        # static slices + concat (matches nn.ReflectionPad2d).
        h, w = v.shape[0], v.shape[1]
        rows = [v[r:r + 1, :, :] for r in range(p, 0, -1)]
        rows.append(v)
        rows += [v[r:r + 1, :, :] for r in range(h - 2, h - 2 - p, -1)]
        v = jnp.concatenate(rows, axis=0)                        # (h+2p, w, c)
        cols = [v[:, c:c + 1, :] for c in range(p, 0, -1)]
        cols.append(v)
        cols += [v[:, c:c + 1, :] for c in range(w - 2, w - 2 - p, -1)]
        return jnp.concatenate(cols, axis=1)                     # (h+2p, w+2p, c)

    def conv_layer(v_bf16, K, cin_l, w_ref, b_row, g_row, beta_row):
        # v_bf16: (H, W, cin_l) bf16 (unpadded).  Returns (H*W, cout) f32.
        p = K // 2
        vp = reflect_pad_hw(v_bf16, p)                           # (H+2p, W+2p, cin_l)
        # im2col: lane-concat of the K*K shifted views, single reshape.
        taps = [vp[kh:kh + H, kw:kw + W, :]
                for kh in range(K) for kw in range(K)]
        patches = jnp.concatenate(taps, axis=-1)                 # (H, W, K*K*cin_l)
        patches2d = patches.reshape(H * W, K * K * cin_l)        # bf16
        out = jnp.dot(patches2d, w_ref[...],
                      preferred_element_type=jnp.float32)        # (H*W, cout) f32
        out = out + b_row                                        # (1, cout) broadcast
        if instance_norm:
            # InstanceNorm2d: per-channel stats over spatial (biased var).
            mean = jnp.mean(out, axis=0, keepdims=True)
            var = jnp.mean(jnp.square(out - mean), axis=0, keepdims=True)
            out = (out - mean) * lax.rsqrt(var + 1e-5)
            out = out * g_row + beta_row
        # LeakyReLU(0.2)
        return jnp.where(out >= 0, out, 0.2 * out)

    branch_outs = []
    for bi, K in enumerate(ks_list):
        wa = w_refs[2 * bi]
        wb = w_refs[2 * bi + 1]
        ba = bias_all[bi, 0:1, :]
        bb = bias_all[bi, 1:2, :]
        if instance_norm:
            ga, gb = gamma_all[bi, 0:1, :], gamma_all[bi, 1:2, :]
            bta, btb = beta_all[bi, 0:1, :], beta_all[bi, 1:2, :]
        else:
            ga = gb = bta = btb = None
        h1 = conv_layer(x, K, cin, wa, ba, ga, bta)              # (H*W, cout) f32
        h1_bf = h1.reshape(H, W, cout).astype(jnp.bfloat16)      # stays on-chip
        h2 = conv_layer(h1_bf, K, cout, wb, bb, gb, btb)         # (H*W, cout) f32
        branch_outs.append(h2)

    out = jnp.concatenate(branch_outs, axis=-1)                  # (H*W, n*cout)
    o_ref[0] = out.reshape(H, W, n_branch * cout).astype(o_ref.dtype)


# ----------------------------------------------------------------------------
# Wrapper: NCHW in / NCHW out (like the PyTorch module), one pallas_call.
# ----------------------------------------------------------------------------
def conv_multi_block_forward(x_nchw, params, *, max_conv_size, instance_norm):
    ks_list = [k for k in (3, 5, 7, 9) if k <= max_conv_size]
    n_branch = len(ks_list)
    B, cin, H, W = x_nchw.shape
    cout = params["conv_3a"]["w"].shape[-1]

    # NCHW -> NHWC once for the whole block; bf16 activations for the MXU.
    x = jnp.transpose(x_nchw, (0, 2, 3, 1)).astype(jnp.bfloat16)

    weight_args = []
    bias_rows, gamma_rows, beta_rows = [], [], []
    for k in ks_list:
        pa = params[f"conv_{k}a"]
        pb = params[f"conv_{k}b"]
        # (K, K, Cin, Cout) -> (K*K*Cin, Cout), row order matches in-kernel taps.
        weight_args.append(pa["w"].reshape(k * k * cin, cout).astype(jnp.bfloat16))
        weight_args.append(pb["w"].reshape(k * k * cout, cout).astype(jnp.bfloat16))
        bias_rows.append(jnp.stack([pa["b"][0], pb["b"][0]]))     # (2, cout)
        gamma_rows.append(jnp.stack([pa["g"][0], pb["g"][0]]))
        beta_rows.append(jnp.stack([pa["beta"][0], pb["beta"][0]]))
    bias_all = jnp.stack(bias_rows)                               # (n_branch, 2, cout)
    gamma_all = jnp.stack(gamma_rows)
    beta_all = jnp.stack(beta_rows)

    kern = functools.partial(_fused_multiblock_kernel,
                             ks_list=tuple(ks_list), H=H, W=W,
                             cin=cin, cout=cout,
                             instance_norm=instance_norm)

    in_specs = [pl.BlockSpec((1, H, W, cin), lambda b: (b, 0, 0, 0))]
    inputs = [x]
    for wmat in weight_args:
        in_specs.append(pl.BlockSpec(wmat.shape, lambda b: (0, 0)))
        inputs.append(wmat)
    in_specs.append(pl.BlockSpec(bias_all.shape, lambda b: (0, 0, 0)))
    inputs.append(bias_all)
    if instance_norm:
        in_specs.append(pl.BlockSpec(gamma_all.shape, lambda b: (0, 0, 0)))
        inputs.append(gamma_all)
        in_specs.append(pl.BlockSpec(beta_all.shape, lambda b: (0, 0, 0)))
        inputs.append(beta_all)

    out_nhwc = pl.pallas_call(
        kern,
        out_shape=jax.ShapeDtypeStruct((B, H, W, n_branch * cout), jnp.float32),
        grid=(B,),
        in_specs=in_specs,
        out_specs=pl.BlockSpec((1, H, W, n_branch * cout), lambda b: (b, 0, 0, 0)),
        compiler_params=pltpu.CompilerParams(
            dimension_semantics=("parallel",)),   # batch across TCs on v7x
    )(*inputs)

    return jnp.transpose(out_nhwc, (0, 3, 1, 2))  # NHWC -> NCHW


# ----------------------------------------------------------------------------
# Parameter construction (deterministic, synthetic — no checkpoint load).
# ----------------------------------------------------------------------------
def _init_conv_params(key, k, cin, cout, instance_norm):
    kw_, kb_, kg_, kbeta_ = jax.random.split(key, 4)
    fan_in = cin * k * k
    bound = 1.0 / jnp.sqrt(fan_in)
    weight = jax.random.uniform(kw_, (k, k, cin, cout), jnp.float32,
                                -bound, bound)                 # HWIO
    bias = jax.random.uniform(kb_, (1, cout), jnp.float32, -bound, bound)
    if instance_norm:
        gamma = 1.0 + 0.1 * jax.random.normal(kg_, (1, cout), jnp.float32)
        beta = 0.1 * jax.random.normal(kbeta_, (1, cout), jnp.float32)
    else:
        gamma = jnp.ones((1, cout), jnp.float32)
        beta = jnp.zeros((1, cout), jnp.float32)
    return dict(w=weight, b=bias, g=gamma, beta=beta)


def make_conv_multi_block_params(key, in_channels, out_channels,
                                 max_conv_size, instance_norm):
    params = {}
    i = 0
    for k in (3, 5, 7, 9):
        if k > max_conv_size:
            break
        params[f"conv_{k}a"] = _init_conv_params(
            jax.random.fold_in(key, i), k, in_channels, out_channels,
            instance_norm)
        i += 1
        params[f"conv_{k}b"] = _init_conv_params(
            jax.random.fold_in(key, i), k, out_channels, out_channels,
            instance_norm)
        i += 1
    return params


# ----------------------------------------------------------------------------
# Pure-JAX f32 reference (correctness check only).
# ----------------------------------------------------------------------------
def _ref_conv_layer(x_nhwc, p, *, kernel_size, instance_norm):
    k = kernel_size
    pad = k // 2
    xp = jnp.pad(x_nhwc, ((0, 0), (pad, pad), (pad, pad), (0, 0)),
                 mode="reflect")
    out = lax.conv_general_dilated(
        xp, p["w"], window_strides=(1, 1), padding="VALID",
        dimension_numbers=("NHWC", "HWIO", "NHWC"))
    out = out + p["b"].reshape(1, 1, 1, -1)
    if instance_norm:
        mean = jnp.mean(out, axis=(1, 2), keepdims=True)
        var = jnp.mean((out - mean) ** 2, axis=(1, 2), keepdims=True)
        out = (out - mean) * lax.rsqrt(var + 1e-5)
        out = out * p["g"].reshape(1, 1, 1, -1) + p["beta"].reshape(1, 1, 1, -1)
    return jnp.where(out >= 0, out, 0.2 * out)


def _ref_forward(x_nchw, params, *, max_conv_size, instance_norm):
    x = jnp.transpose(x_nchw, (0, 2, 3, 1))
    outs = []
    for k in (3, 5, 7, 9):
        if k > max_conv_size:
            break
        h = _ref_conv_layer(x, params[f"conv_{k}a"], kernel_size=k,
                            instance_norm=instance_norm)
        h = _ref_conv_layer(h, params[f"conv_{k}b"], kernel_size=k,
                            instance_norm=instance_norm)
        outs.append(h)
    return jnp.transpose(jnp.concatenate(outs, axis=-1), (0, 3, 1, 2))


if __name__ == "__main__":
    key = jax.random.PRNGKey(0)

    def run_case(in_ch, out_ch, max_conv_size, instance_norm, B, H, W, sub):
        kx, kp = jax.random.split(sub)
        x = jax.random.normal(kx, (B, in_ch, H, W), jnp.float32)   # NCHW
        params = make_conv_multi_block_params(kp, in_ch, out_ch,
                                              max_conv_size, instance_norm)
        out = conv_multi_block_forward(x, params,
                                       max_conv_size=max_conv_size,
                                       instance_norm=instance_norm)
        out = jax.block_until_ready(out)
        n_branch = len([k for k in (3, 5, 7, 9) if k <= max_conv_size])
        assert out.shape == (B, n_branch * out_ch, H, W), out.shape
        ref = jax.block_until_ready(
            _ref_forward(x, params, max_conv_size=max_conv_size,
                         instance_norm=instance_norm))
        err = float(jnp.max(jnp.abs(out - ref)))
        # bf16 matmul operands -> looser tolerance than a pure-f32 kernel.
        assert err < 5e-2, err

    # main config: 2 branches (k=3, k=5), instance norm, affine.
    run_case(4, 8, 5, True, 2, 16, 16, jax.random.fold_in(key, 0))
    # secondary config: single branch, no instance norm (gamma/beta omitted).
    run_case(4, 8, 3, False, 2, 16, 16, jax.random.fold_in(key, 1))

    print("KERNEL_OK")
</pallas_src>

<mosaic_0001>
module attributes {stable_mosaic.version = 11 : i64} {
  func.func @_fused_multiblock_kernel(%arg0: i32, %arg1: memref<1x16x16x4xbf16, #tpu.memory_space<vmem>>, %arg2: memref<36x8xbf16, #tpu.memory_space<vmem>>, %arg3: memref<72x8xbf16, #tpu.memory_space<vmem>>, %arg4: memref<100x8xbf16, #tpu.memory_space<vmem>>, %arg5: memref<200x8xbf16, #tpu.memory_space<vmem>>, %arg6: memref<2x2x8xf32, #tpu.memory_space<vmem>>, %arg7: memref<2x2x8xf32, #tpu.memory_space<vmem>>, %arg8: memref<2x2x8xf32, #tpu.memory_space<vmem>>, %arg9: memref<1x16x16x16xf32, #tpu.memory_space<vmem>>) attributes {dimension_semantics = [#tpu.dimension_semantics<parallel>], iteration_bounds = array<i64: 2>, scalar_prefetch = 0 : i64, scratch_operands = 0 : i64, tpu.core_type = #tpu.core_type<tc>, window_params = [{transform_indices = @transform_0, window_bounds = array<i64: 1, 16, 16, 4>}, {pipeline_mode = #tpu.pipeline_mode<synchronous>, transform_indices = @transform_1, window_bounds = array<i64: 36, 8>}, {pipeline_mode = #tpu.pipeline_mode<synchronous>, transform_indices = @transform_2, window_bounds = array<i64: 72, 8>}, {pipeline_mode = #tpu.pipeline_mode<synchronous>, transform_indices = @transform_3, window_bounds = array<i64: 100, 8>}, {pipeline_mode = #tpu.pipeline_mode<synchronous>, transform_indices = @transform_4, window_bounds = array<i64: 200, 8>}, {pipeline_mode = #tpu.pipeline_mode<synchronous>, transform_indices = @transform_5, window_bounds = array<i64: 2, 2, 8>}, {pipeline_mode = #tpu.pipeline_mode<synchronous>, transform_indices = @transform_6, window_bounds = array<i64: 2, 2, 8>}, {pipeline_mode = #tpu.pipeline_mode<synchronous>, transform_indices = @transform_7, window_bounds = array<i64: 2, 2, 8>}, {transform_indices = @transform_8, window_bounds = array<i64: 1, 16, 16, 16>}]} {
    %c0 = arith.constant 0 : index
    %c0_0 = arith.constant 0 : index
    %c0_1 = arith.constant 0 : index
    %c0_2 = arith.constant 0 : index
    %0 = vector.load %arg1[%c0, %c0_0, %c0_1, %c0_2] : memref<1x16x16x4xbf16, #tpu.memory_space<vmem>>, vector<1x16x16x4xbf16>
    %1 = vector.shape_cast %0 : vector<1x16x16x4xbf16> to vector<16x16x4xbf16>
    %c0_3 = arith.constant 0 : index
    %c0_4 = arith.constant 0 : index
    %c0_5 = arith.constant 0 : index
    %2 = vector.load %arg6[%c0_3, %c0_4, %c0_5] : memref<2x2x8xf32, #tpu.memory_space<vmem>>, vector<2x2x8xf32>
    %c0_6 = arith.constant 0 : index
    %c0_7 = arith.constant 0 : index
    %c0_8 = arith.constant 0 : index
    %3 = vector.load %arg7[%c0_6, %c0_7, %c0_8] : memref<2x2x8xf32, #tpu.memory_space<vmem>>, vector<2x2x8xf32>
    %c0_9 = arith.constant 0 : index
    %c0_10 = arith.constant 0 : index
    %c0_11 = arith.constant 0 : index
    %4 = vector.load %arg8[%c0_9, %c0_10, %c0_11] : memref<2x2x8xf32, #tpu.memory_space<vmem>>, vector<2x2x8xf32>
    %5 = vector.extract_strided_slice %2 {offsets = [0, 0, 0], sizes = [1, 1, 8], strides = [1, 1, 1]} : vector<2x2x8xf32> to vector<1x1x8xf32>
    %6 = vector.shape_cast %5 : vector<1x1x8xf32> to vector<1x8xf32>
    %7 = vector.extract_strided_slice %2 {offsets = [0, 1, 0], sizes = [1, 1, 8], strides = [1, 1, 1]} : vector<2x2x8xf32> to vector<1x1x8xf32>
    %8 = vector.shape_cast %7 : vector<1x1x8xf32> to vector<1x8xf32>
    %9 = vector.extract_strided_slice %3 {offsets = [0, 0, 0], sizes = [1, 1, 8], strides = [1, 1, 1]} : vector<2x2x8xf32> to vector<1x1x8xf32>
    %10 = vector.shape_cast %9 : vector<1x1x8xf32> to vector<1x8xf32>
    %11 = vector.extract_strided_slice %3 {offsets = [0, 1, 0], sizes = [1, 1, 8], strides = [1, 1, 1]} : vector<2x2x8xf32> to vector<1x1x8xf32>
    %12 = vector.shape_cast %11 : vector<1x1x8xf32> to vector<1x8xf32>
    %13 = vector.extract_strided_slice %4 {offsets = [0, 0, 0], sizes = [1, 1, 8], strides = [1, 1, 1]} : vector<2x2x8xf32> to vector<1x1x8xf32>
    %14 = vector.shape_cast %13 : vector<1x1x8xf32> to vector<1x8xf32>
    %15 = vector.extract_strided_slice %4 {offsets = [0, 1, 0], sizes = [1, 1, 8], strides = [1, 1, 1]} : vector<2x2x8xf32> to vector<1x1x8xf32>
    %16 = vector.shape_cast %15 : vector<1x1x8xf32> to vector<1x8xf32>
    %17 = vector.extract_strided_slice %1 {offsets = [1, 0, 0], sizes = [1, 16, 4], strides = [1, 1, 1]} : vector<16x16x4xbf16> to vector<1x16x4xbf16>
    %18 = vector.extract_strided_slice %1 {offsets = [14, 0, 0], sizes = [1, 16, 4], strides = [1, 1, 1]} : vector<16x16x4xbf16> to vector<1x16x4xbf16>
    %19 = tpu.concatenate %17, %1, %18 in 0 : vector<1x16x4xbf16>, vector<16x16x4xbf16>, vector<1x16x4xbf16> -> vector<18x16x4xbf16>
    %20 = vector.extract_strided_slice %19 {offsets = [0, 1, 0], sizes = [18, 1, 4], strides = [1, 1, 1]} : vector<18x16x4xbf16> to vector<18x1x4xbf16>
    %21 = vector.extract_strided_slice %19 {offsets = [0, 14, 0], sizes = [18, 1, 4], strides = [1, 1, 1]} : vector<18x16x4xbf16> to vector<18x1x4xbf16>
    %22 = tpu.concatenate %20, %19, %21 in 1 : vector<18x1x4xbf16>, vector<18x16x4xbf16>, vector<18x1x4xbf16> -> vector<18x18x4xbf16>
    %23 = vector.extract_strided_slice %22 {offsets = [0, 0, 0], sizes = [16, 16, 4], strides = [1, 1, 1]} : vector<18x18x4xbf16> to vector<16x16x4xbf16>
    %24 = vector.extract_strided_slice %22 {offsets = [0, 1, 0], sizes = [16, 16, 4], strides = [1, 1, 1]} : vector<18x18x4xbf16> to vector<16x16x4xbf16>
    %25 = vector.extract_strided_slice %22 {offsets = [0, 2, 0], sizes = [16, 16, 4], strides = [1, 1, 1]} : vector<18x18x4xbf16> to vector<16x16x4xbf16>
    %26 = vector.extract_strided_slice %22 {offsets = [1, 0, 0], sizes = [16, 16, 4], strides = [1, 1, 1]} : vector<18x18x4xbf16> to vector<16x16x4xbf16>
    %27 = vector.extract_strided_slice %22 {offsets = [1, 1, 0], sizes = [16, 16, 4], strides = [1, 1, 1]} : vector<18x18x4xbf16> to vector<16x16x4xbf16>
    %28 = vector.extract_strided_slice %22 {offsets = [1, 2, 0], sizes = [16, 16, 4], strides = [1, 1, 1]} : vector<18x18x4xbf16> to vector<16x16x4xbf16>
    %29 = vector.extract_strided_slice %22 {offsets = [2, 0, 0], sizes = [16, 16, 4], strides = [1, 1, 1]} : vector<18x18x4xbf16> to vector<16x16x4xbf16>
    %30 = vector.extract_strided_slice %22 {offsets = [2, 1, 0], sizes = [16, 16, 4], strides = [1, 1, 1]} : vector<18x18x4xbf16> to vector<16x16x4xbf16>
    %31 = vector.extract_strided_slice %22 {offsets = [2, 2, 0], sizes = [16, 16, 4], strides = [1, 1, 1]} : vector<18x18x4xbf16> to vector<16x16x4xbf16>
    %32 = tpu.concatenate %23, %24, %25, %26, %27, %28, %29, %30, %31 in 2 : vector<16x16x4xbf16>, vector<16x16x4xbf16>, vector<16x16x4xbf16>, vector<16x16x4xbf16>, vector<16x16x4xbf16>, vector<16x16x4xbf16>, vector<16x16x4xbf16>, vector<16x16x4xbf16>, vector<16x16x4xbf16> -> vector<16x16x36xbf16>
    %33 = vector.shape_cast %32 : vector<16x16x36xbf16> to vector<256x36xbf16>
    %c0_12 = arith.constant 0 : index
    %c0_13 = arith.constant 0 : index
    %34 = vector.load %arg2[%c0_12, %c0_13] : memref<36x8xbf16, #tpu.memory_space<vmem>>, vector<36x8xbf16>
    %cst = arith.constant dense<0.000000e+00> : vector<256x8xf32>
    %35 = tpu.matmul %33, %34, %cst {dimension_numbers = #tpu.dot_dimension_numbers<[1], [0], [0], [1], [0, 0, 1, 1], [], []>} : vector<256x36xbf16>, vector<36x8xbf16>, vector<256x8xf32> -> vector<256x8xf32>
    %36 = vector.broadcast %6 : vector<1x8xf32> to vector<256x8xf32>
    %37 = arith.addf %35, %36 : vector<256x8xf32>
    %cst_14 = arith.constant dense<0.000000e+00> : vector<8xf32>
    %38 = vector.multi_reduction <add>, %37, %cst_14 [0] : vector<256x8xf32> to vector<8xf32>
    %39 = vector.shape_cast %38 : vector<8xf32> to vector<1x8xf32>
    %cst_15 = arith.constant 2.560000e+02 : f32
    %40 = vector.broadcast %cst_15 : f32 to vector<1x8xf32>
    %41 = arith.divf %39, %40 : vector<1x8xf32>
    %42 = vector.broadcast %41 : vector<1x8xf32> to vector<256x8xf32>
    %43 = arith.subf %37, %42 : vector<256x8xf32>
    %44 = arith.mulf %43, %43 : vector<256x8xf32>
    %cst_16 = arith.constant dense<0.000000e+00> : vector<8xf32>
    %45 = vector.multi_reduction <add>, %44, %cst_16 [0] : vector<256x8xf32> to vector<8xf32>
    %46 = vector.shape_cast %45 : vector<8xf32> to vector<1x8xf32>
    %cst_17 = arith.constant 2.560000e+02 : f32
    %47 = vector.broadcast %cst_17 : f32 to vector<1x8xf32>
    %48 = arith.divf %46, %47 : vector<1x8xf32>
    %49 = vector.broadcast %41 : vector<1x8xf32> to vector<256x8xf32>
    %50 = arith.subf %37, %49 : vector<256x8xf32>
    %cst_18 = arith.constant 9.99999974E-6 : f32
    %51 = vector.broadcast %cst_18 : f32 to vector<1x8xf32>
    %52 = arith.addf %48, %51 : vector<1x8xf32>
    %53 = math.rsqrt %52 : vector<1x8xf32>
    %54 = vector.broadcast %53 : vector<1x8xf32> to vector<256x8xf32>
    %55 = arith.mulf %50, %54 : vector<256x8xf32>
    %56 = vector.broadcast %10 : vector<1x8xf32> to vector<256x8xf32>
    %57 = arith.mulf %55, %56 : vector<256x8xf32>
    %58 = vector.broadcast %14 : vector<1x8xf32> to vector<256x8xf32>
    %59 = arith.addf %57, %58 : vector<256x8xf32>
    %cst_19 = arith.constant 0.000000e+00 : f32
    %60 = vector.broadcast %cst_19 : f32 to vector<256x8xf32>
    %61 = arith.cmpf oge, %59, %60 : vector<256x8xf32>
    %cst_20 = arith.constant 2.000000e-01 : f32
    %62 = vector.broadcast %cst_20 : f32 to vector<256x8xf32>
    %63 = arith.mulf %62, %59 : vector<256x8xf32>
    %64 = arith.select %61, %59, %63 : vector<256x8xi1>, vector<256x8xf32>
    %65 = vector.shape_cast %64 : vector<256x8xf32> to vector<16x16x8xf32>
    %66 = arith.truncf %65 : vector<16x16x8xf32> to vector<16x16x8xbf16>
    %67 = vector.extract_strided_slice %66 {offsets = [1, 0, 0], sizes = [1, 16, 8], strides = [1, 1, 1]} : vector<16x16x8xbf16> to vector<1x16x8xbf16>
    %68 = vector.extract_strided_slice %66 {offsets = [14, 0, 0], sizes = [1, 16, 8], strides = [1, 1, 1]} : vector<16x16x8xbf16> to vector<1x16x8xbf16>
    %69 = tpu.concatenate %67, %66, %68 in 0 : vector<1x16x8xbf16>, vector<16x16x8xbf16>, vector<1x16x8xbf16> -> vector<18x16x8xbf16>
    %70 = vector.extract_strided_slice %69 {offsets = [0, 1, 0], sizes = [18, 1, 8], strides = [1, 1, 1]} : vector<18x16x8xbf16> to vector<18x1x8xbf16>
    %71 = vector.extract_strided_slice %69 {offsets = [0, 14, 0], sizes = [18, 1, 8], strides = [1, 1, 1]} : vector<18x16x8xbf16> to vector<18x1x8xbf16>
    %72 = tpu.concatenate %70, %69, %71 in 1 : vector<18x1x8xbf16>, vector<18x16x8xbf16>, vector<18x1x8xbf16> -> vector<18x18x8xbf16>
    %73 = vector.extract_strided_slice %72 {offsets = [0, 0, 0], sizes = [16, 16, 8], strides = [1, 1, 1]} : vector<18x18x8xbf16> to vector<16x16x8xbf16>
    %74 = vector.extract_strided_slice %72 {offsets = [0, 1, 0], sizes = [16, 16, 8], strides = [1, 1, 1]} : vector<18x18x8xbf16> to vector<16x16x8xbf16>
    %75 = vector.extract_strided_slice %72 {offsets = [0, 2, 0], sizes = [16, 16, 8], strides = [1, 1, 1]} : vector<18x18x8xbf16> to vector<16x16x8xbf16>
    %76 = vector.extract_strided_slice %72 {offsets = [1, 0, 0], sizes = [16, 16, 8], strides = [1, 1, 1]} : vector<18x18x8xbf16> to vector<16x16x8xbf16>
    %77 = vector.extract_strided_slice %72 {offsets = [1, 1, 0], sizes = [16, 16, 8], strides = [1, 1, 1]} : vector<18x18x8xbf16> to vector<16x16x8xbf16>
    %78 = vector.extract_strided_slice %72 {offsets = [1, 2, 0], sizes = [16, 16, 8], strides = [1, 1, 1]} : vector<18x18x8xbf16> to vector<16x16x8xbf16>
    %79 = vector.extract_strided_slice %72 {offsets = [2, 0, 0], sizes = [16, 16, 8], strides = [1, 1, 1]} : vector<18x18x8xbf16> to vector<16x16x8xbf16>
    %80 = vector.extract_strided_slice %72 {offsets = [2, 1, 0], sizes = [16, 16, 8], strides = [1, 1, 1]} : vector<18x18x8xbf16> to vector<16x16x8xbf16>
    %81 = vector.extract_strided_slice %72 {offsets = [2, 2, 0], sizes = [16, 16, 8], strides = [1, 1, 1]} : vector<18x18x8xbf16> to vector<16x16x8xbf16>
    %82 = tpu.concatenate %73, %74, %75, %76, %77, %78, %79, %80, %81 in 2 : vector<16x16x8xbf16>, vector<16x16x8xbf16>, vector<16x16x8xbf16>, vector<16x16x8xbf16>, vector<16x16x8xbf16>, vector<16x16x8xbf16>, vector<16x16x8xbf16>, vector<16x16x8xbf16>, vector<16x16x8xbf16> -> vector<16x16x72xbf16>
    %83 = vector.shape_cast %82 : vector<16x16x72xbf16> to vector<256x72xbf16>
    %c0_21 = arith.constant 0 : index
    %c0_22 = arith.constant 0 : index
    %84 = vector.load %arg3[%c0_21, %c0_22] : memref<72x8xbf16, #tpu.memory_space<vmem>>, vector<72x8xbf16>
    %cst_23 = arith.constant dense<0.000000e+00> : vector<256x8xf32>
    %85 = tpu.matmul %83, %84, %cst_23 {dimension_numbers = #tpu.dot_dimension_numbers<[1], [0], [0], [1], [0, 0, 1, 1], [], []>} : vector<256x72xbf16>, vector<72x8xbf16>, vector<256x8xf32> -> vector<256x8xf32>
    %86 = vector.broadcast %8 : vector<1x8xf32> to vector<256x8xf32>
    %87 = arith.addf %85, %86 : vector<256x8xf32>
    %cst_24 = arith.constant dense<0.000000e+00> : vector<8xf32>
    %88 = vector.multi_reduction <add>, %87, %cst_24 [0] : vector<256x8xf32> to vector<8xf32>
    %89 = vector.shape_cast %88 : vector<8xf32> to vector<1x8xf32>
    %cst_25 = arith.constant 2.560000e+02 : f32
    %90 = vector.broadcast %cst_25 : f32 to vector<1x8xf32>
    %91 = arith.divf %89, %90 : vector<1x8xf32>
    %92 = vector.broadcast %91 : vector<1x8xf32> to vector<256x8xf32>
    %93 = arith.subf %87, %92 : vector<256x8xf32>
    %94 = arith.mulf %93, %93 : vector<256x8xf32>
    %cst_26 = arith.constant dense<0.000000e+00> : vector<8xf32>
    %95 = vector.multi_reduction <add>, %94, %cst_26 [0] : vector<256x8xf32> to vector<8xf32>
    %96 = vector.shape_cast %95 : vector<8xf32> to vector<1x8xf32>
    %cst_27 = arith.constant 2.560000e+02 : f32
    %97 = vector.broadcast %cst_27 : f32 to vector<1x8xf32>
    %98 = arith.divf %96, %97 : vector<1x8xf32>
    %99 = vector.broadcast %91 : vector<1x8xf32> to vector<256x8xf32>
    %100 = arith.subf %87, %99 : vector<256x8xf32>
    %cst_28 = arith.constant 9.99999974E-6 : f32
    %101 = vector.broadcast %cst_28 : f32 to vector<1x8xf32>
    %102 = arith.addf %98, %101 : vector<1x8xf32>
    %103 = math.rsqrt %102 : vector<1x8xf32>
    %104 = vector.broadcast %103 : vector<1x8xf32> to vector<256x8xf32>
    %105 = arith.mulf %100, %104 : vector<256x8xf32>
    %106 = vector.broadcast %12 : vector<1x8xf32> to vector<256x8xf32>
    %107 = arith.mulf %105, %106 : vector<256x8xf32>
    %108 = vector.broadcast %16 : vector<1x8xf32> to vector<256x8xf32>
    %109 = arith.addf %107, %108 : vector<256x8xf32>
    %cst_29 = arith.constant 0.000000e+00 : f32
    %110 = vector.broadcast %cst_29 : f32 to vector<256x8xf32>
    %111 = arith.cmpf oge, %109, %110 : vector<256x8xf32>
    %cst_30 = arith.constant 2.000000e-01 : f32
    %112 = vector.broadcast %cst_30 : f32 to vector<256x8xf32>
    %113 = arith.mulf %112, %109 : vector<256x8xf32>
    %114 = arith.select %111, %109, %113 : vector<256x8xi1>, vector<256x8xf32>
    %115 = vector.extract_strided_slice %2 {offsets = [1, 0, 0], sizes = [1, 1, 8], strides = [1, 1, 1]} : vector<2x2x8xf32> to vector<1x1x8xf32>
    %116 = vector.shape_cast %115 : vector<1x1x8xf32> to vector<1x8xf32>
    %117 = vector.extract_strided_slice %2 {offsets = [1, 1, 0], sizes = [1, 1, 8], strides = [1, 1, 1]} : vector<2x2x8xf32> to vector<1x1x8xf32>
    %118 = vector.shape_cast %117 : vector<1x1x8xf32> to vector<1x8xf32>
    %119 = vector.extract_strided_slice %3 {offsets = [1, 0, 0], sizes = [1, 1, 8], strides = [1, 1, 1]} : vector<2x2x8xf32> to vector<1x1x8xf32>
    %120 = vector.shape_cast %119 : vector<1x1x8xf32> to vector<1x8xf32>
    %121 = vector.extract_strided_slice %3 {offsets = [1, 1, 0], sizes = [1, 1, 8], strides = [1, 1, 1]} : vector<2x2x8xf32> to vector<1x1x8xf32>
    %122 = vector.shape_cast %121 : vector<1x1x8xf32> to vector<1x8xf32>
    %123 = vector.extract_strided_slice %4 {offsets = [1, 0, 0], sizes = [1, 1, 8], strides = [1, 1, 1]} : vector<2x2x8xf32> to vector<1x1x8xf32>
    %124 = vector.shape_cast %123 : vector<1x1x8xf32> to vector<1x8xf32>
    %125 = vector.extract_strided_slice %4 {offsets = [1, 1, 0], sizes = [1, 1, 8], strides = [1, 1, 1]} : vector<2x2x8xf32> to vector<1x1x8xf32>
    %126 = vector.shape_cast %125 : vector<1x1x8xf32> to vector<1x8xf32>
    %127 = vector.extract_strided_slice %1 {offsets = [2, 0, 0], sizes = [1, 16, 4], strides = [1, 1, 1]} : vector<16x16x4xbf16> to vector<1x16x4xbf16>
    %128 = vector.extract_strided_slice %1 {offsets = [1, 0, 0], sizes = [1, 16, 4], strides = [1, 1, 1]} : vector<16x16x4xbf16> to vector<1x16x4xbf16>
    %129 = vector.extract_strided_slice %1 {offsets = [14, 0, 0], sizes = [1, 16, 4], strides = [1, 1, 1]} : vector<16x16x4xbf16> to vector<1x16x4xbf16>
    %130 = vector.extract_strided_slice %1 {offsets = [13, 0, 0], sizes = [1, 16, 4], strides = [1, 1, 1]} : vector<16x16x4xbf16> to vector<1x16x4xbf16>
    %131 = tpu.concatenate %127, %128, %1, %129, %130 in 0 : vector<1x16x4xbf16>, vector<1x16x4xbf16>, vector<16x16x4xbf16>, vector<1x16x4xbf16>, vector<1x16x4xbf16> -> vector<20x16x4xbf16>
    %132 = vector.extract_strided_slice %131 {offsets = [0, 2, 0], sizes = [20, 1, 4], strides = [1, 1, 1]} : vector<20x16x4xbf16> to vector<20x1x4xbf16>
    %133 = vector.extract_strided_slice %131 {offsets = [0, 1, 0], sizes = [20, 1, 4], strides = [1, 1, 1]} : vector<20x16x4xbf16> to vector<20x1x4xbf16>
    %134 = vector.extract_strided_slice %131 {offsets = [0, 14, 0], sizes = [20, 1, 4], strides = [1, 1, 1]} : vector<20x16x4xbf16> to vector<20x1x4xbf16>
    %135 = vector.extract_strided_slice %131 {offsets = [0, 13, 0], sizes = [20, 1, 4], strides = [1, 1, 1]} : vector<20x16x4xbf16> to vector<20x1x4xbf16>
    %136 = tpu.concatenate %132, %133, %131, %134, %135 in 1 : vector<20x1x4xbf16>, vector<20x1x4xbf16>, vector<20x16x4xbf16>, vector<20x1x4xbf16>, vector<20x1x4xbf16> -> vector<20x20x4xbf16>
    %137 = vector.extract_strided_slice %136 {offsets = [0, 0, 0], sizes = [16, 16, 4], strides = [1, 1, 1]} : vector<20x20x4xbf16> to vector<16x16x4xbf16>
    %138 = vector.extract_strided_slice %136 {offsets = [0, 1, 0], sizes = [16, 16, 4], strides = [1, 1, 1]} : vector<20x20x4xbf16> to vector<16x16x4xbf16>
    %139 = vector.extract_strided_slice %136 {offsets = [0, 2, 0], sizes = [16, 16, 4], strides = [1, 1, 1]} : vector<20x20x4xbf16> to vector<16x16x4xbf16>
    %140 = vector.extract_strided_slice %136 {offsets = [0, 3, 0], sizes = [16, 16, 4], strides = [1, 1, 1]} : vector<20x20x4xbf16> to vector<16x16x4xbf16>
    %141 = vector.extract_strided_slice %136 {offsets = [0, 4, 0], sizes = [16, 16, 4], strides = [1, 1, 1]} : vector<20x20x4xbf16> to vector<16x16x4xbf16>
    %142 = vector.extract_strided_slice %136 {offsets = [1, 0, 0], sizes = [16, 16, 4], strides = [1, 1, 1]} : vector<20x20x4xbf16> to vector<16x16x4xbf16>
    %143 = vector.extract_strided_slice %136 {offsets = [1, 1, 0], sizes = [16, 16, 4], strides = [1, 1, 1]} : vector<20x20x4xbf16> to vector<16x16x4xbf16>
    %144 = vector.extract_strided_slice %136 {offsets = [1, 2, 0], sizes = [16, 16, 4], strides = [1, 1, 1]} : vector<20x20x4xbf16> to vector<16x16x4xbf16>
    %145 = vector.extract_strided_slice %136 {offsets = [1, 3, 0], sizes = [16, 16, 4], strides = [1, 1, 1]} : vector<20x20x4xbf16> to vector<16x16x4xbf16>
    %146 = vector.extract_strided_slice %136 {offsets = [1, 4, 0], sizes = [16, 16, 4], strides = [1, 1, 1]} : vector<20x20x4xbf16> to vector<16x16x4xbf16>
    %147 = vector.extract_strided_slice %136 {offsets = [2, 0, 0], sizes = [16, 16, 4], strides = [1, 1, 1]} : vector<20x20x4xbf16> to vector<16x16x4xbf16>
    %148 = vector.extract_strided_slice %136 {offsets = [2, 1, 0], sizes = [16, 16, 4], strides = [1, 1, 1]} : vector<20x20x4xbf16> to vector<16x16x4xbf16>
    %149 = vector.extract_strided_slice %136 {offsets = [2, 2, 0], sizes = [16, 16, 4], strides = [1, 1, 1]} : vector<20x20x4xbf16> to vector<16x16x4xbf16>
    %150 = vector.extract_strided_slice %136 {offsets = [2, 3, 0], sizes = [16, 16, 4], strides = [1, 1, 1]} : vector<20x20x4xbf16> to vector<16x16x4xbf16>
    %151 = vector.extract_strided_slice %136 {offsets = [2, 4, 0], sizes = [16, 16, 4], strides = [1, 1, 1]} : vector<20x20x4xbf16> to vector<16x16x4xbf16>
    %152 = vector.extract_strided_slice %136 {offsets = [3, 0, 0], sizes = [16, 16, 4], strides = [1, 1, 1]} : vector<20x20x4xbf16> to vector<16x16x4xbf16>
    %153 = vector.extract_strided_slice %136 {offsets = [3, 1, 0], sizes = [16, 16, 4], strides = [1, 1, 1]} : vector<20x20x4xbf16> to vector<16x16x4xbf16>
    %154 = vector.extract_strided_slice %136 {offsets = [3, 2, 0], sizes = [16, 16, 4], strides = [1, 1, 1]} : vector<20x20x4xbf16> to vector<16x16x4xbf16>
    %155 = vector.extract_strided_slice %136 {offsets = [3, 3, 0], sizes = [16, 16, 4], strides = [1, 1, 1]} : vector<20x20x4xbf16> to vector<16x16x4xbf16>
    %156 = vector.extract_strided_slice %136 {offsets = [3, 4, 0], sizes = [16, 16, 4], strides = [1, 1, 1]} : vector<20x20x4xbf16> to vector<16x16x4xbf16>
    %157 = vector.extract_strided_slice %136 {offsets = [4, 0, 0], sizes = [16, 16, 4], strides = [1, 1, 1]} : vector<20x20x4xbf16> to vector<16x16x4xbf16>
    %158 = vector.extract_strided_slice %136 {offsets = [4, 1, 0], sizes = [16, 16, 4], strides = [1, 1, 1]} : vector<20x20x4xbf16> to vector<16x16x4xbf16>
    %159 = vector.extract_strided_slice %136 {offsets = [4, 2, 0], sizes = [16, 16, 4], strides = [1, 1, 1]} : vector<20x20x4xbf16> to vector<16x16x4xbf16>
    %160 = vector.extract_strided_slice %136 {offsets = [4, 3, 0], sizes = [16, 16, 4], strides = [1, 1, 1]} : vector<20x20x4xbf16> to vector<16x16x4xbf16>
    %161 = vector.extract_strided_slice %136 {offsets = [4, 4, 0], sizes = [16, 16, 4], strides = [1, 1, 1]} : vector<20x20x4xbf16> to vector<16x16x4xbf16>
    %162 = tpu.concatenate %137, %138, %139, %140, %141, %142, %143, %144, %145, %146, %147, %148, %149, %150, %151, %152 in 2 : vector<16x16x4xbf16>, vector<16x16x4xbf16>, vector<16x16x4xbf16>, vector<16x16x4xbf16>, vector<16x16x4xbf16>, vector<16x16x4xbf16>, vector<16x16x4xbf16>, vector<16x16x4xbf16>, vector<16x16x4xbf16>, vector<16x16x4xbf16>, vector<16x16x4xbf16>, vector<16x16x4xbf16>, vector<16x16x4xbf16>, vector<16x16x4xbf16>, vector<16x16x4xbf16>, vector<16x16x4xbf16> -> vector<16x16x64xbf16>
    %163 = tpu.concatenate %153, %154, %155, %156, %157, %158, %159, %160, %161 in 2 : vector<16x16x4xbf16>, vector<16x16x4xbf16>, vector<16x16x4xbf16>, vector<16x16x4xbf16>, vector<16x16x4xbf16>, vector<16x16x4xbf16>, vector<16x16x4xbf16>, vector<16x16x4xbf16>, vector<16x16x4xbf16> -> vector<16x16x36xbf16>
    %164 = tpu.concatenate %162, %163 in 2 : vector<16x16x64xbf16>, vector<16x16x36xbf16> -> vector<16x16x100xbf16>
    %165 = vector.shape_cast %164 : vector<16x16x100xbf16> to vector<256x100xbf16>
    %c0_31 = arith.constant 0 : index
    %c0_32 = arith.constant 0 : index
    %166 = vector.load %arg4[%c0_31, %c0_32] : memref<100x8xbf16, #tpu.memory_space<vmem>>, vector<100x8xbf16>
    %cst_33 = arith.constant dense<0.000000e+00> : vector<256x8xf32>
    %167 = tpu.matmul %165, %166, %cst_33 {dimension_numbers = #tpu.dot_dimension_numbers<[1], [0], [0], [1], [0, 0, 1, 1], [], []>} : vector<256x100xbf16>, vector<100x8xbf16>, vector<256x8xf32> -> vector<256x8xf32>
    %168 = vector.broadcast %116 : vector<1x8xf32> to vector<256x8xf32>
    %169 = arith.addf %167, %168 : vector<256x8xf32>
    %cst_34 = arith.constant dense<0.000000e+00> : vector<8xf32>
    %170 = vector.multi_reduction <add>, %169, %cst_34 [0] : vector<256x8xf32> to vector<8xf32>
    %171 = vector.shape_cast %170 : vector<8xf32> to vector<1x8xf32>
    %cst_35 = arith.constant 2.560000e+02 : f32
    %172 = vector.broadcast %cst_35 : f32 to vector<1x8xf32>
    %173 = arith.divf %171, %172 : vector<1x8xf32>
    %174 = vector.broadcast %173 : vector<1x8xf32> to vector<256x8xf32>
    %175 = arith.subf %169, %174 : vector<256x8xf32>
    %176 = arith.mulf %175, %175 : vector<256x8xf32>
    %cst_36 = arith.constant dense<0.000000e+00> : vector<8xf32>
    %177 = vector.multi_reduction <add>, %176, %cst_36 [0] : vector<256x8xf32> to vector<8xf32>
    %178 = vector.shape_cast %177 : vector<8xf32> to vector<1x8xf32>
    %cst_37 = arith.constant 2.560000e+02 : f32
    %179 = vector.broadcast %cst_37 : f32 to vector<1x8xf32>
    %180 = arith.divf %178, %179 : vector<1x8xf32>
    %181 = vector.broadcast %173 : vector<1x8xf32> to vector<256x8xf32>
    %182 = arith.subf %169, %181 : vector<256x8xf32>
    %cst_38 = arith.constant 9.99999974E-6 : f32
    %183 = vector.broadcast %cst_38 : f32 to vector<1x8xf32>
    %184 = arith.addf %180, %183 : vector<1x8xf32>
    %185 = math.rsqrt %184 : vector<1x8xf32>
    %186 = vector.broadcast %185 : vector<1x8xf32> to vector<256x8xf32>
    %187 = arith.mulf %182, %186 : vector<256x8xf32>
    %188 = vector.broadcast %120 : vector<1x8xf32> to vector<256x8xf32>
    %189 = arith.mulf %187, %188 : vector<256x8xf32>
    %190 = vector.broadcast %124 : vector<1x8xf32> to vector<256x8xf32>
    %191 = arith.addf %189, %190 : vector<256x8xf32>
    %cst_39 = arith.constant 0.000000e+00 : f32
    %192 = vector.broadcast %cst_39 : f32 to vector<256x8xf32>
    %193 = arith.cmpf oge, %191, %192 : vector<256x8xf32>
    %cst_40 = arith.constant 2.000000e-01 : f32
    %194 = vector.broadcast %cst_40 : f32 to vector<256x8xf32>
    %195 = arith.mulf %194, %191 : vector<256x8xf32>
    %196 = arith.select %193, %191, %195 : vector<256x8xi1>, vector<256x8xf32>
    %197 = vector.shape_cast %196 : vector<256x8xf32> to vector<16x16x8xf32>
    %198 = arith.truncf %197 : vector<16x16x8xf32> to vector<16x16x8xbf16>
    %199 = vector.extract_strided_slice %198 {offsets = [2, 0, 0], sizes = [1, 16, 8], strides = [1, 1, 1]} : vector<16x16x8xbf16> to vector<1x16x8xbf16>
    %200 = vector.extract_strided_slice %198 {offsets = [1, 0, 0], sizes = [1, 16, 8], strides = [1, 1, 1]} : vector<16x16x8xbf16> to vector<1x16x8xbf16>
    %201 = vector.extract_strided_slice %198 {offsets = [14, 0, 0], sizes = [1, 16, 8], strides = [1, 1, 1]} : vector<16x16x8xbf16> to vector<1x16x8xbf16>
    %202 = vector.extract_strided_slice %198 {offsets = [13, 0, 0], sizes = [1, 16, 8], strides = [1, 1, 1]} : vector<16x16x8xbf16> to vector<1x16x8xbf16>
    %203 = tpu.concatenate %199, %200, %198, %201, %202 in 0 : vector<1x16x8xbf16>, vector<1x16x8xbf16>, vector<16x16x8xbf16>, vector<1x16x8xbf16>, vector<1x16x8xbf16> -> vector<20x16x8xbf16>
    %204 = vector.extract_strided_slice %203 {offsets = [0, 2, 0], sizes = [20, 1, 8], strides = [1, 1, 1]} : vector<20x16x8xbf16> to vector<20x1x8xbf16>
    %205 = vector.extract_strided_slice %203 {offsets = [0, 1, 0], sizes = [20, 1, 8], strides = [1, 1, 1]} : vector<20x16x8xbf16> to vector<20x1x8xbf16>
    %206 = vector.extract_strided_slice %203 {offsets = [0, 14, 0], sizes = [20, 1, 8], strides = [1, 1, 1]} : vector<20x16x8xbf16> to vector<20x1x8xbf16>
    %207 = vector.extract_strided_slice %203 {offsets = [0, 13, 0], sizes = [20, 1, 8], strides = [1, 1, 1]} : vector<20x16x8xbf16> to vector<20x1x8xbf16>
    %208 = tpu.concatenate %204, %205, %203, %206, %207 in 1 : vector<20x1x8xbf16>, vector<20x1x8xbf16>, vector<20x16x8xbf16>, vector<20x1x8xbf16>, vector<20x1x8xbf16> -> vector<20x20x8xbf16>
    %209 = vector.extract_strided_slice %208 {offsets = [0, 0, 0], sizes = [16, 16, 8], strides = [1, 1, 1]} : vector<20x20x8xbf16> to vector<16x16x8xbf16>
    %210 = vector.extract_strided_slice %208 {offsets = [0, 1, 0], sizes = [16, 16, 8], strides = [1, 1, 1]} : vector<20x20x8xbf16> to vector<16x16x8xbf16>
    %211 = vector.extract_strided_slice %208 {offsets = [0, 2, 0], sizes = [16, 16, 8], strides = [1, 1, 1]} : vector<20x20x8xbf16> to vector<16x16x8xbf16>
    %212 = vector.extract_strided_slice %208 {offsets = [0, 3, 0], sizes = [16, 16, 8], strides = [1, 1, 1]} : vector<20x20x8xbf16> to vector<16x16x8xbf16>
    %213 = vector.extract_strided_slice %208 {offsets = [0, 4, 0], sizes = [16, 16, 8], strides = [1, 1, 1]} : vector<20x20x8xbf16> to vector<16x16x8xbf16>
    %214 = vector.extract_strided_slice %208 {offsets = [1, 0, 0], sizes = [16, 16, 8], strides = [1, 1, 1]} : vector<20x20x8xbf16> to vector<16x16x8xbf16>
    %215 = vector.extract_strided_slice %208 {offsets = [1, 1, 0], sizes = [16, 16, 8], strides = [1, 1, 1]} : vector<20x20x8xbf16> to vector<16x16x8xbf16>
    %216 = vector.extract_strided_slice %208 {offsets = [1, 2, 0], sizes = [16, 16, 8], strides = [1, 1, 1]} : vector<20x20x8xbf16> to vector<16x16x8xbf16>
    %217 = vector.extract_strided_slice %208 {offsets = [1, 3, 0], sizes = [16, 16, 8], strides = [1, 1, 1]} : vector<20x20x8xbf16> to vector<16x16x8xbf16>
    %218 = vector.extract_strided_slice %208 {offsets = [1, 4, 0], sizes = [16, 16, 8], strides = [1, 1, 1]} : vector<20x20x8xbf16> to vector<16x16x8xbf16>
    %219 = vector.extract_strided_slice %208 {offsets = [2, 0, 0], sizes = [16, 16, 8], strides = [1, 1, 1]} : vector<20x20x8xbf16> to vector<16x16x8xbf16>
    %220 = vector.extract_strided_slice %208 {offsets = [2, 1, 0], sizes = [16, 16, 8], strides = [1, 1, 1]} : vector<20x20x8xbf16> to vector<16x16x8xbf16>
    %221 = vector.extract_strided_slice %208 {offsets = [2, 2, 0], sizes = [16, 16, 8], strides = [1, 1, 1]} : vector<20x20x8xbf16> to vector<16x16x8xbf16>
    %222 = vector.extract_strided_slice %208 {offsets = [2, 3, 0], sizes = [16, 16, 8], strides = [1, 1, 1]} : vector<20x20x8xbf16> to vector<16x16x8xbf16>
    %223 = vector.extract_strided_slice %208 {offsets = [2, 4, 0], sizes = [16, 16, 8], strides = [1, 1, 1]} : vector<20x20x8xbf16> to vector<16x16x8xbf16>
    %224 = vector.extract_strided_slice %208 {offsets = [3, 0, 0], sizes = [16, 16, 8], strides = [1, 1, 1]} : vector<20x20x8xbf16> to vector<16x16x8xbf16>
    %225 = vector.extract_strided_slice %208 {offsets = [3, 1, 0], sizes = [16, 16, 8], strides = [1, 1, 1]} : vector<20x20x8xbf16> to vector<16x16x8xbf16>
    %226 = vector.extract_strided_slice %208 {offsets = [3, 2, 0], sizes = [16, 16, 8], strides = [1, 1, 1]} : vector<20x20x8xbf16> to vector<16x16x8xbf16>
    %227 = vector.extract_strided_slice %208 {offsets = [3, 3, 0], sizes = [16, 16, 8], strides = [1, 1, 1]} : vector<20x20x8xbf16> to vector<16x16x8xbf16>
    %228 = vector.extract_strided_slice %208 {offsets = [3, 4, 0], sizes = [16, 16, 8], strides = [1, 1, 1]} : vector<20x20x8xbf16> to vector<16x16x8xbf16>
    %229 = vector.extract_strided_slice %208 {offsets = [4, 0, 0], sizes = [16, 16, 8], strides = [1, 1, 1]} : vector<20x20x8xbf16> to vector<16x16x8xbf16>
    %230 = vector.extract_strided_slice %208 {offsets = [4, 1, 0], sizes = [16, 16, 8], strides = [1, 1, 1]} : vector<20x20x8xbf16> to vector<16x16x8xbf16>
    %231 = vector.extract_strided_slice %208 {offsets = [4, 2, 0], sizes = [16, 16, 8], strides = [1, 1, 1]} : vector<20x20x8xbf16> to vector<16x16x8xbf16>
    %232 = vector.extract_strided_slice %208 {offsets = [4, 3, 0], sizes = [16, 16, 8], strides = [1, 1, 1]} : vector<20x20x8xbf16> to vector<16x16x8xbf16>
    %233 = vector.extract_strided_slice %208 {offsets = [4, 4, 0], sizes = [16, 16, 8], strides = [1, 1, 1]} : vector<20x20x8xbf16> to vector<16x16x8xbf16>
    %234 = tpu.concatenate %209, %210, %211, %212, %213, %214, %215, %216, %217, %218, %219, %220, %221, %222, %223, %224 in 2 : vector<16x16x8xbf16>, vector<16x16x8xbf16>, vector<16x16x8xbf16>, vector<16x16x8xbf16>, vector<16x16x8xbf16>, vector<16x16x8xbf16>, vector<16x16x8xbf16>, vector<16x16x8xbf16>, vector<16x16x8xbf16>, vector<16x16x8xbf16>, vector<16x16x8xbf16>, vector<16x16x8xbf16>, vector<16x16x8xbf16>, vector<16x16x8xbf16>, vector<16x16x8xbf16>, vector<16x16x8xbf16> -> vector<16x16x128xbf16>
    %235 = tpu.concatenate %225, %226, %227, %228, %229, %230, %231, %232, %233 in 2 : vector<16x16x8xbf16>, vector<16x16x8xbf16>, vector<16x16x8xbf16>, vector<16x16x8xbf16>, vector<16x16x8xbf16>, vector<16x16x8xbf16>, vector<16x16x8xbf16>, vector<16x16x8xbf16>, vector<16x16x8xbf16> -> vector<16x16x72xbf16>
    %236 = tpu.concatenate %234, %235 in 2 : vector<16x16x128xbf16>, vector<16x16x72xbf16> -> vector<16x16x200xbf16>
    %237 = vector.shape_cast %236 : vector<16x16x200xbf16> to vector<256x200xbf16>
    %c0_41 = arith.constant 0 : index
    %c0_42 = arith.constant 0 : index
    %238 = vector.load %arg5[%c0_41, %c0_42] : memref<200x8xbf16, #tpu.memory_space<vmem>>, vector<200x8xbf16>
    %cst_43 = arith.constant dense<0.000000e+00> : vector<256x8xf32>
    %239 = tpu.matmul %237, %238, %cst_43 {dimension_numbers = #tpu.dot_dimension_numbers<[1], [0], [0], [1], [0, 0, 1, 1], [], []>} : vector<256x200xbf16>, vector<200x8xbf16>, vector<256x8xf32> -> vector<256x8xf32>
    %240 = vector.broadcast %118 : vector<1x8xf32> to vector<256x8xf32>
    %241 = arith.addf %239, %240 : vector<256x8xf32>
    %cst_44 = arith.constant dense<0.000000e+00> : vector<8xf32>
    %242 = vector.multi_reduction <add>, %241, %cst_44 [0] : vector<256x8xf32> to vector<8xf32>
    %243 = vector.shape_cast %242 : vector<8xf32> to vector<1x8xf32>
    %cst_45 = arith.constant 2.560000e+02 : f32
    %244 = vector.broadcast %cst_45 : f32 to vector<1x8xf32>
    %245 = arith.divf %243, %244 : vector<1x8xf32>
    %246 = vector.broadcast %245 : vector<1x8xf32> to vector<256x8xf32>
    %247 = arith.subf %241, %246 : vector<256x8xf32>
    %248 = arith.mulf %247, %247 : vector<256x8xf32>
    %cst_46 = arith.constant dense<0.000000e+00> : vector<8xf32>
    %249 = vector.multi_reduction <add>, %248, %cst_46 [0] : vector<256x8xf32> to vector<8xf32>
    %250 = vector.shape_cast %249 : vector<8xf32> to vector<1x8xf32>
    %cst_47 = arith.constant 2.560000e+02 : f32
    %251 = vector.broadcast %cst_47 : f32 to vector<1x8xf32>
    %252 = arith.divf %250, %251 : vector<1x8xf32>
    %253 = vector.broadcast %245 : vector<1x8xf32> to vector<256x8xf32>
    %254 = arith.subf %241, %253 : vector<256x8xf32>
    %cst_48 = arith.constant 9.99999974E-6 : f32
    %255 = vector.broadcast %cst_48 : f32 to vector<1x8xf32>
    %256 = arith.addf %252, %255 : vector<1x8xf32>
    %257 = math.rsqrt %256 : vector<1x8xf32>
    %258 = vector.broadcast %257 : vector<1x8xf32> to vector<256x8xf32>
    %259 = arith.mulf %254, %258 : vector<256x8xf32>
    %260 = vector.broadcast %122 : vector<1x8xf32> to vector<256x8xf32>
    %261 = arith.mulf %259, %260 : vector<256x8xf32>
    %262 = vector.broadcast %126 : vector<1x8xf32> to vector<256x8xf32>
    %263 = arith.addf %261, %262 : vector<256x8xf32>
    %cst_49 = arith.constant 0.000000e+00 : f32
    %264 = vector.broadcast %cst_49 : f32 to vector<256x8xf32>
    %265 = arith.cmpf oge, %263, %264 : vector<256x8xf32>
    %cst_50 = arith.constant 2.000000e-01 : f32
    %266 = vector.broadcast %cst_50 : f32 to vector<256x8xf32>
    %267 = arith.mulf %266, %263 : vector<256x8xf32>
    %268 = arith.select %265, %263, %267 : vector<256x8xi1>, vector<256x8xf32>
    %269 = tpu.concatenate %114, %268 in 1 : vector<256x8xf32>, vector<256x8xf32> -> vector<256x16xf32>
    %270 = vector.shape_cast %269 : vector<256x16xf32> to vector<16x16x16xf32>
    %c0_51 = arith.constant 0 : index
    %c0_52 = arith.constant 0 : index
    %c0_53 = arith.constant 0 : index
    %c0_54 = arith.constant 0 : index
    %271 = vector.load %arg9[%c0_51, %c0_52, %c0_53, %c0_54] : memref<1x16x16x16xf32, #tpu.memory_space<vmem>>, vector<1x16x16x16xf32>
    %272 = vector.shape_cast %271 : vector<1x16x16x16xf32> to vector<16x16x16xf32>
    %273 = vector.shape_cast %270 : vector<16x16x16xf32> to vector<1x16x16x16xf32>
    tpu.vector_store %arg9[%c0_51, %c0_52, %c0_53, %c0_54], %273 {strides = array<i32>} : memref<1x16x16x16xf32, #tpu.memory_space<vmem>>, vector<1x16x16x16xf32>,
    return
  }
  func.func @transform_0(%arg0: i32) -> (i32, i32, i32, i32) {
    %c0_i32 = arith.constant 0 : i32
    %c0_i32_0 = arith.constant 0 : i32
    %c0_i32_1 = arith.constant 0 : i32
    %c0_i32_2 = arith.constant 0 : i32
    return %arg0, %c0_i32, %c0_i32_0, %c0_i32_1 : i32, i32, i32, i32
  }
  func.func @transform_1(%arg0: i32) -> (i32, i32) {
    %c0_i32 = arith.constant 0 : i32
    %c0_i32_0 = arith.constant 0 : i32
    %c0_i32_1 = arith.constant 0 : i32
    return %c0_i32, %c0_i32_0 : i32, i32
  }
  func.func @transform_2(%arg0: i32) -> (i32, i32) {
    %c0_i32 = arith.constant 0 : i32
    %c0_i32_0 = arith.constant 0 : i32
    %c0_i32_1 = arith.constant 0 : i32
    return %c0_i32, %c0_i32_0 : i32, i32
  }
  func.func @transform_3(%arg0: i32) -> (i32, i32) {
    %c0_i32 = arith.constant 0 : i32
    %c0_i32_0 = arith.constant 0 : i32
    %c0_i32_1 = arith.constant 0 : i32
    return %c0_i32, %c0_i32_0 : i32, i32
  }
  func.func @transform_4(%arg0: i32) -> (i32, i32) {
    %c0_i32 = arith.constant 0 : i32
    %c0_i32_0 = arith.constant 0 : i32
    %c0_i32_1 = arith.constant 0 : i32
    return %c0_i32, %c0_i32_0 : i32, i32
  }
  func.func @transform_5(%arg0: i32) -> (i32, i32, i32) {
    %c0_i32 = arith.constant 0 : i32
    %c0_i32_0 = arith.constant 0 : i32
    %c0_i32_1 = arith.constant 0 : i32
    %c0_i32_2 = arith.constant 0 : i32
    return %c0_i32, %c0_i32_0, %c0_i32_1 : i32, i32, i32
  }
  func.func @transform_6(%arg0: i32) -> (i32, i32, i32) {
    %c0_i32 = arith.constant 0 : i32
    %c0_i32_0 = arith.constant 0 : i32
    %c0_i32_1 = arith.constant 0 : i32
    %c0_i32_2 = arith.constant 0 : i32
    return %c0_i32, %c0_i32_0, %c0_i32_1 : i32, i32, i32
  }
  func.func @transform_7(%arg0: i32) -> (i32, i32, i32) {
    %c0_i32 = arith.constant 0 : i32
    %c0_i32_0 = arith.constant 0 : i32
    %c0_i32_1 = arith.constant 0 : i32
    %c0_i32_2 = arith.constant 0 : i32
    return %c0_i32, %c0_i32_0, %c0_i32_1 : i32, i32, i32
  }
  func.func @transform_8(%arg0: i32) -> (i32, i32, i32, i32) {
    %c0_i32 = arith.constant 0 : i32
    %c0_i32_0 = arith.constant 0 : i32
    %c0_i32_1 = arith.constant 0 : i32
    %c0_i32_2 = arith.constant 0 : i32
    return %arg0, %c0_i32, %c0_i32_0, %c0_i32_1 : i32, i32, i32, i32
  }
}

</mosaic_0001>

<llo_original>
// kernel: tpu_custom_call.1
$region0: #{tpu_custom_call.1}
  #allocation0 [shape = 'u32[]', space=smem, size = 0x4, offset = 0x4, fixed_abs, tag = 'smem constant byte address 0x4 - core index']
  #allocation1 [shape = 'u32[144,128]{1,0:T(1,128)}', space=vmem, size = 0x12000, scoped, tag = 'internal scratch']
  %s0 = inlined_call_operand.vmem [shape: bf16[2,16,16,4], index: 0, kind: input, shape index: {}]
  %s1 = inlined_call_operand.vmem [shape: bf16[36,8], index: 1, kind: input, shape index: {}]
  %s2 = inlined_call_operand.vmem [shape: bf16[72,8], index: 2, kind: input, shape index: {}]
  %s3 = inlined_call_operand.vmem [shape: bf16[100,8], index: 3, kind: input, shape index: {}]
  %s4 = inlined_call_operand.vmem [shape: bf16[200,8], index: 4, kind: input, shape index: {}]
  %s5 = inlined_call_operand.vmem [shape: f32[2,2,8], index: 5, kind: input, shape index: {}]
  %s6 = inlined_call_operand.vmem [shape: f32[2,2,8], index: 6, kind: input, shape index: {}]
  %s7 = inlined_call_operand.vmem [shape: f32[2,2,8], index: 7, kind: input, shape index: {}]
  %s8 = inlined_call_operand.hbm [shape: f32[2,16,16,16], index: 8, kind: output, shape index: {}]
  %s9 = sld [smem:[#allocation0]]
  $region65: #{tpu_custom_call.1} parent=0
    _
  %s11 = ssub.s32 1, %s9
  %s12 = scalar_select 0, %s11, %s9
  $region1: #{tpu_custom_call.1} parent=0
    #allocation2 [shape = 'u8[262144]{0}', space=vmem, size = 0x40000, scoped, tag = 'output window, operand 0']
    #allocation3 [shape = 's32[2]{0}', space=sflag, size = 0x8, scoped, tag = 'scoped memory for tpu_custom_call.1']
    %13 = vsyncpa [#allocation3], 0
    %s14 = scalar_lea.sflag [#allocation3], 1
    %15 = vsyncpa %s14, 0
    loop: start=0, step=1, limit=4
    $region2: #{tpu_custom_call.1} parent=1 // loop_pre_header
      _
    $region3: #{tpu_custom_call.1} parent=1 // loop_header
      %s17 = sphi 0, %s21
      %p18 = scmp.ge.s32.totalorder %s17, 4
      %s27 = sphi 0, %s29
      %s30 = sphi 0, %s27
      %s31 = sphi 0, %s30
      %s47 = sphi 0, %s31
      %s51 = sphi 0, %s51
      %s53 = sphi 0, %s51
      %s54 = sphi 0, %s53
      %s68 = sphi 0, %s54
      %s72 = sphi 0, %s72
      %s74 = sphi 0, %s72
      %s75 = sphi 0, %s74
      %s89 = sphi 0, %s75
      %s93 = sphi 0, %s93
      %s95 = sphi 0, %s93
      %s96 = sphi 0, %s95
      %s110 = sphi 0, %s96
      %s114 = sphi 0, %s114
      %s116 = sphi 0, %s114
      %s117 = sphi 0, %s116
      %s131 = sphi 0, %s117
      %s135 = sphi 0, %s135
      %s137 = sphi 0, %s135
      %s138 = sphi 0, %s137
      %s152 = sphi 0, %s138
      %s156 = sphi 0, %s156
      %s158 = sphi 0, %s156
      %s159 = sphi 0, %s158
      %s173 = sphi 0, %s159
      %s177 = sphi 0, %s177
      %s179 = sphi 0, %s177
      %s180 = sphi 0, %s179
      %s194 = sphi 0, %s180
      %s200 = sphi 0, %s202
      %s203 = sphi 0, %s200
      %s204 = sphi 0, %s203
      %s220 = sphi 0, %s204
    $region4: #{tpu_custom_call.1} parent=1 // loop_header_branch
      %20 = sbr.rel (%p18) target = $region8
    $region5: #{tpu_custom_call.1} parent=1 // loop_body
      %s22 = ssub.s32 %s17, 1
      %s23 = ssub.s32 %s17, 2
      %s24 = sadd.s32 %s17, 1
      %s25 = ssub.s32 %s17, %s24
      %p26 = scmp.eq.s32.totalorder %s25, 0
      %s28 = sadd.s32 %s27, 1
      %s29 = scalar_select %p26, %s27, %s28
      %p32 = pneg %p26
      %p33 = scmp.eq.s32.totalorder %s17, 1
      %p34 = por %p32, %p33
      %p35 = scmp.ne.s32.totalorder %s27, %s30
      %p36 = scmp.eq.s32.totalorder %s17, 0
      %p37 = por %p35, %p36
      %p38 = scmp.ne.s32.totalorder %s27, %s30
      %p39 = scmp.eq.s32.totalorder %s22, 1
      %p40 = por %p38, %p39
      %p41 = scmp.ne.s32.totalorder %s30, %s31
      %p42 = scmp.eq.s32.totalorder %s22, 0
      %p43 = por %p41, %p42
      %p44 = scmp.ne.s32.totalorder %s30, %s31
      %p45 = scmp.eq.s32.totalorder %s23, 1
      %p46 = por %p44, %p45
      %p48 = scmp.ne.s32.totalorder %s31, %s47
      %p49 = scmp.eq.s32.totalorder %s23, 0
      %p50 = por %p48, %p49
      %s52 = sadd.s32 %s51, 1
      %p55 = scmp.eq.s32.totalorder %s17, 1
      %p56 = scmp.ne.s32.totalorder %s51, %s53
      %p57 = scmp.eq.s32.totalorder %s17, 0
      %p58 = por %p56, %p57
      %p59 = scmp.ne.s32.totalorder %s51, %s53
      %p60 = scmp.eq.s32.totalorder %s22, 1
      %p61 = por %p59, %p60
      %p62 = scmp.ne.s32.totalorder %s53, %s54
      %p63 = scmp.eq.s32.totalorder %s22, 0
      %p64 = por %p62, %p63
      %p65 = scmp.ne.s32.totalorder %s53, %s54
      %p66 = scmp.eq.s32.totalorder %s23, 1
      %p67 = por %p65, %p66
      %p69 = scmp.ne.s32.totalorder %s54, %s68
      %p70 = scmp.eq.s32.totalorder %s23, 0
      %p71 = por %p69, %p70
      %s73 = sadd.s32 %s72, 1
      %p76 = scmp.eq.s32.totalorder %s17, 1
      %p77 = scmp.ne.s32.totalorder %s72, %s74
      %p78 = scmp.eq.s32.totalorder %s17, 0
      %p79 = por %p77, %p78
      %p80 = scmp.ne.s32.totalorder %s72, %s74
      %p81 = scmp.eq.s32.totalorder %s22, 1
      %p82 = por %p80, %p81
      %p83 = scmp.ne.s32.totalorder %s74, %s75
      %p84 = scmp.eq.s32.totalorder %s22, 0
      %p85 = por %p83, %p84
      %p86 = scmp.ne.s32.totalorder %s74, %s75
      %p87 = scmp.eq.s32.totalorder %s23, 1
      %p88 = por %p86, %p87
      %p90 = scmp.ne.s32.totalorder %s75, %s89
      %p91 = scmp.eq.s32.totalorder %s23, 0
      %p92 = por %p90, %p91
      %s94 = sadd.s32 %s93, 1
      %p97 = scmp.eq.s32.totalorder %s17, 1
      %p98 = scmp.ne.s32.totalorder %s93, %s95
      %p99 = scmp.eq.s32.totalorder %s17, 0
      %p100 = por %p98, %p99
      %p101 = scmp.ne.s32.totalorder %s93, %s95
      %p102 = scmp.eq.s32.totalorder %s22, 1
      %p103 = por %p101, %p102
      %p104 = scmp.ne.s32.totalorder %s95, %s96
      %p105 = scmp.eq.s32.totalorder %s22, 0
      %p106 = por %p104, %p105
      %p107 = scmp.ne.s32.totalorder %s95, %s96
      %p108 = scmp.eq.s32.totalorder %s23, 1
      %p109 = por %p107, %p108
      %p111 = scmp.ne.s32.totalorder %s96, %s110
      %p112 = scmp.eq.s32.totalorder %s23, 0
      %p113 = por %p111, %p112
      %s115 = sadd.s32 %s114, 1
      %p118 = scmp.eq.s32.totalorder %s17, 1
      %p119 = scmp.ne.s32.totalorder %s114, %s116
      %p120 = scmp.eq.s32.totalorder %s17, 0
      %p121 = por %p119, %p120
      %p122 = scmp.ne.s32.totalorder %s114, %s116
      %p123 = scmp.eq.s32.totalorder %s22, 1
      %p124 = por %p122, %p123
      %p125 = scmp.ne.s32.totalorder %s116, %s117
      %p126 = scmp.eq.s32.totalorder %s22, 0
      %p127 = por %p125, %p126
      %p128 = scmp.ne.s32.totalorder %s116, %s117
      %p129 = scmp.eq.s32.totalorder %s23, 1
      %p130 = por %p128, %p129
      %p132 = scmp.ne.s32.totalorder %s117, %s131
      %p133 = scmp.eq.s32.totalorder %s23, 0
      %p134 = por %p132, %p133
      %s136 = sadd.s32 %s135, 1
      %p139 = scmp.eq.s32.totalorder %s17, 1
      %p140 = scmp.ne.s32.totalorder %s135, %s137
      %p141 = scmp.eq.s32.totalorder %s17, 0
      %p142 = por %p140, %p141
      %p143 = scmp.ne.s32.totalorder %s135, %s137
      %p144 = scmp.eq.s32.totalorder %s22, 1
      %p145 = por %p143, %p144
      %p146 = scmp.ne.s32.totalorder %s137, %s138
      %p147 = scmp.eq.s32.totalorder %s22, 0
      %p148 = por %p146, %p147
      %p149 = scmp.ne.s32.totalorder %s137, %s138
      %p150 = scmp.eq.s32.totalorder %s23, 1
      %p151 = por %p149, %p150
      %p153 = scmp.ne.s32.totalorder %s138, %s152
      %p154 = scmp.eq.s32.totalorder %s23, 0
      %p155 = por %p153, %p154
      %s157 = sadd.s32 %s156, 1
      %p160 = scmp.eq.s32.totalorder %s17, 1
      %p161 = scmp.ne.s32.totalorder %s156, %s158
      %p162 = scmp.eq.s32.totalorder %s17, 0
      %p163 = por %p161, %p162
      %p164 = scmp.ne.s32.totalorder %s156, %s158
      %p165 = scmp.eq.s32.totalorder %s22, 1
      %p166 = por %p164, %p165
      %p167 = scmp.ne.s32.totalorder %s158, %s159
      %p168 = scmp.eq.s32.totalorder %s22, 0
      %p169 = por %p167, %p168
      %p170 = scmp.ne.s32.totalorder %s158, %s159
      %p171 = scmp.eq.s32.totalorder %s23, 1
      %p172 = por %p170, %p171
      %p174 = scmp.ne.s32.totalorder %s159, %s173
      %p175 = scmp.eq.s32.totalorder %s23, 0
      %p176 = por %p174, %p175
      %s178 = sadd.s32 %s177, 1
      %p181 = scmp.eq.s32.totalorder %s17, 1
      %p182 = scmp.ne.s32.totalorder %s177, %s179
      %p183 = scmp.eq.s32.totalorder %s17, 0
      %p184 = por %p182, %p183
      %p185 = scmp.ne.s32.totalorder %s177, %s179
      %p186 = scmp.eq.s32.totalorder %s22, 1
      %p187 = por %p185, %p186
      %p188 = scmp.ne.s32.totalorder %s179, %s180
      %p189 = scmp.eq.s32.totalorder %s22, 0
      %p190 = por %p188, %p189
      %p191 = scmp.ne.s32.totalorder %s179, %s180
      %p192 = scmp.eq.s32.totalorder %s23, 1
      %p193 = por %p191, %p192
      %p195 = scmp.ne.s32.totalorder %s180, %s194
      %p196 = scmp.eq.s32.totalorder %s23, 0
      %p197 = por %p195, %p196
      %s198 = ssub.s32 %s17, %s24
      %p199 = scmp.eq.s32.totalorder %s198, 0
      %s201 = sadd.s32 %s200, 1
      %s202 = scalar_select %p199, %s200, %s201
      %p205 = pneg %p199
      %p206 = scmp.eq.s32.totalorder %s17, 1
      %p207 = por %p205, %p206
      %p208 = scmp.ne.s32.totalorder %s200, %s203
      %p209 = scmp.eq.s32.totalorder %s17, 0
      %p210 = por %p208, %p209
      %p211 = scmp.ne.s32.totalorder %s200, %s203
      %p212 = scmp.eq.s32.totalorder %s22, 1
      %p213 = por %p211, %p212
      %p214 = scmp.ne.s32.totalorder %s203, %s204
      %p215 = scmp.eq.s32.totalorder %s22, 0
      %p216 = por %p214, %p215
      %p217 = scmp.ne.s32.totalorder %s203, %s204
      %p218 = scmp.eq.s32.totalorder %s23, 1
      %p219 = por %p217, %p218
      %p221 = scmp.ne.s32.totalorder %s204, %s220
      %p222 = scmp.eq.s32.totalorder %s23, 0
      %p223 = por %p221, %p222
      %p224 = scmp.le.s32.totalorder 1, %s17
      %p225 = scmp.lt.s32.totalorder %s17, 3
      %p226 = pnand %p224, %p225
      %p227 = pneg %p226
      // Predicated region
      $region9: #{tpu_custom_call.1} parent=5 // pred_check
        _
      $region10: #{tpu_custom_call.1} parent=5 // pred_check_branch
        %229 = sbr.rel (%p226) target = $region12
      $region11: #{tpu_custom_call.1} parent=5 // pred_region
        %s230 = ssub.s32 %s17, 1
        // Predicated region
        $region13: #{tpu_custom_call.1} parent=11 // pred_check
          %p231 = pneg %p64
        $region14: #{tpu_custom_call.1} parent=11 // pred_check_branch
          %233 = sbr.rel (%p231) target = $region16
        $region15: #{tpu_custom_call.1} parent=11 // pred_region
          _
        $region16: #{tpu_custom_call.1} parent=11 // pred_fallthru
          _
        // Predicated region
        $region17: #{tpu_custom_call.1} parent=11 // pred_check
          %p234 = pneg %p85
        $region18: #{tpu_custom_call.1} parent=11 // pred_check_branch
          %236 = sbr.rel (%p234) target = $region20
        $region19: #{tpu_custom_call.1} parent=11 // pred_region
          _
        $region20: #{tpu_custom_call.1} parent=11 // pred_fallthru
          _
        // Predicated region
        $region21: #{tpu_custom_call.1} parent=11 // pred_check
          %p237 = pneg %p106
        $region22: #{tpu_custom_call.1} parent=11 // pred_check_branch
          %239 = sbr.rel (%p237) target = $region24
        $region23: #{tpu_custom_call.1} parent=11 // pred_region
          _
        $region24: #{tpu_custom_call.1} parent=11 // pred_fallthru
          _
        // Predicated region
        $region25: #{tpu_custom_call.1} parent=11 // pred_check
          %p240 = pneg %p127
        $region26: #{tpu_custom_call.1} parent=11 // pred_check_branch
          %242 = sbr.rel (%p240) target = $region28
        $region27: #{tpu_custom_call.1} parent=11 // pred_region
          _
        $region28: #{tpu_custom_call.1} parent=11 // pred_fallthru
          _
        // Predicated region
        $region29: #{tpu_custom_call.1} parent=11 // pred_check
          %p243 = pneg %p148
        $region30: #{tpu_custom_call.1} parent=11 // pred_check_branch
          %245 = sbr.rel (%p243) target = $region32
        $region31: #{tpu_custom_call.1} parent=11 // pred_region
          _
        $region32: #{tpu_custom_call.1} parent=11 // pred_fallthru
          _
        // Predicated region
        $region33: #{tpu_custom_call.1} parent=11 // pred_check
          %p246 = pneg %p169
        $region34: #{tpu_custom_call.1} parent=11 // pred_check_branch
          %248 = sbr.rel (%p246) target = $region36
        $region35: #{tpu_custom_call.1} parent=11 // pred_region
          _
        $region36: #{tpu_custom_call.1} parent=11 // pred_fallthru
          _
        // Predicated region
        $region37: #{tpu_custom_call.1} parent=11 // pred_check
          %p249 = pneg %p190
        $region38: #{tpu_custom_call.1} parent=11 // pred_check_branch
          %251 = sbr.rel (%p249) target = $region40
        $region39: #{tpu_custom_call.1} parent=11 // pred_region
          _
        $region40: #{tpu_custom_call.1} parent=11 // pred_fallthru
          _
      $region12: #{tpu_custom_call.1} parent=5 // pred_fallthru
        _
      %p252 = scmp.lt.s32.totalorder %s17, 2
      // Predicated region
      $region41: #{tpu_custom_call.1} parent=5 // pred_check
        %p253 = pneg %p252
      $region42: #{tpu_custom_call.1} parent=5 // pred_check_branch
        %255 = sbr.rel (%p253) target = $region44
      $region43: #{tpu_custom_call.1} parent=5 // pred_region
        // Predicated region
        $region45: #{tpu_custom_call.1} parent=43 // pred_check
          %p256 = pneg %p37
        $region46: #{tpu_custom_call.1} parent=43 // pred_check_branch
          %258 = sbr.rel (%p256) target = $region48
        $region47: #{tpu_custom_call.1} parent=43 // pred_region
          %p259 = scmp.lt.s32.totalorder %s17, 1
          %s260 = scalar_select %p259, %s17, 1
          %s261 = smul.addr %s260, 32
          %s262 = smul.addr %s261, 4
          %s263 = scalar_lea.vmem %s0, %s262
        $region48: #{tpu_custom_call.1} parent=43 // pred_fallthru
          _
      $region44: #{tpu_custom_call.1} parent=5 // pred_fallthru
        _
      %p264 = scmp.le.s32.totalorder 1, %s17
      %p265 = scmp.lt.s32.totalorder %s17, 3
      %p266 = pnand %p264, %p265
      %p267 = pneg %p266
      // Predicated region
      $region49: #{tpu_custom_call.1} parent=5 // pred_check
        _
      $region50: #{tpu_custom_call.1} parent=5 // pred_check_branch
        %269 = sbr.rel (%p266) target = $region52
      $region51: #{tpu_custom_call.1} parent=5 // pred_region
        %s270 = ssub.s32 %s17, 1
        %p271 = scmp.lt.s32.totalorder %s22, 1
        %s272 = scalar_select %p271, %s22, 1
        %s273 = smul.addr %s272, 32
        %s274 = smul.addr %s273, 4
        %s275 = scalar_lea.vmem %s0, %s274
        %p276 = pneg %p43
        %p277 = pneg %p40
        %p278 = pneg %p64
        %p279 = pneg %p61
        %p280 = pneg %p85
        %p281 = pneg %p82
        %p282 = pneg %p106
        %p283 = pneg %p103
        %p284 = pneg %p127
        %p285 = pneg %p124
        %p286 = pneg %p148
        %p287 = pneg %p145
        %p288 = pneg %p169
        %p289 = pneg %p166
        %p290 = pneg %p190
        %p291 = pneg %p187
        %p292 = pneg %p216
        %p293 = pneg %p213
        %s294 = sand.u32 %s203, 1
        %s295 = scalar_lea.sflag [#allocation3], %s294
        %s296 = sand.u32 %s203, 1
        %s297 = smul.addr %s296, 256
        %s298 = scalar_lea.vmem [#allocation2], %s297
        %p299 = scmp.lt.s32.totalorder %s22, 1
        %s300 = scalar_select %p299, %s22, 1
        %s301 = smul.addr %s300, 32
        %s302 = smul.addr %s301, 4
        %s303 = scalar_lea.vmem %s0, %s302
        %v305 = vld [vmem:[%s303] sm:$0xf]
        %v306 = vld [vmem:[%s303 + $0x4] sm:$0xf]
        %v307 = vld [vmem:[%s303 + $0x8] sm:$0xf]
        %v308 = vld [vmem:[%s303 + $0xc] sm:$0xf]
        %v309 = vld [vmem:[%s303 + $0x10] sm:$0xf]
        %v310 = vld [vmem:[%s303 + $0x14] sm:$0xf]
        %v311 = vld [vmem:[%s303 + $0x18] sm:$0xf]
        %v312 = vld [vmem:[%s303 + $0x1c] sm:$0xf]
        %v313 = vld [vmem:[%s303 + $0x20] sm:$0xf]
        %v314 = vld [vmem:[%s303 + $0x24] sm:$0xf]
        %v315 = vld [vmem:[%s303 + $0x28] sm:$0xf]
        %v316 = vld [vmem:[%s303 + $0x2c] sm:$0xf]
        %v317 = vld [vmem:[%s303 + $0x30] sm:$0xf]
        %v318 = vld [vmem:[%s303 + $0x34] sm:$0xf]
        %v319 = vld [vmem:[%s303 + $0x38] sm:$0xf]
        %v320 = vld [vmem:[%s303 + $0x3c] sm:$0xf]
        %v321 = vld [vmem:[%s303 + $0x40] sm:$0xf]
        %v322 = vld [vmem:[%s303 + $0x44] sm:$0xf]
        %v323 = vld [vmem:[%s303 + $0x48] sm:$0xf]
        %v324 = vld [vmem:[%s303 + $0x4c] sm:$0xf]
        %v325 = vld [vmem:[%s303 + $0x50] sm:$0xf]
        %v326 = vld [vmem:[%s303 + $0x54] sm:$0xf]
        %v327 = vld [vmem:[%s303 + $0x58] sm:$0xf]
        %v328 = vld [vmem:[%s303 + $0x5c] sm:$0xf]
        %v329 = vld [vmem:[%s303 + $0x60] sm:$0xf]
        %v330 = vld [vmem:[%s303 + $0x64] sm:$0xf]
        %v331 = vld [vmem:[%s303 + $0x68] sm:$0xf]
        %v332 = vld [vmem:[%s303 + $0x6c] sm:$0xf]
        %v333 = vld [vmem:[%s303 + $0x70] sm:$0xf]
        %v334 = vld [vmem:[%s303 + $0x74] sm:$0xf]
        %v335 = vld [vmem:[%s303 + $0x78] sm:$0xf]
        %v336 = vld [vmem:[%s303 + $0x7c] sm:$0xf]
        %v337 = vld [vmem:[%s5] sm:$0x3]
        %v338 = vld [vmem:[%s5 + $0x2] sm:$0x3]
        %v339 = vld [vmem:[%s6] sm:$0x3]
        %v340 = vld [vmem:[%s6 + $0x2] sm:$0x3]
        %v341 = vld [vmem:[%s7] sm:$0x3]
        %v342 = vld [vmem:[%s7 + $0x2] sm:$0x3]
        %v359 = vunpack.c.l.b16 %v307
        %v360 = vunpack.c.l.b16 %v305
        %v361 = vunpack.c.l.b16 %v309
        %v362 = vunpack.c.l.b16 %v311
        %v363 = vunpack.c.l.b16 %v313
        %v364 = vunpack.c.l.b16 %v315
        %v365 = vunpack.c.l.b16 %v317
        %v366 = vunpack.c.l.b16 %v319
        %v367 = vunpack.c.l.b16 %v321
        %v368 = vunpack.c.l.b16 %v323
        %v369 = vunpack.c.l.b16 %v325
        %v370 = vunpack.c.l.b16 %v327
        %v371 = vunpack.c.l.b16 %v329
        %v372 = vunpack.c.l.b16 %v331
        %v373 = vunpack.c.l.b16 %v333
        %v374 = vunpack.c.l.b16 %v335
        %v375 = vpack.c.b16 %v359, %v359
        %v376 = vpack.c.b16 %v360, %v360
        %v377 = vpack.c.b16 %v361, %v361
        %v378 = vpack.c.b16 %v362, %v362
        %v379 = vpack.c.b16 %v363, %v363
        %v380 = vpack.c.b16 %v364, %v364
        %v381 = vpack.c.b16 %v365, %v365
        %v382 = vpack.c.b16 %v366, %v366
        %v383 = vpack.c.b16 %v367, %v367
        %v384 = vpack.c.b16 %v368, %v368
        %v385 = vpack.c.b16 %v369, %v369
        %v386 = vpack.c.b16 %v370, %v370
        %v387 = vpack.c.b16 %v371, %v371
        %v388 = vpack.c.b16 %v372, %v372
        %v389 = vpack.c.b16 %v373, %v373
        %v390 = vpack.c.b16 %v374, %v374
        %v392 = vshrl.u32 %v375, 16
        %v395 = vshrl.u32 %v376, 16
        %v398 = vshrl.u32 %v377, 16
        %v401 = vshrl.u32 %v378, 16
        %v404 = vshrl.u32 %v379, 16
        %v407 = vshrl.u32 %v380, 16
        %v410 = vshrl.u32 %v381, 16
        %v413 = vshrl.u32 %v382, 16
        %v416 = vshrl.u32 %v383, 16
        %v419 = vshrl.u32 %v384, 16
        %v422 = vshrl.u32 %v385, 16
        %v425 = vshrl.u32 %v386, 16
        %v428 = vshrl.u32 %v387, 16
        %v431 = vshrl.u32 %v388, 16
        %v434 = vshrl.u32 %v389, 16
        %v437 = vshrl.u32 %v390, 16
        %v471 = vunpack.c.l.b16 %v308
        %v472 = vunpack.c.l.b16 %v306
        %v473 = vunpack.c.l.b16 %v310
        %v474 = vunpack.c.l.b16 %v312
        %v475 = vunpack.c.l.b16 %v314
        %v476 = vunpack.c.l.b16 %v316
        %v477 = vunpack.c.l.b16 %v318
        %v478 = vunpack.c.l.b16 %v320
        %v479 = vunpack.c.l.b16 %v322
        %v480 = vunpack.c.l.b16 %v324
        %v481 = vunpack.c.l.b16 %v326
        %v482 = vunpack.c.l.b16 %v328
        %v483 = vunpack.c.l.b16 %v330
        %v484 = vunpack.c.l.b16 %v332
        %v485 = vunpack.c.l.b16 %v334
        %v486 = vunpack.c.l.b16 %v336
        %v487 = vpack.c.b16 %v471, %v359
        %v488 = vpack.c.b16 %v472, %v360
        %v489 = vpack.c.b16 %v473, %v361
        %v490 = vpack.c.b16 %v474, %v362
        %v491 = vpack.c.b16 %v475, %v363
        %v492 = vpack.c.b16 %v476, %v364
        %v493 = vpack.c.b16 %v477, %v365
        %v494 = vpack.c.b16 %v478, %v366
        %v495 = vpack.c.b16 %v479, %v367
        %v496 = vpack.c.b16 %v480, %v368
        %v497 = vpack.c.b16 %v481, %v369
        %v498 = vpack.c.b16 %v482, %v370
        %v499 = vpack.c.b16 %v483, %v371
        %v500 = vpack.c.b16 %v484, %v372
        %v501 = vpack.c.b16 %v485, %v373
        %v502 = vpack.c.b16 %v486, %v374
        %v504 = vshrl.u32 %v487, 16
        %v506 = vrot.slane %v504, 7
        %v507 = vshll.u32 %v487, 16
        %v509 = vor.u32 %v506, %v507
        %v511 = vshrl.u32 %v488, 16
        %v513 = vrot.slane %v511, 7
        %v514 = vshll.u32 %v488, 16
        %v516 = vor.u32 %v513, %v514
        %v518 = vshrl.u32 %v489, 16
        %v520 = vrot.slane %v518, 7
        %v521 = vshll.u32 %v489, 16
        %v523 = vor.u32 %v520, %v521
        %v525 = vshrl.u32 %v490, 16
        %v527 = vrot.slane %v525, 7
        %v528 = vshll.u32 %v490, 16
        %v530 = vor.u32 %v527, %v528
        %v532 = vshrl.u32 %v491, 16
        %v534 = vrot.slane %v532, 7
        %v535 = vshll.u32 %v491, 16
        %v537 = vor.u32 %v534, %v535
        %v539 = vshrl.u32 %v492, 16
        %v541 = vrot.slane %v539, 7
        %v542 = vshll.u32 %v492, 16
        %v544 = vor.u32 %v541, %v542
        %v546 = vshrl.u32 %v493, 16
        %v548 = vrot.slane %v546, 7
        %v549 = vshll.u32 %v493, 16
        %v551 = vor.u32 %v548, %v549
        %v553 = vshrl.u32 %v494, 16
        %v555 = vrot.slane %v553, 7
        %v556 = vshll.u32 %v494, 16
        %v558 = vor.u32 %v555, %v556
        %v560 = vshrl.u32 %v495, 16
        %v562 = vrot.slane %v560, 7
        %v563 = vshll.u32 %v495, 16
        %v565 = vor.u32 %v562, %v563
        %v567 = vshrl.u32 %v496, 16
        %v569 = vrot.slane %v567, 7
        %v570 = vshll.u32 %v496, 16
        %v572 = vor.u32 %v569, %v570
        %v574 = vshrl.u32 %v497, 16
        %v576 = vrot.slane %v574, 7
        %v577 = vshll.u32 %v497, 16
        %v579 = vor.u32 %v576, %v577
        %v581 = vshrl.u32 %v498, 16
        %v583 = vrot.slane %v581, 7
        %v584 = vshll.u32 %v498, 16
        %v586 = vor.u32 %v583, %v584
        %v588 = vshrl.u32 %v499, 16
        %v590 = vrot.slane %v588, 7
        %v591 = vshll.u32 %v499, 16
        %v593 = vor.u32 %v590, %v591
        %v595 = vshrl.u32 %v500, 16
        %v597 = vrot.slane %v595, 7
        %v598 = vshll.u32 %v500, 16
        %v600 = vor.u32 %v597, %v598
        %v602 = vshrl.u32 %v501, 16
        %v604 = vrot.slane %v602, 7
        %v605 = vshll.u32 %v501, 16
        %v607 = vor.u32 %v604, %v605
        %v609 = vshrl.u32 %v502, 16
        %v611 = vrot.slane %v609, 7
        %v612 = vshll.u32 %v502, 16
        %v614 = vor.u32 %v611, %v612
        %v647 = vpack.c.b16 %v471, %v471
        %v648 = vpack.c.b16 %v472, %v472
        %v649 = vpack.c.b16 %v473, %v473
        %v650 = vpack.c.b16 %v474, %v474
        %v651 = vpack.c.b16 %v475, %v475
        %v652 = vpack.c.b16 %v476, %v476
        %v653 = vpack.c.b16 %v477, %v477
        %v654 = vpack.c.b16 %v478, %v478
        %v655 = vpack.c.b16 %v479, %v479
        %v656 = vpack.c.b16 %v480, %v480
        %v657 = vpack.c.b16 %v481, %v481
        %v658 = vpack.c.b16 %v482, %v482
        %v659 = vpack.c.b16 %v483, %v483
        %v660 = vpack.c.b16 %v484, %v484
        %v661 = vpack.c.b16 %v485, %v485
        %v662 = vpack.c.b16 %v486, %v486
        %v664 = vshll.u32 %v647, 16
        %v666 = vrot.slane %v664, 3
        %v668 = vshll.u32 %v648, 16
        %v670 = vrot.slane %v668, 3
        %v672 = vshll.u32 %v649, 16
        %v674 = vrot.slane %v672, 3
        %v676 = vshll.u32 %v650, 16
        %v678 = vrot.slane %v676, 3
        %v680 = vshll.u32 %v651, 16
        %v682 = vrot.slane %v680, 3
        %v684 = vshll.u32 %v652, 16
        %v686 = vrot.slane %v684, 3
        %v688 = vshll.u32 %v653, 16
        %v690 = vrot.slane %v688, 3
        %v692 = vshll.u32 %v654, 16
        %v694 = vrot.slane %v692, 3
        %v696 = vshll.u32 %v655, 16
        %v698 = vrot.slane %v696, 3
        %v700 = vshll.u32 %v656, 16
        %v702 = vrot.slane %v700, 3
        %v704 = vshll.u32 %v657, 16
        %v706 = vrot.slane %v704, 3
        %v708 = vshll.u32 %v658, 16
        %v710 = vrot.slane %v708, 3
        %v712 = vshll.u32 %v659, 16
        %v714 = vrot.slane %v712, 3
        %v716 = vshll.u32 %v660, 16
        %v718 = vrot.slane %v716, 3
        %v720 = vshll.u32 %v661, 16
        %v722 = vrot.slane %v720, 3
        %v724 = vshll.u32 %v662, 16
        %v726 = vrot.slane %v724, 3
        %vm743 = vcmask 1040384
        %vm744 = vsmask.f32 256
        %vm745 = vmand %vm743, %vm744
        %v746 = vsel %vm745, %v392, %v509
        %v747 = vsel %vm745, %v395, %v516
        %v748 = vsel %vm745, %v398, %v523
        %v749 = vsel %vm745, %v401, %v530
        %v750 = vsel %vm745, %v404, %v537
        %v751 = vsel %vm745, %v407, %v544
        %v752 = vsel %vm745, %v410, %v551
        %v753 = vsel %vm745, %v413, %v558
        %v754 = vsel %vm745, %v416, %v565
        %v755 = vsel %vm745, %v419, %v572
        %v756 = vsel %vm745, %v422, %v579
        %v757 = vsel %vm745, %v425, %v586
        %v758 = vsel %vm745, %v428, %v593
        %v759 = vsel %vm745, %v431, %v600
        %v760 = vsel %vm745, %v434, %v607
        %v761 = vsel %vm745, %v437, %v614
        %v762 = vsel %vm745, %v506, %v666
        %v763 = vsel %vm745, %v513, %v670
        %v764 = vsel %vm745, %v520, %v674
        %v765 = vsel %vm745, %v527, %v678
        %v766 = vsel %vm745, %v534, %v682
        %v767 = vsel %vm745, %v541, %v686
        %v768 = vsel %vm745, %v548, %v690
        %v769 = vsel %vm745, %v555, %v694
        %v770 = vsel %vm745, %v562, %v698
        %v771 = vsel %vm745, %v569, %v702
        %v772 = vsel %vm745, %v576, %v706
        %v773 = vsel %vm745, %v583, %v710
        %v774 = vsel %vm745, %v590, %v714
        %v775 = vsel %vm745, %v597, %v718
        %v776 = vsel %vm745, %v604, %v722
        %v777 = vsel %vm745, %v611, %v726
        %vm778 = vsmask.f32 7424
        %v780 = vshrl.u32 %v746, 16
        %v782 = vshll.u32 %v746, 16
        %v784 = vrot.slane %v782, 1
        %v785 = vor.u32 %v780, %v784
        %v787 = vshll.u32 %v762, 16
        %v789 = vrot.slane %v787, 1
        %v790 = vsel %vm778, %v785, %v789
        %v792 = vshrl.u32 %v747, 16
        %v794 = vshll.u32 %v747, 16
        %v796 = vrot.slane %v794, 1
        %v797 = vor.u32 %v792, %v796
        %v799 = vshll.u32 %v763, 16
        %v801 = vrot.slane %v799, 1
        %v802 = vsel %vm778, %v797, %v801
        %v804 = vshrl.u32 %v748, 16
        %v806 = vshll.u32 %v748, 16
        %v808 = vrot.slane %v806, 1
        %v809 = vor.u32 %v804, %v808
        %v811 = vshll.u32 %v764, 16
        %v813 = vrot.slane %v811, 1
        %v814 = vsel %vm778, %v809, %v813
        %v816 = vshrl.u32 %v749, 16
        %v818 = vshll.u32 %v749, 16
        %v820 = vrot.slane %v818, 1
        %v821 = vor.u32 %v816, %v820
        %v823 = vshll.u32 %v765, 16
        %v825 = vrot.slane %v823, 1
        %v826 = vsel %vm778, %v821, %v825
        %v828 = vshrl.u32 %v750, 16
        %v830 = vshll.u32 %v750, 16
        %v832 = vrot.slane %v830, 1
        %v833 = vor.u32 %v828, %v832
        %v835 = vshll.u32 %v766, 16
        %v837 = vrot.slane %v835, 1
        %v838 = vsel %vm778, %v833, %v837
        %v840 = vshrl.u32 %v751, 16
        %v842 = vshll.u32 %v751, 16
        %v844 = vrot.slane %v842, 1
        %v845 = vor.u32 %v840, %v844
        %v847 = vshll.u32 %v767, 16
        %v849 = vrot.slane %v847, 1
        %v850 = vsel %vm778, %v845, %v849
        %v852 = vshrl.u32 %v752, 16
        %v854 = vshll.u32 %v752, 16
        %v856 = vrot.slane %v854, 1
        %v857 = vor.u32 %v852, %v856
        %v859 = vshll.u32 %v768, 16
        %v861 = vrot.slane %v859, 1
        %v862 = vsel %vm778, %v857, %v861
        %v864 = vshrl.u32 %v753, 16
        %v866 = vshll.u32 %v753, 16
        %v868 = vrot.slane %v866, 1
        %v869 = vor.u32 %v864, %v868
        %v871 = vshll.u32 %v769, 16
        %v873 = vrot.slane %v871, 1
        %v874 = vsel %vm778, %v869, %v873
        %v876 = vshrl.u32 %v754, 16
        %v878 = vshll.u32 %v754, 16
        %v880 = vrot.slane %v878, 1
        %v881 = vor.u32 %v876, %v880
        %v883 = vshll.u32 %v770, 16
        %v885 = vrot.slane %v883, 1
        %v886 = vsel %vm778, %v881, %v885
        %v888 = vshrl.u32 %v755, 16
        %v890 = vshll.u32 %v755, 16
        %v892 = vrot.slane %v890, 1
        %v893 = vor.u32 %v888, %v892
        %v895 = vshll.u32 %v771, 16
        %v897 = vrot.slane %v895, 1
        %v898 = vsel %vm778, %v893, %v897
        %v900 = vshrl.u32 %v756, 16
        %v902 = vshll.u32 %v756, 16
        %v904 = vrot.slane %v902, 1
        %v905 = vor.u32 %v900, %v904
        %v907 = vshll.u32 %v772, 16
        %v909 = vrot.slane %v907, 1
        %v910 = vsel %vm778, %v905, %v909
        %v912 = vshrl.u32 %v757, 16
        %v914 = vshll.u32 %v757, 16
        %v916 = vrot.slane %v914, 1
        %v917 = vor.u32 %v912, %v916
        %v919 = vshll.u32 %v773, 16
        %v921 = vrot.slane %v919, 1
        %v922 = vsel %vm778, %v917, %v921
        %v924 = vshrl.u32 %v758, 16
        %v926 = vshll.u32 %v758, 16
        %v928 = vrot.slane %v926, 1
        %v929 = vor.u32 %v924, %v928
        %v931 = vshll.u32 %v774, 16
        %v933 = vrot.slane %v931, 1
        %v934 = vsel %vm778, %v929, %v933
        %v936 = vshrl.u32 %v759, 16
        %v938 = vshll.u32 %v759, 16
        %v940 = vrot.slane %v938, 1
        %v941 = vor.u32 %v936, %v940
        %v943 = vshll.u32 %v775, 16
        %v945 = vrot.slane %v943, 1
        %v946 = vsel %vm778, %v941, %v945
        %v948 = vshrl.u32 %v760, 16
        %v950 = vshll.u32 %v760, 16
        %v952 = vrot.slane %v950, 1
        %v953 = vor.u32 %v948, %v952
        %v955 = vshll.u32 %v776, 16
        %v957 = vrot.slane %v955, 1
        %v958 = vsel %vm778, %v953, %v957
        %959 = vrot.lane.b32.xlu0 %v790, 4
        %v960 = vpop.permute.xlu0 %959
        %961 = vrot.lane.b32.xlu0 %v802, 4
        %v962 = vpop.permute.xlu0 %961
        %963 = vrot.lane.b32.xlu0 %v814, 4
        %v964 = vpop.permute.xlu0 %963
        %965 = vrot.lane.b32.xlu0 %v826, 4
        %v966 = vpop.permute.xlu0 %965
        %967 = vrot.lane.b32.xlu0 %v838, 4
        %v968 = vpop.permute.xlu0 %967
        %969 = vrot.lane.b32.xlu0 %v850, 4
        %v970 = vpop.permute.xlu0 %969
        %971 = vrot.lane.b32.xlu0 %v862, 4
        %v972 = vpop.permute.xlu0 %971
        %973 = vrot.lane.b32.xlu0 %v874, 4
        %v974 = vpop.permute.xlu0 %973
        %975 = vrot.lane.b32.xlu0 %v886, 4
        %v976 = vpop.permute.xlu0 %975
        %977 = vrot.lane.b32.xlu0 %v898, 4
        %v978 = vpop.permute.xlu0 %977
        %979 = vrot.lane.b32.xlu0 %v910, 4
        %v980 = vpop.permute.xlu0 %979
        %981 = vrot.lane.b32.xlu0 %v922, 4
        %v982 = vpop.permute.xlu0 %981
        %983 = vrot.lane.b32.xlu0 %v934, 4
        %v984 = vpop.permute.xlu0 %983
        %985 = vrot.lane.b32.xlu0 %v946, 4
        %v986 = vpop.permute.xlu0 %985
        %987 = vrot.lane.b32.xlu0 %v958, 4
        %v988 = vpop.permute.xlu0 %987
        %vm1019 = vcmask 1046528
        %v1020 = vrot.slane %v746, 1
        %v1021 = vrot.slane %v762, 1
        %v1022 = vsel %vm1019, %v1020, %v1021
        %v1023 = vrot.slane %v747, 1
        %v1024 = vrot.slane %v763, 1
        %v1025 = vsel %vm1019, %v1023, %v1024
        %v1026 = vrot.slane %v748, 1
        %v1027 = vrot.slane %v764, 1
        %v1028 = vsel %vm1019, %v1026, %v1027
        %v1029 = vrot.slane %v749, 1
        %v1030 = vrot.slane %v765, 1
        %v1031 = vsel %vm1019, %v1029, %v1030
        %v1032 = vrot.slane %v750, 1
        %v1033 = vrot.slane %v766, 1
        %v1034 = vsel %vm1019, %v1032, %v1033
        %v1035 = vrot.slane %v751, 1
        %v1036 = vrot.slane %v767, 1
        %v1037 = vsel %vm1019, %v1035, %v1036
        %v1038 = vrot.slane %v752, 1
        %v1039 = vrot.slane %v768, 1
        %v1040 = vsel %vm1019, %v1038, %v1039
        %v1041 = vrot.slane %v753, 1
        %v1042 = vrot.slane %v769, 1
        %v1043 = vsel %vm1019, %v1041, %v1042
        %v1044 = vrot.slane %v754, 1
        %v1045 = vrot.slane %v770, 1
        %v1046 = vsel %vm1019, %v1044, %v1045
        %v1047 = vrot.slane %v755, 1
        %v1048 = vrot.slane %v771, 1
        %v1049 = vsel %vm1019, %v1047, %v1048
        %v1050 = vrot.slane %v756, 1
        %v1051 = vrot.slane %v772, 1
        %v1052 = vsel %vm1019, %v1050, %v1051
        %v1053 = vrot.slane %v757, 1
        %v1054 = vrot.slane %v773, 1
        %v1055 = vsel %vm1019, %v1053, %v1054
        %v1056 = vrot.slane %v758, 1
        %v1057 = vrot.slane %v774, 1
        %v1058 = vsel %vm1019, %v1056, %v1057
        %v1059 = vrot.slane %v759, 1
        %v1060 = vrot.slane %v775, 1
        %v1061 = vsel %vm1019, %v1059, %v1060
        %v1062 = vrot.slane %v760, 1
        %v1063 = vrot.slane %v776, 1
        %v1064 = vsel %vm1019, %v1062, %v1063
        %1065 = vrot.lane.b32.xlu0 %v1022, 8
        %v1066 = vpop.permute.xlu0 %1065
        %1067 = vrot.lane.b32.xlu0 %v1025, 8
        %v1068 = vpop.permute.xlu0 %1067
        %1069 = vrot.lane.b32.xlu0 %v1028, 8
        %v1070 = vpop.permute.xlu0 %1069
        %1071 = vrot.lane.b32.xlu0 %v1031, 8
        %v1072 = vpop.permute.xlu0 %1071
        %1073 = vrot.lane.b32.xlu0 %v1034, 8
        %v1074 = vpop.permute.xlu0 %1073
        %1075 = vrot.lane.b32.xlu0 %v1037, 8
        %v1076 = vpop.permute.xlu0 %1075
        %1077 = vrot.lane.b32.xlu0 %v1040, 8
        %v1078 = vpop.permute.xlu0 %1077
        %1079 = vrot.lane.b32.xlu0 %v1043, 8
        %v1080 = vpop.permute.xlu0 %1079
        %1081 = vrot.lane.b32.xlu0 %v1046, 8
        %v1082 = vpop.permute.xlu0 %1081
        %1083 = vrot.lane.b32.xlu0 %v1049, 8
        %v1084 = vpop.permute.xlu0 %1083
        %1085 = vrot.lane.b32.xlu0 %v1052, 8
        %v1086 = vpop.permute.xlu0 %1085
        %1087 = vrot.lane.b32.xlu0 %v1055, 8
        %v1088 = vpop.permute.xlu0 %1087
        %1089 = vrot.lane.b32.xlu0 %v1058, 8
        %v1090 = vpop.permute.xlu0 %1089
        %1091 = vrot.lane.b32.xlu0 %v1061, 8
        %v1092 = vpop.permute.xlu0 %1091
        %1093 = vrot.lane.b32.xlu0 %v1064, 8
        %v1094 = vpop.permute.xlu0 %1093
        %1096 = vrot.lane.b32.xlu0 %v747, 12
        %v1097 = vpop.permute.xlu0 %1096
        %1098 = vrot.lane.b32.xlu0 %v746, 12
        %v1099 = vpop.permute.xlu0 %1098
        %1100 = vrot.lane.b32.xlu0 %v748, 12
        %v1101 = vpop.permute.xlu0 %1100
        %1102 = vrot.lane.b32.xlu0 %v749, 12
        %v1103 = vpop.permute.xlu0 %1102
        %1104 = vrot.lane.b32.xlu0 %v750, 12
        %v1105 = vpop.permute.xlu0 %1104
        %1106 = vrot.lane.b32.xlu0 %v751, 12
        %v1107 = vpop.permute.xlu0 %1106
        %1108 = vrot.lane.b32.xlu0 %v752, 12
        %v1109 = vpop.permute.xlu0 %1108
        %1110 = vrot.lane.b32.xlu0 %v753, 12
        %v1111 = vpop.permute.xlu0 %1110
        %1112 = vrot.lane.b32.xlu0 %v754, 12
        %v1113 = vpop.permute.xlu0 %1112
        %1114 = vrot.lane.b32.xlu0 %v755, 12
        %v1115 = vpop.permute.xlu0 %1114
        %1116 = vrot.lane.b32.xlu0 %v756, 12
        %v1117 = vpop.permute.xlu0 %1116
        %1118 = vrot.lane.b32.xlu0 %v757, 12
        %v1119 = vpop.permute.xlu0 %1118
        %1120 = vrot.lane.b32.xlu0 %v758, 12
        %v1121 = vpop.permute.xlu0 %1120
        %1122 = vrot.lane.b32.xlu0 %v759, 12
        %v1123 = vpop.permute.xlu0 %1122
        %1124 = vrot.lane.b32.xlu0 %v760, 12
        %v1125 = vpop.permute.xlu0 %1124
        %1126 = vrot.lane.b32.xlu0 %v761, 12
        %v1127 = vpop.permute.xlu0 %1126
        %v1129 = vshrl.u32 %v761, 16
        %v1131 = vshll.u32 %v761, 16
        %v1133 = vrot.slane %v1131, 1
        %v1134 = vor.u32 %v1129, %v1133
        %v1136 = vshll.u32 %v777, 16
        %v1138 = vrot.slane %v1136, 1
        %v1139 = vsel %vm778, %v1134, %v1138
        %1140 = vrot.lane.b32.xlu0 %v802, 16
        %v1141 = vpop.permute.xlu0 %1140
        %1142 = vrot.lane.b32.xlu0 %v790, 16
        %v1143 = vpop.permute.xlu0 %1142
        %1144 = vrot.lane.b32.xlu0 %v814, 16
        %v1145 = vpop.permute.xlu0 %1144
        %1146 = vrot.lane.b32.xlu0 %v826, 16
        %v1147 = vpop.permute.xlu0 %1146
        %1148 = vrot.lane.b32.xlu0 %v838, 16
        %v1149 = vpop.permute.xlu0 %1148
        %1150 = vrot.lane.b32.xlu0 %v850, 16
        %v1151 = vpop.permute.xlu0 %1150
        %1152 = vrot.lane.b32.xlu0 %v862, 16
        %v1153 = vpop.permute.xlu0 %1152
        %1154 = vrot.lane.b32.xlu0 %v874, 16
        %v1155 = vpop.permute.xlu0 %1154
        %1156 = vrot.lane.b32.xlu0 %v886, 16
        %v1157 = vpop.permute.xlu0 %1156
        %1158 = vrot.lane.b32.xlu0 %v898, 16
        %v1159 = vpop.permute.xlu0 %1158
        %1160 = vrot.lane.b32.xlu0 %v910, 16
        %v1161 = vpop.permute.xlu0 %1160
        %1162 = vrot.lane.b32.xlu0 %v922, 16
        %v1163 = vpop.permute.xlu0 %1162
        %1164 = vrot.lane.b32.xlu0 %v934, 16
        %v1165 = vpop.permute.xlu0 %1164
        %1166 = vrot.lane.b32.xlu0 %v946, 16
        %v1167 = vpop.permute.xlu0 %1166
        %1168 = vrot.lane.b32.xlu0 %v958, 16
        %v1169 = vpop.permute.xlu0 %1168
        %1170 = vrot.lane.b32.xlu0 %v1139, 16
        %v1171 = vpop.permute.xlu0 %1170
        %v1173 = vrot.slane %v761, 1
        %v1174 = vrot.slane %v777, 1
        %v1175 = vsel %vm1019, %v1173, %v1174
        %1176 = vrot.lane.b32.xlu0 %v1025, 20
        %v1177 = vpop.permute.xlu0 %1176
        %1178 = vrot.lane.b32.xlu0 %v1022, 20
        %v1179 = vpop.permute.xlu0 %1178
        %1180 = vrot.lane.b32.xlu0 %v1028, 20
        %v1181 = vpop.permute.xlu0 %1180
        %1182 = vrot.lane.b32.xlu0 %v1031, 20
        %v1183 = vpop.permute.xlu0 %1182
        %1184 = vrot.lane.b32.xlu0 %v1034, 20
        %v1185 = vpop.permute.xlu0 %1184
        %1186 = vrot.lane.b32.xlu0 %v1037, 20
        %v1187 = vpop.permute.xlu0 %1186
        %1188 = vrot.lane.b32.xlu0 %v1040, 20
        %v1189 = vpop.permute.xlu0 %1188
        %1190 = vrot.lane.b32.xlu0 %v1043, 20
        %v1191 = vpop.permute.xlu0 %1190
        %1192 = vrot.lane.b32.xlu0 %v1046, 20
        %v1193 = vpop.permute.xlu0 %1192
        %1194 = vrot.lane.b32.xlu0 %v1049, 20
        %v1195 = vpop.permute.xlu0 %1194
        %1196 = vrot.lane.b32.xlu0 %v1052, 20
        %v1197 = vpop.permute.xlu0 %1196
        %1198 = vrot.lane.b32.xlu0 %v1055, 20
        %v1199 = vpop.permute.xlu0 %1198
        %1200 = vrot.lane.b32.xlu0 %v1058, 20
        %v1201 = vpop.permute.xlu0 %1200
        %1202 = vrot.lane.b32.xlu0 %v1061, 20
        %v1203 = vpop.permute.xlu0 %1202
        %1204 = vrot.lane.b32.xlu0 %v1064, 20
        %v1205 = vpop.permute.xlu0 %1204
        %1206 = vrot.lane.b32.xlu0 %v1175, 20
        %v1207 = vpop.permute.xlu0 %1206
        %1208 = vrot.lane.b32.xlu0 %v746, 24
        %v1209 = vpop.permute.xlu0 %1208
        %1210 = vrot.lane.b32.xlu0 %v748, 24
        %v1211 = vpop.permute.xlu0 %1210
        %1212 = vrot.lane.b32.xlu0 %v749, 24
        %v1213 = vpop.permute.xlu0 %1212
        %1214 = vrot.lane.b32.xlu0 %v750, 24
        %v1215 = vpop.permute.xlu0 %1214
        %1216 = vrot.lane.b32.xlu0 %v751, 24
        %v1217 = vpop.permute.xlu0 %1216
        %1218 = vrot.lane.b32.xlu0 %v752, 24
        %v1219 = vpop.permute.xlu0 %1218
        %1220 = vrot.lane.b32.xlu0 %v753, 24
        %v1221 = vpop.permute.xlu0 %1220
        %1222 = vrot.lane.b32.xlu0 %v754, 24
        %v1223 = vpop.permute.xlu0 %1222
        %1224 = vrot.lane.b32.xlu0 %v755, 24
        %v1225 = vpop.permute.xlu0 %1224
        %1226 = vrot.lane.b32.xlu0 %v756, 24
        %v1227 = vpop.permute.xlu0 %1226
        %1228 = vrot.lane.b32.xlu0 %v757, 24
        %v1229 = vpop.permute.xlu0 %1228
        %1230 = vrot.lane.b32.xlu0 %v758, 24
        %v1231 = vpop.permute.xlu0 %1230
        %1232 = vrot.lane.b32.xlu0 %v759, 24
        %v1233 = vpop.permute.xlu0 %1232
        %1234 = vrot.lane.b32.xlu0 %v760, 24
        %v1235 = vpop.permute.xlu0 %1234
        %1236 = vrot.lane.b32.xlu0 %v761, 24
        %v1237 = vpop.permute.xlu0 %1236
        %1238 = vrot.lane.b32.xlu0 %v790, 28
        %v1239 = vpop.permute.xlu0 %1238
        %1240 = vrot.lane.b32.xlu0 %v814, 28
        %v1241 = vpop.permute.xlu0 %1240
        %1242 = vrot.lane.b32.xlu0 %v826, 28
        %v1243 = vpop.permute.xlu0 %1242
        %1244 = vrot.lane.b32.xlu0 %v838, 28
        %v1245 = vpop.permute.xlu0 %1244
        %1246 = vrot.lane.b32.xlu0 %v850, 28
        %v1247 = vpop.permute.xlu0 %1246
        %1248 = vrot.lane.b32.xlu0 %v862, 28
        %v1249 = vpop.permute.xlu0 %1248
        %1250 = vrot.lane.b32.xlu0 %v874, 28
        %v1251 = vpop.permute.xlu0 %1250
        %1252 = vrot.lane.b32.xlu0 %v886, 28
        %v1253 = vpop.permute.xlu0 %1252
        %1254 = vrot.lane.b32.xlu0 %v898, 28
        %v1255 = vpop.permute.xlu0 %1254
        %1256 = vrot.lane.b32.xlu0 %v910, 28
        %v1257 = vpop.permute.xlu0 %1256
        %1258 = vrot.lane.b32.xlu0 %v922, 28
        %v1259 = vpop.permute.xlu0 %1258
        %1260 = vrot.lane.b32.xlu0 %v934, 28
        %v1261 = vpop.permute.xlu0 %1260
        %1262 = vrot.lane.b32.xlu0 %v946, 28
        %v1263 = vpop.permute.xlu0 %1262
        %1264 = vrot.lane.b32.xlu0 %v958, 28
        %v1265 = vpop.permute.xlu0 %1264
        %1266 = vrot.lane.b32.xlu0 %v1139, 28
        %v1267 = vpop.permute.xlu0 %1266
        %1268 = vrot.lane.b32.xlu0 %v1022, 32
        %v1269 = vpop.permute.xlu0 %1268
        %1270 = vrot.lane.b32.xlu0 %v1028, 32
        %v1271 = vpop.permute.xlu0 %1270
        %1272 = vrot.lane.b32.xlu0 %v1031, 32
        %v1273 = vpop.permute.xlu0 %1272
        %1274 = vrot.lane.b32.xlu0 %v1034, 32
        %v1275 = vpop.permute.xlu0 %1274
        %1276 = vrot.lane.b32.xlu0 %v1037, 32
        %v1277 = vpop.permute.xlu0 %1276
        %1278 = vrot.lane.b32.xlu0 %v1040, 32
        %v1279 = vpop.permute.xlu0 %1278
        %1280 = vrot.lane.b32.xlu0 %v1043, 32
        %v1281 = vpop.permute.xlu0 %1280
        %1282 = vrot.lane.b32.xlu0 %v1046, 32
        %v1283 = vpop.permute.xlu0 %1282
        %1284 = vrot.lane.b32.xlu0 %v1049, 32
        %v1285 = vpop.permute.xlu0 %1284
        %1286 = vrot.lane.b32.xlu0 %v1052, 32
        %v1287 = vpop.permute.xlu0 %1286
        %1288 = vrot.lane.b32.xlu0 %v1055, 32
        %v1289 = vpop.permute.xlu0 %1288
        %1290 = vrot.lane.b32.xlu0 %v1058, 32
        %v1291 = vpop.permute.xlu0 %1290
        %1292 = vrot.lane.b32.xlu0 %v1061, 32
        %v1293 = vpop.permute.xlu0 %1292
        %1294 = vrot.lane.b32.xlu0 %v1064, 32
        %v1295 = vpop.permute.xlu0 %1294
        %1296 = vrot.lane.b32.xlu0 %v1175, 32
        %v1297 = vpop.permute.xlu0 %1296
        %vm1298 = vcmask 31744
        %v1300 = vsel %vm1298, %v746, %v960
        %v1302 = vsel %vm1298, %v747, %v962
        %v1304 = vsel %vm1298, %v748, %v964
        %v1306 = vsel %vm1298, %v749, %v966
        %v1308 = vsel %vm1298, %v750, %v968
        %v1310 = vsel %vm1298, %v751, %v970
        %v1312 = vsel %vm1298, %v752, %v972
        %v1314 = vsel %vm1298, %v753, %v974
        %v1316 = vsel %vm1298, %v754, %v976
        %v1318 = vsel %vm1298, %v755, %v978
        %v1320 = vsel %vm1298, %v756, %v980
        %v1322 = vsel %vm1298, %v757, %v982
        %v1324 = vsel %vm1298, %v758, %v984
        %v1326 = vsel %vm1298, %v759, %v986
        %v1328 = vsel %vm1298, %v760, %v988
        %vm1329 = vcmask 64512
        %v1331 = vsel %vm1329, %v1300, %v1066
        %v1333 = vsel %vm1329, %v1302, %v1068
        %v1335 = vsel %vm1329, %v1304, %v1070
        %v1337 = vsel %vm1329, %v1306, %v1072
        %v1339 = vsel %vm1329, %v1308, %v1074
        %v1341 = vsel %vm1329, %v1310, %v1076
        %v1343 = vsel %vm1329, %v1312, %v1078
        %v1345 = vsel %vm1329, %v1314, %v1080
        %v1347 = vsel %vm1329, %v1316, %v1082
        %v1349 = vsel %vm1329, %v1318, %v1084
        %v1351 = vsel %vm1329, %v1320, %v1086
        %v1353 = vsel %vm1329, %v1322, %v1088
        %v1355 = vsel %vm1329, %v1324, %v1090
        %v1357 = vsel %vm1329, %v1326, %v1092
        %v1359 = vsel %vm1329, %v1328, %v1094
        %vm1360 = vcmask 97280
        %v1362 = vsel %vm1360, %v1331, %v1097
        %v1364 = vsel %vm1360, %v1333, %v1099
        %v1366 = vsel %vm1360, %v1331, %v1101
        %v1368 = vsel %vm1360, %v1335, %v1103
        %v1370 = vsel %vm1360, %v1337, %v1105
        %v1372 = vsel %vm1360, %v1339, %v1107
        %v1374 = vsel %vm1360, %v1341, %v1109
        %v1376 = vsel %vm1360, %v1343, %v1111
        %v1378 = vsel %vm1360, %v1345, %v1113
        %v1380 = vsel %vm1360, %v1347, %v1115
        %v1382 = vsel %vm1360, %v1349, %v1117
        %v1384 = vsel %vm1360, %v1351, %v1119
        %v1386 = vsel %vm1360, %v1353, %v1121
        %v1388 = vsel %vm1360, %v1355, %v1123
        %v1390 = vsel %vm1360, %v1357, %v1125
        %v1392 = vsel %vm1360, %v1359, %v1127
        %vm1393 = vcmask 130048
        %v1395 = vsel %vm1393, %v1362, %v1141
        %v1397 = vsel %vm1393, %v1364, %v1143
        %v1399 = vsel %vm1393, %v1366, %v1145
        %v1401 = vsel %vm1393, %v1368, %v1147
        %v1403 = vsel %vm1393, %v1370, %v1149
        %v1405 = vsel %vm1393, %v1372, %v1151
        %v1407 = vsel %vm1393, %v1374, %v1153
        %v1409 = vsel %vm1393, %v1376, %v1155
        %v1411 = vsel %vm1393, %v1378, %v1157
        %v1413 = vsel %vm1393, %v1380, %v1159
        %v1415 = vsel %vm1393, %v1382, %v1161
        %v1417 = vsel %vm1393, %v1384, %v1163
        %v1419 = vsel %vm1393, %v1386, %v1165
        %v1421 = vsel %vm1393, %v1388, %v1167
        %v1423 = vsel %vm1393, %v1390, %v1169
        %v1425 = vsel %vm1393, %v1392, %v1171
        %vm1426 = vcmask 162816
        %v1428 = vsel %vm1426, %v1395, %v1177
        %v1430 = vsel %vm1426, %v1397, %v1179
        %v1432 = vsel %vm1426, %v1399, %v1181
        %v1434 = vsel %vm1426, %v1401, %v1183
        %v1436 = vsel %vm1426, %v1403, %v1185
        %v1438 = vsel %vm1426, %v1405, %v1187
        %v1440 = vsel %vm1426, %v1407, %v1189
        %v1442 = vsel %vm1426, %v1409, %v1191
        %v1444 = vsel %vm1426, %v1411, %v1193
        %v1446 = vsel %vm1426, %v1413, %v1195
        %v1448 = vsel %vm1426, %v1415, %v1197
        %v1450 = vsel %vm1426, %v1417, %v1199
        %v1452 = vsel %vm1426, %v1419, %v1201
        %v1454 = vsel %vm1426, %v1421, %v1203
        %v1456 = vsel %vm1426, %v1423, %v1205
        %v1458 = vsel %vm1426, %v1425, %v1207
        %vm1459 = vcmask 195584
        %v1461 = vsel %vm1459, %v1428, %v1209
        %v1463 = vsel %vm1459, %v1430, %v1211
        %v1465 = vsel %vm1459, %v1432, %v1213
        %v1467 = vsel %vm1459, %v1434, %v1215
        %v1469 = vsel %vm1459, %v1436, %v1217
        %v1471 = vsel %vm1459, %v1438, %v1219
        %v1473 = vsel %vm1459, %v1440, %v1221
        %v1475 = vsel %vm1459, %v1442, %v1223
        %v1477 = vsel %vm1459, %v1444, %v1225
        %v1479 = vsel %vm1459, %v1446, %v1227
        %v1481 = vsel %vm1459, %v1448, %v1229
        %v1483 = vsel %vm1459, %v1450, %v1231
        %v1485 = vsel %vm1459, %v1452, %v1233
        %v1487 = vsel %vm1459, %v1454, %v1235
        %v1489 = vsel %vm1459, %v1456, %v1237
        %v1490 = vsel %vm1459, %v1458, %v1235
        %vm1491 = vcmask 228352
        %v1493 = vsel %vm1491, %v1461, %v1239
        %v1495 = vsel %vm1491, %v1463, %v1241
        %v1497 = vsel %vm1491, %v1465, %v1243
        %v1499 = vsel %vm1491, %v1467, %v1245
        %v1501 = vsel %vm1491, %v1469, %v1247
        %v1503 = vsel %vm1491, %v1471, %v1249
        %v1505 = vsel %vm1491, %v1473, %v1251
        %v1507 = vsel %vm1491, %v1475, %v1253
        %v1509 = vsel %vm1491, %v1477, %v1255
        %v1511 = vsel %vm1491, %v1479, %v1257
        %v1513 = vsel %vm1491, %v1481, %v1259
        %v1515 = vsel %vm1491, %v1483, %v1261
        %v1517 = vsel %vm1491, %v1485, %v1263
        %v1519 = vsel %vm1491, %v1487, %v1265
        %v1521 = vsel %vm1491, %v1489, %v1267
        %v1522 = vsel %vm1491, %v1490, %v1265
        %vm1523 = vcmask 261120
        %v1525 = vsel %vm1523, %v1493, %v1269
        %v1527 = vsel %vm1523, %v1495, %v1271
        %v1529 = vsel %vm1523, %v1497, %v1273
        %v1531 = vsel %vm1523, %v1499, %v1275
        %v1533 = vsel %vm1523, %v1501, %v1277
        %v1535 = vsel %vm1523, %v1503, %v1279
        %v1537 = vsel %vm1523, %v1505, %v1281
        %v1539 = vsel %vm1523, %v1507, %v1283
        %v1541 = vsel %vm1523, %v1509, %v1285
        %v1543 = vsel %vm1523, %v1511, %v1287
        %v1545 = vsel %vm1523, %v1513, %v1289
        %v1547 = vsel %vm1523, %v1515, %v1291
        %v1549 = vsel %vm1523, %v1517, %v1293
        %v1551 = vsel %vm1523, %v1519, %v1295
        %v1553 = vsel %vm1523, %v1521, %v1297
        %v1554 = vsel %vm1523, %v1522, %v1295
        %v1555 = vld [vmem:[%s1] sm:$0xf]
        %v1556 = vld [vmem:[%s1 + $0x4] sm:$0xf]
        %v1557 = vld [vmem:[%s1 + $0x8] sm:$0xf]
        %v1558 = vld [vmem:[%s1 + $0xc] sm:$0xf]
        %v1559 = vld [vmem:[%s1 + $0x10] sm:$0x3]
        %v1560 = vlaneseq
        %v1561 = vshrl.u32 %v1560, 7
        %v1562 = vsub.s32 0, %v1561
        %v1563 = vrot.slane %v337, %v1562
        %v1569 = vunpack.c.l.b16 %v1555
        %v1570 = vunpack.c.l.b16 %v1556
        %v1571 = vunpack.c.l.b16 %v1557
        %v1572 = vunpack.c.l.b16 %v1558
        %v1573 = vunpack.c.l.b16 %v1559
        %v1574 = vpack.c.b16 %v1570, %v1569
        %v1575 = vpack.c.b16 %v1572, %v1571
        %v1576 = vpack.c.b16 %v1573, %v1573
        %vm1579 = vcmask 293888
        %v1580 = vsel %vm1579, %v1525, 0
        %v1582 = vsel %vm1579, %v1527, 0
        %v1584 = vsel %vm1579, %v1529, 0
        %v1586 = vsel %vm1579, %v1531, 0
        %v1588 = vsel %vm1579, %v1533, 0
        %v1590 = vsel %vm1579, %v1535, 0
        %v1592 = vsel %vm1579, %v1537, 0
        %v1594 = vsel %vm1579, %v1539, 0
        %v1596 = vsel %vm1579, %v1541, 0
        %v1598 = vsel %vm1579, %v1543, 0
        %v1600 = vsel %vm1579, %v1545, 0
        %v1602 = vsel %vm1579, %v1547, 0
        %v1604 = vsel %vm1579, %v1549, 0
        %v1606 = vsel %vm1579, %v1551, 0
        %v1608 = vsel %vm1579, %v1553, 0
        %v1610 = vsel %vm1579, %v1554, 0
        %vm1612 = vcmask 1041408
        %v1614 = vsel %vm1612, %v1576, 0
        %1616 = vmatprep.subr.bf16.mxu0 0
        %1617 = vmatpush1.bf16.msra.mxu0 %v1574
        %1618 = vmatprep.subr.bf16.mxu0 0
        %1619 = vmatpush1.bf16.msra.mxu0 %v1575
        %1620 = vmatprep.subr.bf16.mxu0 0
        %1621 = vmatpush1.bf16.msra.mxu0 %v1614
        %1622 = vmatprep.subr.bf16.mxu0 0
        %1623 = vmatpush1.bf16.msra.mxu0 0
        %1624 = vmatprep.subr.bf16.mxu0 0
        %1625 = vmatpush1.bf16.msra.mxu0 0
        %1626 = vmatprep.subr.bf16.mxu0 0
        %1627 = vmatpush1.bf16.msra.mxu0 0
        %1628 = vmatprep.subr.bf16.mxu0 0
        %1629 = vmatpush1.bf16.msra.mxu0 0
        %1630 = vmatprep.subr.bf16.mxu0 0
        %1631 = vmatpush1.bf16.msra.mxu0 0
        %1632 = vmatprep.subr.bf16.mxu0 0
        %1633 = vmatpush1.bf16.msra.mxu0 0
        %1634 = vmatprep.subr.bf16.mxu0 0
        %1635 = vmatpush1.bf16.msra.mxu0 0
        %1636 = vmatprep.subr.bf16.mxu0 0
        %1637 = vmatpush1.bf16.msra.mxu0 0
        %1638 = vmatprep.subr.bf16.mxu0 0
        %1639 = vmatpush1.bf16.msra.mxu0 0
        %1640 = vmatprep.subr.bf16.mxu0 0
        %1641 = vmatpush1.bf16.msra.mxu0 0
        %1642 = vmatprep.subr.bf16.mxu0 0
        %1643 = vmatpush1.bf16.msra.mxu0 0
        %1644 = vmatprep.subr.bf16.mxu0 0
        %1645 = vmatpush1.bf16.msra.mxu0 0
        %1646 = vmatprep.subr.bf16.mxu0 0
        %1647 = vmatpush1.bf16.msra.mxu0 0
        %1648 = vmatprep.mubr.bf16.mxu0 0
        %1649 = vmatmul.mubr.bf16.gmra.mrb[0].mxu0 %v1580
        %v1650 = vpop.f32.mrb[0].mxu0
        %v1651 = vadd.f32 %v1563, %v1650
        %v1652 = vpop.f32.mrb[0].mxu0
        %v1653 = vpop.f32.mrb[0].mxu0
        %v1654 = vadd.f32 %v1563, %v1653
        %v1655 = vpop.f32.mrb[0].mxu0
        %1656 = vmatprep.mubr.bf16.mxu0 0
        %1657 = vmatmul.mubr.bf16.gmra.mrb[0].mxu0 %v1582
        %v1658 = vpop.f32.mrb[0].mxu0
        %v1659 = vadd.f32 %v1563, %v1658
        %v1660 = vpop.f32.mrb[0].mxu0
        %v1661 = vpop.f32.mrb[0].mxu0
        %v1662 = vadd.f32 %v1563, %v1661
        %v1663 = vpop.f32.mrb[0].mxu0
        %1664 = vmatprep.mubr.bf16.mxu0 0
        %1665 = vmatmul.mubr.bf16.gmra.mrb[0].mxu0 %v1584
        %v1666 = vpop.f32.mrb[0].mxu0
        %v1667 = vadd.f32 %v1563, %v1666
        %v1668 = vpop.f32.mrb[0].mxu0
        %v1669 = vpop.f32.mrb[0].mxu0
        %v1670 = vadd.f32 %v1563, %v1669
        %v1671 = vpop.f32.mrb[0].mxu0
        %1672 = vmatprep.mubr.bf16.mxu0 0
        %1673 = vmatmul.mubr.bf16.gmra.mrb[0].mxu0 %v1586
        %v1674 = vpop.f32.mrb[0].mxu0
        %v1675 = vadd.f32 %v1563, %v1674
        %v1676 = vpop.f32.mrb[0].mxu0
        %v1677 = vpop.f32.mrb[0].mxu0
        %v1678 = vadd.f32 %v1563, %v1677
        %v1679 = vpop.f32.mrb[0].mxu0
        %1680 = vmatprep.mubr.bf16.mxu0 0
        %1681 = vmatmul.mubr.bf16.gmra.mrb[0].mxu0 %v1588
        %v1682 = vpop.f32.mrb[0].mxu0
        %v1683 = vadd.f32 %v1563, %v1682
        %v1684 = vpop.f32.mrb[0].mxu0
        %v1685 = vpop.f32.mrb[0].mxu0
        %v1686 = vadd.f32 %v1563, %v1685
        %v1687 = vpop.f32.mrb[0].mxu0
        %1688 = vmatprep.mubr.bf16.mxu0 0
        %1689 = vmatmul.mubr.bf16.gmra.mrb[0].mxu0 %v1590
        %v1690 = vpop.f32.mrb[0].mxu0
        %v1691 = vadd.f32 %v1563, %v1690
        %v1692 = vpop.f32.mrb[0].mxu0
        %v1693 = vpop.f32.mrb[0].mxu0
        %v1694 = vadd.f32 %v1563, %v1693
        %v1695 = vpop.f32.mrb[0].mxu0
        %1696 = vmatprep.mubr.bf16.mxu0 0
        %1697 = vmatmul.mubr.bf16.gmra.mrb[0].mxu0 %v1592
        %v1698 = vpop.f32.mrb[0].mxu0
        %v1699 = vadd.f32 %v1563, %v1698
        %v1700 = vpop.f32.mrb[0].mxu0
        %v1701 = vpop.f32.mrb[0].mxu0
        %v1702 = vadd.f32 %v1563, %v1701
        %v1703 = vpop.f32.mrb[0].mxu0
        %1704 = vmatprep.mubr.bf16.mxu0 0
        %1705 = vmatmul.mubr.bf16.gmra.mrb[0].mxu0 %v1594
        %v1706 = vpop.f32.mrb[0].mxu0
        %v1707 = vadd.f32 %v1563, %v1706
        %v1708 = vpop.f32.mrb[0].mxu0
        %v1709 = vpop.f32.mrb[0].mxu0
        %v1710 = vadd.f32 %v1563, %v1709
        %v1711 = vpop.f32.mrb[0].mxu0
        %1712 = vmatprep.mubr.bf16.mxu0 0
        %1713 = vmatmul.mubr.bf16.gmra.mrb[0].mxu0 %v1596
        %v1714 = vpop.f32.mrb[0].mxu0
        %v1715 = vadd.f32 %v1563, %v1714
        %v1716 = vpop.f32.mrb[0].mxu0
        %v1717 = vpop.f32.mrb[0].mxu0
        %v1718 = vadd.f32 %v1563, %v1717
        %v1719 = vpop.f32.mrb[0].mxu0
        %1720 = vmatprep.mubr.bf16.mxu0 0
        %1721 = vmatmul.mubr.bf16.gmra.mrb[0].mxu0 %v1598
        %v1722 = vpop.f32.mrb[0].mxu0
        %v1723 = vadd.f32 %v1563, %v1722
        %v1724 = vpop.f32.mrb[0].mxu0
        %v1725 = vpop.f32.mrb[0].mxu0
        %v1726 = vadd.f32 %v1563, %v1725
        %v1727 = vpop.f32.mrb[0].mxu0
        %1728 = vmatprep.mubr.bf16.mxu0 0
        %1729 = vmatmul.mubr.bf16.gmra.mrb[0].mxu0 %v1600
        %v1730 = vpop.f32.mrb[0].mxu0
        %v1731 = vadd.f32 %v1563, %v1730
        %v1732 = vpop.f32.mrb[0].mxu0
        %v1733 = vpop.f32.mrb[0].mxu0
        %v1734 = vadd.f32 %v1563, %v1733
        %v1735 = vpop.f32.mrb[0].mxu0
        %1736 = vmatprep.mubr.bf16.mxu0 0
        %1737 = vmatmul.mubr.bf16.gmra.mrb[0].mxu0 %v1602
        %v1738 = vpop.f32.mrb[0].mxu0
        %v1739 = vadd.f32 %v1563, %v1738
        %v1740 = vpop.f32.mrb[0].mxu0
        %v1741 = vpop.f32.mrb[0].mxu0
        %v1742 = vadd.f32 %v1563, %v1741
        %v1743 = vpop.f32.mrb[0].mxu0
        %1744 = vmatprep.mubr.bf16.mxu0 0
        %1745 = vmatmul.mubr.bf16.gmra.mrb[0].mxu0 %v1604
        %v1746 = vpop.f32.mrb[0].mxu0
        %v1747 = vadd.f32 %v1563, %v1746
        %v1748 = vpop.f32.mrb[0].mxu0
        %v1749 = vpop.f32.mrb[0].mxu0
        %v1750 = vadd.f32 %v1563, %v1749
        %v1751 = vpop.f32.mrb[0].mxu0
        %1752 = vmatprep.mubr.bf16.mxu0 0
        %1753 = vmatmul.mubr.bf16.gmra.mrb[0].mxu0 %v1606
        %v1754 = vpop.f32.mrb[0].mxu0
        %v1755 = vadd.f32 %v1563, %v1754
        %v1756 = vpop.f32.mrb[0].mxu0
        %v1757 = vpop.f32.mrb[0].mxu0
        %v1758 = vadd.f32 %v1563, %v1757
        %v1759 = vpop.f32.mrb[0].mxu0
        %1760 = vmatprep.mubr.bf16.mxu0 0
        %1761 = vmatmul.mubr.bf16.gmra.mrb[0].mxu0 %v1608
        %v1762 = vpop.f32.mrb[0].mxu0
        %v1763 = vadd.f32 %v1563, %v1762
        %v1764 = vpop.f32.mrb[0].mxu0
        %v1765 = vpop.f32.mrb[0].mxu0
        %v1766 = vadd.f32 %v1563, %v1765
        %v1767 = vpop.f32.mrb[0].mxu0
        %1768 = vmatprep.mubr.bf16.mxu0 0
        %1769 = vmatmul.mubr.bf16.gmra.mrb[0].mxu0 %v1610
        %v1770 = vpop.f32.mrb[0].mxu0
        %v1771 = vadd.f32 %v1563, %v1770
        %v1772 = vpop.f32.mrb[0].mxu0
        %v1773 = vpop.f32.mrb[0].mxu0
        %v1774 = vadd.f32 %v1563, %v1773
        %v1775 = vpop.f32.mrb[0].mxu0
        %1776 = vdwg.mxu0
        %v1777 = vsel %vm1329, %v1651, 0.0
        %v1778 = vsel %vm1329, %v1654, 0.0
        %v1779 = vadd.f32 %v1777, %v1778
        %v1780 = vsel %vm1329, %v1659, 0.0
        %v1781 = vadd.f32 %v1779, %v1780
        %v1782 = vsel %vm1329, %v1662, 0.0
        %v1783 = vadd.f32 %v1781, %v1782
        %v1784 = vsel %vm1329, %v1667, 0.0
        %v1785 = vadd.f32 %v1783, %v1784
        %v1786 = vsel %vm1329, %v1670, 0.0
        %v1787 = vadd.f32 %v1785, %v1786
        %v1788 = vsel %vm1329, %v1675, 0.0
        %v1789 = vadd.f32 %v1787, %v1788
        %v1790 = vsel %vm1329, %v1678, 0.0
        %v1791 = vadd.f32 %v1789, %v1790
        %v1792 = vsel %vm1329, %v1683, 0.0
        %v1793 = vadd.f32 %v1791, %v1792
        %v1794 = vsel %vm1329, %v1686, 0.0
        %v1795 = vadd.f32 %v1793, %v1794
        %v1796 = vsel %vm1329, %v1691, 0.0
        %v1797 = vadd.f32 %v1795, %v1796
        %v1798 = vsel %vm1329, %v1694, 0.0
        %v1799 = vadd.f32 %v1797, %v1798
        %v1800 = vsel %vm1329, %v1699, 0.0
        %v1801 = vadd.f32 %v1799, %v1800
        %v1802 = vsel %vm1329, %v1702, 0.0
        %v1803 = vadd.f32 %v1801, %v1802
        %v1804 = vsel %vm1329, %v1707, 0.0
        %v1805 = vadd.f32 %v1803, %v1804
        %v1806 = vsel %vm1329, %v1710, 0.0
        %v1807 = vadd.f32 %v1805, %v1806
        %v1808 = vsel %vm1329, %v1715, 0.0
        %v1809 = vadd.f32 %v1807, %v1808
        %v1810 = vsel %vm1329, %v1718, 0.0
        %v1811 = vadd.f32 %v1809, %v1810
        %v1812 = vsel %vm1329, %v1723, 0.0
        %v1813 = vadd.f32 %v1811, %v1812
        %v1814 = vsel %vm1329, %v1726, 0.0
        %v1815 = vadd.f32 %v1813, %v1814
        %v1816 = vsel %vm1329, %v1731, 0.0
        %v1817 = vadd.f32 %v1815, %v1816
        %v1818 = vsel %vm1329, %v1734, 0.0
        %v1819 = vadd.f32 %v1817, %v1818
        %v1820 = vsel %vm1329, %v1739, 0.0
        %v1821 = vadd.f32 %v1819, %v1820
        %v1822 = vsel %vm1329, %v1742, 0.0
        %v1823 = vadd.f32 %v1821, %v1822
        %v1824 = vsel %vm1329, %v1747, 0.0
        %v1825 = vadd.f32 %v1823, %v1824
        %v1826 = vsel %vm1329, %v1750, 0.0
        %v1827 = vadd.f32 %v1825, %v1826
        %v1828 = vsel %vm1329, %v1755, 0.0
        %v1829 = vadd.f32 %v1827, %v1828
        %v1830 = vsel %vm1329, %v1758, 0.0
        %v1831 = vadd.f32 %v1829, %v1830
        %v1832 = vsel %vm1329, %v1763, 0.0
        %v1833 = vadd.f32 %v1831, %v1832
        %v1834 = vsel %vm1329, %v1766, 0.0
        %v1835 = vadd.f32 %v1833, %v1834
        %v1836 = vsel %vm1329, %v1771, 0.0
        %v1837 = vadd.f32 %v1835, %v1836
        %v1838 = vsel %vm1329, %v1774, 0.0
        %v1839 = vadd.f32 %v1837, %v1838
        %v1840 = vrot.slane %v1839, 4
        %v1841 = vadd.f32 %v1839, %v1840
        %v1842 = vrot.slane %v1841, 2
        %v1843 = vadd.f32 %v1841, %v1842
        %v1844 = vrot.slane %v1843, 1
        %v1845 = vadd.f32 %v1843, %v1844
        %v1846 = vrcp.pop 256.0
        %v1847 = vmul.f32 %v1845, %v1846
        %v1848 = vsub.f32 %v1651, %v1847
        %v1849 = vsub.f32 %v1654, %v1847
        %v1850 = vsub.f32 %v1659, %v1847
        %v1851 = vsub.f32 %v1662, %v1847
        %v1852 = vsub.f32 %v1667, %v1847
        %v1853 = vsub.f32 %v1670, %v1847
        %v1854 = vsub.f32 %v1675, %v1847
        %v1855 = vsub.f32 %v1678, %v1847
        %v1856 = vsub.f32 %v1683, %v1847
        %v1857 = vsub.f32 %v1686, %v1847
        %v1858 = vsub.f32 %v1691, %v1847
        %v1859 = vsub.f32 %v1694, %v1847
        %v1860 = vsub.f32 %v1699, %v1847
        %v1861 = vsub.f32 %v1702, %v1847
        %v1862 = vsub.f32 %v1707, %v1847
        %v1863 = vsub.f32 %v1710, %v1847
        %v1864 = vsub.f32 %v1715, %v1847
        %v1865 = vsub.f32 %v1718, %v1847
        %v1866 = vsub.f32 %v1723, %v1847
        %v1867 = vsub.f32 %v1726, %v1847
        %v1868 = vsub.f32 %v1731, %v1847
        %v1869 = vsub.f32 %v1734, %v1847
        %v1870 = vsub.f32 %v1739, %v1847
        %v1871 = vsub.f32 %v1742, %v1847
        %v1872 = vsub.f32 %v1747, %v1847
        %v1873 = vsub.f32 %v1750, %v1847
        %v1874 = vsub.f32 %v1755, %v1847
        %v1875 = vsub.f32 %v1758, %v1847
        %v1876 = vsub.f32 %v1763, %v1847
        %v1877 = vsub.f32 %v1766, %v1847
        %v1878 = vsub.f32 %v1771, %v1847
        %v1879 = vsub.f32 %v1774, %v1847
        %v1880 = vmul.f32 %v1848, %v1848
        %v1881 = vmul.f32 %v1849, %v1849
        %v1882 = vmul.f32 %v1850, %v1850
        %v1883 = vmul.f32 %v1851, %v1851
        %v1884 = vmul.f32 %v1852, %v1852
        %v1885 = vmul.f32 %v1853, %v1853
        %v1886 = vmul.f32 %v1854, %v1854
        %v1887 = vmul.f32 %v1855, %v1855
        %v1888 = vmul.f32 %v1856, %v1856
        %v1889 = vmul.f32 %v1857, %v1857
        %v1890 = vmul.f32 %v1858, %v1858
        %v1891 = vmul.f32 %v1859, %v1859
        %v1892 = vmul.f32 %v1860, %v1860
        %v1893 = vmul.f32 %v1861, %v1861
        %v1894 = vmul.f32 %v1862, %v1862
        %v1895 = vmul.f32 %v1863, %v1863
        %v1896 = vmul.f32 %v1864, %v1864
        %v1897 = vmul.f32 %v1865, %v1865
        %v1898 = vmul.f32 %v1866, %v1866
        %v1899 = vmul.f32 %v1867, %v1867
        %v1900 = vmul.f32 %v1868, %v1868
        %v1901 = vmul.f32 %v1869, %v1869
        %v1902 = vmul.f32 %v1870, %v1870
        %v1903 = vmul.f32 %v1871, %v1871
        %v1904 = vmul.f32 %v1872, %v1872
        %v1905 = vmul.f32 %v1873, %v1873
        %v1906 = vmul.f32 %v1874, %v1874
        %v1907 = vmul.f32 %v1875, %v1875
        %v1908 = vmul.f32 %v1876, %v1876
        %v1909 = vmul.f32 %v1877, %v1877
        %v1910 = vmul.f32 %v1878, %v1878
        %v1911 = vmul.f32 %v1879, %v1879
        %v1912 = vsel %vm1329, %v1880, 0.0
        %v1913 = vsel %vm1329, %v1881, 0.0
        %v1914 = vadd.f32 %v1912, %v1913
        %v1915 = vsel %vm1329, %v1882, 0.0
        %v1916 = vadd.f32 %v1914, %v1915
        %v1917 = vsel %vm1329, %v1883, 0.0
        %v1918 = vadd.f32 %v1916, %v1917
        %v1919 = vsel %vm1329, %v1884, 0.0
        %v1920 = vadd.f32 %v1918, %v1919
        %v1921 = vsel %vm1329, %v1885, 0.0
        %v1922 = vadd.f32 %v1920, %v1921
        %v1923 = vsel %vm1329, %v1886, 0.0
        %v1924 = vadd.f32 %v1922, %v1923
        %v1925 = vsel %vm1329, %v1887, 0.0
        %v1926 = vadd.f32 %v1924, %v1925
        %v1927 = vsel %vm1329, %v1888, 0.0
        %v1928 = vadd.f32 %v1926, %v1927
        %v1929 = vsel %vm1329, %v1889, 0.0
        %v1930 = vadd.f32 %v1928, %v1929
        %v1931 = vsel %vm1329, %v1890, 0.0
        %v1932 = vadd.f32 %v1930, %v1931
        %v1933 = vsel %vm1329, %v1891, 0.0
        %v1934 = vadd.f32 %v1932, %v1933
        %v1935 = vsel %vm1329, %v1892, 0.0
        %v1936 = vadd.f32 %v1934, %v1935
        %v1937 = vsel %vm1329, %v1893, 0.0
        %v1938 = vadd.f32 %v1936, %v1937
        %v1939 = vsel %vm1329, %v1894, 0.0
        %v1940 = vadd.f32 %v1938, %v1939
        %v1941 = vsel %vm1329, %v1895, 0.0
        %v1942 = vadd.f32 %v1940, %v1941
        %v1943 = vsel %vm1329, %v1896, 0.0
        %v1944 = vadd.f32 %v1942, %v1943
        %v1945 = vsel %vm1329, %v1897, 0.0
        %v1946 = vadd.f32 %v1944, %v1945
        %v1947 = vsel %vm1329, %v1898, 0.0
        %v1948 = vadd.f32 %v1946, %v1947
        %v1949 = vsel %vm1329, %v1899, 0.0
        %v1950 = vadd.f32 %v1948, %v1949
        %v1951 = vsel %vm1329, %v1900, 0.0
        %v1952 = vadd.f32 %v1950, %v1951
        %v1953 = vsel %vm1329, %v1901, 0.0
        %v1954 = vadd.f32 %v1952, %v1953
        %v1955 = vsel %vm1329, %v1902, 0.0
        %v1956 = vadd.f32 %v1954, %v1955
        %v1957 = vsel %vm1329, %v1903, 0.0
        %v1958 = vadd.f32 %v1956, %v1957
        %v1959 = vsel %vm1329, %v1904, 0.0
        %v1960 = vadd.f32 %v1958, %v1959
        %v1961 = vsel %vm1329, %v1905, 0.0
        %v1962 = vadd.f32 %v1960, %v1961
        %v1963 = vsel %vm1329, %v1906, 0.0
        %v1964 = vadd.f32 %v1962, %v1963
        %v1965 = vsel %vm1329, %v1907, 0.0
        %v1966 = vadd.f32 %v1964, %v1965
        %v1967 = vsel %vm1329, %v1908, 0.0
        %v1968 = vadd.f32 %v1966, %v1967
        %v1969 = vsel %vm1329, %v1909, 0.0
        %v1970 = vadd.f32 %v1968, %v1969
        %v1971 = vsel %vm1329, %v1910, 0.0
        %v1972 = vadd.f32 %v1970, %v1971
        %v1973 = vsel %vm1329, %v1911, 0.0
        %v1974 = vadd.f32 %v1972, %v1973
        %v1975 = vrot.slane %v1974, 4
        %v1976 = vadd.f32 %v1974, %v1975
        %v1977 = vrot.slane %v1976, 2
        %v1978 = vadd.f32 %v1976, %v1977
        %v1979 = vrot.slane %v1978, 1
        %v1980 = vadd.f32 %v1978, %v1979
        %v1981 = vmul.f32 %v1980, %v1846
        %v1982 = vadd.f32 %v1981, 1e-05
        %v1983 = vrsqrt.pop %v1982
        %v1984 = vmul.f32 %v1848, %v1983
        %v1985 = vmul.f32 %v1849, %v1983
        %v1986 = vmul.f32 %v1850, %v1983
        %v1987 = vmul.f32 %v1851, %v1983
        %v1988 = vmul.f32 %v1852, %v1983
        %v1989 = vmul.f32 %v1853, %v1983
        %v1990 = vmul.f32 %v1854, %v1983
        %v1991 = vmul.f32 %v1855, %v1983
        %v1992 = vmul.f32 %v1856, %v1983
        %v1993 = vmul.f32 %v1857, %v1983
        %v1994 = vmul.f32 %v1858, %v1983
        %v1995 = vmul.f32 %v1859, %v1983
        %v1996 = vmul.f32 %v1860, %v1983
        %v1997 = vmul.f32 %v1861, %v1983
        %v1998 = vmul.f32 %v1862, %v1983
        %v1999 = vmul.f32 %v1863, %v1983
        %v2000 = vmul.f32 %v1864, %v1983
        %v2001 = vmul.f32 %v1865, %v1983
        %v2002 = vmul.f32 %v1866, %v1983
        %v2003 = vmul.f32 %v1867, %v1983
        %v2004 = vmul.f32 %v1868, %v1983
        %v2005 = vmul.f32 %v1869, %v1983
        %v2006 = vmul.f32 %v1870, %v1983
        %v2007 = vmul.f32 %v1871, %v1983
        %v2008 = vmul.f32 %v1872, %v1983
        %v2009 = vmul.f32 %v1873, %v1983
        %v2010 = vmul.f32 %v1874, %v1983
        %v2011 = vmul.f32 %v1875, %v1983
        %v2012 = vmul.f32 %v1876, %v1983
        %v2013 = vmul.f32 %v1877, %v1983
        %v2014 = vmul.f32 %v1878, %v1983
        %v2015 = vmul.f32 %v1879, %v1983
        %v2016 = vlaneseq
        %v2017 = vshrl.u32 %v2016, 7
        %v2018 = vsub.s32 0, %v2017
        %v2019 = vrot.slane %v339, %v2018
        %v2020 = vmul.f32 %v1984, %v2019
        %v2021 = vmul.f32 %v1985, %v2019
        %v2022 = vmul.f32 %v1986, %v2019
        %v2023 = vmul.f32 %v1987, %v2019
        %v2024 = vmul.f32 %v1988, %v2019
        %v2025 = vmul.f32 %v1989, %v2019
        %v2026 = vmul.f32 %v1990, %v2019
        %v2027 = vmul.f32 %v1991, %v2019
        %v2028 = vmul.f32 %v1992, %v2019
        %v2029 = vmul.f32 %v1993, %v2019
        %v2030 = vmul.f32 %v1994, %v2019
        %v2031 = vmul.f32 %v1995, %v2019
        %v2032 = vmul.f32 %v1996, %v2019
        %v2033 = vmul.f32 %v1997, %v2019
        %v2034 = vmul.f32 %v1998, %v2019
        %v2035 = vmul.f32 %v1999, %v2019
        %v2036 = vmul.f32 %v2000, %v2019
        %v2037 = vmul.f32 %v2001, %v2019
        %v2038 = vmul.f32 %v2002, %v2019
        %v2039 = vmul.f32 %v2003, %v2019
        %v2040 = vmul.f32 %v2004, %v2019
        %v2041 = vmul.f32 %v2005, %v2019
        %v2042 = vmul.f32 %v2006, %v2019
        %v2043 = vmul.f32 %v2007, %v2019
        %v2044 = vmul.f32 %v2008, %v2019
        %v2045 = vmul.f32 %v2009, %v2019
        %v2046 = vmul.f32 %v2010, %v2019
        %v2047 = vmul.f32 %v2011, %v2019
        %v2048 = vmul.f32 %v2012, %v2019
        %v2049 = vmul.f32 %v2013, %v2019
        %v2050 = vmul.f32 %v2014, %v2019
        %v2051 = vmul.f32 %v2015, %v2019
        %v2052 = vlaneseq
        %v2053 = vshrl.u32 %v2052, 7
        %v2054 = vsub.s32 0, %v2053
        %v2055 = vrot.slane %v341, %v2054
        %v2056 = vadd.f32 %v2020, %v2055
        %v2057 = vadd.f32 %v2021, %v2055
        %v2058 = vadd.f32 %v2022, %v2055
        %v2059 = vadd.f32 %v2023, %v2055
        %v2060 = vadd.f32 %v2024, %v2055
        %v2061 = vadd.f32 %v2025, %v2055
        %v2062 = vadd.f32 %v2026, %v2055
        %v2063 = vadd.f32 %v2027, %v2055
        %v2064 = vadd.f32 %v2028, %v2055
        %v2065 = vadd.f32 %v2029, %v2055
        %v2066 = vadd.f32 %v2030, %v2055
        %v2067 = vadd.f32 %v2031, %v2055
        %v2068 = vadd.f32 %v2032, %v2055
        %v2069 = vadd.f32 %v2033, %v2055
        %v2070 = vadd.f32 %v2034, %v2055
        %v2071 = vadd.f32 %v2035, %v2055
        %v2072 = vadd.f32 %v2036, %v2055
        %v2073 = vadd.f32 %v2037, %v2055
        %v2074 = vadd.f32 %v2038, %v2055
        %v2075 = vadd.f32 %v2039, %v2055
        %v2076 = vadd.f32 %v2040, %v2055
        %v2077 = vadd.f32 %v2041, %v2055
        %v2078 = vadd.f32 %v2042, %v2055
        %v2079 = vadd.f32 %v2043, %v2055
        %v2080 = vadd.f32 %v2044, %v2055
        %v2081 = vadd.f32 %v2045, %v2055
        %v2082 = vadd.f32 %v2046, %v2055
        %v2083 = vadd.f32 %v2047, %v2055
        %v2084 = vadd.f32 %v2048, %v2055
        %v2085 = vadd.f32 %v2049, %v2055
        %v2086 = vadd.f32 %v2050, %v2055
        %v2087 = vadd.f32 %v2051, %v2055
        %vm2088 = vcmp.ge.f32.partialorder %v2056, 0.0
        %vm2089 = vcmp.ge.f32.partialorder %v2057, 0.0
        %vm2090 = vcmp.ge.f32.partialorder %v2058, 0.0
        %vm2091 = vcmp.ge.f32.partialorder %v2059, 0.0
        %vm2092 = vcmp.ge.f32.partialorder %v2060, 0.0
        %vm2093 = vcmp.ge.f32.partialorder %v2061, 0.0
        %vm2094 = vcmp.ge.f32.partialorder %v2062, 0.0
        %vm2095 = vcmp.ge.f32.partialorder %v2063, 0.0
        %vm2096 = vcmp.ge.f32.partialorder %v2064, 0.0
        %vm2097 = vcmp.ge.f32.partialorder %v2065, 0.0
        %vm2098 = vcmp.ge.f32.partialorder %v2066, 0.0
        %vm2099 = vcmp.ge.f32.partialorder %v2067, 0.0
        %vm2100 = vcmp.ge.f32.partialorder %v2068, 0.0
        %vm2101 = vcmp.ge.f32.partialorder %v2069, 0.0
        %vm2102 = vcmp.ge.f32.partialorder %v2070, 0.0
        %vm2103 = vcmp.ge.f32.partialorder %v2071, 0.0
        %vm2104 = vcmp.ge.f32.partialorder %v2072, 0.0
        %vm2105 = vcmp.ge.f32.partialorder %v2073, 0.0
        %vm2106 = vcmp.ge.f32.partialorder %v2074, 0.0
        %vm2107 = vcmp.ge.f32.partialorder %v2075, 0.0
        %vm2108 = vcmp.ge.f32.partialorder %v2076, 0.0
        %vm2109 = vcmp.ge.f32.partialorder %v2077, 0.0
        %vm2110 = vcmp.ge.f32.partialorder %v2078, 0.0
        %vm2111 = vcmp.ge.f32.partialorder %v2079, 0.0
        %vm2112 = vcmp.ge.f32.partialorder %v2080, 0.0
        %vm2113 = vcmp.ge.f32.partialorder %v2081, 0.0
        %vm2114 = vcmp.ge.f32.partialorder %v2082, 0.0
        %vm2115 = vcmp.ge.f32.partialorder %v2083, 0.0
        %vm2116 = vcmp.ge.f32.partialorder %v2084, 0.0
        %vm2117 = vcmp.ge.f32.partialorder %v2085, 0.0
        %vm2118 = vcmp.ge.f32.partialorder %v2086, 0.0
        %vm2119 = vcmp.ge.f32.partialorder %v2087, 0.0
        %v2120 = vmul.f32 %v2056, 0.2
        %v2121 = vmul.f32 %v2057, 0.2
        %v2122 = vmul.f32 %v2058, 0.2
        %v2123 = vmul.f32 %v2059, 0.2
        %v2124 = vmul.f32 %v2060, 0.2
        %v2125 = vmul.f32 %v2061, 0.2
        %v2126 = vmul.f32 %v2062, 0.2
        %v2127 = vmul.f32 %v2063, 0.2
        %v2128 = vmul.f32 %v2064, 0.2
        %v2129 = vmul.f32 %v2065, 0.2
        %v2130 = vmul.f32 %v2066, 0.2
        %v2131 = vmul.f32 %v2067, 0.2
        %v2132 = vmul.f32 %v2068, 0.2
        %v2133 = vmul.f32 %v2069, 0.2
        %v2134 = vmul.f32 %v2070, 0.2
        %v2135 = vmul.f32 %v2071, 0.2
        %v2136 = vmul.f32 %v2072, 0.2
        %v2137 = vmul.f32 %v2073, 0.2
        %v2138 = vmul.f32 %v2074, 0.2
        %v2139 = vmul.f32 %v2075, 0.2
        %v2140 = vmul.f32 %v2076, 0.2
        %v2141 = vmul.f32 %v2077, 0.2
        %v2142 = vmul.f32 %v2078, 0.2
        %v2143 = vmul.f32 %v2079, 0.2
        %v2144 = vmul.f32 %v2080, 0.2
        %v2145 = vmul.f32 %v2081, 0.2
        %v2146 = vmul.f32 %v2082, 0.2
        %v2147 = vmul.f32 %v2083, 0.2
        %v2148 = vmul.f32 %v2084, 0.2
        %v2149 = vmul.f32 %v2085, 0.2
        %v2150 = vmul.f32 %v2086, 0.2
        %v2151 = vmul.f32 %v2087, 0.2
        %v2152 = vsel %vm2088, %v2056, %v2120
        %v2153 = vsel %vm2089, %v2057, %v2121
        %v2154 = vsel %vm2090, %v2058, %v2122
        %v2155 = vsel %vm2091, %v2059, %v2123
        %v2156 = vsel %vm2092, %v2060, %v2124
        %v2157 = vsel %vm2093, %v2061, %v2125
        %v2158 = vsel %vm2094, %v2062, %v2126
        %v2159 = vsel %vm2095, %v2063, %v2127
        %v2160 = vsel %vm2096, %v2064, %v2128
        %v2161 = vsel %vm2097, %v2065, %v2129
        %v2162 = vsel %vm2098, %v2066, %v2130
        %v2163 = vsel %vm2099, %v2067, %v2131
        %v2164 = vsel %vm2100, %v2068, %v2132
        %v2165 = vsel %vm2101, %v2069, %v2133
        %v2166 = vsel %vm2102, %v2070, %v2134
        %v2167 = vsel %vm2103, %v2071, %v2135
        %v2168 = vsel %vm2104, %v2072, %v2136
        %v2169 = vsel %vm2105, %v2073, %v2137
        %v2170 = vsel %vm2106, %v2074, %v2138
        %v2171 = vsel %vm2107, %v2075, %v2139
        %v2172 = vsel %vm2108, %v2076, %v2140
        %v2173 = vsel %vm2109, %v2077, %v2141
        %v2174 = vsel %vm2110, %v2078, %v2142
        %v2175 = vsel %vm2111, %v2079, %v2143
        %v2176 = vsel %vm2112, %v2080, %v2144
        %v2177 = vsel %vm2113, %v2081, %v2145
        %v2178 = vsel %vm2114, %v2082, %v2146
        %v2179 = vsel %vm2115, %v2083, %v2147
        %v2180 = vsel %vm2116, %v2084, %v2148
        %v2181 = vsel %vm2117, %v2085, %v2149
        %v2182 = vsel %vm2118, %v2086, %v2150
        %v2183 = vsel %vm2119, %v2087, %v2151
        %v2184 = vpack.c.bf16 %v2153, %v2152
        %v2185 = vpack.c.bf16 %v2155, %v2154
        %v2186 = vpack.c.bf16 %v2157, %v2156
        %v2187 = vpack.c.bf16 %v2159, %v2158
        %v2188 = vpack.c.bf16 %v2161, %v2160
        %v2189 = vpack.c.bf16 %v2163, %v2162
        %v2190 = vpack.c.bf16 %v2165, %v2164
        %v2191 = vpack.c.bf16 %v2167, %v2166
        %v2192 = vpack.c.bf16 %v2169, %v2168
        %v2193 = vpack.c.bf16 %v2171, %v2170
        %v2194 = vpack.c.bf16 %v2173, %v2172
        %v2195 = vpack.c.bf16 %v2175, %v2174
        %v2196 = vpack.c.bf16 %v2177, %v2176
        %v2197 = vpack.c.bf16 %v2179, %v2178
        %v2198 = vpack.c.bf16 %v2181, %v2180
        %v2199 = vpack.c.bf16 %v2183, %v2182
        %v2201 = vshrl.u32 %v2185, 16
        %v2204 = vshrl.u32 %v2184, 16
        %v2207 = vshrl.u32 %v2186, 16
        %v2210 = vshrl.u32 %v2187, 16
        %v2213 = vshrl.u32 %v2188, 16
        %v2216 = vshrl.u32 %v2189, 16
        %v2219 = vshrl.u32 %v2190, 16
        %v2222 = vshrl.u32 %v2191, 16
        %v2225 = vshrl.u32 %v2192, 16
        %v2228 = vshrl.u32 %v2193, 16
        %v2231 = vshrl.u32 %v2194, 16
        %v2234 = vshrl.u32 %v2195, 16
        %v2237 = vshrl.u32 %v2196, 16
        %v2240 = vshrl.u32 %v2197, 16
        %v2243 = vshrl.u32 %v2198, 16
        %v2246 = vshrl.u32 %v2199, 16
        %v2264 = vrot.slane %v2201, 7
        %v2265 = vshll.u32 %v2185, 16
        %v2267 = vor.u32 %v2264, %v2265
        %v2268 = vrot.slane %v2204, 7
        %v2269 = vshll.u32 %v2184, 16
        %v2271 = vor.u32 %v2268, %v2269
        %v2272 = vrot.slane %v2207, 7
        %v2273 = vshll.u32 %v2186, 16
        %v2275 = vor.u32 %v2272, %v2273
        %v2276 = vrot.slane %v2210, 7
        %v2277 = vshll.u32 %v2187, 16
        %v2279 = vor.u32 %v2276, %v2277
        %v2280 = vrot.slane %v2213, 7
        %v2281 = vshll.u32 %v2188, 16
        %v2283 = vor.u32 %v2280, %v2281
        %v2284 = vrot.slane %v2216, 7
        %v2285 = vshll.u32 %v2189, 16
        %v2287 = vor.u32 %v2284, %v2285
        %v2288 = vrot.slane %v2219, 7
        %v2289 = vshll.u32 %v2190, 16
        %v2291 = vor.u32 %v2288, %v2289
        %v2292 = vrot.slane %v2222, 7
        %v2293 = vshll.u32 %v2191, 16
        %v2295 = vor.u32 %v2292, %v2293
        %v2296 = vrot.slane %v2225, 7
        %v2297 = vshll.u32 %v2192, 16
        %v2299 = vor.u32 %v2296, %v2297
        %v2300 = vrot.slane %v2228, 7
        %v2301 = vshll.u32 %v2193, 16
        %v2303 = vor.u32 %v2300, %v2301
        %v2304 = vrot.slane %v2231, 7
        %v2305 = vshll.u32 %v2194, 16
        %v2307 = vor.u32 %v2304, %v2305
        %v2308 = vrot.slane %v2234, 7
        %v2309 = vshll.u32 %v2195, 16
        %v2311 = vor.u32 %v2308, %v2309
        %v2312 = vrot.slane %v2237, 7
        %v2313 = vshll.u32 %v2196, 16
        %v2315 = vor.u32 %v2312, %v2313
        %v2316 = vrot.slane %v2240, 7
        %v2317 = vshll.u32 %v2197, 16
        %v2319 = vor.u32 %v2316, %v2317
        %v2320 = vrot.slane %v2243, 7
        %v2321 = vshll.u32 %v2198, 16
        %v2323 = vor.u32 %v2320, %v2321
        %v2324 = vrot.slane %v2246, 7
        %v2325 = vshll.u32 %v2199, 16
        %v2327 = vor.u32 %v2324, %v2325
        %v2360 = vrot.slane %v2265, 7
        %v2361 = vrot.slane %v2269, 7
        %v2362 = vrot.slane %v2273, 7
        %v2363 = vrot.slane %v2277, 7
        %v2364 = vrot.slane %v2281, 7
        %v2365 = vrot.slane %v2285, 7
        %v2366 = vrot.slane %v2289, 7
        %v2367 = vrot.slane %v2293, 7
        %v2368 = vrot.slane %v2297, 7
        %v2369 = vrot.slane %v2301, 7
        %v2370 = vrot.slane %v2305, 7
        %v2371 = vrot.slane %v2309, 7
        %v2372 = vrot.slane %v2313, 7
        %v2373 = vrot.slane %v2317, 7
        %v2374 = vrot.slane %v2321, 7
        %v2375 = vrot.slane %v2325, 7
        %v2392 = vsel %vm745, %v2201, %v2267
        %v2393 = vsel %vm745, %v2204, %v2271
        %v2394 = vsel %vm745, %v2207, %v2275
        %v2395 = vsel %vm745, %v2210, %v2279
        %v2396 = vsel %vm745, %v2213, %v2283
        %v2397 = vsel %vm745, %v2216, %v2287
        %v2398 = vsel %vm745, %v2219, %v2291
        %v2399 = vsel %vm745, %v2222, %v2295
        %v2400 = vsel %vm745, %v2225, %v2299
        %v2401 = vsel %vm745, %v2228, %v2303
        %v2402 = vsel %vm745, %v2231, %v2307
        %v2403 = vsel %vm745, %v2234, %v2311
        %v2404 = vsel %vm745, %v2237, %v2315
        %v2405 = vsel %vm745, %v2240, %v2319
        %v2406 = vsel %vm745, %v2243, %v2323
        %v2407 = vsel %vm745, %v2246, %v2327
        %v2408 = vsel %vm745, %v2264, %v2360
        %v2409 = vsel %vm745, %v2268, %v2361
        %v2410 = vsel %vm745, %v2272, %v2362
        %v2411 = vsel %vm745, %v2276, %v2363
        %v2412 = vsel %vm745, %v2280, %v2364
        %v2413 = vsel %vm745, %v2284, %v2365
        %v2414 = vsel %vm745, %v2288, %v2366
        %v2415 = vsel %vm745, %v2292, %v2367
        %v2416 = vsel %vm745, %v2296, %v2368
        %v2417 = vsel %vm745, %v2300, %v2369
        %v2418 = vsel %vm745, %v2304, %v2370
        %v2419 = vsel %vm745, %v2308, %v2371
        %v2420 = vsel %vm745, %v2312, %v2372
        %v2421 = vsel %vm745, %v2316, %v2373
        %v2422 = vsel %vm745, %v2320, %v2374
        %v2423 = vsel %vm745, %v2324, %v2375
        %v2425 = vshrl.u32 %v2392, 16
        %v2427 = vshll.u32 %v2392, 16
        %v2429 = vrot.slane %v2427, 1
        %v2430 = vor.u32 %v2425, %v2429
        %v2432 = vshll.u32 %v2408, 16
        %v2434 = vrot.slane %v2432, 1
        %v2435 = vsel %vm778, %v2430, %v2434
        %v2437 = vshrl.u32 %v2393, 16
        %v2439 = vshll.u32 %v2393, 16
        %v2441 = vrot.slane %v2439, 1
        %v2442 = vor.u32 %v2437, %v2441
        %v2444 = vshll.u32 %v2409, 16
        %v2446 = vrot.slane %v2444, 1
        %v2447 = vsel %vm778, %v2442, %v2446
        %v2449 = vshrl.u32 %v2394, 16
        %v2451 = vshll.u32 %v2394, 16
        %v2453 = vrot.slane %v2451, 1
        %v2454 = vor.u32 %v2449, %v2453
        %v2456 = vshll.u32 %v2410, 16
        %v2458 = vrot.slane %v2456, 1
        %v2459 = vsel %vm778, %v2454, %v2458
        %v2461 = vshrl.u32 %v2395, 16
        %v2463 = vshll.u32 %v2395, 16
        %v2465 = vrot.slane %v2463, 1
        %v2466 = vor.u32 %v2461, %v2465
        %v2468 = vshll.u32 %v2411, 16
        %v2470 = vrot.slane %v2468, 1
        %v2471 = vsel %vm778, %v2466, %v2470
        %v2473 = vshrl.u32 %v2396, 16
        %v2475 = vshll.u32 %v2396, 16
        %v2477 = vrot.slane %v2475, 1
        %v2478 = vor.u32 %v2473, %v2477
        %v2480 = vshll.u32 %v2412, 16
        %v2482 = vrot.slane %v2480, 1
        %v2483 = vsel %vm778, %v2478, %v2482
        %v2485 = vshrl.u32 %v2397, 16
        %v2487 = vshll.u32 %v2397, 16
        %v2489 = vrot.slane %v2487, 1
        %v2490 = vor.u32 %v2485, %v2489
        %v2492 = vshll.u32 %v2413, 16
        %v2494 = vrot.slane %v2492, 1
        %v2495 = vsel %vm778, %v2490, %v2494
        %v2497 = vshrl.u32 %v2398, 16
        %v2499 = vshll.u32 %v2398, 16
        %v2501 = vrot.slane %v2499, 1
        %v2502 = vor.u32 %v2497, %v2501
        %v2504 = vshll.u32 %v2414, 16
        %v2506 = vrot.slane %v2504, 1
        %v2507 = vsel %vm778, %v2502, %v2506
        %v2509 = vshrl.u32 %v2399, 16
        %v2511 = vshll.u32 %v2399, 16
        %v2513 = vrot.slane %v2511, 1
        %v2514 = vor.u32 %v2509, %v2513
        %v2516 = vshll.u32 %v2415, 16
        %v2518 = vrot.slane %v2516, 1
        %v2519 = vsel %vm778, %v2514, %v2518
        %v2521 = vshrl.u32 %v2400, 16
        %v2523 = vshll.u32 %v2400, 16
        %v2525 = vrot.slane %v2523, 1
        %v2526 = vor.u32 %v2521, %v2525
        %v2528 = vshll.u32 %v2416, 16
        %v2530 = vrot.slane %v2528, 1
        %v2531 = vsel %vm778, %v2526, %v2530
        %v2533 = vshrl.u32 %v2401, 16
        %v2535 = vshll.u32 %v2401, 16
        %v2537 = vrot.slane %v2535, 1
        %v2538 = vor.u32 %v2533, %v2537
        %v2540 = vshll.u32 %v2417, 16
        %v2542 = vrot.slane %v2540, 1
        %v2543 = vsel %vm778, %v2538, %v2542
        %v2545 = vshrl.u32 %v2402, 16
        %v2547 = vshll.u32 %v2402, 16
        %v2549 = vrot.slane %v2547, 1
        %v2550 = vor.u32 %v2545, %v2549
        %v2552 = vshll.u32 %v2418, 16
        %v2554 = vrot.slane %v2552, 1
        %v2555 = vsel %vm778, %v2550, %v2554
        %v2557 = vshrl.u32 %v2403, 16
        %v2559 = vshll.u32 %v2403, 16
        %v2561 = vrot.slane %v2559, 1
        %v2562 = vor.u32 %v2557, %v2561
        %v2564 = vshll.u32 %v2419, 16
        %v2566 = vrot.slane %v2564, 1
        %v2567 = vsel %vm778, %v2562, %v2566
        %v2569 = vshrl.u32 %v2404, 16
        %v2571 = vshll.u32 %v2404, 16
        %v2573 = vrot.slane %v2571, 1
        %v2574 = vor.u32 %v2569, %v2573
        %v2576 = vshll.u32 %v2420, 16
        %v2578 = vrot.slane %v2576, 1
        %v2579 = vsel %vm778, %v2574, %v2578
        %v2581 = vshrl.u32 %v2405, 16
        %v2583 = vshll.u32 %v2405, 16
        %v2585 = vrot.slane %v2583, 1
        %v2586 = vor.u32 %v2581, %v2585
        %v2588 = vshll.u32 %v2421, 16
        %v2590 = vrot.slane %v2588, 1
        %v2591 = vsel %vm778, %v2586, %v2590
        %v2593 = vshrl.u32 %v2406, 16
        %v2595 = vshll.u32 %v2406, 16
        %v2597 = vrot.slane %v2595, 1
        %v2598 = vor.u32 %v2593, %v2597
        %v2600 = vshll.u32 %v2422, 16
        %v2602 = vrot.slane %v2600, 1
        %v2603 = vsel %vm778, %v2598, %v2602
        %2604 = vrot.lane.b32.xlu0 %v2435, 8
        %v2605 = vpop.permute.xlu0 %2604
        %2606 = vrot.lane.b32.xlu0 %v2447, 8
        %v2607 = vpop.permute.xlu0 %2606
        %2608 = vrot.lane.b32.xlu0 %v2459, 8
        %v2609 = vpop.permute.xlu0 %2608
        %2610 = vrot.lane.b32.xlu0 %v2471, 8
        %v2611 = vpop.permute.xlu0 %2610
        %2612 = vrot.lane.b32.xlu0 %v2483, 8
        %v2613 = vpop.permute.xlu0 %2612
        %2614 = vrot.lane.b32.xlu0 %v2495, 8
        %v2615 = vpop.permute.xlu0 %2614
        %2616 = vrot.lane.b32.xlu0 %v2507, 8
        %v2617 = vpop.permute.xlu0 %2616
        %2618 = vrot.lane.b32.xlu0 %v2519, 8
        %v2619 = vpop.permute.xlu0 %2618
        %2620 = vrot.lane.b32.xlu0 %v2531, 8
        %v2621 = vpop.permute.xlu0 %2620
        %2622 = vrot.lane.b32.xlu0 %v2543, 8
        %v2623 = vpop.permute.xlu0 %2622
        %2624 = vrot.lane.b32.xlu0 %v2555, 8
        %v2625 = vpop.permute.xlu0 %2624
        %2626 = vrot.lane.b32.xlu0 %v2567, 8
        %v2627 = vpop.permute.xlu0 %2626
        %2628 = vrot.lane.b32.xlu0 %v2579, 8
        %v2629 = vpop.permute.xlu0 %2628
        %2630 = vrot.lane.b32.xlu0 %v2591, 8
        %v2631 = vpop.permute.xlu0 %2630
        %2632 = vrot.lane.b32.xlu0 %v2603, 8
        %v2633 = vpop.permute.xlu0 %2632
        %v2664 = vrot.slane %v2392, 1
        %v2665 = vrot.slane %v2408, 1
        %v2666 = vsel %vm1019, %v2664, %v2665
        %v2667 = vrot.slane %v2393, 1
        %v2668 = vrot.slane %v2409, 1
        %v2669 = vsel %vm1019, %v2667, %v2668
        %v2670 = vrot.slane %v2394, 1
        %v2671 = vrot.slane %v2410, 1
        %v2672 = vsel %vm1019, %v2670, %v2671
        %v2673 = vrot.slane %v2395, 1
        %v2674 = vrot.slane %v2411, 1
        %v2675 = vsel %vm1019, %v2673, %v2674
        %v2676 = vrot.slane %v2396, 1
        %v2677 = vrot.slane %v2412, 1
        %v2678 = vsel %vm1019, %v2676, %v2677
        %v2679 = vrot.slane %v2397, 1
        %v2680 = vrot.slane %v2413, 1
        %v2681 = vsel %vm1019, %v2679, %v2680
        %v2682 = vrot.slane %v2398, 1
        %v2683 = vrot.slane %v2414, 1
        %v2684 = vsel %vm1019, %v2682, %v2683
        %v2685 = vrot.slane %v2399, 1
        %v2686 = vrot.slane %v2415, 1
        %v2687 = vsel %vm1019, %v2685, %v2686
        %v2688 = vrot.slane %v2400, 1
        %v2689 = vrot.slane %v2416, 1
        %v2690 = vsel %vm1019, %v2688, %v2689
        %v2691 = vrot.slane %v2401, 1
        %v2692 = vrot.slane %v2417, 1
        %v2693 = vsel %vm1019, %v2691, %v2692
        %v2694 = vrot.slane %v2402, 1
        %v2695 = vrot.slane %v2418, 1
        %v2696 = vsel %vm1019, %v2694, %v2695
        %v2697 = vrot.slane %v2403, 1
        %v2698 = vrot.slane %v2419, 1
        %v2699 = vsel %vm1019, %v2697, %v2698
        %v2700 = vrot.slane %v2404, 1
        %v2701 = vrot.slane %v2420, 1
        %v2702 = vsel %vm1019, %v2700, %v2701
        %v2703 = vrot.slane %v2405, 1
        %v2704 = vrot.slane %v2421, 1
        %v2705 = vsel %vm1019, %v2703, %v2704
        %v2706 = vrot.slane %v2406, 1
        %v2707 = vrot.slane %v2422, 1
        %v2708 = vsel %vm1019, %v2706, %v2707
        %2709 = vrot.lane.b32.xlu0 %v2666, 16
        %v2710 = vpop.permute.xlu0 %2709
        %2711 = vrot.lane.b32.xlu0 %v2669, 16
        %v2712 = vpop.permute.xlu0 %2711
        %2713 = vrot.lane.b32.xlu0 %v2672, 16
        %v2714 = vpop.permute.xlu0 %2713
        %2715 = vrot.lane.b32.xlu0 %v2675, 16
        %v2716 = vpop.permute.xlu0 %2715
        %2717 = vrot.lane.b32.xlu0 %v2678, 16
        %v2718 = vpop.permute.xlu0 %2717
        %2719 = vrot.lane.b32.xlu0 %v2681, 16
        %v2720 = vpop.permute.xlu0 %2719
        %2721 = vrot.lane.b32.xlu0 %v2684, 16
        %v2722 = vpop.permute.xlu0 %2721
        %2723 = vrot.lane.b32.xlu0 %v2687, 16
        %v2724 = vpop.permute.xlu0 %2723
        %2725 = vrot.lane.b32.xlu0 %v2690, 16
        %v2726 = vpop.permute.xlu0 %2725
        %2727 = vrot.lane.b32.xlu0 %v2693, 16
        %v2728 = vpop.permute.xlu0 %2727
        %2729 = vrot.lane.b32.xlu0 %v2696, 16
        %v2730 = vpop.permute.xlu0 %2729
        %2731 = vrot.lane.b32.xlu0 %v2699, 16
        %v2732 = vpop.permute.xlu0 %2731
        %2733 = vrot.lane.b32.xlu0 %v2702, 16
        %v2734 = vpop.permute.xlu0 %2733
        %2735 = vrot.lane.b32.xlu0 %v2705, 16
        %v2736 = vpop.permute.xlu0 %2735
        %2737 = vrot.lane.b32.xlu0 %v2708, 16
        %v2738 = vpop.permute.xlu0 %2737
        %2740 = vrot.lane.b32.xlu0 %v2393, 24
        %v2741 = vpop.permute.xlu0 %2740
        %2742 = vrot.lane.b32.xlu0 %v2392, 24
        %v2743 = vpop.permute.xlu0 %2742
        %2744 = vrot.lane.b32.xlu0 %v2394, 24
        %v2745 = vpop.permute.xlu0 %2744
        %2746 = vrot.lane.b32.xlu0 %v2395, 24
        %v2747 = vpop.permute.xlu0 %2746
        %2748 = vrot.lane.b32.xlu0 %v2396, 24
        %v2749 = vpop.permute.xlu0 %2748
        %2750 = vrot.lane.b32.xlu0 %v2397, 24
        %v2751 = vpop.permute.xlu0 %2750
        %2752 = vrot.lane.b32.xlu0 %v2398, 24
        %v2753 = vpop.permute.xlu0 %2752
        %2754 = vrot.lane.b32.xlu0 %v2399, 24
        %v2755 = vpop.permute.xlu0 %2754
        %2756 = vrot.lane.b32.xlu0 %v2400, 24
        %v2757 = vpop.permute.xlu0 %2756
        %2758 = vrot.lane.b32.xlu0 %v2401, 24
        %v2759 = vpop.permute.xlu0 %2758
        %2760 = vrot.lane.b32.xlu0 %v2402, 24
        %v2761 = vpop.permute.xlu0 %2760
        %2762 = vrot.lane.b32.xlu0 %v2403, 24
        %v2763 = vpop.permute.xlu0 %2762
        %2764 = vrot.lane.b32.xlu0 %v2404, 24
        %v2765 = vpop.permute.xlu0 %2764
        %2766 = vrot.lane.b32.xlu0 %v2405, 24
        %v2767 = vpop.permute.xlu0 %2766
        %2768 = vrot.lane.b32.xlu0 %v2406, 24
        %v2769 = vpop.permute.xlu0 %2768
        %2770 = vrot.lane.b32.xlu0 %v2407, 24
        %v2771 = vpop.permute.xlu0 %2770
        %v2773 = vshrl.u32 %v2407, 16
        %v2775 = vshll.u32 %v2407, 16
        %v2777 = vrot.slane %v2775, 1
        %v2778 = vor.u32 %v2773, %v2777
        %v2780 = vshll.u32 %v2423, 16
        %v2782 = vrot.slane %v2780, 1
        %v2783 = vsel %vm778, %v2778, %v2782
        %2784 = vrot.lane.b32.xlu0 %v2447, 32
        %v2785 = vpop.permute.xlu0 %2784
        %2786 = vrot.lane.b32.xlu0 %v2435, 32
        %v2787 = vpop.permute.xlu0 %2786
        %2788 = vrot.lane.b32.xlu0 %v2459, 32
        %v2789 = vpop.permute.xlu0 %2788
        %2790 = vrot.lane.b32.xlu0 %v2471, 32
        %v2791 = vpop.permute.xlu0 %2790
        %2792 = vrot.lane.b32.xlu0 %v2483, 32
        %v2793 = vpop.permute.xlu0 %2792
        %2794 = vrot.lane.b32.xlu0 %v2495, 32
        %v2795 = vpop.permute.xlu0 %2794
        %2796 = vrot.lane.b32.xlu0 %v2507, 32
        %v2797 = vpop.permute.xlu0 %2796
        %2798 = vrot.lane.b32.xlu0 %v2519, 32
        %v2799 = vpop.permute.xlu0 %2798
        %2800 = vrot.lane.b32.xlu0 %v2531, 32
        %v2801 = vpop.permute.xlu0 %2800
        %2802 = vrot.lane.b32.xlu0 %v2543, 32
        %v2803 = vpop.permute.xlu0 %2802
        %2804 = vrot.lane.b32.xlu0 %v2555, 32
        %v2805 = vpop.permute.xlu0 %2804
        %2806 = vrot.lane.b32.xlu0 %v2567, 32
        %v2807 = vpop.permute.xlu0 %2806
        %2808 = vrot.lane.b32.xlu0 %v2579, 32
        %v2809 = vpop.permute.xlu0 %2808
        %2810 = vrot.lane.b32.xlu0 %v2591, 32
        %v2811 = vpop.permute.xlu0 %2810
        %2812 = vrot.lane.b32.xlu0 %v2603, 32
        %v2813 = vpop.permute.xlu0 %2812
        %2814 = vrot.lane.b32.xlu0 %v2783, 32
        %v2815 = vpop.permute.xlu0 %2814
        %v2817 = vrot.slane %v2407, 1
        %v2818 = vrot.slane %v2423, 1
        %v2819 = vsel %vm1019, %v2817, %v2818
        %2820 = vrot.lane.b32.xlu0 %v2669, 40
        %v2821 = vpop.permute.xlu0 %2820
        %2822 = vrot.lane.b32.xlu0 %v2666, 40
        %v2823 = vpop.permute.xlu0 %2822
        %2824 = vrot.lane.b32.xlu0 %v2672, 40
        %v2825 = vpop.permute.xlu0 %2824
        %2826 = vrot.lane.b32.xlu0 %v2675, 40
        %v2827 = vpop.permute.xlu0 %2826
        %2828 = vrot.lane.b32.xlu0 %v2678, 40
        %v2829 = vpop.permute.xlu0 %2828
        %2830 = vrot.lane.b32.xlu0 %v2681, 40
        %v2831 = vpop.permute.xlu0 %2830
        %2832 = vrot.lane.b32.xlu0 %v2684, 40
        %v2833 = vpop.permute.xlu0 %2832
        %2834 = vrot.lane.b32.xlu0 %v2687, 40
        %v2835 = vpop.permute.xlu0 %2834
        %2836 = vrot.lane.b32.xlu0 %v2690, 40
        %v2837 = vpop.permute.xlu0 %2836
        %2838 = vrot.lane.b32.xlu0 %v2693, 40
        %v2839 = vpop.permute.xlu0 %2838
        %2840 = vrot.lane.b32.xlu0 %v2696, 40
        %v2841 = vpop.permute.xlu0 %2840
        %2842 = vrot.lane.b32.xlu0 %v2699, 40
        %v2843 = vpop.permute.xlu0 %2842
        %2844 = vrot.lane.b32.xlu0 %v2702, 40
        %v2845 = vpop.permute.xlu0 %2844
        %2846 = vrot.lane.b32.xlu0 %v2705, 40
        %v2847 = vpop.permute.xlu0 %2846
        %2848 = vrot.lane.b32.xlu0 %v2708, 40
        %v2849 = vpop.permute.xlu0 %2848
        %2850 = vrot.lane.b32.xlu0 %v2819, 40
        %v2851 = vpop.permute.xlu0 %2850
        %2852 = vrot.lane.b32.xlu0 %v2392, 48
        %v2853 = vpop.permute.xlu0 %2852
        %2854 = vrot.lane.b32.xlu0 %v2394, 48
        %v2855 = vpop.permute.xlu0 %2854
        %2856 = vrot.lane.b32.xlu0 %v2395, 48
        %v2857 = vpop.permute.xlu0 %2856
        %2858 = vrot.lane.b32.xlu0 %v2396, 48
        %v2859 = vpop.permute.xlu0 %2858
        %2860 = vrot.lane.b32.xlu0 %v2397, 48
        %v2861 = vpop.permute.xlu0 %2860
        %2862 = vrot.lane.b32.xlu0 %v2398, 48
        %v2863 = vpop.permute.xlu0 %2862
        %2864 = vrot.lane.b32.xlu0 %v2399, 48
        %v2865 = vpop.permute.xlu0 %2864
        %2866 = vrot.lane.b32.xlu0 %v2400, 48
        %v2867 = vpop.permute.xlu0 %2866
        %2868 = vrot.lane.b32.xlu0 %v2401, 48
        %v2869 = vpop.permute.xlu0 %2868
        %2870 = vrot.lane.b32.xlu0 %v2402, 48
        %v2871 = vpop.permute.xlu0 %2870
        %2872 = vrot.lane.b32.xlu0 %v2403, 48
        %v2873 = vpop.permute.xlu0 %2872
        %2874 = vrot.lane.b32.xlu0 %v2404, 48
        %v2875 = vpop.permute.xlu0 %2874
        %2876 = vrot.lane.b32.xlu0 %v2405, 48
        %v2877 = vpop.permute.xlu0 %2876
        %2878 = vrot.lane.b32.xlu0 %v2406, 48
        %v2879 = vpop.permute.xlu0 %2878
        %2880 = vrot.lane.b32.xlu0 %v2407, 48
        %v2881 = vpop.permute.xlu0 %2880
        %2882 = vrot.lane.b32.xlu0 %v2435, 56
        %v2883 = vpop.permute.xlu0 %2882
        %2884 = vrot.lane.b32.xlu0 %v2459, 56
        %v2885 = vpop.permute.xlu0 %2884
        %2886 = vrot.lane.b32.xlu0 %v2471, 56
        %v2887 = vpop.permute.xlu0 %2886
        %2888 = vrot.lane.b32.xlu0 %v2483, 56
        %v2889 = vpop.permute.xlu0 %2888
        %2890 = vrot.lane.b32.xlu0 %v2495, 56
        %v2891 = vpop.permute.xlu0 %2890
        %2892 = vrot.lane.b32.xlu0 %v2507, 56
        %v2893 = vpop.permute.xlu0 %2892
        %2894 = vrot.lane.b32.xlu0 %v2519, 56
        %v2895 = vpop.permute.xlu0 %2894
        %2896 = vrot.lane.b32.xlu0 %v2531, 56
        %v2897 = vpop.permute.xlu0 %2896
        %2898 = vrot.lane.b32.xlu0 %v2543, 56
        %v2899 = vpop.permute.xlu0 %2898
        %2900 = vrot.lane.b32.xlu0 %v2555, 56
        %v2901 = vpop.permute.xlu0 %2900
        %2902 = vrot.lane.b32.xlu0 %v2567, 56
        %v2903 = vpop.permute.xlu0 %2902
        %2904 = vrot.lane.b32.xlu0 %v2579, 56
        %v2905 = vpop.permute.xlu0 %2904
        %2906 = vrot.lane.b32.xlu0 %v2591, 56
        %v2907 = vpop.permute.xlu0 %2906
        %2908 = vrot.lane.b32.xlu0 %v2603, 56
        %v2909 = vpop.permute.xlu0 %2908
        %2910 = vrot.lane.b32.xlu0 %v2783, 56
        %v2911 = vpop.permute.xlu0 %2910
        %2912 = vrot.lane.b32.xlu0 %v2666, 64
        %v2913 = vpop.permute.xlu0 %2912
        %2914 = vrot.lane.b32.xlu0 %v2672, 64
        %v2915 = vpop.permute.xlu0 %2914
        %2916 = vrot.lane.b32.xlu0 %v2675, 64
        %v2917 = vpop.permute.xlu0 %2916
        %2918 = vrot.lane.b32.xlu0 %v2678, 64
        %v2919 = vpop.permute.xlu0 %2918
        %2920 = vrot.lane.b32.xlu0 %v2681, 64
        %v2921 = vpop.permute.xlu0 %2920
        %2922 = vrot.lane.b32.xlu0 %v2684, 64
        %v2923 = vpop.permute.xlu0 %2922
        %2924 = vrot.lane.b32.xlu0 %v2687, 64
        %v2925 = vpop.permute.xlu0 %2924
        %2926 = vrot.lane.b32.xlu0 %v2690, 64
        %v2927 = vpop.permute.xlu0 %2926
        %2928 = vrot.lane.b32.xlu0 %v2693, 64
        %v2929 = vpop.permute.xlu0 %2928
        %2930 = vrot.lane.b32.xlu0 %v2696, 64
        %v2931 = vpop.permute.xlu0 %2930
        %2932 = vrot.lane.b32.xlu0 %v2699, 64
        %v2933 = vpop.permute.xlu0 %2932
        %2934 = vrot.lane.b32.xlu0 %v2702, 64
        %v2935 = vpop.permute.xlu0 %2934
        %2936 = vrot.lane.b32.xlu0 %v2705, 64
        %v2937 = vpop.permute.xlu0 %2936
        %2938 = vrot.lane.b32.xlu0 %v2708, 64
        %v2939 = vpop.permute.xlu0 %2938
        %2940 = vrot.lane.b32.xlu0 %v2819, 64
        %v2941 = vpop.permute.xlu0 %2940
        %v2943 = vsel %vm1329, %v2392, %v2605
        %v2945 = vsel %vm1329, %v2393, %v2607
        %v2947 = vsel %vm1329, %v2394, %v2609
        %v2949 = vsel %vm1329, %v2395, %v2611
        %v2951 = vsel %vm1329, %v2396, %v2613
        %v2953 = vsel %vm1329, %v2397, %v2615
        %v2955 = vsel %vm1329, %v2398, %v2617
        %v2957 = vsel %vm1329, %v2399, %v2619
        %v2959 = vsel %vm1329, %v2400, %v2621
        %v2961 = vsel %vm1329, %v2401, %v2623
        %v2963 = vsel %vm1329, %v2402, %v2625
        %v2965 = vsel %vm1329, %v2403, %v2627
        %v2967 = vsel %vm1329, %v2404, %v2629
        %v2969 = vsel %vm1329, %v2405, %v2631
        %v2971 = vsel %vm1329, %v2406, %v2633
        %v2973 = vsel %vm1393, %v2943, %v2710
        %v2975 = vsel %vm1393, %v2945, %v2712
        %v2977 = vsel %vm1393, %v2947, %v2714
        %v2979 = vsel %vm1393, %v2949, %v2716
        %v2981 = vsel %vm1393, %v2951, %v2718
        %v2983 = vsel %vm1393, %v2953, %v2720
        %v2985 = vsel %vm1393, %v2955, %v2722
        %v2987 = vsel %vm1393, %v2957, %v2724
        %v2989 = vsel %vm1393, %v2959, %v2726
        %v2991 = vsel %vm1393, %v2961, %v2728
        %v2993 = vsel %vm1393, %v2963, %v2730
        %v2995 = vsel %vm1393, %v2965, %v2732
        %v2997 = vsel %vm1393, %v2967, %v2734
        %v2999 = vsel %vm1393, %v2969, %v2736
        %v3001 = vsel %vm1393, %v2971, %v2738
        %v3003 = vsel %vm1459, %v2973, %v2741
        %v3005 = vsel %vm1459, %v2975, %v2743
        %v3007 = vsel %vm1459, %v2973, %v2745
        %v3009 = vsel %vm1459, %v2977, %v2747
        %v3011 = vsel %vm1459, %v2979, %v2749
        %v3013 = vsel %vm1459, %v2981, %v2751
        %v3015 = vsel %vm1459, %v2983, %v2753
        %v3017 = vsel %vm1459, %v2985, %v2755
        %v3019 = vsel %vm1459, %v2987, %v2757
        %v3021 = vsel %vm1459, %v2989, %v2759
        %v3023 = vsel %vm1459, %v2991, %v2761
        %v3025 = vsel %vm1459, %v2993, %v2763
        %v3027 = vsel %vm1459, %v2995, %v2765
        %v3029 = vsel %vm1459, %v2997, %v2767
        %v3031 = vsel %vm1459, %v2999, %v2769
        %v3033 = vsel %vm1459, %v3001, %v2771
        %v3035 = vsel %vm1523, %v3003, %v2785
        %v3037 = vsel %vm1523, %v3005, %v2787
        %v3039 = vsel %vm1523, %v3007, %v2789
        %v3041 = vsel %vm1523, %v3009, %v2791
        %v3043 = vsel %vm1523, %v3011, %v2793
        %v3045 = vsel %vm1523, %v3013, %v2795
        %v3047 = vsel %vm1523, %v3015, %v2797
        %v3049 = vsel %vm1523, %v3017, %v2799
        %v3051 = vsel %vm1523, %v3019, %v2801
        %v3053 = vsel %vm1523, %v3021, %v2803
        %v3055 = vsel %vm1523, %v3023, %v2805
        %v3057 = vsel %vm1523, %v3025, %v2807
        %v3059 = vsel %vm1523, %v3027, %v2809
        %v3061 = vsel %vm1523, %v3029, %v2811
        %v3063 = vsel %vm1523, %v3031, %v2813
        %v3065 = vsel %vm1523, %v3033, %v2815
        %vm3066 = vcmask 326656
        %v3068 = vsel %vm3066, %v3035, %v2821
        %v3070 = vsel %vm3066, %v3037, %v2823
        %v3072 = vsel %vm3066, %v3039, %v2825
        %v3074 = vsel %vm3066, %v3041, %v2827
        %v3076 = vsel %vm3066, %v3043, %v2829
        %v3078 = vsel %vm3066, %v3045, %v2831
        %v3080 = vsel %vm3066, %v3047, %v2833
        %v3082 = vsel %vm3066, %v3049, %v2835
        %v3084 = vsel %vm3066, %v3051, %v2837
        %v3086 = vsel %vm3066, %v3053, %v2839
        %v3088 = vsel %vm3066, %v3055, %v2841
        %v3090 = vsel %vm3066, %v3057, %v2843
        %v3092 = vsel %vm3066, %v3059, %v2845
        %v3094 = vsel %vm3066, %v3061, %v2847
        %v3096 = vsel %vm3066, %v3063, %v2849
        %v3098 = vsel %vm3066, %v3065, %v2851
        %vm3099 = vcmask 392192
        %v3101 = vsel %vm3099, %v3068, %v2853
        %v3103 = vsel %vm3099, %v3070, %v2855
        %v3105 = vsel %vm3099, %v3072, %v2857
        %v3107 = vsel %vm3099, %v3074, %v2859
        %v3109 = vsel %vm3099, %v3076, %v2861
        %v3111 = vsel %vm3099, %v3078, %v2863
        %v3113 = vsel %vm3099, %v3080, %v2865
        %v3115 = vsel %vm3099, %v3082, %v2867
        %v3117 = vsel %vm3099, %v3084, %v2869
        %v3119 = vsel %vm3099, %v3086, %v2871
        %v3121 = vsel %vm3099, %v3088, %v2873
        %v3123 = vsel %vm3099, %v3090, %v2875
        %v3125 = vsel %vm3099, %v3092, %v2877
        %v3127 = vsel %vm3099, %v3094, %v2879
        %v3129 = vsel %vm3099, %v3096, %v2881
        %v3130 = vsel %vm3099, %v3098, %v2879
        %vm3131 = vcmask 457728
        %v3133 = vsel %vm3131, %v3101, %v2883
        %v3135 = vsel %vm3131, %v3103, %v2885
        %v3137 = vsel %vm3131, %v3105, %v2887
        %v3139 = vsel %vm3131, %v3107, %v2889
        %v3141 = vsel %vm3131, %v3109, %v2891
        %v3143 = vsel %vm3131, %v3111, %v2893
        %v3145 = vsel %vm3131, %v3113, %v2895
        %v3147 = vsel %vm3131, %v3115, %v2897
        %v3149 = vsel %vm3131, %v3117, %v2899
        %v3151 = vsel %vm3131, %v3119, %v2901
        %v3153 = vsel %vm3131, %v3121, %v2903
        %v3155 = vsel %vm3131, %v3123, %v2905
        %v3157 = vsel %vm3131, %v3125, %v2907
        %v3159 = vsel %vm3131, %v3127, %v2909
        %v3161 = vsel %vm3131, %v3129, %v2911
        %v3162 = vsel %vm3131, %v3130, %v2909
        %vm3163 = vcmask 523264
        %v3165 = vsel %vm3163, %v3133, %v2913
        %v3167 = vsel %vm3163, %v3135, %v2915
        %v3169 = vsel %vm3163, %v3137, %v2917
        %v3171 = vsel %vm3163, %v3139, %v2919
        %v3173 = vsel %vm3163, %v3141, %v2921
        %v3175 = vsel %vm3163, %v3143, %v2923
        %v3177 = vsel %vm3163, %v3145, %v2925
        %v3179 = vsel %vm3163, %v3147, %v2927
        %v3181 = vsel %vm3163, %v3149, %v2929
        %v3183 = vsel %vm3163, %v3151, %v2931
        %v3185 = vsel %vm3163, %v3153, %v2933
        %v3187 = vsel %vm3163, %v3155, %v2935
        %v3189 = vsel %vm3163, %v3157, %v2937
        %v3191 = vsel %vm3163, %v3159, %v2939
        %v3193 = vsel %vm3163, %v3161, %v2941
        %v3194 = vsel %vm3163, %v3162, %v2939
        %v3195 = vld [vmem:[%s2] sm:$0xf]
        %v3196 = vld [vmem:[%s2 + $0x4] sm:$0xf]
        %v3197 = vld [vmem:[%s2 + $0x8] sm:$0xf]
        %v3198 = vld [vmem:[%s2 + $0xc] sm:$0xf]
        %v3199 = vld [vmem:[%s2 + $0x10] sm:$0xf]
        %v3200 = vld [vmem:[%s2 + $0x14] sm:$0xf]
        %v3201 = vld [vmem:[%s2 + $0x18] sm:$0xf]
        %v3202 = vld [vmem:[%s2 + $0x1c] sm:$0xf]
        %v3203 = vld [vmem:[%s2 + $0x20] sm:$0xf]
        %v3204 = vlaneseq
        %v3205 = vshrl.u32 %v3204, 7
        %v3206 = vsub.s32 1, %v3205
        %v3207 = vrot.slane %v337, %v3206
        %v3217 = vunpack.c.l.b16 %v3195
        %v3218 = vunpack.c.l.b16 %v3196
        %v3219 = vunpack.c.l.b16 %v3197
        %v3220 = vunpack.c.l.b16 %v3198
        %v3221 = vunpack.c.l.b16 %v3199
        %v3222 = vunpack.c.l.b16 %v3200
        %v3223 = vunpack.c.l.b16 %v3201
        %v3224 = vunpack.c.l.b16 %v3202
        %v3225 = vunpack.c.l.b16 %v3203
        %v3226 = vpack.c.b16 %v3218, %v3217
        %v3227 = vpack.c.b16 %v3220, %v3219
        %v3228 = vpack.c.b16 %v3222, %v3221
        %v3229 = vpack.c.b16 %v3224, %v3223
        %v3230 = vpack.c.b16 %v3225, %v3225
        %vm3235 = vcmask 588800
        %v3236 = vsel %vm3235, %v3165, 0
        %v3238 = vsel %vm3235, %v3167, 0
        %v3240 = vsel %vm3235, %v3169, 0
        %v3242 = vsel %vm3235, %v3171, 0
        %v3244 = vsel %vm3235, %v3173, 0
        %v3246 = vsel %vm3235, %v3175, 0
        %v3248 = vsel %vm3235, %v3177, 0
        %v3250 = vsel %vm3235, %v3179, 0
        %v3252 = vsel %vm3235, %v3181, 0
        %v3254 = vsel %vm3235, %v3183, 0
        %v3256 = vsel %vm3235, %v3185, 0
        %v3258 = vsel %vm3235, %v3187, 0
        %v3260 = vsel %vm3235, %v3189, 0
        %v3262 = vsel %vm3235, %v3191, 0
        %v3264 = vsel %vm3235, %v3193, 0
        %v3266 = vsel %vm3235, %v3194, 0
        %vm3268 = vcmask 1043456
        %v3270 = vsel %vm3268, %v3230, 0
        %3272 = vmatprep.subr.bf16.mxu0 0
        %3273 = vmatpush1.bf16.msra.mxu0 %v3226
        %3274 = vmatprep.subr.bf16.mxu0 0
        %3275 = vmatpush1.bf16.msra.mxu0 %v3227
        %3276 = vmatprep.subr.bf16.mxu0 0
        %3277 = vmatpush1.bf16.msra.mxu0 %v3228
        %3278 = vmatprep.subr.bf16.mxu0 0
        %3279 = vmatpush1.bf16.msra.mxu0 %v3229
        %3280 = vmatprep.subr.bf16.mxu0 0
        %3281 = vmatpush1.bf16.msra.mxu0 %v3270
        %3282 = vmatprep.subr.bf16.mxu0 0
        %3283 = vmatpush1.bf16.msra.mxu0 0
        %3284 = vmatprep.subr.bf16.mxu0 0
        %3285 = vmatpush1.bf16.msra.mxu0 0
        %3286 = vmatprep.subr.bf16.mxu0 0
        %3287 = vmatpush1.bf16.msra.mxu0 0
        %3288 = vmatprep.subr.bf16.mxu0 0
        %3289 = vmatpush1.bf16.msra.mxu0 0
        %3290 = vmatprep.subr.bf16.mxu0 0
        %3291 = vmatpush1.bf16.msra.mxu0 0
        %3292 = vmatprep.subr.bf16.mxu0 0
        %3293 = vmatpush1.bf16.msra.mxu0 0
        %3294 = vmatprep.subr.bf16.mxu0 0
        %3295 = vmatpush1.bf16.msra.mxu0 0
        %3296 = vmatprep.subr.bf16.mxu0 0
        %3297 = vmatpush1.bf16.msra.mxu0 0
        %3298 = vmatprep.subr.bf16.mxu0 0
        %3299 = vmatpush1.bf16.msra.mxu0 0
        %3300 = vmatprep.subr.bf16.mxu0 0
        %3301 = vmatpush1.bf16.msra.mxu0 0
        %3302 = vmatprep.subr.bf16.mxu0 0
        %3303 = vmatpush1.bf16.msra.mxu0 0
        %3304 = vmatprep.mubr.bf16.mxu0 0
        %3305 = vmatmul.mubr.bf16.gmra.mrb[0].mxu0 %v3236
        %v3306 = vpop.f32.mrb[0].mxu0
        %v3307 = vadd.f32 %v3207, %v3306
        %v3308 = vpop.f32.mrb[0].mxu0
        %v3309 = vpop.f32.mrb[0].mxu0
        %v3310 = vadd.f32 %v3207, %v3309
        %v3311 = vpop.f32.mrb[0].mxu0
        %3312 = vmatprep.mubr.bf16.mxu0 0
        %3313 = vmatmul.mubr.bf16.gmra.mrb[0].mxu0 %v3238
        %v3314 = vpop.f32.mrb[0].mxu0
        %v3315 = vadd.f32 %v3207, %v3314
        %v3316 = vpop.f32.mrb[0].mxu0
        %v3317 = vpop.f32.mrb[0].mxu0
        %v3318 = vadd.f32 %v3207, %v3317
        %v3319 = vpop.f32.mrb[0].mxu0
        %3320 = vmatprep.mubr.bf16.mxu0 0
        %3321 = vmatmul.mubr.bf16.gmra.mrb[0].mxu0 %v3240
        %v3322 = vpop.f32.mrb[0].mxu0
        %v3323 = vadd.f32 %v3207, %v3322
        %v3324 = vpop.f32.mrb[0].mxu0
        %v3325 = vpop.f32.mrb[0].mxu0
        %v3326 = vadd.f32 %v3207, %v3325
        %v3327 = vpop.f32.mrb[0].mxu0
        %3328 = vmatprep.mubr.bf16.mxu0 0
        %3329 = vmatmul.mubr.bf16.gmra.mrb[0].mxu0 %v3242
        %v3330 = vpop.f32.mrb[0].mxu0
        %v3331 = vadd.f32 %v3207, %v3330
        %v3332 = vpop.f32.mrb[0].mxu0
        %v3333 = vpop.f32.mrb[0].mxu0
        %v3334 = vadd.f32 %v3207, %v3333
        %v3335 = vpop.f32.mrb[0].mxu0
        %3336 = vmatprep.mubr.bf16.mxu0 0
        %3337 = vmatmul.mubr.bf16.gmra.mrb[0].mxu0 %v3244
        %v3338 = vpop.f32.mrb[0].mxu0
        %v3339 = vadd.f32 %v3207, %v3338
        %v3340 = vpop.f32.mrb[0].mxu0
        %v3341 = vpop.f32.mrb[0].mxu0
        %v3342 = vadd.f32 %v3207, %v3341
        %v3343 = vpop.f32.mrb[0].mxu0
        %3344 = vmatprep.mubr.bf16.mxu0 0
        %3345 = vmatmul.mubr.bf16.gmra.mrb[0].mxu0 %v3246
        %v3346 = vpop.f32.mrb[0].mxu0
        %v3347 = vadd.f32 %v3207, %v3346
        %v3348 = vpop.f32.mrb[0].mxu0
        %v3349 = vpop.f32.mrb[0].mxu0
        %v3350 = vadd.f32 %v3207, %v3349
        %v3351 = vpop.f32.mrb[0].mxu0
        %3352 = vmatprep.mubr.bf16.mxu0 0
        %3353 = vmatmul.mubr.bf16.gmra.mrb[0].mxu0 %v3248
        %v3354 = vpop.f32.mrb[0].mxu0
        %v3355 = vadd.f32 %v3207, %v3354
        %v3356 = vpop.f32.mrb[0].mxu0
        %v3357 = vpop.f32.mrb[0].mxu0
        %v3358 = vadd.f32 %v3207, %v3357
        %v3359 = vpop.f32.mrb[0].mxu0
        %3360 = vmatprep.mubr.bf16.mxu0 0
        %3361 = vmatmul.mubr.bf16.gmra.mrb[0].mxu0 %v3250
        %v3362 = vpop.f32.mrb[0].mxu0
        %v3363 = vadd.f32 %v3207, %v3362
        %v3364 = vpop.f32.mrb[0].mxu0
        %v3365 = vpop.f32.mrb[0].mxu0
        %v3366 = vadd.f32 %v3207, %v3365
        %v3367 = vpop.f32.mrb[0].mxu0
        %3368 = vmatprep.mubr.bf16.mxu0 0
        %3369 = vmatmul.mubr.bf16.gmra.mrb[0].mxu0 %v3252
        %v3370 = vpop.f32.mrb[0].mxu0
        %v3371 = vadd.f32 %v3207, %v3370
        %v3372 = vpop.f32.mrb[0].mxu0
        %v3373 = vpop.f32.mrb[0].mxu0
        %v3374 = vadd.f32 %v3207, %v3373
        %v3375 = vpop.f32.mrb[0].mxu0
        %3376 = vmatprep.mubr.bf16.mxu0 0
        %3377 = vmatmul.mubr.bf16.gmra.mrb[0].mxu0 %v3254
        %v3378 = vpop.f32.mrb[0].mxu0
        %v3379 = vadd.f32 %v3207, %v3378
        %v3380 = vpop.f32.mrb[0].mxu0
        %v3381 = vpop.f32.mrb[0].mxu0
        %v3382 = vadd.f32 %v3207, %v3381
        %v3383 = vpop.f32.mrb[0].mxu0
        %3384 = vmatprep.mubr.bf16.mxu0 0
        %3385 = vmatmul.mubr.bf16.gmra.mrb[0].mxu0 %v3256
        %v3386 = vpop.f32.mrb[0].mxu0
        %v3387 = vadd.f32 %v3207, %v3386
        %v3388 = vpop.f32.mrb[0].mxu0
        %v3389 = vpop.f32.mrb[0].mxu0
        %v3390 = vadd.f32 %v3207, %v3389
        %v3391 = vpop.f32.mrb[0].mxu0
        %3392 = vmatprep.mubr.bf16.mxu0 0
        %3393 = vmatmul.mubr.bf16.gmra.mrb[0].mxu0 %v3258
        %v3394 = vpop.f32.mrb[0].mxu0
        %v3395 = vadd.f32 %v3207, %v3394
        %v3396 = vpop.f32.mrb[0].mxu0
        %v3397 = vpop.f32.mrb[0].mxu0
        %v3398 = vadd.f32 %v3207, %v3397
        %v3399 = vpop.f32.mrb[0].mxu0
        %3400 = vmatprep.mubr.bf16.mxu0 0
        %3401 = vmatmul.mubr.bf16.gmra.mrb[0].mxu0 %v3260
        %v3402 = vpop.f32.mrb[0].mxu0
        %v3403 = vadd.f32 %v3207, %v3402
        %v3404 = vpop.f32.mrb[0].mxu0
        %v3405 = vpop.f32.mrb[0].mxu0
        %v3406 = vadd.f32 %v3207, %v3405
        %v3407 = vpop.f32.mrb[0].mxu0
        %3408 = vmatprep.mubr.bf16.mxu0 0
        %3409 = vmatmul.mubr.bf16.gmra.mrb[0].mxu0 %v3262
        %v3410 = vpop.f32.mrb[0].mxu0
        %v3411 = vadd.f32 %v3207, %v3410
        %v3412 = vpop.f32.mrb[0].mxu0
        %v3413 = vpop.f32.mrb[0].mxu0
        %v3414 = vadd.f32 %v3207, %v3413
        %v3415 = vpop.f32.mrb[0].mxu0
        %3416 = vmatprep.mubr.bf16.mxu0 0
        %3417 = vmatmul.mubr.bf16.gmra.mrb[0].mxu0 %v3264
        %v3418 = vpop.f32.mrb[0].mxu0
        %v3419 = vadd.f32 %v3207, %v3418
        %v3420 = vpop.f32.mrb[0].mxu0
        %v3421 = vpop.f32.mrb[0].mxu0
        %v3422 = vadd.f32 %v3207, %v3421
        %v3423 = vpop.f32.mrb[0].mxu0
        %3424 = vmatprep.mubr.bf16.mxu0 0
        %3425 = vmatmul.mubr.bf16.gmra.mrb[0].mxu0 %v3266
        %v3426 = vpop.f32.mrb[0].mxu0
        %v3427 = vadd.f32 %v3207, %v3426
        %v3428 = vpop.f32.mrb[0].mxu0
        %v3429 = vpop.f32.mrb[0].mxu0
        %v3430 = vadd.f32 %v3207, %v3429
        %v3431 = vpop.f32.mrb[0].mxu0
        %3432 = vdwg.mxu0
        %v3433 = vsel %vm1329, %v3307, 0.0
        %v3434 = vsel %vm1329, %v3310, 0.0
        %v3435 = vadd.f32 %v3433, %v3434
        %v3436 = vsel %vm1329, %v3315, 0.0
        %v3437 = vadd.f32 %v3435, %v3436
        %v3438 = vsel %vm1329, %v3318, 0.0
        %v3439 = vadd.f32 %v3437, %v3438
        %v3440 = vsel %vm1329, %v3323, 0.0
        %v3441 = vadd.f32 %v3439, %v3440
        %v3442 = vsel %vm1329, %v3326, 0.0
        %v3443 = vadd.f32 %v3441, %v3442
        %v3444 = vsel %vm1329, %v3331, 0.0
        %v3445 = vadd.f32 %v3443, %v3444
        %v3446 = vsel %vm1329, %v3334, 0.0
        %v3447 = vadd.f32 %v3445, %v3446
        %v3448 = vsel %vm1329, %v3339, 0.0
        %v3449 = vadd.f32 %v3447, %v3448
        %v3450 = vsel %vm1329, %v3342, 0.0
        %v3451 = vadd.f32 %v3449, %v3450
        %v3452 = vsel %vm1329, %v3347, 0.0
        %v3453 = vadd.f32 %v3451, %v3452
        %v3454 = vsel %vm1329, %v3350, 0.0
        %v3455 = vadd.f32 %v3453, %v3454
        %v3456 = vsel %vm1329, %v3355, 0.0
        %v3457 = vadd.f32 %v3455, %v3456
        %v3458 = vsel %vm1329, %v3358, 0.0
        %v3459 = vadd.f32 %v3457, %v3458
        %v3460 = vsel %vm1329, %v3363, 0.0
        %v3461 = vadd.f32 %v3459, %v3460
        %v3462 = vsel %vm1329, %v3366, 0.0
        %v3463 = vadd.f32 %v3461, %v3462
        %v3464 = vsel %vm1329, %v3371, 0.0
        %v3465 = vadd.f32 %v3463, %v3464
        %v3466 = vsel %vm1329, %v3374, 0.0
        %v3467 = vadd.f32 %v3465, %v3466
        %v3468 = vsel %vm1329, %v3379, 0.0
        %v3469 = vadd.f32 %v3467, %v3468
        %v3470 = vsel %vm1329, %v3382, 0.0
        %v3471 = vadd.f32 %v3469, %v3470
        %v3472 = vsel %vm1329, %v3387, 0.0
        %v3473 = vadd.f32 %v3471, %v3472
        %v3474 = vsel %vm1329, %v3390, 0.0
        %v3475 = vadd.f32 %v3473, %v3474
        %v3476 = vsel %vm1329, %v3395, 0.0
        %v3477 = vadd.f32 %v3475, %v3476
        %v3478 = vsel %vm1329, %v3398, 0.0
        %v3479 = vadd.f32 %v3477, %v3478
        %v3480 = vsel %vm1329, %v3403, 0.0
        %v3481 = vadd.f32 %v3479, %v3480
        %v3482 = vsel %vm1329, %v3406, 0.0
        %v3483 = vadd.f32 %v3481, %v3482
        %v3484 = vsel %vm1329, %v3411, 0.0
        %v3485 = vadd.f32 %v3483, %v3484
        %v3486 = vsel %vm1329, %v3414, 0.0
        %v3487 = vadd.f32 %v3485, %v3486
        %v3488 = vsel %vm1329, %v3419, 0.0
        %v3489 = vadd.f32 %v3487, %v3488
        %v3490 = vsel %vm1329, %v3422, 0.0
        %v3491 = vadd.f32 %v3489, %v3490
        %v3492 = vsel %vm1329, %v3427, 0.0
        %v3493 = vadd.f32 %v3491, %v3492
        %v3494 = vsel %vm1329, %v3430, 0.0
        %v3495 = vadd.f32 %v3493, %v3494
        %v3496 = vrot.slane %v3495, 4
        %v3497 = vadd.f32 %v3495, %v3496
        %v3498 = vrot.slane %v3497, 2
        %v3499 = vadd.f32 %v3497, %v3498
        %v3500 = vrot.slane %v3499, 1
        %v3501 = vadd.f32 %v3499, %v3500
        %v3502 = vmul.f32 %v3501, %v1846
        %v3503 = vsub.f32 %v3307, %v3502
        %v3504 = vsub.f32 %v3310, %v3502
        %v3505 = vsub.f32 %v3315, %v3502
        %v3506 = vsub.f32 %v3318, %v3502
        %v3507 = vsub.f32 %v3323, %v3502
        %v3508 = vsub.f32 %v3326, %v3502
        %v3509 = vsub.f32 %v3331, %v3502
        %v3510 = vsub.f32 %v3334, %v3502
        %v3511 = vsub.f32 %v3339, %v3502
        %v3512 = vsub.f32 %v3342, %v3502
        %v3513 = vsub.f32 %v3347, %v3502
        %v3514 = vsub.f32 %v3350, %v3502
        %v3515 = vsub.f32 %v3355, %v3502
        %v3516 = vsub.f32 %v3358, %v3502
        %v3517 = vsub.f32 %v3363, %v3502
        %v3518 = vsub.f32 %v3366, %v3502
        %v3519 = vsub.f32 %v3371, %v3502
        %v3520 = vsub.f32 %v3374, %v3502
        %v3521 = vsub.f32 %v3379, %v3502
        %v3522 = vsub.f32 %v3382, %v3502
        %v3523 = vsub.f32 %v3387, %v3502
        %v3524 = vsub.f32 %v3390, %v3502
        %v3525 = vsub.f32 %v3395, %v3502
        %v3526 = vsub.f32 %v3398, %v3502
        %v3527 = vsub.f32 %v3403, %v3502
        %v3528 = vsub.f32 %v3406, %v3502
        %v3529 = vsub.f32 %v3411, %v3502
        %v3530 = vsub.f32 %v3414, %v3502
        %v3531 = vsub.f32 %v3419, %v3502
        %v3532 = vsub.f32 %v3422, %v3502
        %v3533 = vsub.f32 %v3427, %v3502
        %v3534 = vsub.f32 %v3430, %v3502
        %v3535 = vmul.f32 %v3503, %v3503
        %v3536 = vmul.f32 %v3504, %v3504
        %v3537 = vmul.f32 %v3505, %v3505
        %v3538 = vmul.f32 %v3506, %v3506
        %v3539 = vmul.f32 %v3507, %v3507
        %v3540 = vmul.f32 %v3508, %v3508
        %v3541 = vmul.f32 %v3509, %v3509
        %v3542 = vmul.f32 %v3510, %v3510
        %v3543 = vmul.f32 %v3511, %v3511
        %v3544 = vmul.f32 %v3512, %v3512
        %v3545 = vmul.f32 %v3513, %v3513
        %v3546 = vmul.f32 %v3514, %v3514
        %v3547 = vmul.f32 %v3515, %v3515
        %v3548 = vmul.f32 %v3516, %v3516
        %v3549 = vmul.f32 %v3517, %v3517
        %v3550 = vmul.f32 %v3518, %v3518
        %v3551 = vmul.f32 %v3519, %v3519
        %v3552 = vmul.f32 %v3520, %v3520
        %v3553 = vmul.f32 %v3521, %v3521
        %v3554 = vmul.f32 %v3522, %v3522
        %v3555 = vmul.f32 %v3523, %v3523
        %v3556 = vmul.f32 %v3524, %v3524
        %v3557 = vmul.f32 %v3525, %v3525
        %v3558 = vmul.f32 %v3526, %v3526
        %v3559 = vmul.f32 %v3527, %v3527
        %v3560 = vmul.f32 %v3528, %v3528
        %v3561 = vmul.f32 %v3529, %v3529
        %v3562 = vmul.f32 %v3530, %v3530
        %v3563 = vmul.f32 %v3531, %v3531
        %v3564 = vmul.f32 %v3532, %v3532
        %v3565 = vmul.f32 %v3533, %v3533
        %v3566 = vmul.f32 %v3534, %v3534
        %v3567 = vsel %vm1329, %v3535, 0.0
        %v3568 = vsel %vm1329, %v3536, 0.0
        %v3569 = vadd.f32 %v3567, %v3568
        %v3570 = vsel %vm1329, %v3537, 0.0
        %v3571 = vadd.f32 %v3569, %v3570
        %v3572 = vsel %vm1329, %v3538, 0.0
        %v3573 = vadd.f32 %v3571, %v3572
        %v3574 = vsel %vm1329, %v3539, 0.0
        %v3575 = vadd.f32 %v3573, %v3574
        %v3576 = vsel %vm1329, %v3540, 0.0
        %v3577 = vadd.f32 %v3575, %v3576
        %v3578 = vsel %vm1329, %v3541, 0.0
        %v3579 = vadd.f32 %v3577, %v3578
        %v3580 = vsel %vm1329, %v3542, 0.0
        %v3581 = vadd.f32 %v3579, %v3580
        %v3582 = vsel %vm1329, %v3543, 0.0
        %v3583 = vadd.f32 %v3581, %v3582
        %v3584 = vsel %vm1329, %v3544, 0.0
        %v3585 = vadd.f32 %v3583, %v3584
        %v3586 = vsel %vm1329, %v3545, 0.0
        %v3587 = vadd.f32 %v3585, %v3586
        %v3588 = vsel %vm1329, %v3546, 0.0
        %v3589 = vadd.f32 %v3587, %v3588
        %v3590 = vsel %vm1329, %v3547, 0.0
        %v3591 = vadd.f32 %v3589, %v3590
        %v3592 = vsel %vm1329, %v3548, 0.0
        %v3593 = vadd.f32 %v3591, %v3592
        %v3594 = vsel %vm1329, %v3549, 0.0
        %v3595 = vadd.f32 %v3593, %v3594
        %v3596 = vsel %vm1329, %v3550, 0.0
        %v3597 = vadd.f32 %v3595, %v3596
        %v3598 = vsel %vm1329, %v3551, 0.0
        %v3599 = vadd.f32 %v3597, %v3598
        %v3600 = vsel %vm1329, %v3552, 0.0
        %v3601 = vadd.f32 %v3599, %v3600
        %v3602 = vsel %vm1329, %v3553, 0.0
        %v3603 = vadd.f32 %v3601, %v3602
        %v3604 = vsel %vm1329, %v3554, 0.0
        %v3605 = vadd.f32 %v3603, %v3604
        %v3606 = vsel %vm1329, %v3555, 0.0
        %v3607 = vadd.f32 %v3605, %v3606
        %v3608 = vsel %vm1329, %v3556, 0.0
        %v3609 = vadd.f32 %v3607, %v3608
        %v3610 = vsel %vm1329, %v3557, 0.0
        %v3611 = vadd.f32 %v3609, %v3610
        %v3612 = vsel %vm1329, %v3558, 0.0
        %v3613 = vadd.f32 %v3611, %v3612
        %v3614 = vsel %vm1329, %v3559, 0.0
        %v3615 = vadd.f32 %v3613, %v3614
        %v3616 = vsel %vm1329, %v3560, 0.0
        %v3617 = vadd.f32 %v3615, %v3616
        %v3618 = vsel %vm1329, %v3561, 0.0
        %v3619 = vadd.f32 %v3617, %v3618
        %v3620 = vsel %vm1329, %v3562, 0.0
        %v3621 = vadd.f32 %v3619, %v3620
        %v3622 = vsel %vm1329, %v3563, 0.0
        %v3623 = vadd.f32 %v3621, %v3622
        %v3624 = vsel %vm1329, %v3564, 0.0
        %v3625 = vadd.f32 %v3623, %v3624
        %v3626 = vsel %vm1329, %v3565, 0.0
        %v3627 = vadd.f32 %v3625, %v3626
        %v3628 = vsel %vm1329, %v3566, 0.0
        %v3629 = vadd.f32 %v3627, %v3628
        %v3630 = vrot.slane %v3629, 4
        %v3631 = vadd.f32 %v3629, %v3630
        %v3632 = vrot.slane %v3631, 2
        %v3633 = vadd.f32 %v3631, %v3632
        %v3634 = vrot.slane %v3633, 1
        %v3635 = vadd.f32 %v3633, %v3634
        %v3636 = vmul.f32 %v3635, %v1846
        %v3637 = vadd.f32 %v3636, 1e-05
        %v3638 = vrsqrt.pop %v3637
        %v3639 = vmul.f32 %v3503, %v3638
        %v3640 = vmul.f32 %v3504, %v3638
        %v3641 = vmul.f32 %v3505, %v3638
        %v3642 = vmul.f32 %v3506, %v3638
        %v3643 = vmul.f32 %v3507, %v3638
        %v3644 = vmul.f32 %v3508, %v3638
        %v3645 = vmul.f32 %v3509, %v3638
        %v3646 = vmul.f32 %v3510, %v3638
        %v3647 = vmul.f32 %v3511, %v3638
        %v3648 = vmul.f32 %v3512, %v3638
        %v3649 = vmul.f32 %v3513, %v3638
        %v3650 = vmul.f32 %v3514, %v3638
        %v3651 = vmul.f32 %v3515, %v3638
        %v3652 = vmul.f32 %v3516, %v3638
        %v3653 = vmul.f32 %v3517, %v3638
        %v3654 = vmul.f32 %v3518, %v3638
        %v3655 = vmul.f32 %v3519, %v3638
        %v3656 = vmul.f32 %v3520, %v3638
        %v3657 = vmul.f32 %v3521, %v3638
        %v3658 = vmul.f32 %v3522, %v3638
        %v3659 = vmul.f32 %v3523, %v3638
        %v3660 = vmul.f32 %v3524, %v3638
        %v3661 = vmul.f32 %v3525, %v3638
        %v3662 = vmul.f32 %v3526, %v3638
        %v3663 = vmul.f32 %v3527, %v3638
        %v3664 = vmul.f32 %v3528, %v3638
        %v3665 = vmul.f32 %v3529, %v3638
        %v3666 = vmul.f32 %v3530, %v3638
        %v3667 = vmul.f32 %v3531, %v3638
        %v3668 = vmul.f32 %v3532, %v3638
        %v3669 = vmul.f32 %v3533, %v3638
        %v3670 = vmul.f32 %v3534, %v3638
        %v3671 = vlaneseq
        %v3672 = vshrl.u32 %v3671, 7
        %v3673 = vsub.s32 1, %v3672
        %v3674 = vrot.slane %v339, %v3673
        %v3675 = vmul.f32 %v3639, %v3674
        %v3676 = vmul.f32 %v3640, %v3674
        %v3677 = vmul.f32 %v3641, %v3674
        %v3678 = vmul.f32 %v3642, %v3674
        %v3679 = vmul.f32 %v3643, %v3674
        %v3680 = vmul.f32 %v3644, %v3674
        %v3681 = vmul.f32 %v3645, %v3674
        %v3682 = vmul.f32 %v3646, %v3674
        %v3683 = vmul.f32 %v3647, %v3674
        %v3684 = vmul.f32 %v3648, %v3674
        %v3685 = vmul.f32 %v3649, %v3674
        %v3686 = vmul.f32 %v3650, %v3674
        %v3687 = vmul.f32 %v3651, %v3674
        %v3688 = vmul.f32 %v3652, %v3674
        %v3689 = vmul.f32 %v3653, %v3674
        %v3690 = vmul.f32 %v3654, %v3674
        %v3691 = vmul.f32 %v3655, %v3674
        %v3692 = vmul.f32 %v3656, %v3674
        %v3693 = vmul.f32 %v3657, %v3674
        %v3694 = vmul.f32 %v3658, %v3674
        %v3695 = vmul.f32 %v3659, %v3674
        %v3696 = vmul.f32 %v3660, %v3674
        %v3697 = vmul.f32 %v3661, %v3674
        %v3698 = vmul.f32 %v3662, %v3674
        %v3699 = vmul.f32 %v3663, %v3674
        %v3700 = vmul.f32 %v3664, %v3674
        %v3701 = vmul.f32 %v3665, %v3674
        %v3702 = vmul.f32 %v3666, %v3674
        %v3703 = vmul.f32 %v3667, %v3674
        %v3704 = vmul.f32 %v3668, %v3674
        %v3705 = vmul.f32 %v3669, %v3674
        %v3706 = vmul.f32 %v3670, %v3674
        %v3707 = vlaneseq
        %v3708 = vshrl.u32 %v3707, 7
        %v3709 = vsub.s32 1, %v3708
        %v3710 = vrot.slane %v341, %v3709
        %v3711 = vadd.f32 %v3675, %v3710
        %v3712 = vadd.f32 %v3676, %v3710
        %v3713 = vadd.f32 %v3677, %v3710
        %v3714 = vadd.f32 %v3678, %v3710
        %v3715 = vadd.f32 %v3679, %v3710
        %v3716 = vadd.f32 %v3680, %v3710
        %v3717 = vadd.f32 %v3681, %v3710
        %v3718 = vadd.f32 %v3682, %v3710
        %v3719 = vadd.f32 %v3683, %v3710
        %v3720 = vadd.f32 %v3684, %v3710
        %v3721 = vadd.f32 %v3685, %v3710
        %v3722 = vadd.f32 %v3686, %v3710
        %v3723 = vadd.f32 %v3687, %v3710
        %v3724 = vadd.f32 %v3688, %v3710
        %v3725 = vadd.f32 %v3689, %v3710
        %v3726 = vadd.f32 %v3690, %v3710
        %v3727 = vadd.f32 %v3691, %v3710
        %v3728 = vadd.f32 %v3692, %v3710
        %v3729 = vadd.f32 %v3693, %v3710
        %v3730 = vadd.f32 %v3694, %v3710
        %v3731 = vadd.f32 %v3695, %v3710
        %v3732 = vadd.f32 %v3696, %v3710
        %v3733 = vadd.f32 %v3697, %v3710
        %v3734 = vadd.f32 %v3698, %v3710
        %v3735 = vadd.f32 %v3699, %v3710
        %v3736 = vadd.f32 %v3700, %v3710
        %v3737 = vadd.f32 %v3701, %v3710
        %v3738 = vadd.f32 %v3702, %v3710
        %v3739 = vadd.f32 %v3703, %v3710
        %v3740 = vadd.f32 %v3704, %v3710
        %v3741 = vadd.f32 %v3705, %v3710
        %v3742 = vadd.f32 %v3706, %v3710
        %vm3743 = vcmp.ge.f32.partialorder %v3711, 0.0
        %vm3744 = vcmp.ge.f32.partialorder %v3712, 0.0
        %vm3745 = vcmp.ge.f32.partialorder %v3713, 0.0
        %vm3746 = vcmp.ge.f32.partialorder %v3714, 0.0
        %vm3747 = vcmp.ge.f32.partialorder %v3715, 0.0
        %vm3748 = vcmp.ge.f32.partialorder %v3716, 0.0
        %vm3749 = vcmp.ge.f32.partialorder %v3717, 0.0
        %vm3750 = vcmp.ge.f32.partialorder %v3718, 0.0
        %vm3751 = vcmp.ge.f32.partialorder %v3719, 0.0
        %vm3752 = vcmp.ge.f32.partialorder %v3720, 0.0
        %vm3753 = vcmp.ge.f32.partialorder %v3721, 0.0
        %vm3754 = vcmp.ge.f32.partialorder %v3722, 0.0
        %vm3755 = vcmp.ge.f32.partialorder %v3723, 0.0
        %vm3756 = vcmp.ge.f32.partialorder %v3724, 0.0
        %vm3757 = vcmp.ge.f32.partialorder %v3725, 0.0
        %vm3758 = vcmp.ge.f32.partialorder %v3726, 0.0
        %vm3759 = vcmp.ge.f32.partialorder %v3727, 0.0
        %vm3760 = vcmp.ge.f32.partialorder %v3728, 0.0
        %vm3761 = vcmp.ge.f32.partialorder %v3729, 0.0
        %vm3762 = vcmp.ge.f32.partialorder %v3730, 0.0
        %vm3763 = vcmp.ge.f32.partialorder %v3731, 0.0
        %vm3764 = vcmp.ge.f32.partialorder %v3732, 0.0
        %vm3765 = vcmp.ge.f32.partialorder %v3733, 0.0
        %vm3766 = vcmp.ge.f32.partialorder %v3734, 0.0
        %vm3767 = vcmp.ge.f32.partialorder %v3735, 0.0
        %vm3768 = vcmp.ge.f32.partialorder %v3736, 0.0
        %vm3769 = vcmp.ge.f32.partialorder %v3737, 0.0
        %vm3770 = vcmp.ge.f32.partialorder %v3738, 0.0
        %vm3771 = vcmp.ge.f32.partialorder %v3739, 0.0
        %vm3772 = vcmp.ge.f32.partialorder %v3740, 0.0
        %vm3773 = vcmp.ge.f32.partialorder %v3741, 0.0
        %vm3774 = vcmp.ge.f32.partialorder %v3742, 0.0
        %v3775 = vmul.f32 %v3711, 0.2
        %v3776 = vmul.f32 %v3712, 0.2
        %v3777 = vmul.f32 %v3713, 0.2
        %v3778 = vmul.f32 %v3714, 0.2
        %v3779 = vmul.f32 %v3715, 0.2
        %v3780 = vmul.f32 %v3716, 0.2
        %v3781 = vmul.f32 %v3717, 0.2
        %v3782 = vmul.f32 %v3718, 0.2
        %v3783 = vmul.f32 %v3719, 0.2
        %v3784 = vmul.f32 %v3720, 0.2
        %v3785 = vmul.f32 %v3721, 0.2
        %v3786 = vmul.f32 %v3722, 0.2
        %v3787 = vmul.f32 %v3723, 0.2
        %v3788 = vmul.f32 %v3724, 0.2
        %v3789 = vmul.f32 %v3725, 0.2
        %v3790 = vmul.f32 %v3726, 0.2
        %v3791 = vmul.f32 %v3727, 0.2
        %v3792 = vmul.f32 %v3728, 0.2
        %v3793 = vmul.f32 %v3729, 0.2
        %v3794 = vmul.f32 %v3730, 0.2
        %v3795 = vmul.f32 %v3731, 0.2
        %v3796 = vmul.f32 %v3732, 0.2
        %v3797 = vmul.f32 %v3733, 0.2
        %v3798 = vmul.f32 %v3734, 0.2
        %v3799 = vmul.f32 %v3735, 0.2
        %v3800 = vmul.f32 %v3736, 0.2
        %v3801 = vmul.f32 %v3737, 0.2
        %v3802 = vmul.f32 %v3738, 0.2
        %v3803 = vmul.f32 %v3739, 0.2
        %v3804 = vmul.f32 %v3740, 0.2
        %v3805 = vmul.f32 %v3741, 0.2
        %v3806 = vmul.f32 %v3742, 0.2
        %v3807 = vsel %vm3743, %v3711, %v3775
        %v3808 = vsel %vm3744, %v3712, %v3776
        %v3809 = vsel %vm3745, %v3713, %v3777
        %v3810 = vsel %vm3746, %v3714, %v3778
        %v3811 = vsel %vm3747, %v3715, %v3779
        %v3812 = vsel %vm3748, %v3716, %v3780
        %v3813 = vsel %vm3749, %v3717, %v3781
        %v3814 = vsel %vm3750, %v3718, %v3782
        %v3815 = vsel %vm3751, %v3719, %v3783
        %v3816 = vsel %vm3752, %v3720, %v3784
        %v3817 = vsel %vm3753, %v3721, %v3785
        %v3818 = vsel %vm3754, %v3722, %v3786
        %v3819 = vsel %vm3755, %v3723, %v3787
        %v3820 = vsel %vm3756, %v3724, %v3788
        %v3821 = vsel %vm3757, %v3725, %v3789
        %v3822 = vsel %vm3758, %v3726, %v3790
        %v3823 = vsel %vm3759, %v3727, %v3791
        %v3824 = vsel %vm3760, %v3728, %v3792
        %v3825 = vsel %vm3761, %v3729, %v3793
        %v3826 = vsel %vm3762, %v3730, %v3794
        %v3827 = vsel %vm3763, %v3731, %v3795
        %v3828 = vsel %vm3764, %v3732, %v3796
        %v3829 = vsel %vm3765, %v3733, %v3797
        %v3830 = vsel %vm3766, %v3734, %v3798
        %v3831 = vsel %vm3767, %v3735, %v3799
        %v3832 = vsel %vm3768, %v3736, %v3800
        %v3833 = vsel %vm3769, %v3737, %v3801
        %v3834 = vsel %vm3770, %v3738, %v3802
        %v3835 = vsel %vm3771, %v3739, %v3803
        %v3836 = vsel %vm3772, %v3740, %v3804
        %v3837 = vsel %vm3773, %v3741, %v3805
        %v3838 = vsel %vm3774, %v3742, %v3806
        %v3839 = vrot.slane %v377, 1
        %v3840 = vrot.slane %v375, 1
        %v3841 = vrot.slane %v376, 1
        %v3842 = vrot.slane %v378, 1
        %v3843 = vrot.slane %v379, 1
        %v3844 = vrot.slane %v380, 1
        %v3845 = vrot.slane %v381, 1
        %v3846 = vrot.slane %v382, 1
        %v3847 = vrot.slane %v383, 1
        %v3848 = vrot.slane %v384, 1
        %v3849 = vrot.slane %v385, 1
        %v3850 = vrot.slane %v386, 1
        %v3851 = vrot.slane %v387, 1
        %v3852 = vrot.slane %v388, 1
        %v3853 = vrot.slane %v389, 1
        %v3854 = vrot.slane %v390, 1
        %v3871 = vrot.slane %v489, 7
        %v3872 = vrot.slane %v487, 7
        %v3873 = vrot.slane %v488, 7
        %v3874 = vrot.slane %v490, 7
        %v3875 = vrot.slane %v491, 7
        %v3876 = vrot.slane %v492, 7
        %v3877 = vrot.slane %v493, 7
        %v3878 = vrot.slane %v494, 7
        %v3879 = vrot.slane %v495, 7
        %v3880 = vrot.slane %v496, 7
        %v3881 = vrot.slane %v497, 7
        %v3882 = vrot.slane %v498, 7
        %v3883 = vrot.slane %v499, 7
        %v3884 = vrot.slane %v500, 7
        %v3885 = vrot.slane %v501, 7
        %v3886 = vrot.slane %v502, 7
        %v3887 = vrot.slane %v649, 2
        %v3888 = vrot.slane %v647, 2
        %v3889 = vrot.slane %v648, 2
        %v3890 = vrot.slane %v650, 2
        %v3891 = vrot.slane %v651, 2
        %v3892 = vrot.slane %v652, 2
        %v3893 = vrot.slane %v653, 2
        %v3894 = vrot.slane %v654, 2
        %v3895 = vrot.slane %v655, 2
        %v3896 = vrot.slane %v656, 2
        %v3897 = vrot.slane %v657, 2
        %v3898 = vrot.slane %v658, 2
        %v3899 = vrot.slane %v659, 2
        %v3900 = vrot.slane %v660, 2
        %v3901 = vrot.slane %v661, 2
        %v3902 = vrot.slane %v662, 2
        %v3903 = vrot.slane %v649, 1
        %v3904 = vrot.slane %v647, 1
        %v3905 = vrot.slane %v648, 1
        %v3906 = vrot.slane %v650, 1
        %v3907 = vrot.slane %v651, 1
        %v3908 = vrot.slane %v652, 1
        %v3909 = vrot.slane %v653, 1
        %v3910 = vrot.slane %v654, 1
        %v3911 = vrot.slane %v655, 1
        %v3912 = vrot.slane %v656, 1
        %v3913 = vrot.slane %v657, 1
        %v3914 = vrot.slane %v658, 1
        %v3915 = vrot.slane %v659, 1
        %v3916 = vrot.slane %v660, 1
        %v3917 = vrot.slane %v661, 1
        %v3918 = vrot.slane %v662, 1
        %v3935 = vsel %vm745, %v3839, %v309
        %v3936 = vsel %vm745, %v3840, %v307
        %v3937 = vsel %vm745, %v3841, %v305
        %v3938 = vsel %vm745, %v3842, %v311
        %v3939 = vsel %vm745, %v3843, %v313
        %v3940 = vsel %vm745, %v3844, %v315
        %v3941 = vsel %vm745, %v3845, %v317
        %v3942 = vsel %vm745, %v3846, %v319
        %v3943 = vsel %vm745, %v3847, %v321
        %v3944 = vsel %vm745, %v3848, %v323
        %v3945 = vsel %vm745, %v3849, %v325
        %v3946 = vsel %vm745, %v3850, %v327
        %v3947 = vsel %vm745, %v3851, %v329
        %v3948 = vsel %vm745, %v3852, %v331
        %v3949 = vsel %vm745, %v3853, %v333
        %v3950 = vsel %vm745, %v3854, %v335
        %vm3951 = vcmask 1040384
        %v3954 = vsel %vm3951, %v3935, %v3871
        %v3957 = vsel %vm3951, %v3936, %v3872
        %v3960 = vsel %vm3951, %v3937, %v3873
        %v3963 = vsel %vm3951, %v3938, %v3874
        %v3966 = vsel %vm3951, %v3939, %v3875
        %v3969 = vsel %vm3951, %v3940, %v3876
        %v3972 = vsel %vm3951, %v3941, %v3877
        %v3975 = vsel %vm3951, %v3942, %v3878
        %v3978 = vsel %vm3951, %v3943, %v3879
        %v3981 = vsel %vm3951, %v3944, %v3880
        %v3984 = vsel %vm3951, %v3945, %v3881
        %v3987 = vsel %vm3951, %v3946, %v3882
        %v3990 = vsel %vm3951, %v3947, %v3883
        %v3993 = vsel %vm3951, %v3948, %v3884
        %v3996 = vsel %vm3951, %v3949, %v3885
        %v3999 = vsel %vm3951, %v3950, %v3886
        %v4001 = vsel %vm3951, %v3871, %v3887
        %v4004 = vsel %vm3951, %v3872, %v3888
        %v4007 = vsel %vm3951, %v3873, %v3889
        %v4010 = vsel %vm3951, %v3874, %v3890
        %v4013 = vsel %vm3951, %v3875, %v3891
        %v4016 = vsel %vm3951, %v3876, %v3892
        %v4019 = vsel %vm3951, %v3877, %v3893
        %v4022 = vsel %vm3951, %v3878, %v3894
        %v4025 = vsel %vm3951, %v3879, %v3895
        %v4028 = vsel %vm3951, %v3880, %v3896
        %v4031 = vsel %vm3951, %v3881, %v3897
        %v4034 = vsel %vm3951, %v3882, %v3898
        %v4037 = vsel %vm3951, %v3883, %v3899
        %v4040 = vsel %vm3951, %v3884, %v3900
        %v4043 = vsel %vm3951, %v3885, %v3901
        %v4046 = vsel %vm3951, %v3886, %v3902
        %vm4048 = vcmask 1041408
        %vm4049 = vsmask.f32 1280
        %vm4050 = vmand %vm4048, %vm4049
        %v4051 = vsel %vm4050, %v4001, %v3903
        %v4052 = vsel %vm4050, %v4004, %v3904
        %v4053 = vsel %vm4050, %v4007, %v3905
        %v4054 = vsel %vm4050, %v4010, %v3906
        %v4055 = vsel %vm4050, %v4013, %v3907
        %v4056 = vsel %vm4050, %v4016, %v3908
        %v4057 = vsel %vm4050, %v4019, %v3909
        %v4058 = vsel %vm4050, %v4022, %v3910
        %v4059 = vsel %vm4050, %v4025, %v3911
        %v4060 = vsel %vm4050, %v4028, %v3912
        %v4061 = vsel %vm4050, %v4031, %v3913
        %v4062 = vsel %vm4050, %v4034, %v3914
        %v4063 = vsel %vm4050, %v4037, %v3915
        %v4064 = vsel %vm4050, %v4040, %v3916
        %v4065 = vsel %vm4050, %v4043, %v3917
        %v4066 = vsel %vm4050, %v4046, %v3918
        %v4067 = vshrl.u32 %v3954, 16
        %v4069 = vshll.u32 %v3954, 16
        %v4071 = vrot.slane %v4069, 1
        %v4072 = vor.u32 %v4067, %v4071
        %v4074 = vshll.u32 %v4051, 16
        %v4076 = vrot.slane %v4074, 1
        %v4077 = vsel %vm778, %v4072, %v4076
        %v4078 = vshrl.u32 %v3957, 16
        %v4080 = vshll.u32 %v3957, 16
        %v4082 = vrot.slane %v4080, 1
        %v4083 = vor.u32 %v4078, %v4082
        %v4085 = vshll.u32 %v4052, 16
        %v4087 = vrot.slane %v4085, 1
        %v4088 = vsel %vm778, %v4083, %v4087
        %v4089 = vshrl.u32 %v3960, 16
        %v4091 = vshll.u32 %v3960, 16
        %v4093 = vrot.slane %v4091, 1
        %v4094 = vor.u32 %v4089, %v4093
        %v4096 = vshll.u32 %v4053, 16
        %v4098 = vrot.slane %v4096, 1
        %v4099 = vsel %vm778, %v4094, %v4098
        %v4100 = vshrl.u32 %v3963, 16
        %v4102 = vshll.u32 %v3963, 16
        %v4104 = vrot.slane %v4102, 1
        %v4105 = vor.u32 %v4100, %v4104
        %v4107 = vshll.u32 %v4054, 16
        %v4109 = vrot.slane %v4107, 1
        %v4110 = vsel %vm778, %v4105, %v4109
        %v4111 = vshrl.u32 %v3966, 16
        %v4113 = vshll.u32 %v3966, 16
        %v4115 = vrot.slane %v4113, 1
        %v4116 = vor.u32 %v4111, %v4115
        %v4118 = vshll.u32 %v4055, 16
        %v4120 = vrot.slane %v4118, 1
        %v4121 = vsel %vm778, %v4116, %v4120
        %v4122 = vshrl.u32 %v3969, 16
        %v4124 = vshll.u32 %v3969, 16
        %v4126 = vrot.slane %v4124, 1
        %v4127 = vor.u32 %v4122, %v4126
        %v4129 = vshll.u32 %v4056, 16
        %v4131 = vrot.slane %v4129, 1
        %v4132 = vsel %vm778, %v4127, %v4131
        %v4133 = vshrl.u32 %v3972, 16
        %v4135 = vshll.u32 %v3972, 16
        %v4137 = vrot.slane %v4135, 1
        %v4138 = vor.u32 %v4133, %v4137
        %v4140 = vshll.u32 %v4057, 16
        %v4142 = vrot.slane %v4140, 1
        %v4143 = vsel %vm778, %v4138, %v4142
        %v4144 = vshrl.u32 %v3975, 16
        %v4146 = vshll.u32 %v3975, 16
        %v4148 = vrot.slane %v4146, 1
        %v4149 = vor.u32 %v4144, %v4148
        %v4151 = vshll.u32 %v4058, 16
        %v4153 = vrot.slane %v4151, 1
        %v4154 = vsel %vm778, %v4149, %v4153
        %v4155 = vshrl.u32 %v3978, 16
        %v4157 = vshll.u32 %v3978, 16
        %v4159 = vrot.slane %v4157, 1
        %v4160 = vor.u32 %v4155, %v4159
        %v4162 = vshll.u32 %v4059, 16
        %v4164 = vrot.slane %v4162, 1
        %v4165 = vsel %vm778, %v4160, %v4164
        %v4166 = vshrl.u32 %v3981, 16
        %v4168 = vshll.u32 %v3981, 16
        %v4170 = vrot.slane %v4168, 1
        %v4171 = vor.u32 %v4166, %v4170
        %v4173 = vshll.u32 %v4060, 16
        %v4175 = vrot.slane %v4173, 1
        %v4176 = vsel %vm778, %v4171, %v4175
        %v4177 = vshrl.u32 %v3984, 16
        %v4179 = vshll.u32 %v3984, 16
        %v4181 = vrot.slane %v4179, 1
        %v4182 = vor.u32 %v4177, %v4181
        %v4184 = vshll.u32 %v4061, 16
        %v4186 = vrot.slane %v4184, 1
        %v4187 = vsel %vm778, %v4182, %v4186
        %v4188 = vshrl.u32 %v3987, 16
        %v4190 = vshll.u32 %v3987, 16
        %v4192 = vrot.slane %v4190, 1
        %v4193 = vor.u32 %v4188, %v4192
        %v4195 = vshll.u32 %v4062, 16
        %v4197 = vrot.slane %v4195, 1
        %v4198 = vsel %vm778, %v4193, %v4197
        %v4199 = vshrl.u32 %v3990, 16
        %v4201 = vshll.u32 %v3990, 16
        %v4203 = vrot.slane %v4201, 1
        %v4204 = vor.u32 %v4199, %v4203
        %v4206 = vshll.u32 %v4063, 16
        %v4208 = vrot.slane %v4206, 1
        %v4209 = vsel %vm778, %v4204, %v4208
        %v4210 = vshrl.u32 %v3993, 16
        %v4212 = vshll.u32 %v3993, 16
        %v4214 = vrot.slane %v4212, 1
        %v4215 = vor.u32 %v4210, %v4214
        %v4217 = vshll.u32 %v4064, 16
        %v4219 = vrot.slane %v4217, 1
        %v4220 = vsel %vm778, %v4215, %v4219
        %4221 = vrot.lane.b32.xlu0 %v4077, 4
        %v4222 = vpop.permute.xlu0 %4221
        %4223 = vrot.lane.b32.xlu0 %v4088, 4
        %v4224 = vpop.permute.xlu0 %4223
        %4225 = vrot.lane.b32.xlu0 %v4099, 4
        %v4226 = vpop.permute.xlu0 %4225
        %4227 = vrot.lane.b32.xlu0 %v4110, 4
        %v4228 = vpop.permute.xlu0 %4227
        %4229 = vrot.lane.b32.xlu0 %v4121, 4
        %v4230 = vpop.permute.xlu0 %4229
        %4231 = vrot.lane.b32.xlu0 %v4132, 4
        %v4232 = vpop.permute.xlu0 %4231
        %4233 = vrot.lane.b32.xlu0 %v4143, 4
        %v4234 = vpop.permute.xlu0 %4233
        %4235 = vrot.lane.b32.xlu0 %v4154, 4
        %v4236 = vpop.permute.xlu0 %4235
        %4237 = vrot.lane.b32.xlu0 %v4165, 4
        %v4238 = vpop.permute.xlu0 %4237
        %4239 = vrot.lane.b32.xlu0 %v4176, 4
        %v4240 = vpop.permute.xlu0 %4239
        %4241 = vrot.lane.b32.xlu0 %v4187, 4
        %v4242 = vpop.permute.xlu0 %4241
        %4243 = vrot.lane.b32.xlu0 %v4198, 4
        %v4244 = vpop.permute.xlu0 %4243
        %4245 = vrot.lane.b32.xlu0 %v4209, 4
        %v4246 = vpop.permute.xlu0 %4245
        %4247 = vrot.lane.b32.xlu0 %v4220, 4
        %v4248 = vpop.permute.xlu0 %4247
        %v4277 = vrot.slane %v3954, 1
        %v4278 = vrot.slane %v4051, 1
        %v4279 = vsel %vm1019, %v4277, %v4278
        %v4280 = vrot.slane %v3957, 1
        %v4281 = vrot.slane %v4052, 1
        %v4282 = vsel %vm1019, %v4280, %v4281
        %v4283 = vrot.slane %v3960, 1
        %v4284 = vrot.slane %v4053, 1
        %v4285 = vsel %vm1019, %v4283, %v4284
        %v4286 = vrot.slane %v3963, 1
        %v4287 = vrot.slane %v4054, 1
        %v4288 = vsel %vm1019, %v4286, %v4287
        %v4289 = vrot.slane %v3966, 1
        %v4290 = vrot.slane %v4055, 1
        %v4291 = vsel %vm1019, %v4289, %v4290
        %v4292 = vrot.slane %v3969, 1
        %v4293 = vrot.slane %v4056, 1
        %v4294 = vsel %vm1019, %v4292, %v4293
        %v4295 = vrot.slane %v3972, 1
        %v4296 = vrot.slane %v4057, 1
        %v4297 = vsel %vm1019, %v4295, %v4296
        %v4298 = vrot.slane %v3975, 1
        %v4299 = vrot.slane %v4058, 1
        %v4300 = vsel %vm1019, %v4298, %v4299
        %v4301 = vrot.slane %v3978, 1
        %v4302 = vrot.slane %v4059, 1
        %v4303 = vsel %vm1019, %v4301, %v4302
        %v4304 = vrot.slane %v3981, 1
        %v4305 = vrot.slane %v4060, 1
        %v4306 = vsel %vm1019, %v4304, %v4305
        %v4307 = vrot.slane %v3984, 1
        %v4308 = vrot.slane %v4061, 1
        %v4309 = vsel %vm1019, %v4307, %v4308
        %v4310 = vrot.slane %v3987, 1
        %v4311 = vrot.slane %v4062, 1
        %v4312 = vsel %vm1019, %v4310, %v4311
        %v4313 = vrot.slane %v3990, 1
        %v4314 = vrot.slane %v4063, 1
        %v4315 = vsel %vm1019, %v4313, %v4314
        %v4316 = vrot.slane %v3993, 1
        %v4317 = vrot.slane %v4064, 1
        %v4318 = vsel %vm1019, %v4316, %v4317
        %4319 = vrot.lane.b32.xlu0 %v4279, 8
        %v4320 = vpop.permute.xlu0 %4319
        %4321 = vrot.lane.b32.xlu0 %v4282, 8
        %v4322 = vpop.permute.xlu0 %4321
        %4323 = vrot.lane.b32.xlu0 %v4285, 8
        %v4324 = vpop.permute.xlu0 %4323
        %4325 = vrot.lane.b32.xlu0 %v4288, 8
        %v4326 = vpop.permute.xlu0 %4325
        %4327 = vrot.lane.b32.xlu0 %v4291, 8
        %v4328 = vpop.permute.xlu0 %4327
        %4329 = vrot.lane.b32.xlu0 %v4294, 8
        %v4330 = vpop.permute.xlu0 %4329
        %4331 = vrot.lane.b32.xlu0 %v4297, 8
        %v4332 = vpop.permute.xlu0 %4331
        %4333 = vrot.lane.b32.xlu0 %v4300, 8
        %v4334 = vpop.permute.xlu0 %4333
        %4335 = vrot.lane.b32.xlu0 %v4303, 8
        %v4336 = vpop.permute.xlu0 %4335
        %4337 = vrot.lane.b32.xlu0 %v4306, 8
        %v4338 = vpop.permute.xlu0 %4337
        %4339 = vrot.lane.b32.xlu0 %v4309, 8
        %v4340 = vpop.permute.xlu0 %4339
        %4341 = vrot.lane.b32.xlu0 %v4312, 8
        %v4342 = vpop.permute.xlu0 %4341
        %4343 = vrot.lane.b32.xlu0 %v4315, 8
        %v4344 = vpop.permute.xlu0 %4343
        %4345 = vrot.lane.b32.xlu0 %v4318, 8
        %v4346 = vpop.permute.xlu0 %4345
        %vm4347 = vsmask.f32 6400
        %v4348 = vrot.slane %v4067, 1
        %v4349 = vrot.slane %v4069, 2
        %v4350 = vor.u32 %v4348, %v4349
        %v4351 = vshrl.u32 %v4051, 16
        %v4353 = vrot.slane %v4351, 1
        %v4354 = vrot.slane %v4074, 2
        %v4355 = vor.u32 %v4353, %v4354
        %v4356 = vsel %vm4347, %v4350, %v4355
        %v4357 = vrot.slane %v4078, 1
        %v4358 = vrot.slane %v4080, 2
        %v4359 = vor.u32 %v4357, %v4358
        %v4360 = vshrl.u32 %v4052, 16
        %v4362 = vrot.slane %v4360, 1
        %v4363 = vrot.slane %v4085, 2
        %v4364 = vor.u32 %v4362, %v4363
        %v4365 = vsel %vm4347, %v4359, %v4364
        %v4366 = vrot.slane %v4089, 1
        %v4367 = vrot.slane %v4091, 2
        %v4368 = vor.u32 %v4366, %v4367
        %v4369 = vshrl.u32 %v4053, 16
        %v4371 = vrot.slane %v4369, 1
        %v4372 = vrot.slane %v4096, 2
        %v4373 = vor.u32 %v4371, %v4372
        %v4374 = vsel %vm4347, %v4368, %v4373
        %v4375 = vrot.slane %v4100, 1
        %v4376 = vrot.slane %v4102, 2
        %v4377 = vor.u32 %v4375, %v4376
        %v4378 = vshrl.u32 %v4054, 16
        %v4380 = vrot.slane %v4378, 1
        %v4381 = vrot.slane %v4107, 2
        %v4382 = vor.u32 %v4380, %v4381
        %v4383 = vsel %vm4347, %v4377, %v4382
        %v4384 = vrot.slane %v4111, 1
        %v4385 = vrot.slane %v4113, 2
        %v4386 = vor.u32 %v4384, %v4385
        %v4387 = vshrl.u32 %v4055, 16
        %v4389 = vrot.slane %v4387, 1
        %v4390 = vrot.slane %v4118, 2
        %v4391 = vor.u32 %v4389, %v4390
        %v4392 = vsel %vm4347, %v4386, %v4391
        %v4393 = vrot.slane %v4122, 1
        %v4394 = vrot.slane %v4124, 2
        %v4395 = vor.u32 %v4393, %v4394
        %v4396 = vshrl.u32 %v4056, 16
        %v4398 = vrot.slane %v4396, 1
        %v4399 = vrot.slane %v4129, 2
        %v4400 = vor.u32 %v4398, %v4399
        %v4401 = vsel %vm4347, %v4395, %v4400
        %v4402 = vrot.slane %v4133, 1
        %v4403 = vrot.slane %v4135, 2
        %v4404 = vor.u32 %v4402, %v4403
        %v4405 = vshrl.u32 %v4057, 16
        %v4407 = vrot.slane %v4405, 1
        %v4408 = vrot.slane %v4140, 2
        %v4409 = vor.u32 %v4407, %v4408
        %v4410 = vsel %vm4347, %v4404, %v4409
        %v4411 = vrot.slane %v4144, 1
        %v4412 = vrot.slane %v4146, 2
        %v4413 = vor.u32 %v4411, %v4412
        %v4414 = vshrl.u32 %v4058, 16
        %v4416 = vrot.slane %v4414, 1
        %v4417 = vrot.slane %v4151, 2
        %v4418 = vor.u32 %v4416, %v4417
        %v4419 = vsel %vm4347, %v4413, %v4418
        %v4420 = vrot.slane %v4155, 1
        %v4421 = vrot.slane %v4157, 2
        %v4422 = vor.u32 %v4420, %v4421
        %v4423 = vshrl.u32 %v4059, 16
        %v4425 = vrot.slane %v4423, 1
        %v4426 = vrot.slane %v4162, 2
        %v4427 = vor.u32 %v4425, %v4426
        %v4428 = vsel %vm4347, %v4422, %v4427
        %v4429 = vrot.slane %v4166, 1
        %v4430 = vrot.slane %v4168, 2
        %v4431 = vor.u32 %v4429, %v4430
        %v4432 = vshrl.u32 %v4060, 16
        %v4434 = vrot.slane %v4432, 1
        %v4435 = vrot.slane %v4173, 2
        %v4436 = vor.u32 %v4434, %v4435
        %v4437 = vsel %vm4347, %v4431, %v4436
        %v4438 = vrot.slane %v4177, 1
        %v4439 = vrot.slane %v4179, 2
        %v4440 = vor.u32 %v4438, %v4439
        %v4441 = vshrl.u32 %v4061, 16
        %v4443 = vrot.slane %v4441, 1
        %v4444 = vrot.slane %v4184, 2
        %v4445 = vor.u32 %v4443, %v4444
        %v4446 = vsel %vm4347, %v4440, %v4445
        %v4447 = vrot.slane %v4188, 1
        %v4448 = vrot.slane %v4190, 2
        %v4449 = vor.u32 %v4447, %v4448
        %v4450 = vshrl.u32 %v4062, 16
        %v4452 = vrot.slane %v4450, 1
        %v4453 = vrot.slane %v4195, 2
        %v4454 = vor.u32 %v4452, %v4453
        %v4455 = vsel %vm4347, %v4449, %v4454
        %v4456 = vrot.slane %v4199, 1
        %v4457 = vrot.slane %v4201, 2
        %v4458 = vor.u32 %v4456, %v4457
        %v4459 = vshrl.u32 %v4063, 16
        %v4461 = vrot.slane %v4459, 1
        %v4462 = vrot.slane %v4206, 2
        %v4463 = vor.u32 %v4461, %v4462
        %v4464 = vsel %vm4347, %v4458, %v4463
        %v4465 = vrot.slane %v4210, 1
        %v4466 = vrot.slane %v4212, 2
        %v4467 = vor.u32 %v4465, %v4466
        %v4468 = vshrl.u32 %v4064, 16
        %v4470 = vrot.slane %v4468, 1
        %v4471 = vrot.slane %v4217, 2
        %v4472 = vor.u32 %v4470, %v4471
        %v4473 = vsel %vm4347, %v4467, %v4472
        %4474 = vrot.lane.b32.xlu0 %v4356, 12
        %v4475 = vpop.permute.xlu0 %4474
        %4476 = vrot.lane.b32.xlu0 %v4365, 12
        %v4477 = vpop.permute.xlu0 %4476
        %4478 = vrot.lane.b32.xlu0 %v4374, 12
        %v4479 = vpop.permute.xlu0 %4478
        %4480 = vrot.lane.b32.xlu0 %v4383, 12
        %v4481 = vpop.permute.xlu0 %4480
        %4482 = vrot.lane.b32.xlu0 %v4392, 12
        %v4483 = vpop.permute.xlu0 %4482
        %4484 = vrot.lane.b32.xlu0 %v4401, 12
        %v4485 = vpop.permute.xlu0 %4484
        %4486 = vrot.lane.b32.xlu0 %v4410, 12
        %v4487 = vpop.permute.xlu0 %4486
        %4488 = vrot.lane.b32.xlu0 %v4419, 12
        %v4489 = vpop.permute.xlu0 %4488
        %4490 = vrot.lane.b32.xlu0 %v4428, 12
        %v4491 = vpop.permute.xlu0 %4490
        %4492 = vrot.lane.b32.xlu0 %v4437, 12
        %v4493 = vpop.permute.xlu0 %4492
        %4494 = vrot.lane.b32.xlu0 %v4446, 12
        %v4495 = vpop.permute.xlu0 %4494
        %4496 = vrot.lane.b32.xlu0 %v4455, 12
        %v4497 = vpop.permute.xlu0 %4496
        %4498 = vrot.lane.b32.xlu0 %v4464, 12
        %v4499 = vpop.permute.xlu0 %4498
        %4500 = vrot.lane.b32.xlu0 %v4473, 12
        %v4501 = vpop.permute.xlu0 %4500
        %vm4502 = vcmask 1045504
        %v4503 = vrot.slane %v3954, 2
        %v4504 = vrot.slane %v4051, 2
        %v4505 = vsel %vm4502, %v4503, %v4504
        %v4506 = vrot.slane %v3957, 2
        %v4507 = vrot.slane %v4052, 2
        %v4508 = vsel %vm4502, %v4506, %v4507
        %v4509 = vrot.slane %v3960, 2
        %v4510 = vrot.slane %v4053, 2
        %v4511 = vsel %vm4502, %v4509, %v4510
        %v4512 = vrot.slane %v3963, 2
        %v4513 = vrot.slane %v4054, 2
        %v4514 = vsel %vm4502, %v4512, %v4513
        %v4515 = vrot.slane %v3966, 2
        %v4516 = vrot.slane %v4055, 2
        %v4517 = vsel %vm4502, %v4515, %v4516
        %v4518 = vrot.slane %v3969, 2
        %v4519 = vrot.slane %v4056, 2
        %v4520 = vsel %vm4502, %v4518, %v4519
        %v4521 = vrot.slane %v3972, 2
        %v4522 = vrot.slane %v4057, 2
        %v4523 = vsel %vm4502, %v4521, %v4522
        %v4524 = vrot.slane %v3975, 2
        %v4525 = vrot.slane %v4058, 2
        %v4526 = vsel %vm4502, %v4524, %v4525
        %v4527 = vrot.slane %v3978, 2
        %v4528 = vrot.slane %v4059, 2
        %v4529 = vsel %vm4502, %v4527, %v4528
        %v4530 = vrot.slane %v3981, 2
        %v4531 = vrot.slane %v4060, 2
        %v4532 = vsel %vm4502, %v4530, %v4531
        %v4533 = vrot.slane %v3984, 2
        %v4534 = vrot.slane %v4061, 2
        %v4535 = vsel %vm4502, %v4533, %v4534
        %v4536 = vrot.slane %v3987, 2
        %v4537 = vrot.slane %v4062, 2
        %v4538 = vsel %vm4502, %v4536, %v4537
        %v4539 = vrot.slane %v3990, 2
        %v4540 = vrot.slane %v4063, 2
        %v4541 = vsel %vm4502, %v4539, %v4540
        %v4542 = vrot.slane %v3993, 2
        %v4543 = vrot.slane %v4064, 2
        %v4544 = vsel %vm4502, %v4542, %v4543
        %4545 = vrot.lane.b32.xlu0 %v4505, 16
        %v4546 = vpop.permute.xlu0 %4545
        %4547 = vrot.lane.b32.xlu0 %v4508, 16
        %v4548 = vpop.permute.xlu0 %4547
        %4549 = vrot.lane.b32.xlu0 %v4511, 16
        %v4550 = vpop.permute.xlu0 %4549
        %4551 = vrot.lane.b32.xlu0 %v4514, 16
        %v4552 = vpop.permute.xlu0 %4551
        %4553 = vrot.lane.b32.xlu0 %v4517, 16
        %v4554 = vpop.permute.xlu0 %4553
        %4555 = vrot.lane.b32.xlu0 %v4520, 16
        %v4556 = vpop.permute.xlu0 %4555
        %4557 = vrot.lane.b32.xlu0 %v4523, 16
        %v4558 = vpop.permute.xlu0 %4557
        %4559 = vrot.lane.b32.xlu0 %v4526, 16
        %v4560 = vpop.permute.xlu0 %4559
        %4561 = vrot.lane.b32.xlu0 %v4529, 16
        %v4562 = vpop.permute.xlu0 %4561
        %4563 = vrot.lane.b32.xlu0 %v4532, 16
        %v4564 = vpop.permute.xlu0 %4563
        %4565 = vrot.lane.b32.xlu0 %v4535, 16
        %v4566 = vpop.permute.xlu0 %4565
        %4567 = vrot.lane.b32.xlu0 %v4538, 16
        %v4568 = vpop.permute.xlu0 %4567
        %4569 = vrot.lane.b32.xlu0 %v4541, 16
        %v4570 = vpop.permute.xlu0 %4569
        %4571 = vrot.lane.b32.xlu0 %v4544, 16
        %v4572 = vpop.permute.xlu0 %4571
        %4574 = vrot.lane.b32.xlu0 %v3957, 20
        %v4575 = vpop.permute.xlu0 %4574
        %4576 = vrot.lane.b32.xlu0 %v3960, 20
        %v4577 = vpop.permute.xlu0 %4576
        %4578 = vrot.lane.b32.xlu0 %v3954, 20
        %v4579 = vpop.permute.xlu0 %4578
        %4580 = vrot.lane.b32.xlu0 %v3963, 20
        %v4581 = vpop.permute.xlu0 %4580
        %4582 = vrot.lane.b32.xlu0 %v3966, 20
        %v4583 = vpop.permute.xlu0 %4582
        %4584 = vrot.lane.b32.xlu0 %v3969, 20
        %v4585 = vpop.permute.xlu0 %4584
        %4586 = vrot.lane.b32.xlu0 %v3972, 20
        %v4587 = vpop.permute.xlu0 %4586
        %4588 = vrot.lane.b32.xlu0 %v3975, 20
        %v4589 = vpop.permute.xlu0 %4588
        %4590 = vrot.lane.b32.xlu0 %v3978, 20
        %v4591 = vpop.permute.xlu0 %4590
        %4592 = vrot.lane.b32.xlu0 %v3981, 20
        %v4593 = vpop.permute.xlu0 %4592
        %4594 = vrot.lane.b32.xlu0 %v3984, 20
        %v4595 = vpop.permute.xlu0 %4594
        %4596 = vrot.lane.b32.xlu0 %v3987, 20
        %v4597 = vpop.permute.xlu0 %4596
        %4598 = vrot.lane.b32.xlu0 %v3990, 20
        %v4599 = vpop.permute.xlu0 %4598
        %4600 = vrot.lane.b32.xlu0 %v3993, 20
        %v4601 = vpop.permute.xlu0 %4600
        %4602 = vrot.lane.b32.xlu0 %v3996, 20
        %v4603 = vpop.permute.xlu0 %4602
        %v4604 = vshrl.u32 %v3996, 16
        %v4606 = vshll.u32 %v3996, 16
        %v4608 = vrot.slane %v4606, 1
        %v4609 = vor.u32 %v4604, %v4608
        %v4611 = vshll.u32 %v4065, 16
        %v4613 = vrot.slane %v4611, 1
        %v4614 = vsel %vm778, %v4609, %v4613
        %4615 = vrot.lane.b32.xlu0 %v4088, 24
        %v4616 = vpop.permute.xlu0 %4615
        %4617 = vrot.lane.b32.xlu0 %v4099, 24
        %v4618 = vpop.permute.xlu0 %4617
        %4619 = vrot.lane.b32.xlu0 %v4077, 24
        %v4620 = vpop.permute.xlu0 %4619
        %4621 = vrot.lane.b32.xlu0 %v4110, 24
        %v4622 = vpop.permute.xlu0 %4621
        %4623 = vrot.lane.b32.xlu0 %v4121, 24
        %v4624 = vpop.permute.xlu0 %4623
        %4625 = vrot.lane.b32.xlu0 %v4132, 24
        %v4626 = vpop.permute.xlu0 %4625
        %4627 = vrot.lane.b32.xlu0 %v4143, 24
        %v4628 = vpop.permute.xlu0 %4627
        %4629 = vrot.lane.b32.xlu0 %v4154, 24
        %v4630 = vpop.permute.xlu0 %4629
        %4631 = vrot.lane.b32.xlu0 %v4165, 24
        %v4632 = vpop.permute.xlu0 %4631
        %4633 = vrot.lane.b32.xlu0 %v4176, 24
        %v4634 = vpop.permute.xlu0 %4633
        %4635 = vrot.lane.b32.xlu0 %v4187, 24
        %v4636 = vpop.permute.xlu0 %4635
        %4637 = vrot.lane.b32.xlu0 %v4198, 24
        %v4638 = vpop.permute.xlu0 %4637
        %4639 = vrot.lane.b32.xlu0 %v4209, 24
        %v4640 = vpop.permute.xlu0 %4639
        %4641 = vrot.lane.b32.xlu0 %v4220, 24
        %v4642 = vpop.permute.xlu0 %4641
        %4643 = vrot.lane.b32.xlu0 %v4614, 24
        %v4644 = vpop.permute.xlu0 %4643
        %v4646 = vrot.slane %v3996, 1
        %v4647 = vrot.slane %v4065, 1
        %v4648 = vsel %vm1019, %v4646, %v4647
        %4649 = vrot.lane.b32.xlu0 %v4282, 28
        %v4650 = vpop.permute.xlu0 %4649
        %4651 = vrot.lane.b32.xlu0 %v4285, 28
        %v4652 = vpop.permute.xlu0 %4651
        %4653 = vrot.lane.b32.xlu0 %v4279, 28
        %v4654 = vpop.permute.xlu0 %4653
        %4655 = vrot.lane.b32.xlu0 %v4288, 28
        %v4656 = vpop.permute.xlu0 %4655
        %4657 = vrot.lane.b32.xlu0 %v4291, 28
        %v4658 = vpop.permute.xlu0 %4657
        %4659 = vrot.lane.b32.xlu0 %v4294, 28
        %v4660 = vpop.permute.xlu0 %4659
        %4661 = vrot.lane.b32.xlu0 %v4297, 28
        %v4662 = vpop.permute.xlu0 %4661
        %4663 = vrot.lane.b32.xlu0 %v4300, 28
        %v4664 = vpop.permute.xlu0 %4663
        %4665 = vrot.lane.b32.xlu0 %v4303, 28
        %v4666 = vpop.permute.xlu0 %4665
        %4667 = vrot.lane.b32.xlu0 %v4306, 28
        %v4668 = vpop.permute.xlu0 %4667
        %4669 = vrot.lane.b32.xlu0 %v4309, 28
        %v4670 = vpop.permute.xlu0 %4669
        %4671 = vrot.lane.b32.xlu0 %v4312, 28
        %v4672 = vpop.permute.xlu0 %4671
        %4673 = vrot.lane.b32.xlu0 %v4315, 28
        %v4674 = vpop.permute.xlu0 %4673
        %4675 = vrot.lane.b32.xlu0 %v4318, 28
        %v4676 = vpop.permute.xlu0 %4675
        %4677 = vrot.lane.b32.xlu0 %v4648, 28
        %v4678 = vpop.permute.xlu0 %4677
        %v4679 = vrot.slane %v4604, 1
        %v4680 = vrot.slane %v4606, 2
        %v4681 = vor.u32 %v4679, %v4680
        %v4682 = vshrl.u32 %v4065, 16
        %v4684 = vrot.slane %v4682, 1
        %v4685 = vrot.slane %v4611, 2
        %v4686 = vor.u32 %v4684, %v4685
        %v4687 = vsel %vm4347, %v4681, %v4686
        %4688 = vrot.lane.b32.xlu0 %v4365, 32
        %v4689 = vpop.permute.xlu0 %4688
        %4690 = vrot.lane.b32.xlu0 %v4374, 32
        %v4691 = vpop.permute.xlu0 %4690
        %4692 = vrot.lane.b32.xlu0 %v4356, 32
        %v4693 = vpop.permute.xlu0 %4692
        %4694 = vrot.lane.b32.xlu0 %v4383, 32
        %v4695 = vpop.permute.xlu0 %4694
        %4696 = vrot.lane.b32.xlu0 %v4392, 32
        %v4697 = vpop.permute.xlu0 %4696
        %4698 = vrot.lane.b32.xlu0 %v4401, 32
        %v4699 = vpop.permute.xlu0 %4698
        %4700 = vrot.lane.b32.xlu0 %v4410, 32
        %v4701 = vpop.permute.xlu0 %4700
        %4702 = vrot.lane.b32.xlu0 %v4419, 32
        %v4703 = vpop.permute.xlu0 %4702
        %4704 = vrot.lane.b32.xlu0 %v4428, 32
        %v4705 = vpop.permute.xlu0 %4704
        %4706 = vrot.lane.b32.xlu0 %v4437, 32
        %v4707 = vpop.permute.xlu0 %4706
        %4708 = vrot.lane.b32.xlu0 %v4446, 32
        %v4709 = vpop.permute.xlu0 %4708
        %4710 = vrot.lane.b32.xlu0 %v4455, 32
        %v4711 = vpop.permute.xlu0 %4710
        %4712 = vrot.lane.b32.xlu0 %v4464, 32
        %v4713 = vpop.permute.xlu0 %4712
        %4714 = vrot.lane.b32.xlu0 %v4473, 32
        %v4715 = vpop.permute.xlu0 %4714
        %4716 = vrot.lane.b32.xlu0 %v4687, 32
        %v4717 = vpop.permute.xlu0 %4716
        %v4718 = vrot.slane %v3996, 2
        %v4719 = vrot.slane %v4065, 2
        %v4720 = vsel %vm4502, %v4718, %v4719
        %4721 = vrot.lane.b32.xlu0 %v4508, 36
        %v4722 = vpop.permute.xlu0 %4721
        %4723 = vrot.lane.b32.xlu0 %v4511, 36
        %v4724 = vpop.permute.xlu0 %4723
        %4725 = vrot.lane.b32.xlu0 %v4505, 36
        %v4726 = vpop.permute.xlu0 %4725
        %4727 = vrot.lane.b32.xlu0 %v4514, 36
        %v4728 = vpop.permute.xlu0 %4727
        %4729 = vrot.lane.b32.xlu0 %v4517, 36
        %v4730 = vpop.permute.xlu0 %4729
        %4731 = vrot.lane.b32.xlu0 %v4520, 36
        %v4732 = vpop.permute.xlu0 %4731
        %4733 = vrot.lane.b32.xlu0 %v4523, 36
        %v4734 = vpop.permute.xlu0 %4733
        %4735 = vrot.lane.b32.xlu0 %v4526, 36
        %v4736 = vpop.permute.xlu0 %4735
        %4737 = vrot.lane.b32.xlu0 %v4529, 36
        %v4738 = vpop.permute.xlu0 %4737
        %4739 = vrot.lane.b32.xlu0 %v4532, 36
        %v4740 = vpop.permute.xlu0 %4739
        %4741 = vrot.lane.b32.xlu0 %v4535, 36
        %v4742 = vpop.permute.xlu0 %4741
        %4743 = vrot.lane.b32.xlu0 %v4538, 36
        %v4744 = vpop.permute.xlu0 %4743
        %4745 = vrot.lane.b32.xlu0 %v4541, 36
        %v4746 = vpop.permute.xlu0 %4745
        %4747 = vrot.lane.b32.xlu0 %v4544, 36
        %v4748 = vpop.permute.xlu0 %4747
        %4749 = vrot.lane.b32.xlu0 %v4720, 36
        %v4750 = vpop.permute.xlu0 %4749
        %4752 = vrot.lane.b32.xlu0 %v3960, 40
        %v4753 = vpop.permute.xlu0 %4752
        %4754 = vrot.lane.b32.xlu0 %v3957, 40
        %v4755 = vpop.permute.xlu0 %4754
        %4756 = vrot.lane.b32.xlu0 %v3954, 40
        %v4757 = vpop.permute.xlu0 %4756
        %4758 = vrot.lane.b32.xlu0 %v3963, 40
        %v4759 = vpop.permute.xlu0 %4758
        %4760 = vrot.lane.b32.xlu0 %v3966, 40
        %v4761 = vpop.permute.xlu0 %4760
        %4762 = vrot.lane.b32.xlu0 %v3969, 40
        %v4763 = vpop.permute.xlu0 %4762
        %4764 = vrot.lane.b32.xlu0 %v3972, 40
        %v4765 = vpop.permute.xlu0 %4764
        %4766 = vrot.lane.b32.xlu0 %v3975, 40
        %v4767 = vpop.permute.xlu0 %4766
        %4768 = vrot.lane.b32.xlu0 %v3978, 40
        %v4769 = vpop.permute.xlu0 %4768
        %4770 = vrot.lane.b32.xlu0 %v3981, 40
        %v4771 = vpop.permute.xlu0 %4770
        %4772 = vrot.lane.b32.xlu0 %v3984, 40
        %v4773 = vpop.permute.xlu0 %4772
        %4774 = vrot.lane.b32.xlu0 %v3987, 40
        %v4775 = vpop.permute.xlu0 %4774
        %4776 = vrot.lane.b32.xlu0 %v3990, 40
        %v4777 = vpop.permute.xlu0 %4776
        %4778 = vrot.lane.b32.xlu0 %v3993, 40
        %v4779 = vpop.permute.xlu0 %4778
        %4780 = vrot.lane.b32.xlu0 %v3996, 40
        %v4781 = vpop.permute.xlu0 %4780
        %4782 = vrot.lane.b32.xlu0 %v3999, 40
        %v4783 = vpop.permute.xlu0 %4782
        %v4784 = vshrl.u32 %v3999, 16
        %v4786 = vshll.u32 %v3999, 16
        %v4788 = vrot.slane %v4786, 1
        %v4789 = vor.u32 %v4784, %v4788
        %v4791 = vshll.u32 %v4066, 16
        %v4793 = vrot.slane %v4791, 1
        %v4794 = vsel %vm778, %v4789, %v4793
        %4795 = vrot.lane.b32.xlu0 %v4099, 44
        %v4796 = vpop.permute.xlu0 %4795
        %4797 = vrot.lane.b32.xlu0 %v4088, 44
        %v4798 = vpop.permute.xlu0 %4797
        %4799 = vrot.lane.b32.xlu0 %v4077, 44
        %v4800 = vpop.permute.xlu0 %4799
        %4801 = vrot.lane.b32.xlu0 %v4110, 44
        %v4802 = vpop.permute.xlu0 %4801
        %4803 = vrot.lane.b32.xlu0 %v4121, 44
        %v4804 = vpop.permute.xlu0 %4803
        %4805 = vrot.lane.b32.xlu0 %v4132, 44
        %v4806 = vpop.permute.xlu0 %4805
        %4807 = vrot.lane.b32.xlu0 %v4143, 44
        %v4808 = vpop.permute.xlu0 %4807
        %4809 = vrot.lane.b32.xlu0 %v4154, 44
        %v4810 = vpop.permute.xlu0 %4809
        %4811 = vrot.lane.b32.xlu0 %v4165, 44
        %v4812 = vpop.permute.xlu0 %4811
        %4813 = vrot.lane.b32.xlu0 %v4176, 44
        %v4814 = vpop.permute.xlu0 %4813
        %4815 = vrot.lane.b32.xlu0 %v4187, 44
        %v4816 = vpop.permute.xlu0 %4815
        %4817 = vrot.lane.b32.xlu0 %v4198, 44
        %v4818 = vpop.permute.xlu0 %4817
        %4819 = vrot.lane.b32.xlu0 %v4209, 44
        %v4820 = vpop.permute.xlu0 %4819
        %4821 = vrot.lane.b32.xlu0 %v4220, 44
        %v4822 = vpop.permute.xlu0 %4821
        %4823 = vrot.lane.b32.xlu0 %v4614, 44
        %v4824 = vpop.permute.xlu0 %4823
        %4825 = vrot.lane.b32.xlu0 %v4794, 44
        %v4826 = vpop.permute.xlu0 %4825
        %v4828 = vrot.slane %v3999, 1
        %v4829 = vrot.slane %v4066, 1
        %v4830 = vsel %vm1019, %v4828, %v4829
        %4831 = vrot.lane.b32.xlu0 %v4285, 48
        %v4832 = vpop.permute.xlu0 %4831
        %4833 = vrot.lane.b32.xlu0 %v4282, 48
        %v4834 = vpop.permute.xlu0 %4833
        %4835 = vrot.lane.b32.xlu0 %v4279, 48
        %v4836 = vpop.permute.xlu0 %4835
        %4837 = vrot.lane.b32.xlu0 %v4288, 48
        %v4838 = vpop.permute.xlu0 %4837
        %4839 = vrot.lane.b32.xlu0 %v4291, 48
        %v4840 = vpop.permute.xlu0 %4839
        %4841 = vrot.lane.b32.xlu0 %v4294, 48
        %v4842 = vpop.permute.xlu0 %4841
        %4843 = vrot.lane.b32.xlu0 %v4297, 48
        %v4844 = vpop.permute.xlu0 %4843
        %4845 = vrot.lane.b32.xlu0 %v4300, 48
        %v4846 = vpop.permute.xlu0 %4845
        %4847 = vrot.lane.b32.xlu0 %v4303, 48
        %v4848 = vpop.permute.xlu0 %4847
        %4849 = vrot.lane.b32.xlu0 %v4306, 48
        %v4850 = vpop.permute.xlu0 %4849
        %4851 = vrot.lane.b32.xlu0 %v4309, 48
        %v4852 = vpop.permute.xlu0 %4851
        %4853 = vrot.lane.b32.xlu0 %v4312, 48
        %v4854 = vpop.permute.xlu0 %4853
        %4855 = vrot.lane.b32.xlu0 %v4315, 48
        %v4856 = vpop.permute.xlu0 %4855
        %4857 = vrot.lane.b32.xlu0 %v4318, 48
        %v4858 = vpop.permute.xlu0 %4857
        %4859 = vrot.lane.b32.xlu0 %v4648, 48
        %v4860 = vpop.permute.xlu0 %4859
        %4861 = vrot.lane.b32.xlu0 %v4830, 48
        %v4862 = vpop.permute.xlu0 %4861
        %v4863 = vrot.slane %v4784, 1
        %v4864 = vrot.slane %v4786, 2
        %v4865 = vor.u32 %v4863, %v4864
        %v4866 = vshrl.u32 %v4066, 16
        %v4868 = vrot.slane %v4866, 1
        %v4869 = vrot.slane %v4791, 2
        %v4870 = vor.u32 %v4868, %v4869
        %v4871 = vsel %vm4347, %v4865, %v4870
        %4872 = vrot.lane.b32.xlu0 %v4374, 52
        %v4873 = vpop.permute.xlu0 %4872
        %4874 = vrot.lane.b32.xlu0 %v4365, 52
        %v4875 = vpop.permute.xlu0 %4874
        %4876 = vrot.lane.b32.xlu0 %v4356, 52
        %v4877 = vpop.permute.xlu0 %4876
        %4878 = vrot.lane.b32.xlu0 %v4383, 52
        %v4879 = vpop.permute.xlu0 %4878
        %4880 = vrot.lane.b32.xlu0 %v4392, 52
        %v4881 = vpop.permute.xlu0 %4880
        %4882 = vrot.lane.b32.xlu0 %v4401, 52
        %v4883 = vpop.permute.xlu0 %4882
        %4884 = vrot.lane.b32.xlu0 %v4410, 52
        %v4885 = vpop.permute.xlu0 %4884
        %4886 = vrot.lane.b32.xlu0 %v4419, 52
        %v4887 = vpop.permute.xlu0 %4886
        %4888 = vrot.lane.b32.xlu0 %v4428, 52
        %v4889 = vpop.permute.xlu0 %4888
        %4890 = vrot.lane.b32.xlu0 %v4437, 52
        %v4891 = vpop.permute.xlu0 %4890
        %4892 = vrot.lane.b32.xlu0 %v4446, 52
        %v4893 = vpop.permute.xlu0 %4892
        %4894 = vrot.lane.b32.xlu0 %v4455, 52
        %v4895 = vpop.permute.xlu0 %4894
        %4896 = vrot.lane.b32.xlu0 %v4464, 52
        %v4897 = vpop.permute.xlu0 %4896
        %4898 = vrot.lane.b32.xlu0 %v4473, 52
        %v4899 = vpop.permute.xlu0 %4898
        %4900 = vrot.lane.b32.xlu0 %v4687, 52
        %v4901 = vpop.permute.xlu0 %4900
        %4902 = vrot.lane.b32.xlu0 %v4871, 52
        %v4903 = vpop.permute.xlu0 %4902
        %v4904 = vrot.slane %v3999, 2
        %v4905 = vrot.slane %v4066, 2
        %v4906 = vsel %vm4502, %v4904, %v4905
        %4907 = vrot.lane.b32.xlu0 %v4511, 56
        %v4908 = vpop.permute.xlu0 %4907
        %4909 = vrot.lane.b32.xlu0 %v4508, 56
        %v4910 = vpop.permute.xlu0 %4909
        %4911 = vrot.lane.b32.xlu0 %v4505, 56
        %v4912 = vpop.permute.xlu0 %4911
        %4913 = vrot.lane.b32.xlu0 %v4514, 56
        %v4914 = vpop.permute.xlu0 %4913
        %4915 = vrot.lane.b32.xlu0 %v4517, 56
        %v4916 = vpop.permute.xlu0 %4915
        %4917 = vrot.lane.b32.xlu0 %v4520, 56
        %v4918 = vpop.permute.xlu0 %4917
        %4919 = vrot.lane.b32.xlu0 %v4523, 56
        %v4920 = vpop.permute.xlu0 %4919
        %4921 = vrot.lane.b32.xlu0 %v4526, 56
        %v4922 = vpop.permute.xlu0 %4921
        %4923 = vrot.lane.b32.xlu0 %v4529, 56
        %v4924 = vpop.permute.xlu0 %4923
        %4925 = vrot.lane.b32.xlu0 %v4532, 56
        %v4926 = vpop.permute.xlu0 %4925
        %4927 = vrot.lane.b32.xlu0 %v4535, 56
        %v4928 = vpop.permute.xlu0 %4927
        %4929 = vrot.lane.b32.xlu0 %v4538, 56
        %v4930 = vpop.permute.xlu0 %4929
        %4931 = vrot.lane.b32.xlu0 %v4541, 56
        %v4932 = vpop.permute.xlu0 %4931
        %4933 = vrot.lane.b32.xlu0 %v4544, 56
        %v4934 = vpop.permute.xlu0 %4933
        %4935 = vrot.lane.b32.xlu0 %v4720, 56
        %v4936 = vpop.permute.xlu0 %4935
        %4937 = vrot.lane.b32.xlu0 %v4906, 56
        %v4938 = vpop.permute.xlu0 %4937
        %4939 = vrot.lane.b32.xlu0 %v3957, 60
        %v4940 = vpop.permute.xlu0 %4939
        %4941 = vrot.lane.b32.xlu0 %v3954, 60
        %v4942 = vpop.permute.xlu0 %4941
        %4943 = vrot.lane.b32.xlu0 %v3963, 60
        %v4944 = vpop.permute.xlu0 %4943
        %4945 = vrot.lane.b32.xlu0 %v3966, 60
        %v4946 = vpop.permute.xlu0 %4945
        %4947 = vrot.lane.b32.xlu0 %v3969, 60
        %v4948 = vpop.permute.xlu0 %4947
        %4949 = vrot.lane.b32.xlu0 %v3972, 60
        %v4950 = vpop.permute.xlu0 %4949
        %4951 = vrot.lane.b32.xlu0 %v3975, 60
        %v4952 = vpop.permute.xlu0 %4951
        %4953 = vrot.lane.b32.xlu0 %v3978, 60
        %v4954 = vpop.permute.xlu0 %4953
        %4955 = vrot.lane.b32.xlu0 %v3981, 60
        %v4956 = vpop.permute.xlu0 %4955
        %4957 = vrot.lane.b32.xlu0 %v3984, 60
        %v4958 = vpop.permute.xlu0 %4957
        %4959 = vrot.lane.b32.xlu0 %v3987, 60
        %v4960 = vpop.permute.xlu0 %4959
        %4961 = vrot.lane.b32.xlu0 %v3990, 60
        %v4962 = vpop.permute.xlu0 %4961
        %4963 = vrot.lane.b32.xlu0 %v3993, 60
        %v4964 = vpop.permute.xlu0 %4963
        %4965 = vrot.lane.b32.xlu0 %v3996, 60
        %v4966 = vpop.permute.xlu0 %4965
        %4967 = vrot.lane.b32.xlu0 %v3999, 60
        %v4968 = vpop.permute.xlu0 %4967
        %v4970 = vsel %vm1298, %v3954, %v4222
        %v4972 = vsel %vm1298, %v3957, %v4224
        %v4974 = vsel %vm1298, %v3960, %v4226
        %v4976 = vsel %vm1298, %v3963, %v4228
        %v4978 = vsel %vm1298, %v3966, %v4230
        %v4980 = vsel %vm1298, %v3969, %v4232
        %v4982 = vsel %vm1298, %v3972, %v4234
        %v4984 = vsel %vm1298, %v3975, %v4236
        %v4986 = vsel %vm1298, %v3978, %v4238
        %v4988 = vsel %vm1298, %v3981, %v4240
        %v4990 = vsel %vm1298, %v3984, %v4242
        %v4992 = vsel %vm1298, %v3987, %v4244
        %v4994 = vsel %vm1298, %v3990, %v4246
        %v4996 = vsel %vm1298, %v3993, %v4248
        %v4998 = vsel %vm1329, %v4970, %v4320
        %v5000 = vsel %vm1329, %v4972, %v4322
        %v5002 = vsel %vm1329, %v4974, %v4324
        %v5004 = vsel %vm1329, %v4976, %v4326
        %v5006 = vsel %vm1329, %v4978, %v4328
        %v5008 = vsel %vm1329, %v4980, %v4330
        %v5010 = vsel %vm1329, %v4982, %v4332
        %v5012 = vsel %vm1329, %v4984, %v4334
        %v5014 = vsel %vm1329, %v4986, %v4336
        %v5016 = vsel %vm1329, %v4988, %v4338
        %v5018 = vsel %vm1329, %v4990, %v4340
        %v5020 = vsel %vm1329, %v4992, %v4342
        %v5022 = vsel %vm1329, %v4994, %v4344
        %v5024 = vsel %vm1329, %v4996, %v4346
        %v5026 = vsel %vm1360, %v4998, %v4475
        %v5028 = vsel %vm1360, %v5000, %v4477
        %v5030 = vsel %vm1360, %v5002, %v4479
        %v5032 = vsel %vm1360, %v5004, %v4481
        %v5034 = vsel %vm1360, %v5006, %v4483
        %v5036 = vsel %vm1360, %v5008, %v4485
        %v5038 = vsel %vm1360, %v5010, %v4487
        %v5040 = vsel %vm1360, %v5012, %v4489
        %v5042 = vsel %vm1360, %v5014, %v4491
        %v5044 = vsel %vm1360, %v5016, %v4493
        %v5046 = vsel %vm1360, %v5018, %v4495
        %v5048 = vsel %vm1360, %v5020, %v4497
        %v5050 = vsel %vm1360, %v5022, %v4499
        %v5052 = vsel %vm1360, %v5024, %v4501
        %v5054 = vsel %vm1393, %v5026, %v4546
        %v5056 = vsel %vm1393, %v5028, %v4548
        %v5058 = vsel %vm1393, %v5030, %v4550
        %v5060 = vsel %vm1393, %v5032, %v4552
        %v5062 = vsel %vm1393, %v5034, %v4554
        %v5064 = vsel %vm1393, %v5036, %v4556
        %v5066 = vsel %vm1393, %v5038, %v4558
        %v5068 = vsel %vm1393, %v5040, %v4560
        %v5070 = vsel %vm1393, %v5042, %v4562
        %v5072 = vsel %vm1393, %v5044, %v4564
        %v5074 = vsel %vm1393, %v5046, %v4566
        %v5076 = vsel %vm1393, %v5048, %v4568
        %v5078 = vsel %vm1393, %v5050, %v4570
        %v5080 = vsel %vm1393, %v5052, %v4572
        %v5082 = vsel %vm1426, %v5054, %v4575
        %v5084 = vsel %vm1426, %v5056, %v4577
        %v5085 = vsel %vm1426, %v5058, %v4575
        %v5087 = vsel %vm1426, %v5056, %v4579
        %v5089 = vsel %vm1426, %v5054, %v4581
        %v5091 = vsel %vm1426, %v5060, %v4583
        %v5093 = vsel %vm1426, %v5062, %v4585
        %v5095 = vsel %vm1426, %v5064, %v4587
        %v5097 = vsel %vm1426, %v5066, %v4589
        %v5099 = vsel %vm1426, %v5068, %v4591
        %v5101 = vsel %vm1426, %v5070, %v4593
        %v5103 = vsel %vm1426, %v5072, %v4595
        %v5105 = vsel %vm1426, %v5074, %v4597
        %v5107 = vsel %vm1426, %v5076, %v4599
        %v5109 = vsel %vm1426, %v5078, %v4601
        %v5111 = vsel %vm1426, %v5080, %v4603
        %v5113 = vsel %vm1459, %v5082, %v4616
        %v5115 = vsel %vm1459, %v5084, %v4618
        %v5116 = vsel %vm1459, %v5085, %v4616
        %v5118 = vsel %vm1459, %v5087, %v4620
        %v5120 = vsel %vm1459, %v5089, %v4622
        %v5122 = vsel %vm1459, %v5091, %v4624
        %v5124 = vsel %vm1459, %v5093, %v4626
        %v5126 = vsel %vm1459, %v5095, %v4628
        %v5128 = vsel %vm1459, %v5097, %v4630
        %v5130 = vsel %vm1459, %v5099, %v4632
        %v5132 = vsel %vm1459, %v5101, %v4634
        %v5134 = vsel %vm1459, %v5103, %v4636
        %v5136 = vsel %vm1459, %v5105, %v4638
        %v5138 = vsel %vm1459, %v5107, %v4640
        %v5140 = vsel %vm1459, %v5109, %v4642
        %v5142 = vsel %vm1459, %v5111, %v4644
        %v5144 = vsel %vm1491, %v5113, %v4650
        %v5146 = vsel %vm1491, %v5115, %v4652
        %v5147 = vsel %vm1491, %v5116, %v4650
        %v5149 = vsel %vm1491, %v5118, %v4654
        %v5151 = vsel %vm1491, %v5120, %v4656
        %v5153 = vsel %vm1491, %v5122, %v4658
        %v5155 = vsel %vm1491, %v5124, %v4660
        %v5157 = vsel %vm1491, %v5126, %v4662
        %v5159 = vsel %vm1491, %v5128, %v4664
        %v5161 = vsel %vm1491, %v5130, %v4666
        %v5163 = vsel %vm1491, %v5132, %v4668
        %v5165 = vsel %vm1491, %v5134, %v4670
        %v5167 = vsel %vm1491, %v5136, %v4672
        %v5169 = vsel %vm1491, %v5138, %v4674
        %v5171 = vsel %vm1491, %v5140, %v4676
        %v5173 = vsel %vm1491, %v5142, %v4678
        %v5175 = vsel %vm1523, %v5144, %v4689
        %v5177 = vsel %vm1523, %v5146, %v4691
        %v5178 = vsel %vm1523, %v5147, %v4689
        %v5180 = vsel %vm1523, %v5149, %v4693
        %v5182 = vsel %vm1523, %v5151, %v4695
        %v5184 = vsel %vm1523, %v5153, %v4697
        %v5186 = vsel %vm1523, %v5155, %v4699
        %v5188 = vsel %vm1523, %v5157, %v4701
        %v5190 = vsel %vm1523, %v5159, %v4703
        %v5192 = vsel %vm1523, %v5161, %v4705
        %v5194 = vsel %vm1523, %v5163, %v4707
        %v5196 = vsel %vm1523, %v5165, %v4709
        %v5198 = vsel %vm1523, %v5167, %v4711
        %v5200 = vsel %vm1523, %v5169, %v4713
        %v5202 = vsel %vm1523, %v5171, %v4715
        %v5204 = vsel %vm1523, %v5173, %v4717
        %v5206 = vsel %vm1579, %v5175, %v4722
        %v5208 = vsel %vm1579, %v5177, %v4724
        %v5209 = vsel %vm1579, %v5178, %v4722
        %v5211 = vsel %vm1579, %v5180, %v4726
        %v5213 = vsel %vm1579, %v5182, %v4728
        %v5215 = vsel %vm1579, %v5184, %v4730
        %v5217 = vsel %vm1579, %v5186, %v4732
        %v5219 = vsel %vm1579, %v5188, %v4734
        %v5221 = vsel %vm1579, %v5190, %v4736
        %v5223 = vsel %vm1579, %v5192, %v4738
        %v5225 = vsel %vm1579, %v5194, %v4740
        %v5227 = vsel %vm1579, %v5196, %v4742
        %v5229 = vsel %vm1579, %v5198, %v4744
        %v5231 = vsel %vm1579, %v5200, %v4746
        %v5233 = vsel %vm1579, %v5202, %v4748
        %v5235 = vsel %vm1579, %v5204, %v4750
        %v5237 = vsel %vm3066, %v5206, %v4753
        %v5239 = vsel %vm3066, %v5208, %v4755
        %v5241 = vsel %vm3066, %v5209, %v4757
        %v5243 = vsel %vm3066, %v5211, %v4759
        %v5245 = vsel %vm3066, %v5213, %v4761
        %v5247 = vsel %vm3066, %v5215, %v4763
        %v5249 = vsel %vm3066, %v5217, %v4765
        %v5251 = vsel %vm3066, %v5219, %v4767
        %v5253 = vsel %vm3066, %v5221, %v4769
        %v5255 = vsel %vm3066, %v5223, %v4771
        %v5257 = vsel %vm3066, %v5225, %v4773
        %v5259 = vsel %vm3066, %v5227, %v4775
        %v5261 = vsel %vm3066, %v5229, %v4777
        %v5263 = vsel %vm3066, %v5231, %v4779
        %v5265 = vsel %vm3066, %v5233, %v4781
        %v5267 = vsel %vm3066, %v5235, %v4783
        %vm5268 = vcmask 359424
        %v5270 = vsel %vm5268, %v5237, %v4796
        %v5272 = vsel %vm5268, %v5239, %v4798
        %v5274 = vsel %vm5268, %v5241, %v4800
        %v5276 = vsel %vm5268, %v5243, %v4802
        %v5278 = vsel %vm5268, %v5245, %v4804
        %v5280 = vsel %vm5268, %v5247, %v4806
        %v5282 = vsel %vm5268, %v5249, %v4808
        %v5284 = vsel %vm5268, %v5251, %v4810
        %v5286 = vsel %vm5268, %v5253, %v4812
        %v5288 = vsel %vm5268, %v5255, %v4814
        %v5290 = vsel %vm5268, %v5257, %v4816
        %v5292 = vsel %vm5268, %v5259, %v4818
        %v5294 = vsel %vm5268, %v5261, %v4820
        %v5296 = vsel %vm5268, %v5263, %v4822
        %v5298 = vsel %vm5268, %v5265, %v4824
        %v5300 = vsel %vm5268, %v5267, %v4826
        %v5302 = vsel %vm3099, %v5270, %v4832
        %v5304 = vsel %vm3099, %v5272, %v4834
        %v5306 = vsel %vm3099, %v5274, %v4836
        %v5308 = vsel %vm3099, %v5276, %v4838
        %v5310 = vsel %vm3099, %v5278, %v4840
        %v5312 = vsel %vm3099, %v5280, %v4842
        %v5314 = vsel %vm3099, %v5282, %v4844
        %v5316 = vsel %vm3099, %v5284, %v4846
        %v5318 = vsel %vm3099, %v5286, %v4848
        %v5320 = vsel %vm3099, %v5288, %v4850
        %v5322 = vsel %vm3099, %v5290, %v4852
        %v5324 = vsel %vm3099, %v5292, %v4854
        %v5326 = vsel %vm3099, %v5294, %v4856
        %v5328 = vsel %vm3099, %v5296, %v4858
        %v5330 = vsel %vm3099, %v5298, %v4860
        %v5332 = vsel %vm3099, %v5300, %v4862
        %vm5333 = vcmask 424960
        %v5335 = vsel %vm5333, %v5302, %v4873
        %v5337 = vsel %vm5333, %v5304, %v4875
        %v5339 = vsel %vm5333, %v5306, %v4877
        %v5341 = vsel %vm5333, %v5308, %v4879
        %v5343 = vsel %vm5333, %v5310, %v4881
        %v5345 = vsel %vm5333, %v5312, %v4883
        %v5347 = vsel %vm5333, %v5314, %v4885
        %v5349 = vsel %vm5333, %v5316, %v4887
        %v5351 = vsel %vm5333, %v5318, %v4889
        %v5353 = vsel %vm5333, %v5320, %v4891
        %v5355 = vsel %vm5333, %v5322, %v4893
        %v5357 = vsel %vm5333, %v5324, %v4895
        %v5359 = vsel %vm5333, %v5326, %v4897
        %v5361 = vsel %vm5333, %v5328, %v4899
        %v5363 = vsel %vm5333, %v5330, %v4901
        %v5365 = vsel %vm5333, %v5332, %v4903
        %v5367 = vsel %vm3131, %v5335, %v4908
        %v5369 = vsel %vm3131, %v5337, %v4910
        %v5371 = vsel %vm3131, %v5339, %v4912
        %v5373 = vsel %vm3131, %v5341, %v4914
        %v5375 = vsel %vm3131, %v5343, %v4916
        %v5377 = vsel %vm3131, %v5345, %v4918
        %v5379 = vsel %vm3131, %v5347, %v4920
        %v5381 = vsel %vm3131, %v5349, %v4922
        %v5383 = vsel %vm3131, %v5351, %v4924
        %v5385 = vsel %vm3131, %v5353, %v4926
        %v5387 = vsel %vm3131, %v5355, %v4928
        %v5389 = vsel %vm3131, %v5357, %v4930
        %v5391 = vsel %vm3131, %v5359, %v4932
        %v5393 = vsel %vm3131, %v5361, %v4934
        %v5395 = vsel %vm3131, %v5363, %v4936
        %v5397 = vsel %vm3131, %v5365, %v4938
        %vm5398 = vcmask 490496
        %v5400 = vsel %vm5398, %v5367, %v4940
        %v5402 = vsel %vm5398, %v5369, %v4942
        %v5404 = vsel %vm5398, %v5371, %v4944
        %v5406 = vsel %vm5398, %v5373, %v4946
        %v5408 = vsel %vm5398, %v5375, %v4948
        %v5410 = vsel %vm5398, %v5377, %v4950
        %v5412 = vsel %vm5398, %v5379, %v4952
        %v5414 = vsel %vm5398, %v5381, %v4954
        %v5416 = vsel %vm5398, %v5383, %v4956
        %v5418 = vsel %vm5398, %v5385, %v4958
        %v5420 = vsel %vm5398, %v5387, %v4960
        %v5422 = vsel %vm5398, %v5389, %v4962
        %v5424 = vsel %vm5398, %v5391, %v4964
        %v5426 = vsel %vm5398, %v5393, %v4966
        %v5428 = vsel %vm5398, %v5395, %v4968
        %v5429 = vsel %vm5398, %v5397, %v4966
        %5430 = vrot.lane.b32.xlu0 %v4360, 4
        %v5431 = vpop.permute.xlu0 %5430
        %5432 = vrot.lane.b32.xlu0 %v4351, 4
        %v5433 = vpop.permute.xlu0 %5432
        %5434 = vrot.lane.b32.xlu0 %v4378, 4
        %v5435 = vpop.permute.xlu0 %5434
        %5436 = vrot.lane.b32.xlu0 %v4387, 4
        %v5437 = vpop.permute.xlu0 %5436
        %5438 = vrot.lane.b32.xlu0 %v4396, 4
        %v5439 = vpop.permute.xlu0 %5438
        %5440 = vrot.lane.b32.xlu0 %v4405, 4
        %v5441 = vpop.permute.xlu0 %5440
        %5442 = vrot.lane.b32.xlu0 %v4414, 4
        %v5443 = vpop.permute.xlu0 %5442
        %5444 = vrot.lane.b32.xlu0 %v4423, 4
        %v5445 = vpop.permute.xlu0 %5444
        %5446 = vrot.lane.b32.xlu0 %v4432, 4
        %v5447 = vpop.permute.xlu0 %5446
        %5448 = vrot.lane.b32.xlu0 %v4441, 4
        %v5449 = vpop.permute.xlu0 %5448
        %5450 = vrot.lane.b32.xlu0 %v4450, 4
        %v5451 = vpop.permute.xlu0 %5450
        %5452 = vrot.lane.b32.xlu0 %v4459, 4
        %v5453 = vpop.permute.xlu0 %5452
        %5454 = vrot.lane.b32.xlu0 %v4468, 4
        %v5455 = vpop.permute.xlu0 %5454
        %5456 = vrot.lane.b32.xlu0 %v4614, 4
        %v5457 = vpop.permute.xlu0 %5456
        %5458 = vrot.lane.b32.xlu0 %v4682, 4
        %v5459 = vpop.permute.xlu0 %5458
        %5460 = vrot.lane.b32.xlu0 %v4794, 4
        %v5461 = vpop.permute.xlu0 %5460
        %5462 = vrot.lane.b32.xlu0 %v4866, 4
        %v5463 = vpop.permute.xlu0 %5462
        %5464 = vrot.lane.b32.xlu0 %v4281, 8
        %v5465 = vpop.permute.xlu0 %5464
        %5466 = vrot.lane.b32.xlu0 %v4278, 8
        %v5467 = vpop.permute.xlu0 %5466
        %5468 = vrot.lane.b32.xlu0 %v4287, 8
        %v5469 = vpop.permute.xlu0 %5468
        %5470 = vrot.lane.b32.xlu0 %v4290, 8
        %v5471 = vpop.permute.xlu0 %5470
        %5472 = vrot.lane.b32.xlu0 %v4293, 8
        %v5473 = vpop.permute.xlu0 %5472
        %5474 = vrot.lane.b32.xlu0 %v4296, 8
        %v5475 = vpop.permute.xlu0 %5474
        %5476 = vrot.lane.b32.xlu0 %v4299, 8
        %v5477 = vpop.permute.xlu0 %5476
        %5478 = vrot.lane.b32.xlu0 %v4302, 8
        %v5479 = vpop.permute.xlu0 %5478
        %5480 = vrot.lane.b32.xlu0 %v4305, 8
        %v5481 = vpop.permute.xlu0 %5480
        %5482 = vrot.lane.b32.xlu0 %v4308, 8
        %v5483 = vpop.permute.xlu0 %5482
        %5484 = vrot.lane.b32.xlu0 %v4311, 8
        %v5485 = vpop.permute.xlu0 %5484
        %5486 = vrot.lane.b32.xlu0 %v4314, 8
        %v5487 = vpop.permute.xlu0 %5486
        %5488 = vrot.lane.b32.xlu0 %v4317, 8
        %v5489 = vpop.permute.xlu0 %5488
        %5490 = vrot.lane.b32.xlu0 %v4648, 8
        %v5491 = vpop.permute.xlu0 %5490
        %5492 = vrot.lane.b32.xlu0 %v4647, 8
        %v5493 = vpop.permute.xlu0 %5492
        %5494 = vrot.lane.b32.xlu0 %v4830, 8
        %v5495 = vpop.permute.xlu0 %5494
        %5496 = vrot.lane.b32.xlu0 %v4829, 8
        %v5497 = vpop.permute.xlu0 %5496
        %5498 = vrot.lane.b32.xlu0 %v4362, 12
        %v5499 = vpop.permute.xlu0 %5498
        %5500 = vrot.lane.b32.xlu0 %v4353, 12
        %v5501 = vpop.permute.xlu0 %5500
        %5502 = vrot.lane.b32.xlu0 %v4380, 12
        %v5503 = vpop.permute.xlu0 %5502
        %5504 = vrot.lane.b32.xlu0 %v4389, 12
        %v5505 = vpop.permute.xlu0 %5504
        %5506 = vrot.lane.b32.xlu0 %v4398, 12
        %v5507 = vpop.permute.xlu0 %5506
        %5508 = vrot.lane.b32.xlu0 %v4407, 12
        %v5509 = vpop.permute.xlu0 %5508
        %5510 = vrot.lane.b32.xlu0 %v4416, 12
        %v5511 = vpop.permute.xlu0 %5510
        %5512 = vrot.lane.b32.xlu0 %v4425, 12
        %v5513 = vpop.permute.xlu0 %5512
        %5514 = vrot.lane.b32.xlu0 %v4434, 12
        %v5515 = vpop.permute.xlu0 %5514
        %5516 = vrot.lane.b32.xlu0 %v4443, 12
        %v5517 = vpop.permute.xlu0 %5516
        %5518 = vrot.lane.b32.xlu0 %v4452, 12
        %v5519 = vpop.permute.xlu0 %5518
        %5520 = vrot.lane.b32.xlu0 %v4461, 12
        %v5521 = vpop.permute.xlu0 %5520
        %5522 = vrot.lane.b32.xlu0 %v4470, 12
        %v5523 = vpop.permute.xlu0 %5522
        %5524 = vrot.lane.b32.xlu0 %v4687, 12
        %v5525 = vpop.permute.xlu0 %5524
        %5526 = vrot.lane.b32.xlu0 %v4684, 12
        %v5527 = vpop.permute.xlu0 %5526
        %5528 = vrot.lane.b32.xlu0 %v4871, 12
        %v5529 = vpop.permute.xlu0 %5528
        %5530 = vrot.lane.b32.xlu0 %v4868, 12
        %v5531 = vpop.permute.xlu0 %5530
        %v5532 = vrot.slane %v4067, 7
        %v5533 = vor.u32 %v5532, %v4069
        %v5534 = vrot.slane %v4100, 7
        %v5535 = vor.u32 %v5534, %v4102
        %v5536 = vrot.slane %v4111, 7
        %v5537 = vor.u32 %v5536, %v4113
        %v5538 = vrot.slane %v4122, 7
        %v5539 = vor.u32 %v5538, %v4124
        %v5540 = vrot.slane %v4133, 7
        %v5541 = vor.u32 %v5540, %v4135
        %v5542 = vrot.slane %v4144, 7
        %v5543 = vor.u32 %v5542, %v4146
        %v5544 = vrot.slane %v4155, 7
        %v5545 = vor.u32 %v5544, %v4157
        %v5546 = vrot.slane %v4166, 7
        %v5547 = vor.u32 %v5546, %v4168
        %v5548 = vrot.slane %v4177, 7
        %v5549 = vor.u32 %v5548, %v4179
        %v5550 = vrot.slane %v4188, 7
        %v5551 = vor.u32 %v5550, %v4190
        %v5552 = vrot.slane %v4199, 7
        %v5553 = vor.u32 %v5552, %v4201
        %v5554 = vrot.slane %v4210, 7
        %v5555 = vor.u32 %v5554, %v4212
        %v5556 = vrot.slane %v4604, 7
        %v5557 = vor.u32 %v5556, %v4606
        %v5558 = vrot.slane %v4784, 7
        %v5559 = vor.u32 %v5558, %v4786
        %5560 = vrot.lane.b32.xlu0 %v5533, 16
        %v5561 = vpop.permute.xlu0 %5560
        %5562 = vrot.lane.b32.xlu0 %v5532, 16
        %v5563 = vpop.permute.xlu0 %5562
        %5564 = vrot.lane.b32.xlu0 %v5535, 16
        %v5565 = vpop.permute.xlu0 %5564
        %5566 = vrot.lane.b32.xlu0 %v5534, 16
        %v5567 = vpop.permute.xlu0 %5566
        %5568 = vrot.lane.b32.xlu0 %v5537, 16
        %v5569 = vpop.permute.xlu0 %5568
        %5570 = vrot.lane.b32.xlu0 %v5536, 16
        %v5571 = vpop.permute.xlu0 %5570
        %5572 = vrot.lane.b32.xlu0 %v5539, 16
        %v5573 = vpop.permute.xlu0 %5572
        %5574 = vrot.lane.b32.xlu0 %v5538, 16
        %v5575 = vpop.permute.xlu0 %5574
        %5576 = vrot.lane.b32.xlu0 %v5541, 16
        %v5577 = vpop.permute.xlu0 %5576
        %5578 = vrot.lane.b32.xlu0 %v5540, 16
        %v5579 = vpop.permute.xlu0 %5578
        %5580 = vrot.lane.b32.xlu0 %v5543, 16
        %v5581 = vpop.permute.xlu0 %5580
        %5582 = vrot.lane.b32.xlu0 %v5542, 16
        %v5583 = vpop.permute.xlu0 %5582
        %5584 = vrot.lane.b32.xlu0 %v5545, 16
        %v5585 = vpop.permute.xlu0 %5584
        %5586 = vrot.lane.b32.xlu0 %v5544, 16
        %v5587 = vpop.permute.xlu0 %5586
        %5588 = vrot.lane.b32.xlu0 %v5547, 16
        %v5589 = vpop.permute.xlu0 %5588
        %5590 = vrot.lane.b32.xlu0 %v5546, 16
        %v5591 = vpop.permute.xlu0 %5590
        %5592 = vrot.lane.b32.xlu0 %v5549, 16
        %v5593 = vpop.permute.xlu0 %5592
        %5594 = vrot.lane.b32.xlu0 %v5548, 16
        %v5595 = vpop.permute.xlu0 %5594
        %5596 = vrot.lane.b32.xlu0 %v5551, 16
        %v5597 = vpop.permute.xlu0 %5596
        %5598 = vrot.lane.b32.xlu0 %v5550, 16
        %v5599 = vpop.permute.xlu0 %5598
        %5600 = vrot.lane.b32.xlu0 %v5553, 16
        %v5601 = vpop.permute.xlu0 %5600
        %5602 = vrot.lane.b32.xlu0 %v5552, 16
        %v5603 = vpop.permute.xlu0 %5602
        %5604 = vrot.lane.b32.xlu0 %v5555, 16
        %v5605 = vpop.permute.xlu0 %5604
        %5606 = vrot.lane.b32.xlu0 %v5554, 16
        %v5607 = vpop.permute.xlu0 %5606
        %5608 = vrot.lane.b32.xlu0 %v5557, 16
        %v5609 = vpop.permute.xlu0 %5608
        %5610 = vrot.lane.b32.xlu0 %v5556, 16
        %v5611 = vpop.permute.xlu0 %5610
        %5612 = vrot.lane.b32.xlu0 %v5559, 16
        %v5613 = vpop.permute.xlu0 %5612
        %5614 = vrot.lane.b32.xlu0 %v5558, 16
        %v5615 = vpop.permute.xlu0 %5614
        %5616 = vrot.lane.b32.xlu0 %v4051, 20
        %v5617 = vpop.permute.xlu0 %5616
        %5618 = vrot.lane.b32.xlu0 %v4054, 20
        %v5619 = vpop.permute.xlu0 %5618
        %5620 = vrot.lane.b32.xlu0 %v4055, 20
        %v5621 = vpop.permute.xlu0 %5620
        %5622 = vrot.lane.b32.xlu0 %v4056, 20
        %v5623 = vpop.permute.xlu0 %5622
        %5624 = vrot.lane.b32.xlu0 %v4057, 20
        %v5625 = vpop.permute.xlu0 %5624
        %5626 = vrot.lane.b32.xlu0 %v4058, 20
        %v5627 = vpop.permute.xlu0 %5626
        %5628 = vrot.lane.b32.xlu0 %v4059, 20
        %v5629 = vpop.permute.xlu0 %5628
        %5630 = vrot.lane.b32.xlu0 %v4060, 20
        %v5631 = vpop.permute.xlu0 %5630
        %5632 = vrot.lane.b32.xlu0 %v4061, 20
        %v5633 = vpop.permute.xlu0 %5632
        %5634 = vrot.lane.b32.xlu0 %v4062, 20
        %v5635 = vpop.permute.xlu0 %5634
        %5636 = vrot.lane.b32.xlu0 %v4063, 20
        %v5637 = vpop.permute.xlu0 %5636
        %5638 = vrot.lane.b32.xlu0 %v4064, 20
        %v5639 = vpop.permute.xlu0 %5638
        %5640 = vrot.lane.b32.xlu0 %v4065, 20
        %v5641 = vpop.permute.xlu0 %5640
        %5642 = vrot.lane.b32.xlu0 %v3999, 20
        %v5643 = vpop.permute.xlu0 %5642
        %5644 = vrot.lane.b32.xlu0 %v4066, 20
        %v5645 = vpop.permute.xlu0 %5644
        %5646 = vrot.lane.b32.xlu0 %v4351, 24
        %v5647 = vpop.permute.xlu0 %5646
        %5648 = vrot.lane.b32.xlu0 %v4378, 24
        %v5649 = vpop.permute.xlu0 %5648
        %5650 = vrot.lane.b32.xlu0 %v4387, 24
        %v5651 = vpop.permute.xlu0 %5650
        %5652 = vrot.lane.b32.xlu0 %v4396, 24
        %v5653 = vpop.permute.xlu0 %5652
        %5654 = vrot.lane.b32.xlu0 %v4405, 24
        %v5655 = vpop.permute.xlu0 %5654
        %5656 = vrot.lane.b32.xlu0 %v4414, 24
        %v5657 = vpop.permute.xlu0 %5656
        %5658 = vrot.lane.b32.xlu0 %v4423, 24
        %v5659 = vpop.permute.xlu0 %5658
        %5660 = vrot.lane.b32.xlu0 %v4432, 24
        %v5661 = vpop.permute.xlu0 %5660
        %5662 = vrot.lane.b32.xlu0 %v4441, 24
        %v5663 = vpop.permute.xlu0 %5662
        %5664 = vrot.lane.b32.xlu0 %v4450, 24
        %v5665 = vpop.permute.xlu0 %5664
        %5666 = vrot.lane.b32.xlu0 %v4459, 24
        %v5667 = vpop.permute.xlu0 %5666
        %5668 = vrot.lane.b32.xlu0 %v4468, 24
        %v5669 = vpop.permute.xlu0 %5668
        %5670 = vrot.lane.b32.xlu0 %v4682, 24
        %v5671 = vpop.permute.xlu0 %5670
        %5672 = vrot.lane.b32.xlu0 %v4794, 24
        %v5673 = vpop.permute.xlu0 %5672
        %5674 = vrot.lane.b32.xlu0 %v4866, 24
        %v5675 = vpop.permute.xlu0 %5674
        %5676 = vrot.lane.b32.xlu0 %v4278, 28
        %v5677 = vpop.permute.xlu0 %5676
        %5678 = vrot.lane.b32.xlu0 %v4287, 28
        %v5679 = vpop.permute.xlu0 %5678
        %5680 = vrot.lane.b32.xlu0 %v4290, 28
        %v5681 = vpop.permute.xlu0 %5680
        %5682 = vrot.lane.b32.xlu0 %v4293, 28
        %v5683 = vpop.permute.xlu0 %5682
        %5684 = vrot.lane.b32.xlu0 %v4296, 28
        %v5685 = vpop.permute.xlu0 %5684
        %5686 = vrot.lane.b32.xlu0 %v4299, 28
        %v5687 = vpop.permute.xlu0 %5686
        %5688 = vrot.lane.b32.xlu0 %v4302, 28
        %v5689 = vpop.permute.xlu0 %5688
        %5690 = vrot.lane.b32.xlu0 %v4305, 28
        %v5691 = vpop.permute.xlu0 %5690
        %5692 = vrot.lane.b32.xlu0 %v4308, 28
        %v5693 = vpop.permute.xlu0 %5692
        %5694 = vrot.lane.b32.xlu0 %v4311, 28
        %v5695 = vpop.permute.xlu0 %5694
        %5696 = vrot.lane.b32.xlu0 %v4314, 28
        %v5697 = vpop.permute.xlu0 %5696
        %5698 = vrot.lane.b32.xlu0 %v4317, 28
        %v5699 = vpop.permute.xlu0 %5698
        %5700 = vrot.lane.b32.xlu0 %v4647, 28
        %v5701 = vpop.permute.xlu0 %5700
        %5702 = vrot.lane.b32.xlu0 %v4830, 28
        %v5703 = vpop.permute.xlu0 %5702
        %5704 = vrot.lane.b32.xlu0 %v4829, 28
        %v5705 = vpop.permute.xlu0 %5704
        %5706 = vrot.lane.b32.xlu0 %v4353, 32
        %v5707 = vpop.permute.xlu0 %5706
        %5708 = vrot.lane.b32.xlu0 %v4380, 32
        %v5709 = vpop.permute.xlu0 %5708
        %5710 = vrot.lane.b32.xlu0 %v4389, 32
        %v5711 = vpop.permute.xlu0 %5710
        %5712 = vrot.lane.b32.xlu0 %v4398, 32
        %v5713 = vpop.permute.xlu0 %5712
        %5714 = vrot.lane.b32.xlu0 %v4407, 32
        %v5715 = vpop.permute.xlu0 %5714
        %5716 = vrot.lane.b32.xlu0 %v4416, 32
        %v5717 = vpop.permute.xlu0 %5716
        %5718 = vrot.lane.b32.xlu0 %v4425, 32
        %v5719 = vpop.permute.xlu0 %5718
        %5720 = vrot.lane.b32.xlu0 %v4434, 32
        %v5721 = vpop.permute.xlu0 %5720
        %5722 = vrot.lane.b32.xlu0 %v4443, 32
        %v5723 = vpop.permute.xlu0 %5722
        %5724 = vrot.lane.b32.xlu0 %v4452, 32
        %v5725 = vpop.permute.xlu0 %5724
        %5726 = vrot.lane.b32.xlu0 %v4461, 32
        %v5727 = vpop.permute.xlu0 %5726
        %5728 = vrot.lane.b32.xlu0 %v4470, 32
        %v5729 = vpop.permute.xlu0 %5728
        %5730 = vrot.lane.b32.xlu0 %v4684, 32
        %v5731 = vpop.permute.xlu0 %5730
        %5732 = vrot.lane.b32.xlu0 %v4871, 32
        %v5733 = vpop.permute.xlu0 %5732
        %5734 = vrot.lane.b32.xlu0 %v4868, 32
        %v5735 = vpop.permute.xlu0 %5734
        %v5737 = vsel %vm1298, %v4052, %v5431
        %v5739 = vsel %vm1298, %v4051, %v5433
        %v5741 = vsel %vm1298, %v4054, %v5435
        %v5743 = vsel %vm1298, %v4055, %v5437
        %v5745 = vsel %vm1298, %v4056, %v5439
        %v5747 = vsel %vm1298, %v4057, %v5441
        %v5749 = vsel %vm1298, %v4058, %v5443
        %v5751 = vsel %vm1298, %v4059, %v5445
        %v5753 = vsel %vm1298, %v4060, %v5447
        %v5755 = vsel %vm1298, %v4061, %v5449
        %v5757 = vsel %vm1298, %v4062, %v5451
        %v5759 = vsel %vm1298, %v4063, %v5453
        %v5761 = vsel %vm1298, %v4064, %v5455
        %v5763 = vsel %vm1298, %v3996, %v5457
        %v5765 = vsel %vm1298, %v4065, %v5459
        %v5767 = vsel %vm1298, %v3999, %v5461
        %v5769 = vsel %vm1298, %v4066, %v5463
        %v5771 = vsel %vm1329, %v5737, %v5465
        %v5773 = vsel %vm1329, %v5739, %v5467
        %v5775 = vsel %vm1329, %v5741, %v5469
        %v5777 = vsel %vm1329, %v5743, %v5471
        %v5779 = vsel %vm1329, %v5745, %v5473
        %v5781 = vsel %vm1329, %v5747, %v5475
        %v5783 = vsel %vm1329, %v5749, %v5477
        %v5785 = vsel %vm1329, %v5751, %v5479
        %v5787 = vsel %vm1329, %v5753, %v5481
        %v5789 = vsel %vm1329, %v5755, %v5483
        %v5791 = vsel %vm1329, %v5757, %v5485
        %v5793 = vsel %vm1329, %v5759, %v5487
        %v5795 = vsel %vm1329, %v5761, %v5489
        %v5797 = vsel %vm1329, %v5763, %v5491
        %v5799 = vsel %vm1329, %v5765, %v5493
        %v5801 = vsel %vm1329, %v5767, %v5495
        %v5803 = vsel %vm1329, %v5769, %v5497
        %v5805 = vsel %vm1360, %v5771, %v5499
        %v5807 = vsel %vm1360, %v5773, %v5501
        %v5809 = vsel %vm1360, %v5775, %v5503
        %v5811 = vsel %vm1360, %v5777, %v5505
        %v5813 = vsel %vm1360, %v5779, %v5507
        %v5815 = vsel %vm1360, %v5781, %v5509
        %v5817 = vsel %vm1360, %v5783, %v5511
        %v5819 = vsel %vm1360, %v5785, %v5513
        %v5821 = vsel %vm1360, %v5787, %v5515
        %v5823 = vsel %vm1360, %v5789, %v5517
        %v5825 = vsel %vm1360, %v5791, %v5519
        %v5827 = vsel %vm1360, %v5793, %v5521
        %v5829 = vsel %vm1360, %v5795, %v5523
        %v5831 = vsel %vm1360, %v5797, %v5525
        %v5833 = vsel %vm1360, %v5799, %v5527
        %v5835 = vsel %vm1360, %v5801, %v5529
        %v5837 = vsel %vm1360, %v5803, %v5531
        %v5839 = vsel %vm1393, %v5028, %v5561
        %v5841 = vsel %vm1393, %v5805, %v5563
        %v5843 = vsel %vm1393, %v5026, %v5565
        %v5845 = vsel %vm1393, %v5807, %v5567
        %v5847 = vsel %vm1393, %v5032, %v5569
        %v5849 = vsel %vm1393, %v5809, %v5571
        %v5851 = vsel %vm1393, %v5034, %v5573
        %v5853 = vsel %vm1393, %v5811, %v5575
        %v5855 = vsel %vm1393, %v5036, %v5577
        %v5857 = vsel %vm1393, %v5813, %v5579
        %v5859 = vsel %vm1393, %v5038, %v5581
        %v5861 = vsel %vm1393, %v5815, %v5583
        %v5863 = vsel %vm1393, %v5040, %v5585
        %v5865 = vsel %vm1393, %v5817, %v5587
        %v5867 = vsel %vm1393, %v5042, %v5589
        %v5869 = vsel %vm1393, %v5819, %v5591
        %v5871 = vsel %vm1393, %v5044, %v5593
        %v5873 = vsel %vm1393, %v5821, %v5595
        %v5875 = vsel %vm1393, %v5046, %v5597
        %v5877 = vsel %vm1393, %v5823, %v5599
        %v5879 = vsel %vm1393, %v5048, %v5601
        %v5881 = vsel %vm1393, %v5825, %v5603
        %v5883 = vsel %vm1393, %v5050, %v5605
        %v5885 = vsel %vm1393, %v5827, %v5607
        %v5887 = vsel %vm1393, %v5052, %v5609
        %v5889 = vsel %vm1393, %v5829, %v5611
        %v5891 = vsel %vm1393, %v5831, %v5613
        %v5893 = vsel %vm1393, %v5833, %v5615
        %v5894 = vsel %vm1393, %v5835, %v5609
        %v5895 = vsel %vm1393, %v5837, %v5611
        %v5896 = vsel %vm1393, %v5831, %v5605
        %v5897 = vsel %vm1393, %v5833, %v5607
        %v5898 = vsel %vm1426, %v5839, %v4579
        %v5900 = vsel %vm1426, %v5841, %v5617
        %v5901 = vsel %vm1426, %v5843, %v4581
        %v5903 = vsel %vm1426, %v5845, %v5619
        %v5904 = vsel %vm1426, %v5847, %v4583
        %v5906 = vsel %vm1426, %v5849, %v5621
        %v5907 = vsel %vm1426, %v5851, %v4585
        %v5909 = vsel %vm1426, %v5853, %v5623
        %v5910 = vsel %vm1426, %v5855, %v4587
        %v5912 = vsel %vm1426, %v5857, %v5625
        %v5913 = vsel %vm1426, %v5859, %v4589
        %v5915 = vsel %vm1426, %v5861, %v5627
        %v5916 = vsel %vm1426, %v5863, %v4591
        %v5918 = vsel %vm1426, %v5865, %v5629
        %v5919 = vsel %vm1426, %v5867, %v4593
        %v5921 = vsel %vm1426, %v5869, %v5631
        %v5922 = vsel %vm1426, %v5871, %v4595
        %v5924 = vsel %vm1426, %v5873, %v5633
        %v5925 = vsel %vm1426, %v5875, %v4597
        %v5927 = vsel %vm1426, %v5877, %v5635
        %v5928 = vsel %vm1426, %v5879, %v4599
        %v5930 = vsel %vm1426, %v5881, %v5637
        %v5931 = vsel %vm1426, %v5883, %v4601
        %v5933 = vsel %vm1426, %v5885, %v5639
        %v5934 = vsel %vm1426, %v5887, %v4603
        %v5936 = vsel %vm1426, %v5889, %v5641
        %v5938 = vsel %vm1426, %v5891, %v5643
        %v5940 = vsel %vm1426, %v5893, %v5645
        %v5941 = vsel %vm1426, %v5894, %v4603
        %v5942 = vsel %vm1426, %v5895, %v5641
        %v5943 = vsel %vm1426, %v5896, %v4601
        %v5944 = vsel %vm1426, %v5897, %v5639
        %v5945 = vsel %vm1459, %v5898, %v4620
        %v5947 = vsel %vm1459, %v5900, %v5647
        %v5948 = vsel %vm1459, %v5901, %v4622
        %v5950 = vsel %vm1459, %v5903, %v5649
        %v5951 = vsel %vm1459, %v5904, %v4624
        %v5953 = vsel %vm1459, %v5906, %v5651
        %v5954 = vsel %vm1459, %v5907, %v4626
        %v5956 = vsel %vm1459, %v5909, %v5653
        %v5957 = vsel %vm1459, %v5910, %v4628
        %v5959 = vsel %vm1459, %v5912, %v5655
        %v5960 = vsel %vm1459, %v5913, %v4630
        %v5962 = vsel %vm1459, %v5915, %v5657
        %v5963 = vsel %vm1459, %v5916, %v4632
        %v5965 = vsel %vm1459, %v5918, %v5659
        %v5966 = vsel %vm1459, %v5919, %v4634
        %v5968 = vsel %vm1459, %v5921, %v5661
        %v5969 = vsel %vm1459, %v5922, %v4636
        %v5971 = vsel %vm1459, %v5924, %v5663
        %v5972 = vsel %vm1459, %v5925, %v4638
        %v5974 = vsel %vm1459, %v5927, %v5665
        %v5975 = vsel %vm1459, %v5928, %v4640
        %v5977 = vsel %vm1459, %v5930, %v5667
        %v5978 = vsel %vm1459, %v5931, %v4642
        %v5980 = vsel %vm1459, %v5933, %v5669
        %v5981 = vsel %vm1459, %v5934, %v4644
        %v5983 = vsel %vm1459, %v5936, %v5671
        %v5985 = vsel %vm1459, %v5938, %v5673
        %v5987 = vsel %vm1459, %v5940, %v5675
        %v5988 = vsel %vm1459, %v5941, %v4644
        %v5989 = vsel %vm1459, %v5942, %v5671
        %v5990 = vsel %vm1459, %v5943, %v4642
        %v5991 = vsel %vm1459, %v5944, %v5669
        %v5992 = vsel %vm1491, %v5945, %v4654
        %v5994 = vsel %vm1491, %v5947, %v5677
        %v5995 = vsel %vm1491, %v5948, %v4656
        %v5997 = vsel %vm1491, %v5950, %v5679
        %v5998 = vsel %vm1491, %v5951, %v4658
        %v6000 = vsel %vm1491, %v5953, %v5681
        %v6001 = vsel %vm1491, %v5954, %v4660
        %v6003 = vsel %vm1491, %v5956, %v5683
        %v6004 = vsel %vm1491, %v5957, %v4662
        %v6006 = vsel %vm1491, %v5959, %v5685
        %v6007 = vsel %vm1491, %v5960, %v4664
        %v6009 = vsel %vm1491, %v5962, %v5687
        %v6010 = vsel %vm1491, %v5963, %v4666
        %v6012 = vsel %vm1491, %v5965, %v5689
        %v6013 = vsel %vm1491, %v5966, %v4668
        %v6015 = vsel %vm1491, %v5968, %v5691
        %v6016 = vsel %vm1491, %v5969, %v4670
        %v6018 = vsel %vm1491, %v5971, %v5693
        %v6019 = vsel %vm1491, %v5972, %v4672
        %v6021 = vsel %vm1491, %v5974, %v5695
        %v6022 = vsel %vm1491, %v5975, %v4674
        %v6024 = vsel %vm1491, %v5977, %v5697
        %v6025 = vsel %vm1491, %v5978, %v4676
        %v6027 = vsel %vm1491, %v5980, %v5699
        %v6028 = vsel %vm1491, %v5981, %v4678
        %v6030 = vsel %vm1491, %v5983, %v5701
        %v6032 = vsel %vm1491, %v5985, %v5703
        %v6034 = vsel %vm1491, %v5987, %v5705
        %v6035 = vsel %vm1491, %v5988, %v4678
        %v6036 = vsel %vm1491, %v5989, %v5701
        %v6037 = vsel %vm1491, %v5990, %v4676
        %v6038 = vsel %vm1491, %v5991, %v5699
        %v6039 = vsel %vm1523, %v5992, %v4693
        %v6041 = vsel %vm1523, %v5994, %v5707
        %v6042 = vsel %vm1523, %v5995, %v4695
        %v6044 = vsel %vm1523, %v5997, %v5709
        %v6045 = vsel %vm1523, %v5998, %v4697
        %v6047 = vsel %vm1523, %v6000, %v5711
        %v6048 = vsel %vm1523, %v6001, %v4699
        %v6050 = vsel %vm1523, %v6003, %v5713
        %v6051 = vsel %vm1523, %v6004, %v4701
        %v6053 = vsel %vm1523, %v6006, %v5715
        %v6054 = vsel %vm1523, %v6007, %v4703
        %v6056 = vsel %vm1523, %v6009, %v5717
        %v6057 = vsel %vm1523, %v6010, %v4705
        %v6059 = vsel %vm1523, %v6012, %v5719
        %v6060 = vsel %vm1523, %v6013, %v4707
        %v6062 = vsel %vm1523, %v6015, %v5721
        %v6063 = vsel %vm1523, %v6016, %v4709
        %v6065 = vsel %vm1523, %v6018, %v5723
        %v6066 = vsel %vm1523, %v6019, %v4711
        %v6068 = vsel %vm1523, %v6021, %v5725
        %v6069 = vsel %vm1523, %v6022, %v4713
        %v6071 = vsel %vm1523, %v6024, %v5727
        %v6072 = vsel %vm1523, %v6025, %v4715
        %v6074 = vsel %vm1523, %v6027, %v5729
        %v6075 = vsel %vm1523, %v6028, %v4717
        %v6077 = vsel %vm1523, %v6030, %v5731
        %v6079 = vsel %vm1523, %v6032, %v5733
        %v6081 = vsel %vm1523, %v6034, %v5735
        %v6082 = vsel %vm1523, %v6035, %v4717
        %v6083 = vsel %vm1523, %v6036, %v5731
        %v6084 = vsel %vm1523, %v6037, %v4715
        %v6085 = vsel %vm1523, %v6038, %v5729
        %v6086 = vshrl.u32 %v6039, 16
        %v6088 = vshll.u32 %v6039, 16
        %v6090 = vrot.slane %v6088, 1
        %v6091 = vor.u32 %v6086, %v6090
        %v6092 = vshll.u32 %v6041, 16
        %v6094 = vrot.slane %v6092, 1
        %v6095 = vsel %vm778, %v6091, %v6094
        %v6096 = vshrl.u32 %v6042, 16
        %v6098 = vshll.u32 %v6042, 16
        %v6100 = vrot.slane %v6098, 1
        %v6101 = vor.u32 %v6096, %v6100
        %v6102 = vshll.u32 %v6044, 16
        %v6104 = vrot.slane %v6102, 1
        %v6105 = vsel %vm778, %v6101, %v6104
        %v6106 = vshrl.u32 %v6045, 16
        %v6108 = vshll.u32 %v6045, 16
        %v6110 = vrot.slane %v6108, 1
        %v6111 = vor.u32 %v6106, %v6110
        %v6112 = vshll.u32 %v6047, 16
        %v6114 = vrot.slane %v6112, 1
        %v6115 = vsel %vm778, %v6111, %v6114
        %v6116 = vshrl.u32 %v6048, 16
        %v6118 = vshll.u32 %v6048, 16
        %v6120 = vrot.slane %v6118, 1
        %v6121 = vor.u32 %v6116, %v6120
        %v6122 = vshll.u32 %v6050, 16
        %v6124 = vrot.slane %v6122, 1
        %v6125 = vsel %vm778, %v6121, %v6124
        %v6126 = vshrl.u32 %v6051, 16
        %v6128 = vshll.u32 %v6051, 16
        %v6130 = vrot.slane %v6128, 1
        %v6131 = vor.u32 %v6126, %v6130
        %v6132 = vshll.u32 %v6053, 16
        %v6134 = vrot.slane %v6132, 1
        %v6135 = vsel %vm778, %v6131, %v6134
        %v6136 = vshrl.u32 %v6054, 16
        %v6138 = vshll.u32 %v6054, 16
        %v6140 = vrot.slane %v6138, 1
        %v6141 = vor.u32 %v6136, %v6140
        %v6142 = vshll.u32 %v6056, 16
        %v6144 = vrot.slane %v6142, 1
        %v6145 = vsel %vm778, %v6141, %v6144
        %v6146 = vshrl.u32 %v6057, 16
        %v6148 = vshll.u32 %v6057, 16
        %v6150 = vrot.slane %v6148, 1
        %v6151 = vor.u32 %v6146, %v6150
        %v6152 = vshll.u32 %v6059, 16
        %v6154 = vrot.slane %v6152, 1
        %v6155 = vsel %vm778, %v6151, %v6154
        %v6156 = vshrl.u32 %v6060, 16
        %v6158 = vshll.u32 %v6060, 16
        %v6160 = vrot.slane %v6158, 1
        %v6161 = vor.u32 %v6156, %v6160
        %v6162 = vshll.u32 %v6062, 16
        %v6164 = vrot.slane %v6162, 1
        %v6165 = vsel %vm778, %v6161, %v6164
        %v6166 = vshrl.u32 %v6063, 16
        %v6168 = vshll.u32 %v6063, 16
        %v6170 = vrot.slane %v6168, 1
        %v6171 = vor.u32 %v6166, %v6170
        %v6172 = vshll.u32 %v6065, 16
        %v6174 = vrot.slane %v6172, 1
        %v6175 = vsel %vm778, %v6171, %v6174
        %v6176 = vshrl.u32 %v6066, 16
        %v6178 = vshll.u32 %v6066, 16
        %v6180 = vrot.slane %v6178, 1
        %v6181 = vor.u32 %v6176, %v6180
        %v6182 = vshll.u32 %v6068, 16
        %v6184 = vrot.slane %v6182, 1
        %v6185 = vsel %vm778, %v6181, %v6184
        %v6186 = vshrl.u32 %v6069, 16
        %v6188 = vshll.u32 %v6069, 16
        %v6190 = vrot.slane %v6188, 1
        %v6191 = vor.u32 %v6186, %v6190
        %v6192 = vshll.u32 %v6071, 16
        %v6194 = vrot.slane %v6192, 1
        %v6195 = vsel %vm778, %v6191, %v6194
        %v6196 = vshrl.u32 %v6072, 16
        %v6198 = vshll.u32 %v6072, 16
        %v6200 = vrot.slane %v6198, 1
        %v6201 = vor.u32 %v6196, %v6200
        %v6202 = vshll.u32 %v6074, 16
        %v6204 = vrot.slane %v6202, 1
        %v6205 = vsel %vm778, %v6201, %v6204
        %v6206 = vshrl.u32 %v6075, 16
        %v6208 = vshll.u32 %v6075, 16
        %v6210 = vrot.slane %v6208, 1
        %v6211 = vor.u32 %v6206, %v6210
        %v6212 = vshll.u32 %v6077, 16
        %v6214 = vrot.slane %v6212, 1
        %v6215 = vsel %vm778, %v6211, %v6214
        %v6216 = vshrl.u32 %v6079, 16
        %v6218 = vshll.u32 %v6079, 16
        %v6220 = vrot.slane %v6218, 1
        %v6221 = vor.u32 %v6216, %v6220
        %v6222 = vshll.u32 %v6081, 16
        %v6224 = vrot.slane %v6222, 1
        %v6225 = vsel %vm778, %v6221, %v6224
        %v6226 = vshrl.u32 %v6082, 16
        %v6228 = vshll.u32 %v6082, 16
        %v6230 = vrot.slane %v6228, 1
        %v6231 = vor.u32 %v6226, %v6230
        %v6232 = vshll.u32 %v6083, 16
        %v6234 = vrot.slane %v6232, 1
        %v6235 = vsel %vm778, %v6231, %v6234
        %v6236 = vshrl.u32 %v6084, 16
        %v6238 = vshll.u32 %v6084, 16
        %v6240 = vrot.slane %v6238, 1
        %v6241 = vor.u32 %v6236, %v6240
        %v6242 = vshll.u32 %v6085, 16
        %v6244 = vrot.slane %v6242, 1
        %v6245 = vsel %vm778, %v6241, %v6244
        %6246 = vrot.lane.b32.xlu0 %v6095, 64
        %v6247 = vpop.permute.xlu0 %6246
        %6248 = vrot.lane.b32.xlu0 %v6105, 64
        %v6249 = vpop.permute.xlu0 %6248
        %6250 = vrot.lane.b32.xlu0 %v6115, 64
        %v6251 = vpop.permute.xlu0 %6250
        %6252 = vrot.lane.b32.xlu0 %v6125, 64
        %v6253 = vpop.permute.xlu0 %6252
        %6254 = vrot.lane.b32.xlu0 %v6135, 64
        %v6255 = vpop.permute.xlu0 %6254
        %6256 = vrot.lane.b32.xlu0 %v6145, 64
        %v6257 = vpop.permute.xlu0 %6256
        %6258 = vrot.lane.b32.xlu0 %v6155, 64
        %v6259 = vpop.permute.xlu0 %6258
        %6260 = vrot.lane.b32.xlu0 %v6165, 64
        %v6261 = vpop.permute.xlu0 %6260
        %6262 = vrot.lane.b32.xlu0 %v6175, 64
        %v6263 = vpop.permute.xlu0 %6262
        %6264 = vrot.lane.b32.xlu0 %v6185, 64
        %v6265 = vpop.permute.xlu0 %6264
        %6266 = vrot.lane.b32.xlu0 %v6195, 64
        %v6267 = vpop.permute.xlu0 %6266
        %6268 = vrot.lane.b32.xlu0 %v6205, 64
        %v6269 = vpop.permute.xlu0 %6268
        %6270 = vrot.lane.b32.xlu0 %v6215, 64
        %v6271 = vpop.permute.xlu0 %6270
        %6272 = vrot.lane.b32.xlu0 %v6225, 64
        %v6273 = vpop.permute.xlu0 %6272
        %6274 = vrot.lane.b32.xlu0 %v6235, 64
        %v6275 = vpop.permute.xlu0 %6274
        %6276 = vrot.lane.b32.xlu0 %v6245, 64
        %v6277 = vpop.permute.xlu0 %6276
        %v6279 = vsel %vm3163, %v5400, %v6247
        %v6281 = vsel %vm3163, %v5402, %v6249
        %v6283 = vsel %vm3163, %v5404, %v6251
        %v6285 = vsel %vm3163, %v5406, %v6253
        %v6287 = vsel %vm3163, %v5408, %v6255
        %v6289 = vsel %vm3163, %v5410, %v6257
        %v6291 = vsel %vm3163, %v5412, %v6259
        %v6293 = vsel %vm3163, %v5414, %v6261
        %v6295 = vsel %vm3163, %v5416, %v6263
        %v6297 = vsel %vm3163, %v5418, %v6265
        %v6299 = vsel %vm3163, %v5420, %v6267
        %v6301 = vsel %vm3163, %v5422, %v6269
        %v6303 = vsel %vm3163, %v5424, %v6271
        %v6305 = vsel %vm3163, %v5426, %v6273
        %v6307 = vsel %vm3163, %v5428, %v6275
        %v6309 = vsel %vm3163, %v5429, %v6277
        %v6310 = vld [vmem:[%s3] sm:$0xf]
        %v6311 = vld [vmem:[%s3 + $0x4] sm:$0xf]
        %v6312 = vld [vmem:[%s3 + $0x8] sm:$0xf]
        %v6313 = vld [vmem:[%s3 + $0xc] sm:$0xf]
        %v6314 = vld [vmem:[%s3 + $0x10] sm:$0xf]
        %v6315 = vld [vmem:[%s3 + $0x14] sm:$0xf]
        %v6316 = vld [vmem:[%s3 + $0x18] sm:$0xf]
        %v6317 = vld [vmem:[%s3 + $0x1c] sm:$0xf]
        %v6318 = vld [vmem:[%s3 + $0x20] sm:$0xf]
        %v6319 = vld [vmem:[%s3 + $0x24] sm:$0xf]
        %v6320 = vld [vmem:[%s3 + $0x28] sm:$0xf]
        %v6321 = vld [vmem:[%s3 + $0x2c] sm:$0xf]
        %v6322 = vld [vmem:[%s3 + $0x30] sm:$0x3]
        %v6323 = vlaneseq
        %v6324 = vshrl.u32 %v6323, 7
        %v6325 = vsub.s32 0, %v6324
        %v6326 = vrot.slane %v338, %v6325
        %v6340 = vunpack.c.l.b16 %v6310
        %v6341 = vunpack.c.l.b16 %v6311
        %v6342 = vunpack.c.l.b16 %v6312
        %v6343 = vunpack.c.l.b16 %v6313
        %v6344 = vunpack.c.l.b16 %v6314
        %v6345 = vunpack.c.l.b16 %v6315
        %v6346 = vunpack.c.l.b16 %v6316
        %v6347 = vunpack.c.l.b16 %v6317
        %v6348 = vunpack.c.l.b16 %v6318
        %v6349 = vunpack.c.l.b16 %v6319
        %v6350 = vunpack.c.l.b16 %v6320
        %v6351 = vunpack.c.l.b16 %v6321
        %v6352 = vunpack.c.l.b16 %v6322
        %v6353 = vpack.c.b16 %v6341, %v6340
        %v6354 = vpack.c.b16 %v6343, %v6342
        %v6355 = vpack.c.b16 %v6345, %v6344
        %v6356 = vpack.c.b16 %v6347, %v6346
        %v6357 = vpack.c.b16 %v6349, %v6348
        %v6358 = vpack.c.b16 %v6351, %v6350
        %v6359 = vpack.c.b16 %v6352, %v6352
        %vm6366 = vcmask 818176
        %v6367 = vsel %vm6366, %v6279, 0
        %v6369 = vsel %vm6366, %v6281, 0
        %v6371 = vsel %vm6366, %v6283, 0
        %v6373 = vsel %vm6366, %v6285, 0
        %v6375 = vsel %vm6366, %v6287, 0
        %v6377 = vsel %vm6366, %v6289, 0
        %v6379 = vsel %vm6366, %v6291, 0
        %v6381 = vsel %vm6366, %v6293, 0
        %v6383 = vsel %vm6366, %v6295, 0
        %v6385 = vsel %vm6366, %v6297, 0
        %v6387 = vsel %vm6366, %v6299, 0
        %v6389 = vsel %vm6366, %v6301, 0
        %v6391 = vsel %vm6366, %v6303, 0
        %v6393 = vsel %vm6366, %v6305, 0
        %v6395 = vsel %vm6366, %v6307, 0
        %v6397 = vsel %vm6366, %v6309, 0
        %v6400 = vsel %vm1612, %v6359, 0
        %6402 = vmatprep.subr.bf16.mxu0 0
        %6403 = vmatpush1.bf16.msra.mxu0 %v6353
        %6404 = vmatprep.subr.bf16.mxu0 0
        %6405 = vmatpush1.bf16.msra.mxu0 %v6354
        %6406 = vmatprep.subr.bf16.mxu0 0
        %6407 = vmatpush1.bf16.msra.mxu0 %v6355
        %6408 = vmatprep.subr.bf16.mxu0 0
        %6409 = vmatpush1.bf16.msra.mxu0 %v6356
        %6410 = vmatprep.subr.bf16.mxu0 0
        %6411 = vmatpush1.bf16.msra.mxu0 %v6357
        %6412 = vmatprep.subr.bf16.mxu0 0
        %6413 = vmatpush1.bf16.msra.mxu0 %v6358
        %6414 = vmatprep.subr.bf16.mxu0 0
        %6415 = vmatpush1.bf16.msra.mxu0 %v6400
        %6416 = vmatprep.subr.bf16.mxu0 0
        %6417 = vmatpush1.bf16.msra.mxu0 0
        %6418 = vmatprep.subr.bf16.mxu0 0
        %6419 = vmatpush1.bf16.msra.mxu0 0
        %6420 = vmatprep.subr.bf16.mxu0 0
        %6421 = vmatpush1.bf16.msra.mxu0 0
        %6422 = vmatprep.subr.bf16.mxu0 0
        %6423 = vmatpush1.bf16.msra.mxu0 0
        %6424 = vmatprep.subr.bf16.mxu0 0
        %6425 = vmatpush1.bf16.msra.mxu0 0
        %6426 = vmatprep.subr.bf16.mxu0 0
        %6427 = vmatpush1.bf16.msra.mxu0 0
        %6428 = vmatprep.subr.bf16.mxu0 0
        %6429 = vmatpush1.bf16.msra.mxu0 0
        %6430 = vmatprep.subr.bf16.mxu0 0
        %6431 = vmatpush1.bf16.msra.mxu0 0
        %6432 = vmatprep.subr.bf16.mxu0 0
        %6433 = vmatpush1.bf16.msra.mxu0 0
        %6434 = vmatprep.mubr.bf16.mxu0 0
        %6435 = vmatmul.mubr.bf16.gmra.mrb[0].mxu0 %v6367
        %v6436 = vpop.f32.mrb[0].mxu0
        %v6437 = vadd.f32 %v6326, %v6436
        %v6438 = vpop.f32.mrb[0].mxu0
        %v6439 = vpop.f32.mrb[0].mxu0
        %v6440 = vadd.f32 %v6326, %v6439
        %v6441 = vpop.f32.mrb[0].mxu0
        %6442 = vmatprep.mubr.bf16.mxu0 0
        %6443 = vmatmul.mubr.bf16.gmra.mrb[0].mxu0 %v6369
        %v6444 = vpop.f32.mrb[0].mxu0
        %v6445 = vadd.f32 %v6326, %v6444
        %v6446 = vpop.f32.mrb[0].mxu0
        %v6447 = vpop.f32.mrb[0].mxu0
        %v6448 = vadd.f32 %v6326, %v6447
        %v6449 = vpop.f32.mrb[0].mxu0
        %6450 = vmatprep.mubr.bf16.mxu0 0
        %6451 = vmatmul.mubr.bf16.gmra.mrb[0].mxu0 %v6371
        %v6452 = vpop.f32.mrb[0].mxu0
        %v6453 = vadd.f32 %v6326, %v6452
        %v6454 = vpop.f32.mrb[0].mxu0
        %v6455 = vpop.f32.mrb[0].mxu0
        %v6456 = vadd.f32 %v6326, %v6455
        %v6457 = vpop.f32.mrb[0].mxu0
        %6458 = vmatprep.mubr.bf16.mxu0 0
        %6459 = vmatmul.mubr.bf16.gmra.mrb[0].mxu0 %v6373
        %v6460 = vpop.f32.mrb[0].mxu0
        %v6461 = vadd.f32 %v6326, %v6460
        %v6462 = vpop.f32.mrb[0].mxu0
        %v6463 = vpop.f32.mrb[0].mxu0
        %v6464 = vadd.f32 %v6326, %v6463
        %v6465 = vpop.f32.mrb[0].mxu0
        %6466 = vmatprep.mubr.bf16.mxu0 0
        %6467 = vmatmul.mubr.bf16.gmra.mrb[0].mxu0 %v6375
        %v6468 = vpop.f32.mrb[0].mxu0
        %v6469 = vadd.f32 %v6326, %v6468
        %v6470 = vpop.f32.mrb[0].mxu0
        %v6471 = vpop.f32.mrb[0].mxu0
        %v6472 = vadd.f32 %v6326, %v6471
        %v6473 = vpop.f32.mrb[0].mxu0
        %6474 = vmatprep.mubr.bf16.mxu0 0
        %6475 = vmatmul.mubr.bf16.gmra.mrb[0].mxu0 %v6377
        %v6476 = vpop.f32.mrb[0].mxu0
        %v6477 = vadd.f32 %v6326, %v6476
        %v6478 = vpop.f32.mrb[0].mxu0
        %v6479 = vpop.f32.mrb[0].mxu0
        %v6480 = vadd.f32 %v6326, %v6479
        %v6481 = vpop.f32.mrb[0].mxu0
        %6482 = vmatprep.mubr.bf16.mxu0 0
        %6483 = vmatmul.mubr.bf16.gmra.mrb[0].mxu0 %v6379
        %v6484 = vpop.f32.mrb[0].mxu0
        %v6485 = vadd.f32 %v6326, %v6484
        %v6486 = vpop.f32.mrb[0].mxu0
        %v6487 = vpop.f32.mrb[0].mxu0
        %v6488 = vadd.f32 %v6326, %v6487
        %v6489 = vpop.f32.mrb[0].mxu0
        %6490 = vmatprep.mubr.bf16.mxu0 0
        %6491 = vmatmul.mubr.bf16.gmra.mrb[0].mxu0 %v6381
        %v6492 = vpop.f32.mrb[0].mxu0
        %v6493 = vadd.f32 %v6326, %v6492
        %v6494 = vpop.f32.mrb[0].mxu0
        %v6495 = vpop.f32.mrb[0].mxu0
        %v6496 = vadd.f32 %v6326, %v6495
        %v6497 = vpop.f32.mrb[0].mxu0
        %6498 = vmatprep.mubr.bf16.mxu0 0
        %6499 = vmatmul.mubr.bf16.gmra.mrb[0].mxu0 %v6383
        %v6500 = vpop.f32.mrb[0].mxu0
        %v6501 = vadd.f32 %v6326, %v6500
        %v6502 = vpop.f32.mrb[0].mxu0
        %v6503 = vpop.f32.mrb[0].mxu0
        %v6504 = vadd.f32 %v6326, %v6503
        %v6505 = vpop.f32.mrb[0].mxu0
        %6506 = vmatprep.mubr.bf16.mxu0 0
        %6507 = vmatmul.mubr.bf16.gmra.mrb[0].mxu0 %v6385
        %v6508 = vpop.f32.mrb[0].mxu0
        %v6509 = vadd.f32 %v6326, %v6508
        %v6510 = vpop.f32.mrb[0].mxu0
        %v6511 = vpop.f32.mrb[0].mxu0
        %v6512 = vadd.f32 %v6326, %v6511
        %v6513 = vpop.f32.mrb[0].mxu0
        %6514 = vmatprep.mubr.bf16.mxu0 0
        %6515 = vmatmul.mubr.bf16.gmra.mrb[0].mxu0 %v6387
        %v6516 = vpop.f32.mrb[0].mxu0
        %v6517 = vadd.f32 %v6326, %v6516
        %v6518 = vpop.f32.mrb[0].mxu0
        %v6519 = vpop.f32.mrb[0].mxu0
        %v6520 = vadd.f32 %v6326, %v6519
        %v6521 = vpop.f32.mrb[0].mxu0
        %6522 = vmatprep.mubr.bf16.mxu0 0
        %6523 = vmatmul.mubr.bf16.gmra.mrb[0].mxu0 %v6389
        %v6524 = vpop.f32.mrb[0].mxu0
        %v6525 = vadd.f32 %v6326, %v6524
        %v6526 = vpop.f32.mrb[0].mxu0
        %v6527 = vpop.f32.mrb[0].mxu0
        %v6528 = vadd.f32 %v6326, %v6527
        %v6529 = vpop.f32.mrb[0].mxu0
        %6530 = vmatprep.mubr.bf16.mxu0 0
        %6531 = vmatmul.mubr.bf16.gmra.mrb[0].mxu0 %v6391
        %v6532 = vpop.f32.mrb[0].mxu0
        %v6533 = vadd.f32 %v6326, %v6532
        %v6534 = vpop.f32.mrb[0].mxu0
        %v6535 = vpop.f32.mrb[0].mxu0
        %v6536 = vadd.f32 %v6326, %v6535
        %v6537 = vpop.f32.mrb[0].mxu0
        %6538 = vmatprep.mubr.bf16.mxu0 0
        %6539 = vmatmul.mubr.bf16.gmra.mrb[0].mxu0 %v6393
        %v6540 = vpop.f32.mrb[0].mxu0
        %v6541 = vadd.f32 %v6326, %v6540
        %v6542 = vpop.f32.mrb[0].mxu0
        %v6543 = vpop.f32.mrb[0].mxu0
        %v6544 = vadd.f32 %v6326, %v6543
        %v6545 = vpop.f32.mrb[0].mxu0
        %6546 = vmatprep.mubr.bf16.mxu0 0
        %6547 = vmatmul.mubr.bf16.gmra.mrb[0].mxu0 %v6395
        %v6548 = vpop.f32.mrb[0].mxu0
        %v6549 = vadd.f32 %v6326, %v6548
        %v6550 = vpop.f32.mrb[0].mxu0
        %v6551 = vpop.f32.mrb[0].mxu0
        %v6552 = vadd.f32 %v6326, %v6551
        %v6553 = vpop.f32.mrb[0].mxu0
        %6554 = vmatprep.mubr.bf16.mxu0 0
        %6555 = vmatmul.mubr.bf16.gmra.mrb[0].mxu0 %v6397
        %v6556 = vpop.f32.mrb[0].mxu0
        %v6557 = vadd.f32 %v6326, %v6556
        %v6558 = vpop.f32.mrb[0].mxu0
        %v6559 = vpop.f32.mrb[0].mxu0
        %v6560 = vadd.f32 %v6326, %v6559
        %v6561 = vpop.f32.mrb[0].mxu0
        %6562 = vdwg.mxu0
        %v6563 = vsel %vm1329, %v6437, 0.0
        %v6564 = vsel %vm1329, %v6440, 0.0
        %v6565 = vadd.f32 %v6563, %v6564
        %v6566 = vsel %vm1329, %v6445, 0.0
        %v6567 = vadd.f32 %v6565, %v6566
        %v6568 = vsel %vm1329, %v6448, 0.0
        %v6569 = vadd.f32 %v6567, %v6568
        %v6570 = vsel %vm1329, %v6453, 0.0
        %v6571 = vadd.f32 %v6569, %v6570
        %v6572 = vsel %vm1329, %v6456, 0.0
        %v6573 = vadd.f32 %v6571, %v6572
        %v6574 = vsel %vm1329, %v6461, 0.0
        %v6575 = vadd.f32 %v6573, %v6574
        %v6576 = vsel %vm1329, %v6464, 0.0
        %v6577 = vadd.f32 %v6575, %v6576
        %v6578 = vsel %vm1329, %v6469, 0.0
        %v6579 = vadd.f32 %v6577, %v6578
        %v6580 = vsel %vm1329, %v6472, 0.0
        %v6581 = vadd.f32 %v6579, %v6580
        %v6582 = vsel %vm1329, %v6477, 0.0
        %v6583 = vadd.f32 %v6581, %v6582
        %v6584 = vsel %vm1329, %v6480, 0.0
        %v6585 = vadd.f32 %v6583, %v6584
        %v6586 = vsel %vm1329, %v6485, 0.0
        %v6587 = vadd.f32 %v6585, %v6586
        %v6588 = vsel %vm1329, %v6488, 0.0
        %v6589 = vadd.f32 %v6587, %v6588
        %v6590 = vsel %vm1329, %v6493, 0.0
        %v6591 = vadd.f32 %v6589, %v6590
        %v6592 = vsel %vm1329, %v6496, 0.0
        %v6593 = vadd.f32 %v6591, %v6592
        %v6594 = vsel %vm1329, %v6501, 0.0
        %v6595 = vadd.f32 %v6593, %v6594
        %v6596 = vsel %vm1329, %v6504, 0.0
        %v6597 = vadd.f32 %v6595, %v6596
        %v6598 = vsel %vm1329, %v6509, 0.0
        %v6599 = vadd.f32 %v6597, %v6598
        %v6600 = vsel %vm1329, %v6512, 0.0
        %v6601 = vadd.f32 %v6599, %v6600
        %v6602 = vsel %vm1329, %v6517, 0.0
        %v6603 = vadd.f32 %v6601, %v6602
        %v6604 = vsel %vm1329, %v6520, 0.0
        %v6605 = vadd.f32 %v6603, %v6604
        %v6606 = vsel %vm1329, %v6525, 0.0
        %v6607 = vadd.f32 %v6605, %v6606
        %v6608 = vsel %vm1329, %v6528, 0.0
        %v6609 = vadd.f32 %v6607, %v6608
        %v6610 = vsel %vm1329, %v6533, 0.0
        %v6611 = vadd.f32 %v6609, %v6610
        %v6612 = vsel %vm1329, %v6536, 0.0
        %v6613 = vadd.f32 %v6611, %v6612
        %v6614 = vsel %vm1329, %v6541, 0.0
        %v6615 = vadd.f32 %v6613, %v6614
        %v6616 = vsel %vm1329, %v6544, 0.0
        %v6617 = vadd.f32 %v6615, %v6616
        %v6618 = vsel %vm1329, %v6549, 0.0
        %v6619 = vadd.f32 %v6617, %v6618
        %v6620 = vsel %vm1329, %v6552, 0.0
        %v6621 = vadd.f32 %v6619, %v6620
        %v6622 = vsel %vm1329, %v6557, 0.0
        %v6623 = vadd.f32 %v6621, %v6622
        %v6624 = vsel %vm1329, %v6560, 0.0
        %v6625 = vadd.f32 %v6623, %v6624
        %v6626 = vrot.slane %v6625, 4
        %v6627 = vadd.f32 %v6625, %v6626
        %v6628 = vrot.slane %v6627, 2
        %v6629 = vadd.f32 %v6627, %v6628
        %v6630 = vrot.slane %v6629, 1
        %v6631 = vadd.f32 %v6629, %v6630
        %v6632 = vmul.f32 %v6631, %v1846
        %v6633 = vsub.f32 %v6437, %v6632
        %v6634 = vsub.f32 %v6440, %v6632
        %v6635 = vsub.f32 %v6445, %v6632
        %v6636 = vsub.f32 %v6448, %v6632
        %v6637 = vsub.f32 %v6453, %v6632
        %v6638 = vsub.f32 %v6456, %v6632
        %v6639 = vsub.f32 %v6461, %v6632
        %v6640 = vsub.f32 %v6464, %v6632
        %v6641 = vsub.f32 %v6469, %v6632
        %v6642 = vsub.f32 %v6472, %v6632
        %v6643 = vsub.f32 %v6477, %v6632
        %v6644 = vsub.f32 %v6480, %v6632
        %v6645 = vsub.f32 %v6485, %v6632
        %v6646 = vsub.f32 %v6488, %v6632
        %v6647 = vsub.f32 %v6493, %v6632
        %v6648 = vsub.f32 %v6496, %v6632
        %v6649 = vsub.f32 %v6501, %v6632
        %v6650 = vsub.f32 %v6504, %v6632
        %v6651 = vsub.f32 %v6509, %v6632
        %v6652 = vsub.f32 %v6512, %v6632
        %v6653 = vsub.f32 %v6517, %v6632
        %v6654 = vsub.f32 %v6520, %v6632
        %v6655 = vsub.f32 %v6525, %v6632
        %v6656 = vsub.f32 %v6528, %v6632
        %v6657 = vsub.f32 %v6533, %v6632
        %v6658 = vsub.f32 %v6536, %v6632
        %v6659 = vsub.f32 %v6541, %v6632
        %v6660 = vsub.f32 %v6544, %v6632
        %v6661 = vsub.f32 %v6549, %v6632
        %v6662 = vsub.f32 %v6552, %v6632
        %v6663 = vsub.f32 %v6557, %v6632
        %v6664 = vsub.f32 %v6560, %v6632
        %v6665 = vmul.f32 %v6633, %v6633
        %v6666 = vmul.f32 %v6634, %v6634
        %v6667 = vmul.f32 %v6635, %v6635
        %v6668 = vmul.f32 %v6636, %v6636
        %v6669 = vmul.f32 %v6637, %v6637
        %v6670 = vmul.f32 %v6638, %v6638
        %v6671 = vmul.f32 %v6639, %v6639
        %v6672 = vmul.f32 %v6640, %v6640
        %v6673 = vmul.f32 %v6641, %v6641
        %v6674 = vmul.f32 %v6642, %v6642
        %v6675 = vmul.f32 %v6643, %v6643
        %v6676 = vmul.f32 %v6644, %v6644
        %v6677 = vmul.f32 %v6645, %v6645
        %v6678 = vmul.f32 %v6646, %v6646
        %v6679 = vmul.f32 %v6647, %v6647
        %v6680 = vmul.f32 %v6648, %v6648
        %v6681 = vmul.f32 %v6649, %v6649
        %v6682 = vmul.f32 %v6650, %v6650
        %v6683 = vmul.f32 %v6651, %v6651
        %v6684 = vmul.f32 %v6652, %v6652
        %v6685 = vmul.f32 %v6653, %v6653
        %v6686 = vmul.f32 %v6654, %v6654
        %v6687 = vmul.f32 %v6655, %v6655
        %v6688 = vmul.f32 %v6656, %v6656
        %v6689 = vmul.f32 %v6657, %v6657
        %v6690 = vmul.f32 %v6658, %v6658
        %v6691 = vmul.f32 %v6659, %v6659
        %v6692 = vmul.f32 %v6660, %v6660
        %v6693 = vmul.f32 %v6661, %v6661
        %v6694 = vmul.f32 %v6662, %v6662
        %v6695 = vmul.f32 %v6663, %v6663
        %v6696 = vmul.f32 %v6664, %v6664
        %v6697 = vsel %vm1329, %v6665, 0.0
        %v6698 = vsel %vm1329, %v6666, 0.0
        %v6699 = vadd.f32 %v6697, %v6698
        %v6700 = vsel %vm1329, %v6667, 0.0
        %v6701 = vadd.f32 %v6699, %v6700
        %v6702 = vsel %vm1329, %v6668, 0.0
        %v6703 = vadd.f32 %v6701, %v6702
        %v6704 = vsel %vm1329, %v6669, 0.0
        %v6705 = vadd.f32 %v6703, %v6704
        %v6706 = vsel %vm1329, %v6670, 0.0
        %v6707 = vadd.f32 %v6705, %v6706
        %v6708 = vsel %vm1329, %v6671, 0.0
        %v6709 = vadd.f32 %v6707, %v6708
        %v6710 = vsel %vm1329, %v6672, 0.0
        %v6711 = vadd.f32 %v6709, %v6710
        %v6712 = vsel %vm1329, %v6673, 0.0
        %v6713 = vadd.f32 %v6711, %v6712
        %v6714 = vsel %vm1329, %v6674, 0.0
        %v6715 = vadd.f32 %v6713, %v6714
        %v6716 = vsel %vm1329, %v6675, 0.0
        %v6717 = vadd.f32 %v6715, %v6716
        %v6718 = vsel %vm1329, %v6676, 0.0
        %v6719 = vadd.f32 %v6717, %v6718
        %v6720 = vsel %vm1329, %v6677, 0.0
        %v6721 = vadd.f32 %v6719, %v6720
        %v6722 = vsel %vm1329, %v6678, 0.0
        %v6723 = vadd.f32 %v6721, %v6722
        %v6724 = vsel %vm1329, %v6679, 0.0
        %v6725 = vadd.f32 %v6723, %v6724
        %v6726 = vsel %vm1329, %v6680, 0.0
        %v6727 = vadd.f32 %v6725, %v6726
        %v6728 = vsel %vm1329, %v6681, 0.0
        %v6729 = vadd.f32 %v6727, %v6728
        %v6730 = vsel %vm1329, %v6682, 0.0
        %v6731 = vadd.f32 %v6729, %v6730
        %v6732 = vsel %vm1329, %v6683, 0.0
        %v6733 = vadd.f32 %v6731, %v6732
        %v6734 = vsel %vm1329, %v6684, 0.0
        %v6735 = vadd.f32 %v6733, %v6734
        %v6736 = vsel %vm1329, %v6685, 0.0
        %v6737 = vadd.f32 %v6735, %v6736
        %v6738 = vsel %vm1329, %v6686, 0.0
        %v6739 = vadd.f32 %v6737, %v6738
        %v6740 = vsel %vm1329, %v6687, 0.0
        %v6741 = vadd.f32 %v6739, %v6740
        %v6742 = vsel %vm1329, %v6688, 0.0
        %v6743 = vadd.f32 %v6741, %v6742
        %v6744 = vsel %vm1329, %v6689, 0.0
        %v6745 = vadd.f32 %v6743, %v6744
        %v6746 = vsel %vm1329, %v6690, 0.0
        %v6747 = vadd.f32 %v6745, %v6746
        %v6748 = vsel %vm1329, %v6691, 0.0
        %v6749 = vadd.f32 %v6747, %v6748
        %v6750 = vsel %vm1329, %v6692, 0.0
        %v6751 = vadd.f32 %v6749, %v6750
        %v6752 = vsel %vm1329, %v6693, 0.0
        %v6753 = vadd.f32 %v6751, %v6752
        %v6754 = vsel %vm1329, %v6694, 0.0
        %v6755 = vadd.f32 %v6753, %v6754
        %v6756 = vsel %vm1329, %v6695, 0.0
        %v6757 = vadd.f32 %v6755, %v6756
        %v6758 = vsel %vm1329, %v6696, 0.0
        %v6759 = vadd.f32 %v6757, %v6758
        %v6760 = vrot.slane %v6759, 4
        %v6761 = vadd.f32 %v6759, %v6760
        %v6762 = vrot.slane %v6761, 2
        %v6763 = vadd.f32 %v6761, %v6762
        %v6764 = vrot.slane %v6763, 1
        %v6765 = vadd.f32 %v6763, %v6764
        %v6766 = vmul.f32 %v6765, %v1846
        %v6767 = vadd.f32 %v6766, 1e-05
        %v6768 = vrsqrt.pop %v6767
        %v6769 = vmul.f32 %v6633, %v6768
        %v6770 = vmul.f32 %v6634, %v6768
        %v6771 = vmul.f32 %v6635, %v6768
        %v6772 = vmul.f32 %v6636, %v6768
        %v6773 = vmul.f32 %v6637, %v6768
        %v6774 = vmul.f32 %v6638, %v6768
        %v6775 = vmul.f32 %v6639, %v6768
        %v6776 = vmul.f32 %v6640, %v6768
        %v6777 = vmul.f32 %v6641, %v6768
        %v6778 = vmul.f32 %v6642, %v6768
        %v6779 = vmul.f32 %v6643, %v6768
        %v6780 = vmul.f32 %v6644, %v6768
        %v6781 = vmul.f32 %v6645, %v6768
        %v6782 = vmul.f32 %v6646, %v6768
        %v6783 = vmul.f32 %v6647, %v6768
        %v6784 = vmul.f32 %v6648, %v6768
        %v6785 = vmul.f32 %v6649, %v6768
        %v6786 = vmul.f32 %v6650, %v6768
        %v6787 = vmul.f32 %v6651, %v6768
        %v6788 = vmul.f32 %v6652, %v6768
        %v6789 = vmul.f32 %v6653, %v6768
        %v6790 = vmul.f32 %v6654, %v6768
        %v6791 = vmul.f32 %v6655, %v6768
        %v6792 = vmul.f32 %v6656, %v6768
        %v6793 = vmul.f32 %v6657, %v6768
        %v6794 = vmul.f32 %v6658, %v6768
        %v6795 = vmul.f32 %v6659, %v6768
        %v6796 = vmul.f32 %v6660, %v6768
        %v6797 = vmul.f32 %v6661, %v6768
        %v6798 = vmul.f32 %v6662, %v6768
        %v6799 = vmul.f32 %v6663, %v6768
        %v6800 = vmul.f32 %v6664, %v6768
        %v6801 = vlaneseq
        %v6802 = vshrl.u32 %v6801, 7
        %v6803 = vsub.s32 0, %v6802
        %v6804 = vrot.slane %v340, %v6803
        %v6805 = vmul.f32 %v6769, %v6804
        %v6806 = vmul.f32 %v6770, %v6804
        %v6807 = vmul.f32 %v6771, %v6804
        %v6808 = vmul.f32 %v6772, %v6804
        %v6809 = vmul.f32 %v6773, %v6804
        %v6810 = vmul.f32 %v6774, %v6804
        %v6811 = vmul.f32 %v6775, %v6804
        %v6812 = vmul.f32 %v6776, %v6804
        %v6813 = vmul.f32 %v6777, %v6804
        %v6814 = vmul.f32 %v6778, %v6804
        %v6815 = vmul.f32 %v6779, %v6804
        %v6816 = vmul.f32 %v6780, %v6804
        %v6817 = vmul.f32 %v6781, %v6804
        %v6818 = vmul.f32 %v6782, %v6804
        %v6819 = vmul.f32 %v6783, %v6804
        %v6820 = vmul.f32 %v6784, %v6804
        %v6821 = vmul.f32 %v6785, %v6804
        %v6822 = vmul.f32 %v6786, %v6804
        %v6823 = vmul.f32 %v6787, %v6804
        %v6824 = vmul.f32 %v6788, %v6804
        %v6825 = vmul.f32 %v6789, %v6804
        %v6826 = vmul.f32 %v6790, %v6804
        %v6827 = vmul.f32 %v6791, %v6804
        %v6828 = vmul.f32 %v6792, %v6804
        %v6829 = vmul.f32 %v6793, %v6804
        %v6830 = vmul.f32 %v6794, %v6804
        %v6831 = vmul.f32 %v6795, %v6804
        %v6832 = vmul.f32 %v6796, %v6804
        %v6833 = vmul.f32 %v6797, %v6804
        %v6834 = vmul.f32 %v6798, %v6804
        %v6835 = vmul.f32 %v6799, %v6804
        %v6836 = vmul.f32 %v6800, %v6804
        %v6837 = vlaneseq
        %v6838 = vshrl.u32 %v6837, 7
        %v6839 = vsub.s32 0, %v6838
        %v6840 = vrot.slane %v342, %v6839
        %v6841 = vadd.f32 %v6805, %v6840
        %v6842 = vadd.f32 %v6806, %v6840
        %v6843 = vadd.f32 %v6807, %v6840
        %v6844 = vadd.f32 %v6808, %v6840
        %v6845 = vadd.f32 %v6809, %v6840
        %v6846 = vadd.f32 %v6810, %v6840
        %v6847 = vadd.f32 %v6811, %v6840
        %v6848 = vadd.f32 %v6812, %v6840
        %v6849 = vadd.f32 %v6813, %v6840
        %v6850 = vadd.f32 %v6814, %v6840
        %v6851 = vadd.f32 %v6815, %v6840
        %v6852 = vadd.f32 %v6816, %v6840
        %v6853 = vadd.f32 %v6817, %v6840
        %v6854 = vadd.f32 %v6818, %v6840
        %v6855 = vadd.f32 %v6819, %v6840
        %v6856 = vadd.f32 %v6820, %v6840
        %v6857 = vadd.f32 %v6821, %v6840
        %v6858 = vadd.f32 %v6822, %v6840
        %v6859 = vadd.f32 %v6823, %v6840
        %v6860 = vadd.f32 %v6824, %v6840
        %v6861 = vadd.f32 %v6825, %v6840
        %v6862 = vadd.f32 %v6826, %v6840
        %v6863 = vadd.f32 %v6827, %v6840
        %v6864 = vadd.f32 %v6828, %v6840
        %v6865 = vadd.f32 %v6829, %v6840
        %v6866 = vadd.f32 %v6830, %v6840
        %v6867 = vadd.f32 %v6831, %v6840
        %v6868 = vadd.f32 %v6832, %v6840
        %v6869 = vadd.f32 %v6833, %v6840
        %v6870 = vadd.f32 %v6834, %v6840
        %v6871 = vadd.f32 %v6835, %v6840
        %v6872 = vadd.f32 %v6836, %v6840
        %vm6873 = vcmp.ge.f32.partialorder %v6841, 0.0
        %vm6874 = vcmp.ge.f32.partialorder %v6842, 0.0
        %vm6875 = vcmp.ge.f32.partialorder %v6843, 0.0
        %vm6876 = vcmp.ge.f32.partialorder %v6844, 0.0
        %vm6877 = vcmp.ge.f32.partialorder %v6845, 0.0
        %vm6878 = vcmp.ge.f32.partialorder %v6846, 0.0
        %vm6879 = vcmp.ge.f32.partialorder %v6847, 0.0
        %vm6880 = vcmp.ge.f32.partialorder %v6848, 0.0
        %vm6881 = vcmp.ge.f32.partialorder %v6849, 0.0
        %vm6882 = vcmp.ge.f32.partialorder %v6850, 0.0
        %vm6883 = vcmp.ge.f32.partialorder %v6851, 0.0
        %vm6884 = vcmp.ge.f32.partialorder %v6852, 0.0
        %vm6885 = vcmp.ge.f32.partialorder %v6853, 0.0
        %vm6886 = vcmp.ge.f32.partialorder %v6854, 0.0
        %vm6887 = vcmp.ge.f32.partialorder %v6855, 0.0
        %vm6888 = vcmp.ge.f32.partialorder %v6856, 0.0
        %vm6889 = vcmp.ge.f32.partialorder %v6857, 0.0
        %vm6890 = vcmp.ge.f32.partialorder %v6858, 0.0
        %vm6891 = vcmp.ge.f32.partialorder %v6859, 0.0
        %vm6892 = vcmp.ge.f32.partialorder %v6860, 0.0
        %vm6893 = vcmp.ge.f32.partialorder %v6861, 0.0
        %vm6894 = vcmp.ge.f32.partialorder %v6862, 0.0
        %vm6895 = vcmp.ge.f32.partialorder %v6863, 0.0
        %vm6896 = vcmp.ge.f32.partialorder %v6864, 0.0
        %vm6897 = vcmp.ge.f32.partialorder %v6865, 0.0
        %vm6898 = vcmp.ge.f32.partialorder %v6866, 0.0
        %vm6899 = vcmp.ge.f32.partialorder %v6867, 0.0
        %vm6900 = vcmp.ge.f32.partialorder %v6868, 0.0
        %vm6901 = vcmp.ge.f32.partialorder %v6869, 0.0
        %vm6902 = vcmp.ge.f32.partialorder %v6870, 0.0
        %vm6903 = vcmp.ge.f32.partialorder %v6871, 0.0
        %vm6904 = vcmp.ge.f32.partialorder %v6872, 0.0
        %v6905 = vmul.f32 %v6841, 0.2
        %v6906 = vmul.f32 %v6842, 0.2
        %v6907 = vmul.f32 %v6843, 0.2
        %v6908 = vmul.f32 %v6844, 0.2
        %v6909 = vmul.f32 %v6845, 0.2
        %v6910 = vmul.f32 %v6846, 0.2
        %v6911 = vmul.f32 %v6847, 0.2
        %v6912 = vmul.f32 %v6848, 0.2
        %v6913 = vmul.f32 %v6849, 0.2
        %v6914 = vmul.f32 %v6850, 0.2
        %v6915 = vmul.f32 %v6851, 0.2
        %v6916 = vmul.f32 %v6852, 0.2
        %v6917 = vmul.f32 %v6853, 0.2
        %v6918 = vmul.f32 %v6854, 0.2
        %v6919 = vmul.f32 %v6855, 0.2
        %v6920 = vmul.f32 %v6856, 0.2
        %v6921 = vmul.f32 %v6857, 0.2
        %v6922 = vmul.f32 %v6858, 0.2
        %v6923 = vmul.f32 %v6859, 0.2
        %v6924 = vmul.f32 %v6860, 0.2
        %v6925 = vmul.f32 %v6861, 0.2
        %v6926 = vmul.f32 %v6862, 0.2
        %v6927 = vmul.f32 %v6863, 0.2
        %v6928 = vmul.f32 %v6864, 0.2
        %v6929 = vmul.f32 %v6865, 0.2
        %v6930 = vmul.f32 %v6866, 0.2
        %v6931 = vmul.f32 %v6867, 0.2
        %v6932 = vmul.f32 %v6868, 0.2
        %v6933 = vmul.f32 %v6869, 0.2
        %v6934 = vmul.f32 %v6870, 0.2
        %v6935 = vmul.f32 %v6871, 0.2
        %v6936 = vmul.f32 %v6872, 0.2
        %v6937 = vsel %vm6873, %v6841, %v6905
        %v6938 = vsel %vm6874, %v6842, %v6906
        %v6939 = vsel %vm6875, %v6843, %v6907
        %v6940 = vsel %vm6876, %v6844, %v6908
        %v6941 = vsel %vm6877, %v6845, %v6909
        %v6942 = vsel %vm6878, %v6846, %v6910
        %v6943 = vsel %vm6879, %v6847, %v6911
        %v6944 = vsel %vm6880, %v6848, %v6912
        %v6945 = vsel %vm6881, %v6849, %v6913
        %v6946 = vsel %vm6882, %v6850, %v6914
        %v6947 = vsel %vm6883, %v6851, %v6915
        %v6948 = vsel %vm6884, %v6852, %v6916
        %v6949 = vsel %vm6885, %v6853, %v6917
        %v6950 = vsel %vm6886, %v6854, %v6918
        %v6951 = vsel %vm6887, %v6855, %v6919
        %v6952 = vsel %vm6888, %v6856, %v6920
        %v6953 = vsel %vm6889, %v6857, %v6921
        %v6954 = vsel %vm6890, %v6858, %v6922
        %v6955 = vsel %vm6891, %v6859, %v6923
        %v6956 = vsel %vm6892, %v6860, %v6924
        %v6957 = vsel %vm6893, %v6861, %v6925
        %v6958 = vsel %vm6894, %v6862, %v6926
        %v6959 = vsel %vm6895, %v6863, %v6927
        %v6960 = vsel %vm6896, %v6864, %v6928
        %v6961 = vsel %vm6897, %v6865, %v6929
        %v6962 = vsel %vm6898, %v6866, %v6930
        %v6963 = vsel %vm6899, %v6867, %v6931
        %v6964 = vsel %vm6900, %v6868, %v6932
        %v6965 = vsel %vm6901, %v6869, %v6933
        %v6966 = vsel %vm6902, %v6870, %v6934
        %v6967 = vsel %vm6903, %v6871, %v6935
        %v6968 = vsel %vm6904, %v6872, %v6936
        %v6969 = vpack.c.bf16 %v6938, %v6937
        %v6970 = vpack.c.bf16 %v6940, %v6939
        %v6971 = vpack.c.bf16 %v6942, %v6941
        %v6972 = vpack.c.bf16 %v6944, %v6943
        %v6973 = vpack.c.bf16 %v6946, %v6945
        %v6974 = vpack.c.bf16 %v6948, %v6947
        %v6975 = vpack.c.bf16 %v6950, %v6949
        %v6976 = vpack.c.bf16 %v6952, %v6951
        %v6977 = vpack.c.bf16 %v6954, %v6953
        %v6978 = vpack.c.bf16 %v6956, %v6955
        %v6979 = vpack.c.bf16 %v6958, %v6957
        %v6980 = vpack.c.bf16 %v6960, %v6959
        %v6981 = vpack.c.bf16 %v6962, %v6961
        %v6982 = vpack.c.bf16 %v6964, %v6963
        %v6983 = vpack.c.bf16 %v6966, %v6965
        %v6984 = vpack.c.bf16 %v6968, %v6967
        %v7001 = vrot.slane %v6971, 1
        %v7002 = vrot.slane %v6970, 1
        %v7003 = vrot.slane %v6969, 1
        %v7004 = vrot.slane %v6972, 1
        %v7005 = vrot.slane %v6973, 1
        %v7006 = vrot.slane %v6974, 1
        %v7007 = vrot.slane %v6975, 1
        %v7008 = vrot.slane %v6976, 1
        %v7009 = vrot.slane %v6977, 1
        %v7010 = vrot.slane %v6978, 1
        %v7011 = vrot.slane %v6979, 1
        %v7012 = vrot.slane %v6980, 1
        %v7013 = vrot.slane %v6981, 1
        %v7014 = vrot.slane %v6982, 1
        %v7015 = vrot.slane %v6983, 1
        %v7016 = vrot.slane %v6984, 1
        %v7033 = vrot.slane %v6971, 7
        %v7034 = vrot.slane %v6970, 7
        %v7035 = vrot.slane %v6969, 7
        %v7036 = vrot.slane %v6972, 7
        %v7037 = vrot.slane %v6973, 7
        %v7038 = vrot.slane %v6974, 7
        %v7039 = vrot.slane %v6975, 7
        %v7040 = vrot.slane %v6976, 7
        %v7041 = vrot.slane %v6977, 7
        %v7042 = vrot.slane %v6978, 7
        %v7043 = vrot.slane %v6979, 7
        %v7044 = vrot.slane %v6980, 7
        %v7045 = vrot.slane %v6981, 7
        %v7046 = vrot.slane %v6982, 7
        %v7047 = vrot.slane %v6983, 7
        %v7048 = vrot.slane %v6984, 7
        %v7049 = vrot.slane %v6971, 6
        %v7050 = vrot.slane %v6970, 6
        %v7051 = vrot.slane %v6969, 6
        %v7052 = vrot.slane %v6972, 6
        %v7053 = vrot.slane %v6973, 6
        %v7054 = vrot.slane %v6974, 6
        %v7055 = vrot.slane %v6975, 6
        %v7056 = vrot.slane %v6976, 6
        %v7057 = vrot.slane %v6977, 6
        %v7058 = vrot.slane %v6978, 6
        %v7059 = vrot.slane %v6979, 6
        %v7060 = vrot.slane %v6980, 6
        %v7061 = vrot.slane %v6981, 6
        %v7062 = vrot.slane %v6982, 6
        %v7063 = vrot.slane %v6983, 6
        %v7064 = vrot.slane %v6984, 6
        %v7065 = vrot.slane %v6971, 5
        %v7066 = vrot.slane %v6970, 5
        %v7067 = vrot.slane %v6969, 5
        %v7068 = vrot.slane %v6972, 5
        %v7069 = vrot.slane %v6973, 5
        %v7070 = vrot.slane %v6974, 5
        %v7071 = vrot.slane %v6975, 5
        %v7072 = vrot.slane %v6976, 5
        %v7073 = vrot.slane %v6977, 5
        %v7074 = vrot.slane %v6978, 5
        %v7075 = vrot.slane %v6979, 5
        %v7076 = vrot.slane %v6980, 5
        %v7077 = vrot.slane %v6981, 5
        %v7078 = vrot.slane %v6982, 5
        %v7079 = vrot.slane %v6983, 5
        %v7080 = vrot.slane %v6984, 5
        %v7097 = vsel %vm745, %v7001, %v6971
        %v7098 = vsel %vm745, %v7002, %v6970
        %v7099 = vsel %vm745, %v7003, %v6969
        %v7100 = vsel %vm745, %v7004, %v6972
        %v7101 = vsel %vm745, %v7005, %v6973
        %v7102 = vsel %vm745, %v7006, %v6974
        %v7103 = vsel %vm745, %v7007, %v6975
        %v7104 = vsel %vm745, %v7008, %v6976
        %v7105 = vsel %vm745, %v7009, %v6977
        %v7106 = vsel %vm745, %v7010, %v6978
        %v7107 = vsel %vm745, %v7011, %v6979
        %v7108 = vsel %vm745, %v7012, %v6980
        %v7109 = vsel %vm745, %v7013, %v6981
        %v7110 = vsel %vm745, %v7014, %v6982
        %v7111 = vsel %vm745, %v7015, %v6983
        %v7112 = vsel %vm745, %v7016, %v6984
        %v7115 = vsel %vm3951, %v7097, %v7033
        %v7118 = vsel %vm3951, %v7098, %v7034
        %v7121 = vsel %vm3951, %v7099, %v7035
        %v7124 = vsel %vm3951, %v7100, %v7036
        %v7127 = vsel %vm3951, %v7101, %v7037
        %v7130 = vsel %vm3951, %v7102, %v7038
        %v7133 = vsel %vm3951, %v7103, %v7039
        %v7136 = vsel %vm3951, %v7104, %v7040
        %v7139 = vsel %vm3951, %v7105, %v7041
        %v7142 = vsel %vm3951, %v7106, %v7042
        %v7145 = vsel %vm3951, %v7107, %v7043
        %v7148 = vsel %vm3951, %v7108, %v7044
        %v7151 = vsel %vm3951, %v7109, %v7045
        %v7154 = vsel %vm3951, %v7110, %v7046
        %v7157 = vsel %vm3951, %v7111, %v7047
        %v7160 = vsel %vm3951, %v7112, %v7048
        %v7162 = vsel %vm3951, %v7033, %v7049
        %v7165 = vsel %vm3951, %v7034, %v7050
        %v7168 = vsel %vm3951, %v7035, %v7051
        %v7171 = vsel %vm3951, %v7036, %v7052
        %v7174 = vsel %vm3951, %v7037, %v7053
        %v7177 = vsel %vm3951, %v7038, %v7054
        %v7180 = vsel %vm3951, %v7039, %v7055
        %v7183 = vsel %vm3951, %v7040, %v7056
        %v7186 = vsel %vm3951, %v7041, %v7057
        %v7189 = vsel %vm3951, %v7042, %v7058
        %v7192 = vsel %vm3951, %v7043, %v7059
        %v7195 = vsel %vm3951, %v7044, %v7060
        %v7198 = vsel %vm3951, %v7045, %v7061
        %v7201 = vsel %vm3951, %v7046, %v7062
        %v7204 = vsel %vm3951, %v7047, %v7063
        %v7207 = vsel %vm3951, %v7048, %v7064
        %v7209 = vsel %vm4050, %v7162, %v7065
        %v7210 = vsel %vm4050, %v7165, %v7066
        %v7211 = vsel %vm4050, %v7168, %v7067
        %v7212 = vsel %vm4050, %v7171, %v7068
        %v7213 = vsel %vm4050, %v7174, %v7069
        %v7214 = vsel %vm4050, %v7177, %v7070
        %v7215 = vsel %vm4050, %v7180, %v7071
        %v7216 = vsel %vm4050, %v7183, %v7072
        %v7217 = vsel %vm4050, %v7186, %v7073
        %v7218 = vsel %vm4050, %v7189, %v7074
        %v7219 = vsel %vm4050, %v7192, %v7075
        %v7220 = vsel %vm4050, %v7195, %v7076
        %v7221 = vsel %vm4050, %v7198, %v7077
        %v7222 = vsel %vm4050, %v7201, %v7078
        %v7223 = vsel %vm4050, %v7204, %v7079
        %v7224 = vsel %vm4050, %v7207, %v7080
        %v7225 = vshrl.u32 %v7115, 16
        %v7227 = vshll.u32 %v7115, 16
        %v7229 = vrot.slane %v7227, 1
        %v7230 = vor.u32 %v7225, %v7229
        %v7232 = vshll.u32 %v7209, 16
        %v7234 = vrot.slane %v7232, 1
        %v7235 = vsel %vm778, %v7230, %v7234
        %v7236 = vshrl.u32 %v7118, 16
        %v7238 = vshll.u32 %v7118, 16
        %v7240 = vrot.slane %v7238, 1
        %v7241 = vor.u32 %v7236, %v7240
        %v7243 = vshll.u32 %v7210, 16
        %v7245 = vrot.slane %v7243, 1
        %v7246 = vsel %vm778, %v7241, %v7245
        %v7247 = vshrl.u32 %v7121, 16
        %v7249 = vshll.u32 %v7121, 16
        %v7251 = vrot.slane %v7249, 1
        %v7252 = vor.u32 %v7247, %v7251
        %v7254 = vshll.u32 %v7211, 16
        %v7256 = vrot.slane %v7254, 1
        %v7257 = vsel %vm778, %v7252, %v7256
        %v7258 = vshrl.u32 %v7124, 16
        %v7260 = vshll.u32 %v7124, 16
        %v7262 = vrot.slane %v7260, 1
        %v7263 = vor.u32 %v7258, %v7262
        %v7265 = vshll.u32 %v7212, 16
        %v7267 = vrot.slane %v7265, 1
        %v7268 = vsel %vm778, %v7263, %v7267
        %v7269 = vshrl.u32 %v7127, 16
        %v7271 = vshll.u32 %v7127, 16
        %v7273 = vrot.slane %v7271, 1
        %v7274 = vor.u32 %v7269, %v7273
        %v7276 = vshll.u32 %v7213, 16
        %v7278 = vrot.slane %v7276, 1
        %v7279 = vsel %vm778, %v7274, %v7278
        %v7280 = vshrl.u32 %v7130, 16
        %v7282 = vshll.u32 %v7130, 16
        %v7284 = vrot.slane %v7282, 1
        %v7285 = vor.u32 %v7280, %v7284
        %v7287 = vshll.u32 %v7214, 16
        %v7289 = vrot.slane %v7287, 1
        %v7290 = vsel %vm778, %v7285, %v7289
        %v7291 = vshrl.u32 %v7133, 16
        %v7293 = vshll.u32 %v7133, 16
        %v7295 = vrot.slane %v7293, 1
        %v7296 = vor.u32 %v7291, %v7295
        %v7298 = vshll.u32 %v7215, 16
        %v7300 = vrot.slane %v7298, 1
        %v7301 = vsel %vm778, %v7296, %v7300
        %v7302 = vshrl.u32 %v7136, 16
        %v7304 = vshll.u32 %v7136, 16
        %v7306 = vrot.slane %v7304, 1
        %v7307 = vor.u32 %v7302, %v7306
        %v7309 = vshll.u32 %v7216, 16
        %v7311 = vrot.slane %v7309, 1
        %v7312 = vsel %vm778, %v7307, %v7311
        %v7313 = vshrl.u32 %v7139, 16
        %v7315 = vshll.u32 %v7139, 16
        %v7317 = vrot.slane %v7315, 1
        %v7318 = vor.u32 %v7313, %v7317
        %v7320 = vshll.u32 %v7217, 16
        %v7322 = vrot.slane %v7320, 1
        %v7323 = vsel %vm778, %v7318, %v7322
        %v7324 = vshrl.u32 %v7142, 16
        %v7326 = vshll.u32 %v7142, 16
        %v7328 = vrot.slane %v7326, 1
        %v7329 = vor.u32 %v7324, %v7328
        %v7331 = vshll.u32 %v7218, 16
        %v7333 = vrot.slane %v7331, 1
        %v7334 = vsel %vm778, %v7329, %v7333
        %v7335 = vshrl.u32 %v7145, 16
        %v7337 = vshll.u32 %v7145, 16
        %v7339 = vrot.slane %v7337, 1
        %v7340 = vor.u32 %v7335, %v7339
        %v7342 = vshll.u32 %v7219, 16
        %v7344 = vrot.slane %v7342, 1
        %v7345 = vsel %vm778, %v7340, %v7344
        %v7346 = vshrl.u32 %v7148, 16
        %v7348 = vshll.u32 %v7148, 16
        %v7350 = vrot.slane %v7348, 1
        %v7351 = vor.u32 %v7346, %v7350
        %v7353 = vshll.u32 %v7220, 16
        %v7355 = vrot.slane %v7353, 1
        %v7356 = vsel %vm778, %v7351, %v7355
        %v7357 = vshrl.u32 %v7151, 16
        %v7359 = vshll.u32 %v7151, 16
        %v7361 = vrot.slane %v7359, 1
        %v7362 = vor.u32 %v7357, %v7361
        %v7364 = vshll.u32 %v7221, 16
        %v7366 = vrot.slane %v7364, 1
        %v7367 = vsel %vm778, %v7362, %v7366
        %v7368 = vshrl.u32 %v7154, 16
        %v7370 = vshll.u32 %v7154, 16
        %v7372 = vrot.slane %v7370, 1
        %v7373 = vor.u32 %v7368, %v7372
        %v7375 = vshll.u32 %v7222, 16
        %v7377 = vrot.slane %v7375, 1
        %v7378 = vsel %vm778, %v7373, %v7377
        %7379 = vrot.lane.b32.xlu0 %v7235, 8
        %v7380 = vpop.permute.xlu0 %7379
        %7381 = vrot.lane.b32.xlu0 %v7246, 8
        %v7382 = vpop.permute.xlu0 %7381
        %7383 = vrot.lane.b32.xlu0 %v7257, 8
        %v7384 = vpop.permute.xlu0 %7383
        %7385 = vrot.lane.b32.xlu0 %v7268, 8
        %v7386 = vpop.permute.xlu0 %7385
        %7387 = vrot.lane.b32.xlu0 %v7279, 8
        %v7388 = vpop.permute.xlu0 %7387
        %7389 = vrot.lane.b32.xlu0 %v7290, 8
        %v7390 = vpop.permute.xlu0 %7389
        %7391 = vrot.lane.b32.xlu0 %v7301, 8
        %v7392 = vpop.permute.xlu0 %7391
        %7393 = vrot.lane.b32.xlu0 %v7312, 8
        %v7394 = vpop.permute.xlu0 %7393
        %7395 = vrot.lane.b32.xlu0 %v7323, 8
        %v7396 = vpop.permute.xlu0 %7395
        %7397 = vrot.lane.b32.xlu0 %v7334, 8
        %v7398 = vpop.permute.xlu0 %7397
        %7399 = vrot.lane.b32.xlu0 %v7345, 8
        %v7400 = vpop.permute.xlu0 %7399
        %7401 = vrot.lane.b32.xlu0 %v7356, 8
        %v7402 = vpop.permute.xlu0 %7401
        %7403 = vrot.lane.b32.xlu0 %v7367, 8
        %v7404 = vpop.permute.xlu0 %7403
        %7405 = vrot.lane.b32.xlu0 %v7378, 8
        %v7406 = vpop.permute.xlu0 %7405
        %v7435 = vrot.slane %v7115, 1
        %v7436 = vrot.slane %v7209, 1
        %v7437 = vsel %vm1019, %v7435, %v7436
        %v7438 = vrot.slane %v7118, 1
        %v7439 = vrot.slane %v7210, 1
        %v7440 = vsel %vm1019, %v7438, %v7439
        %v7441 = vrot.slane %v7121, 1
        %v7442 = vrot.slane %v7211, 1
        %v7443 = vsel %vm1019, %v7441, %v7442
        %v7444 = vrot.slane %v7124, 1
        %v7445 = vrot.slane %v7212, 1
        %v7446 = vsel %vm1019, %v7444, %v7445
        %v7447 = vrot.slane %v7127, 1
        %v7448 = vrot.slane %v7213, 1
        %v7449 = vsel %vm1019, %v7447, %v7448
        %v7450 = vrot.slane %v7130, 1
        %v7451 = vrot.slane %v7214, 1
        %v7452 = vsel %vm1019, %v7450, %v7451
        %v7453 = vrot.slane %v7133, 1
        %v7454 = vrot.slane %v7215, 1
        %v7455 = vsel %vm1019, %v7453, %v7454
        %v7456 = vrot.slane %v7136, 1
        %v7457 = vrot.slane %v7216, 1
        %v7458 = vsel %vm1019, %v7456, %v7457
        %v7459 = vrot.slane %v7139, 1
        %v7460 = vrot.slane %v7217, 1
        %v7461 = vsel %vm1019, %v7459, %v7460
        %v7462 = vrot.slane %v7142, 1
        %v7463 = vrot.slane %v7218, 1
        %v7464 = vsel %vm1019, %v7462, %v7463
        %v7465 = vrot.slane %v7145, 1
        %v7466 = vrot.slane %v7219, 1
        %v7467 = vsel %vm1019, %v7465, %v7466
        %v7468 = vrot.slane %v7148, 1
        %v7469 = vrot.slane %v7220, 1
        %v7470 = vsel %vm1019, %v7468, %v7469
        %v7471 = vrot.slane %v7151, 1
        %v7472 = vrot.slane %v7221, 1
        %v7473 = vsel %vm1019, %v7471, %v7472
        %v7474 = vrot.slane %v7154, 1
        %v7475 = vrot.slane %v7222, 1
        %v7476 = vsel %vm1019, %v7474, %v7475
        %7477 = vrot.lane.b32.xlu0 %v7437, 16
        %v7478 = vpop.permute.xlu0 %7477
        %7479 = vrot.lane.b32.xlu0 %v7440, 16
        %v7480 = vpop.permute.xlu0 %7479
        %7481 = vrot.lane.b32.xlu0 %v7443, 16
        %v7482 = vpop.permute.xlu0 %7481
        %7483 = vrot.lane.b32.xlu0 %v7446, 16
        %v7484 = vpop.permute.xlu0 %7483
        %7485 = vrot.lane.b32.xlu0 %v7449, 16
        %v7486 = vpop.permute.xlu0 %7485
        %7487 = vrot.lane.b32.xlu0 %v7452, 16
        %v7488 = vpop.permute.xlu0 %7487
        %7489 = vrot.lane.b32.xlu0 %v7455, 16
        %v7490 = vpop.permute.xlu0 %7489
        %7491 = vrot.lane.b32.xlu0 %v7458, 16
        %v7492 = vpop.permute.xlu0 %7491
        %7493 = vrot.lane.b32.xlu0 %v7461, 16
        %v7494 = vpop.permute.xlu0 %7493
        %7495 = vrot.lane.b32.xlu0 %v7464, 16
        %v7496 = vpop.permute.xlu0 %7495
        %7497 = vrot.lane.b32.xlu0 %v7467, 16
        %v7498 = vpop.permute.xlu0 %7497
        %7499 = vrot.lane.b32.xlu0 %v7470, 16
        %v7500 = vpop.permute.xlu0 %7499
        %7501 = vrot.lane.b32.xlu0 %v7473, 16
        %v7502 = vpop.permute.xlu0 %7501
        %7503 = vrot.lane.b32.xlu0 %v7476, 16
        %v7504 = vpop.permute.xlu0 %7503
        %v7505 = vrot.slane %v7225, 1
        %v7506 = vrot.slane %v7227, 2
        %v7507 = vor.u32 %v7505, %v7506
        %v7508 = vshrl.u32 %v7209, 16
        %v7510 = vrot.slane %v7508, 1
        %v7511 = vrot.slane %v7232, 2
        %v7512 = vor.u32 %v7510, %v7511
        %v7513 = vsel %vm4347, %v7507, %v7512
        %v7514 = vrot.slane %v7236, 1
        %v7515 = vrot.slane %v7238, 2
        %v7516 = vor.u32 %v7514, %v7515
        %v7517 = vshrl.u32 %v7210, 16
        %v7519 = vrot.slane %v7517, 1
        %v7520 = vrot.slane %v7243, 2
        %v7521 = vor.u32 %v7519, %v7520
        %v7522 = vsel %vm4347, %v7516, %v7521
        %v7523 = vrot.slane %v7247, 1
        %v7524 = vrot.slane %v7249, 2
        %v7525 = vor.u32 %v7523, %v7524
        %v7526 = vshrl.u32 %v7211, 16
        %v7528 = vrot.slane %v7526, 1
        %v7529 = vrot.slane %v7254, 2
        %v7530 = vor.u32 %v7528, %v7529
        %v7531 = vsel %vm4347, %v7525, %v7530
        %v7532 = vrot.slane %v7258, 1
        %v7533 = vrot.slane %v7260, 2
        %v7534 = vor.u32 %v7532, %v7533
        %v7535 = vshrl.u32 %v7212, 16
        %v7537 = vrot.slane %v7535, 1
        %v7538 = vrot.slane %v7265, 2
        %v7539 = vor.u32 %v7537, %v7538
        %v7540 = vsel %vm4347, %v7534, %v7539
        %v7541 = vrot.slane %v7269, 1
        %v7542 = vrot.slane %v7271, 2
        %v7543 = vor.u32 %v7541, %v7542
        %v7544 = vshrl.u32 %v7213, 16
        %v7546 = vrot.slane %v7544, 1
        %v7547 = vrot.slane %v7276, 2
        %v7548 = vor.u32 %v7546, %v7547
        %v7549 = vsel %vm4347, %v7543, %v7548
        %v7550 = vrot.slane %v7280, 1
        %v7551 = vrot.slane %v7282, 2
        %v7552 = vor.u32 %v7550, %v7551
        %v7553 = vshrl.u32 %v7214, 16
        %v7555 = vrot.slane %v7553, 1
        %v7556 = vrot.slane %v7287, 2
        %v7557 = vor.u32 %v7555, %v7556
        %v7558 = vsel %vm4347, %v7552, %v7557
        %v7559 = vrot.slane %v7291, 1
        %v7560 = vrot.slane %v7293, 2
        %v7561 = vor.u32 %v7559, %v7560
        %v7562 = vshrl.u32 %v7215, 16
        %v7564 = vrot.slane %v7562, 1
        %v7565 = vrot.slane %v7298, 2
        %v7566 = vor.u32 %v7564, %v7565
        %v7567 = vsel %vm4347, %v7561, %v7566
        %v7568 = vrot.slane %v7302, 1
        %v7569 = vrot.slane %v7304, 2
        %v7570 = vor.u32 %v7568, %v7569
        %v7571 = vshrl.u32 %v7216, 16
        %v7573 = vrot.slane %v7571, 1
        %v7574 = vrot.slane %v7309, 2
        %v7575 = vor.u32 %v7573, %v7574
        %v7576 = vsel %vm4347, %v7570, %v7575
        %v7577 = vrot.slane %v7313, 1
        %v7578 = vrot.slane %v7315, 2
        %v7579 = vor.u32 %v7577, %v7578
        %v7580 = vshrl.u32 %v7217, 16
        %v7582 = vrot.slane %v7580, 1
        %v7583 = vrot.slane %v7320, 2
        %v7584 = vor.u32 %v7582, %v7583
        %v7585 = vsel %vm4347, %v7579, %v7584
        %v7586 = vrot.slane %v7324, 1
        %v7587 = vrot.slane %v7326, 2
        %v7588 = vor.u32 %v7586, %v7587
        %v7589 = vshrl.u32 %v7218, 16
        %v7591 = vrot.slane %v7589, 1
        %v7592 = vrot.slane %v7331, 2
        %v7593 = vor.u32 %v7591, %v7592
        %v7594 = vsel %vm4347, %v7588, %v7593
        %v7595 = vrot.slane %v7335, 1
        %v7596 = vrot.slane %v7337, 2
        %v7597 = vor.u32 %v7595, %v7596
        %v7598 = vshrl.u32 %v7219, 16
        %v7600 = vrot.slane %v7598, 1
        %v7601 = vrot.slane %v7342, 2
        %v7602 = vor.u32 %v7600, %v7601
        %v7603 = vsel %vm4347, %v7597, %v7602
        %v7604 = vrot.slane %v7346, 1
        %v7605 = vrot.slane %v7348, 2
        %v7606 = vor.u32 %v7604, %v7605
        %v7607 = vshrl.u32 %v7220, 16
        %v7609 = vrot.slane %v7607, 1
        %v7610 = vrot.slane %v7353, 2
        %v7611 = vor.u32 %v7609, %v7610
        %v7612 = vsel %vm4347, %v7606, %v7611
        %v7613 = vrot.slane %v7357, 1
        %v7614 = vrot.slane %v7359, 2
        %v7615 = vor.u32 %v7613, %v7614
        %v7616 = vshrl.u32 %v7221, 16
        %v7618 = vrot.slane %v7616, 1
        %v7619 = vrot.slane %v7364, 2
        %v7620 = vor.u32 %v7618, %v7619
        %v7621 = vsel %vm4347, %v7615, %v7620
        %v7622 = vrot.slane %v7368, 1
        %v7623 = vrot.slane %v7370, 2
        %v7624 = vor.u32 %v7622, %v7623
        %v7625 = vshrl.u32 %v7222, 16
        %v7627 = vrot.slane %v7625, 1
        %v7628 = vrot.slane %v7375, 2
        %v7629 = vor.u32 %v7627, %v7628
        %v7630 = vsel %vm4347, %v7624, %v7629
        %7631 = vrot.lane.b32.xlu0 %v7513, 24
        %v7632 = vpop.permute.xlu0 %7631
        %7633 = vrot.lane.b32.xlu0 %v7522, 24
        %v7634 = vpop.permute.xlu0 %7633
        %7635 = vrot.lane.b32.xlu0 %v7531, 24
        %v7636 = vpop.permute.xlu0 %7635
        %7637 = vrot.lane.b32.xlu0 %v7540, 24
        %v7638 = vpop.permute.xlu0 %7637
        %7639 = vrot.lane.b32.xlu0 %v7549, 24
        %v7640 = vpop.permute.xlu0 %7639
        %7641 = vrot.lane.b32.xlu0 %v7558, 24
        %v7642 = vpop.permute.xlu0 %7641
        %7643 = vrot.lane.b32.xlu0 %v7567, 24
        %v7644 = vpop.permute.xlu0 %7643
        %7645 = vrot.lane.b32.xlu0 %v7576, 24
        %v7646 = vpop.permute.xlu0 %7645
        %7647 = vrot.lane.b32.xlu0 %v7585, 24
        %v7648 = vpop.permute.xlu0 %7647
        %7649 = vrot.lane.b32.xlu0 %v7594, 24
        %v7650 = vpop.permute.xlu0 %7649
        %7651 = vrot.lane.b32.xlu0 %v7603, 24
        %v7652 = vpop.permute.xlu0 %7651
        %7653 = vrot.lane.b32.xlu0 %v7612, 24
        %v7654 = vpop.permute.xlu0 %7653
        %7655 = vrot.lane.b32.xlu0 %v7621, 24
        %v7656 = vpop.permute.xlu0 %7655
        %7657 = vrot.lane.b32.xlu0 %v7630, 24
        %v7658 = vpop.permute.xlu0 %7657
        %v7659 = vrot.slane %v7115, 2
        %v7660 = vrot.slane %v7209, 2
        %v7661 = vsel %vm4502, %v7659, %v7660
        %v7662 = vrot.slane %v7118, 2
        %v7663 = vrot.slane %v7210, 2
        %v7664 = vsel %vm4502, %v7662, %v7663
        %v7665 = vrot.slane %v7121, 2
        %v7666 = vrot.slane %v7211, 2
        %v7667 = vsel %vm4502, %v7665, %v7666
        %v7668 = vrot.slane %v7124, 2
        %v7669 = vrot.slane %v7212, 2
        %v7670 = vsel %vm4502, %v7668, %v7669
        %v7671 = vrot.slane %v7127, 2
        %v7672 = vrot.slane %v7213, 2
        %v7673 = vsel %vm4502, %v7671, %v7672
        %v7674 = vrot.slane %v7130, 2
        %v7675 = vrot.slane %v7214, 2
        %v7676 = vsel %vm4502, %v7674, %v7675
        %v7677 = vrot.slane %v7133, 2
        %v7678 = vrot.slane %v7215, 2
        %v7679 = vsel %vm4502, %v7677, %v7678
        %v7680 = vrot.slane %v7136, 2
        %v7681 = vrot.slane %v7216, 2
        %v7682 = vsel %vm4502, %v7680, %v7681
        %v7683 = vrot.slane %v7139, 2
        %v7684 = vrot.slane %v7217, 2
        %v7685 = vsel %vm4502, %v7683, %v7684
        %v7686 = vrot.slane %v7142, 2
        %v7687 = vrot.slane %v7218, 2
        %v7688 = vsel %vm4502, %v7686, %v7687
        %v7689 = vrot.slane %v7145, 2
        %v7690 = vrot.slane %v7219, 2
        %v7691 = vsel %vm4502, %v7689, %v7690
        %v7692 = vrot.slane %v7148, 2
        %v7693 = vrot.slane %v7220, 2
        %v7694 = vsel %vm4502, %v7692, %v7693
        %v7695 = vrot.slane %v7151, 2
        %v7696 = vrot.slane %v7221, 2
        %v7697 = vsel %vm4502, %v7695, %v7696
        %v7698 = vrot.slane %v7154, 2
        %v7699 = vrot.slane %v7222, 2
        %v7700 = vsel %vm4502, %v7698, %v7699
        %7701 = vrot.lane.b32.xlu0 %v7661, 32
        %v7702 = vpop.permute.xlu0 %7701
        %7703 = vrot.lane.b32.xlu0 %v7664, 32
        %v7704 = vpop.permute.xlu0 %7703
        %7705 = vrot.lane.b32.xlu0 %v7667, 32
        %v7706 = vpop.permute.xlu0 %7705
        %7707 = vrot.lane.b32.xlu0 %v7670, 32
        %v7708 = vpop.permute.xlu0 %7707
        %7709 = vrot.lane.b32.xlu0 %v7673, 32
        %v7710 = vpop.permute.xlu0 %7709
        %7711 = vrot.lane.b32.xlu0 %v7676, 32
        %v7712 = vpop.permute.xlu0 %7711
        %7713 = vrot.lane.b32.xlu0 %v7679, 32
        %v7714 = vpop.permute.xlu0 %7713
        %7715 = vrot.lane.b32.xlu0 %v7682, 32
        %v7716 = vpop.permute.xlu0 %7715
        %7717 = vrot.lane.b32.xlu0 %v7685, 32
        %v7718 = vpop.permute.xlu0 %7717
        %7719 = vrot.lane.b32.xlu0 %v7688, 32
        %v7720 = vpop.permute.xlu0 %7719
        %7721 = vrot.lane.b32.xlu0 %v7691, 32
        %v7722 = vpop.permute.xlu0 %7721
        %7723 = vrot.lane.b32.xlu0 %v7694, 32
        %v7724 = vpop.permute.xlu0 %7723
        %7725 = vrot.lane.b32.xlu0 %v7697, 32
        %v7726 = vpop.permute.xlu0 %7725
        %7727 = vrot.lane.b32.xlu0 %v7700, 32
        %v7728 = vpop.permute.xlu0 %7727
        %7730 = vrot.lane.b32.xlu0 %v7118, 40
        %v7731 = vpop.permute.xlu0 %7730
        %7732 = vrot.lane.b32.xlu0 %v7121, 40
        %v7733 = vpop.permute.xlu0 %7732
        %7734 = vrot.lane.b32.xlu0 %v7115, 40
        %v7735 = vpop.permute.xlu0 %7734
        %7736 = vrot.lane.b32.xlu0 %v7124, 40
        %v7737 = vpop.permute.xlu0 %7736
        %7738 = vrot.lane.b32.xlu0 %v7127, 40
        %v7739 = vpop.permute.xlu0 %7738
        %7740 = vrot.lane.b32.xlu0 %v7130, 40
        %v7741 = vpop.permute.xlu0 %7740
        %7742 = vrot.lane.b32.xlu0 %v7133, 40
        %v7743 = vpop.permute.xlu0 %7742
        %7744 = vrot.lane.b32.xlu0 %v7136, 40
        %v7745 = vpop.permute.xlu0 %7744
        %7746 = vrot.lane.b32.xlu0 %v7139, 40
        %v7747 = vpop.permute.xlu0 %7746
        %7748 = vrot.lane.b32.xlu0 %v7142, 40
        %v7749 = vpop.permute.xlu0 %7748
        %7750 = vrot.lane.b32.xlu0 %v7145, 40
        %v7751 = vpop.permute.xlu0 %7750
        %7752 = vrot.lane.b32.xlu0 %v7148, 40
        %v7753 = vpop.permute.xlu0 %7752
        %7754 = vrot.lane.b32.xlu0 %v7151, 40
        %v7755 = vpop.permute.xlu0 %7754
        %7756 = vrot.lane.b32.xlu0 %v7154, 40
        %v7757 = vpop.permute.xlu0 %7756
        %7758 = vrot.lane.b32.xlu0 %v7157, 40
        %v7759 = vpop.permute.xlu0 %7758
        %v7760 = vshrl.u32 %v7157, 16
        %v7762 = vshll.u32 %v7157, 16
        %v7764 = vrot.slane %v7762, 1
        %v7765 = vor.u32 %v7760, %v7764
        %v7767 = vshll.u32 %v7223, 16
        %v7769 = vrot.slane %v7767, 1
        %v7770 = vsel %vm778, %v7765, %v7769
        %7771 = vrot.lane.b32.xlu0 %v7246, 48
        %v7772 = vpop.permute.xlu0 %7771
        %7773 = vrot.lane.b32.xlu0 %v7257, 48
        %v7774 = vpop.permute.xlu0 %7773
        %7775 = vrot.lane.b32.xlu0 %v7235, 48
        %v7776 = vpop.permute.xlu0 %7775
        %7777 = vrot.lane.b32.xlu0 %v7268, 48
        %v7778 = vpop.permute.xlu0 %7777
        %7779 = vrot.lane.b32.xlu0 %v7279, 48
        %v7780 = vpop.permute.xlu0 %7779
        %7781 = vrot.lane.b32.xlu0 %v7290, 48
        %v7782 = vpop.permute.xlu0 %7781
        %7783 = vrot.lane.b32.xlu0 %v7301, 48
        %v7784 = vpop.permute.xlu0 %7783
        %7785 = vrot.lane.b32.xlu0 %v7312, 48
        %v7786 = vpop.permute.xlu0 %7785
        %7787 = vrot.lane.b32.xlu0 %v7323, 48
        %v7788 = vpop.permute.xlu0 %7787
        %7789 = vrot.lane.b32.xlu0 %v7334, 48
        %v7790 = vpop.permute.xlu0 %7789
        %7791 = vrot.lane.b32.xlu0 %v7345, 48
        %v7792 = vpop.permute.xlu0 %7791
        %7793 = vrot.lane.b32.xlu0 %v7356, 48
        %v7794 = vpop.permute.xlu0 %7793
        %7795 = vrot.lane.b32.xlu0 %v7367, 48
        %v7796 = vpop.permute.xlu0 %7795
        %7797 = vrot.lane.b32.xlu0 %v7378, 48
        %v7798 = vpop.permute.xlu0 %7797
        %7799 = vrot.lane.b32.xlu0 %v7770, 48
        %v7800 = vpop.permute.xlu0 %7799
        %v7802 = vrot.slane %v7157, 1
        %v7803 = vrot.slane %v7223, 1
        %v7804 = vsel %vm1019, %v7802, %v7803
        %7805 = vrot.lane.b32.xlu0 %v7440, 56
        %v7806 = vpop.permute.xlu0 %7805
        %7807 = vrot.lane.b32.xlu0 %v7443, 56
        %v7808 = vpop.permute.xlu0 %7807
        %7809 = vrot.lane.b32.xlu0 %v7437, 56
        %v7810 = vpop.permute.xlu0 %7809
        %7811 = vrot.lane.b32.xlu0 %v7446, 56
        %v7812 = vpop.permute.xlu0 %7811
        %7813 = vrot.lane.b32.xlu0 %v7449, 56
        %v7814 = vpop.permute.xlu0 %7813
        %7815 = vrot.lane.b32.xlu0 %v7452, 56
        %v7816 = vpop.permute.xlu0 %7815
        %7817 = vrot.lane.b32.xlu0 %v7455, 56
        %v7818 = vpop.permute.xlu0 %7817
        %7819 = vrot.lane.b32.xlu0 %v7458, 56
        %v7820 = vpop.permute.xlu0 %7819
        %7821 = vrot.lane.b32.xlu0 %v7461, 56
        %v7822 = vpop.permute.xlu0 %7821
        %7823 = vrot.lane.b32.xlu0 %v7464, 56
        %v7824 = vpop.permute.xlu0 %7823
        %7825 = vrot.lane.b32.xlu0 %v7467, 56
        %v7826 = vpop.permute.xlu0 %7825
        %7827 = vrot.lane.b32.xlu0 %v7470, 56
        %v7828 = vpop.permute.xlu0 %7827
        %7829 = vrot.lane.b32.xlu0 %v7473, 56
        %v7830 = vpop.permute.xlu0 %7829
        %7831 = vrot.lane.b32.xlu0 %v7476, 56
        %v7832 = vpop.permute.xlu0 %7831
        %7833 = vrot.lane.b32.xlu0 %v7804, 56
        %v7834 = vpop.permute.xlu0 %7833
        %v7835 = vrot.slane %v7760, 1
        %v7836 = vrot.slane %v7762, 2
        %v7837 = vor.u32 %v7835, %v7836
        %v7838 = vshrl.u32 %v7223, 16
        %v7840 = vrot.slane %v7838, 1
        %v7841 = vrot.slane %v7767, 2
        %v7842 = vor.u32 %v7840, %v7841
        %v7843 = vsel %vm4347, %v7837, %v7842
        %7844 = vrot.lane.b32.xlu0 %v7522, 64
        %v7845 = vpop.permute.xlu0 %7844
        %7846 = vrot.lane.b32.xlu0 %v7531, 64
        %v7847 = vpop.permute.xlu0 %7846
        %7848 = vrot.lane.b32.xlu0 %v7513, 64
        %v7849 = vpop.permute.xlu0 %7848
        %7850 = vrot.lane.b32.xlu0 %v7540, 64
        %v7851 = vpop.permute.xlu0 %7850
        %7852 = vrot.lane.b32.xlu0 %v7549, 64
        %v7853 = vpop.permute.xlu0 %7852
        %7854 = vrot.lane.b32.xlu0 %v7558, 64
        %v7855 = vpop.permute.xlu0 %7854
        %7856 = vrot.lane.b32.xlu0 %v7567, 64
        %v7857 = vpop.permute.xlu0 %7856
        %7858 = vrot.lane.b32.xlu0 %v7576, 64
        %v7859 = vpop.permute.xlu0 %7858
        %7860 = vrot.lane.b32.xlu0 %v7585, 64
        %v7861 = vpop.permute.xlu0 %7860
        %7862 = vrot.lane.b32.xlu0 %v7594, 64
        %v7863 = vpop.permute.xlu0 %7862
        %7864 = vrot.lane.b32.xlu0 %v7603, 64
        %v7865 = vpop.permute.xlu0 %7864
        %7866 = vrot.lane.b32.xlu0 %v7612, 64
        %v7867 = vpop.permute.xlu0 %7866
        %7868 = vrot.lane.b32.xlu0 %v7621, 64
        %v7869 = vpop.permute.xlu0 %7868
        %7870 = vrot.lane.b32.xlu0 %v7630, 64
        %v7871 = vpop.permute.xlu0 %7870
        %7872 = vrot.lane.b32.xlu0 %v7843, 64
        %v7873 = vpop.permute.xlu0 %7872
        %v7874 = vrot.slane %v7157, 2
        %v7875 = vrot.slane %v7223, 2
        %v7876 = vsel %vm4502, %v7874, %v7875
        %7877 = vrot.lane.b32.xlu0 %v7664, 72
        %v7878 = vpop.permute.xlu0 %7877
        %7879 = vrot.lane.b32.xlu0 %v7667, 72
        %v7880 = vpop.permute.xlu0 %7879
        %7881 = vrot.lane.b32.xlu0 %v7661, 72
        %v7882 = vpop.permute.xlu0 %7881
        %7883 = vrot.lane.b32.xlu0 %v7670, 72
        %v7884 = vpop.permute.xlu0 %7883
        %7885 = vrot.lane.b32.xlu0 %v7673, 72
        %v7886 = vpop.permute.xlu0 %7885
        %7887 = vrot.lane.b32.xlu0 %v7676, 72
        %v7888 = vpop.permute.xlu0 %7887
        %7889 = vrot.lane.b32.xlu0 %v7679, 72
        %v7890 = vpop.permute.xlu0 %7889
        %7891 = vrot.lane.b32.xlu0 %v7682, 72
        %v7892 = vpop.permute.xlu0 %7891
        %7893 = vrot.lane.b32.xlu0 %v7685, 72
        %v7894 = vpop.permute.xlu0 %7893
        %7895 = vrot.lane.b32.xlu0 %v7688, 72
        %v7896 = vpop.permute.xlu0 %7895
        %7897 = vrot.lane.b32.xlu0 %v7691, 72
        %v7898 = vpop.permute.xlu0 %7897
        %7899 = vrot.lane.b32.xlu0 %v7694, 72
        %v7900 = vpop.permute.xlu0 %7899
        %7901 = vrot.lane.b32.xlu0 %v7697, 72
        %v7902 = vpop.permute.xlu0 %7901
        %7903 = vrot.lane.b32.xlu0 %v7700, 72
        %v7904 = vpop.permute.xlu0 %7903
        %7905 = vrot.lane.b32.xlu0 %v7876, 72
        %v7906 = vpop.permute.xlu0 %7905
        %7908 = vrot.lane.b32.xlu0 %v7121, 80
        %v7909 = vpop.permute.xlu0 %7908
        %7910 = vrot.lane.b32.xlu0 %v7118, 80
        %v7911 = vpop.permute.xlu0 %7910
        %7912 = vrot.lane.b32.xlu0 %v7115, 80
        %v7913 = vpop.permute.xlu0 %7912
        %7914 = vrot.lane.b32.xlu0 %v7124, 80
        %v7915 = vpop.permute.xlu0 %7914
        %7916 = vrot.lane.b32.xlu0 %v7127, 80
        %v7917 = vpop.permute.xlu0 %7916
        %7918 = vrot.lane.b32.xlu0 %v7130, 80
        %v7919 = vpop.permute.xlu0 %7918
        %7920 = vrot.lane.b32.xlu0 %v7133, 80
        %v7921 = vpop.permute.xlu0 %7920
        %7922 = vrot.lane.b32.xlu0 %v7136, 80
        %v7923 = vpop.permute.xlu0 %7922
        %7924 = vrot.lane.b32.xlu0 %v7139, 80
        %v7925 = vpop.permute.xlu0 %7924
        %7926 = vrot.lane.b32.xlu0 %v7142, 80
        %v7927 = vpop.permute.xlu0 %7926
        %7928 = vrot.lane.b32.xlu0 %v7145, 80
        %v7929 = vpop.permute.xlu0 %7928
        %7930 = vrot.lane.b32.xlu0 %v7148, 80
        %v7931 = vpop.permute.xlu0 %7930
        %7932 = vrot.lane.b32.xlu0 %v7151, 80
        %v7933 = vpop.permute.xlu0 %7932
        %7934 = vrot.lane.b32.xlu0 %v7154, 80
        %v7935 = vpop.permute.xlu0 %7934
        %7936 = vrot.lane.b32.xlu0 %v7157, 80
        %v7937 = vpop.permute.xlu0 %7936
        %7938 = vrot.lane.b32.xlu0 %v7160, 80
        %v7939 = vpop.permute.xlu0 %7938
        %v7940 = vshrl.u32 %v7160, 16
        %v7942 = vshll.u32 %v7160, 16
        %v7944 = vrot.slane %v7942, 1
        %v7945 = vor.u32 %v7940, %v7944
        %v7947 = vshll.u32 %v7224, 16
        %v7949 = vrot.slane %v7947, 1
        %v7950 = vsel %vm778, %v7945, %v7949
        %7951 = vrot.lane.b32.xlu0 %v7257, 88
        %v7952 = vpop.permute.xlu0 %7951
        %7953 = vrot.lane.b32.xlu0 %v7246, 88
        %v7954 = vpop.permute.xlu0 %7953
        %7955 = vrot.lane.b32.xlu0 %v7235, 88
        %v7956 = vpop.permute.xlu0 %7955
        %7957 = vrot.lane.b32.xlu0 %v7268, 88
        %v7958 = vpop.permute.xlu0 %7957
        %7959 = vrot.lane.b32.xlu0 %v7279, 88
        %v7960 = vpop.permute.xlu0 %7959
        %7961 = vrot.lane.b32.xlu0 %v7290, 88
        %v7962 = vpop.permute.xlu0 %7961
        %7963 = vrot.lane.b32.xlu0 %v7301, 88
        %v7964 = vpop.permute.xlu0 %7963
        %7965 = vrot.lane.b32.xlu0 %v7312, 88
        %v7966 = vpop.permute.xlu0 %7965
        %7967 = vrot.lane.b32.xlu0 %v7323, 88
        %v7968 = vpop.permute.xlu0 %7967
        %7969 = vrot.lane.b32.xlu0 %v7334, 88
        %v7970 = vpop.permute.xlu0 %7969
        %7971 = vrot.lane.b32.xlu0 %v7345, 88
        %v7972 = vpop.permute.xlu0 %7971
        %7973 = vrot.lane.b32.xlu0 %v7356, 88
        %v7974 = vpop.permute.xlu0 %7973
        %7975 = vrot.lane.b32.xlu0 %v7367, 88
        %v7976 = vpop.permute.xlu0 %7975
        %7977 = vrot.lane.b32.xlu0 %v7378, 88
        %v7978 = vpop.permute.xlu0 %7977
        %7979 = vrot.lane.b32.xlu0 %v7770, 88
        %v7980 = vpop.permute.xlu0 %7979
        %7981 = vrot.lane.b32.xlu0 %v7950, 88
        %v7982 = vpop.permute.xlu0 %7981
        %v7984 = vrot.slane %v7160, 1
        %v7985 = vrot.slane %v7224, 1
        %v7986 = vsel %vm1019, %v7984, %v7985
        %7987 = vrot.lane.b32.xlu0 %v7443, 96
        %v7988 = vpop.permute.xlu0 %7987
        %7989 = vrot.lane.b32.xlu0 %v7440, 96
        %v7990 = vpop.permute.xlu0 %7989
        %7991 = vrot.lane.b32.xlu0 %v7437, 96
        %v7992 = vpop.permute.xlu0 %7991
        %7993 = vrot.lane.b32.xlu0 %v7446, 96
        %v7994 = vpop.permute.xlu0 %7993
        %7995 = vrot.lane.b32.xlu0 %v7449, 96
        %v7996 = vpop.permute.xlu0 %7995
        %7997 = vrot.lane.b32.xlu0 %v7452, 96
        %v7998 = vpop.permute.xlu0 %7997
        %7999 = vrot.lane.b32.xlu0 %v7455, 96
        %v8000 = vpop.permute.xlu0 %7999
        %8001 = vrot.lane.b32.xlu0 %v7458, 96
        %v8002 = vpop.permute.xlu0 %8001
        %8003 = vrot.lane.b32.xlu0 %v7461, 96
        %v8004 = vpop.permute.xlu0 %8003
        %8005 = vrot.lane.b32.xlu0 %v7464, 96
        %v8006 = vpop.permute.xlu0 %8005
        %8007 = vrot.lane.b32.xlu0 %v7467, 96
        %v8008 = vpop.permute.xlu0 %8007
        %8009 = vrot.lane.b32.xlu0 %v7470, 96
        %v8010 = vpop.permute.xlu0 %8009
        %8011 = vrot.lane.b32.xlu0 %v7473, 96
        %v8012 = vpop.permute.xlu0 %8011
        %8013 = vrot.lane.b32.xlu0 %v7476, 96
        %v8014 = vpop.permute.xlu0 %8013
        %8015 = vrot.lane.b32.xlu0 %v7804, 96
        %v8016 = vpop.permute.xlu0 %8015
        %8017 = vrot.lane.b32.xlu0 %v7986, 96
        %v8018 = vpop.permute.xlu0 %8017
        %v8019 = vrot.slane %v7940, 1
        %v8020 = vrot.slane %v7942, 2
        %v8021 = vor.u32 %v8019, %v8020
        %v8022 = vshrl.u32 %v7224, 16
        %v8024 = vrot.slane %v8022, 1
        %v8025 = vrot.slane %v7947, 2
        %v8026 = vor.u32 %v8024, %v8025
        %v8027 = vsel %vm4347, %v8021, %v8026
        %8028 = vrot.lane.b32.xlu0 %v7531, 104
        %v8029 = vpop.permute.xlu0 %8028
        %8030 = vrot.lane.b32.xlu0 %v7522, 104
        %v8031 = vpop.permute.xlu0 %8030
        %8032 = vrot.lane.b32.xlu0 %v7513, 104
        %v8033 = vpop.permute.xlu0 %8032
        %8034 = vrot.lane.b32.xlu0 %v7540, 104
        %v8035 = vpop.permute.xlu0 %8034
        %8036 = vrot.lane.b32.xlu0 %v7549, 104
        %v8037 = vpop.permute.xlu0 %8036
        %8038 = vrot.lane.b32.xlu0 %v7558, 104
        %v8039 = vpop.permute.xlu0 %8038
        %8040 = vrot.lane.b32.xlu0 %v7567, 104
        %v8041 = vpop.permute.xlu0 %8040
        %8042 = vrot.lane.b32.xlu0 %v7576, 104
        %v8043 = vpop.permute.xlu0 %8042
        %8044 = vrot.lane.b32.xlu0 %v7585, 104
        %v8045 = vpop.permute.xlu0 %8044
        %8046 = vrot.lane.b32.xlu0 %v7594, 104
        %v8047 = vpop.permute.xlu0 %8046
        %8048 = vrot.lane.b32.xlu0 %v7603, 104
        %v8049 = vpop.permute.xlu0 %8048
        %8050 = vrot.lane.b32.xlu0 %v7612, 104
        %v8051 = vpop.permute.xlu0 %8050
        %8052 = vrot.lane.b32.xlu0 %v7621, 104
        %v8053 = vpop.permute.xlu0 %8052
        %8054 = vrot.lane.b32.xlu0 %v7630, 104
        %v8055 = vpop.permute.xlu0 %8054
        %8056 = vrot.lane.b32.xlu0 %v7843, 104
        %v8057 = vpop.permute.xlu0 %8056
        %8058 = vrot.lane.b32.xlu0 %v8027, 104
        %v8059 = vpop.permute.xlu0 %8058
        %v8060 = vrot.slane %v7160, 2
        %v8061 = vrot.slane %v7224, 2
        %v8062 = vsel %vm4502, %v8060, %v8061
        %8063 = vrot.lane.b32.xlu0 %v7667, 112
        %v8064 = vpop.permute.xlu0 %8063
        %8065 = vrot.lane.b32.xlu0 %v7664, 112
        %v8066 = vpop.permute.xlu0 %8065
        %8067 = vrot.lane.b32.xlu0 %v7661, 112
        %v8068 = vpop.permute.xlu0 %8067
        %8069 = vrot.lane.b32.xlu0 %v7670, 112
        %v8070 = vpop.permute.xlu0 %8069
        %8071 = vrot.lane.b32.xlu0 %v7673, 112
        %v8072 = vpop.permute.xlu0 %8071
        %8073 = vrot.lane.b32.xlu0 %v7676, 112
        %v8074 = vpop.permute.xlu0 %8073
        %8075 = vrot.lane.b32.xlu0 %v7679, 112
        %v8076 = vpop.permute.xlu0 %8075
        %8077 = vrot.lane.b32.xlu0 %v7682, 112
        %v8078 = vpop.permute.xlu0 %8077
        %8079 = vrot.lane.b32.xlu0 %v7685, 112
        %v8080 = vpop.permute.xlu0 %8079
        %8081 = vrot.lane.b32.xlu0 %v7688, 112
        %v8082 = vpop.permute.xlu0 %8081
        %8083 = vrot.lane.b32.xlu0 %v7691, 112
        %v8084 = vpop.permute.xlu0 %8083
        %8085 = vrot.lane.b32.xlu0 %v7694, 112
        %v8086 = vpop.permute.xlu0 %8085
        %8087 = vrot.lane.b32.xlu0 %v7697, 112
        %v8088 = vpop.permute.xlu0 %8087
        %8089 = vrot.lane.b32.xlu0 %v7700, 112
        %v8090 = vpop.permute.xlu0 %8089
        %8091 = vrot.lane.b32.xlu0 %v7876, 112
        %v8092 = vpop.permute.xlu0 %8091
        %8093 = vrot.lane.b32.xlu0 %v8062, 112
        %v8094 = vpop.permute.xlu0 %8093
        %8095 = vrot.lane.b32.xlu0 %v7118, 120
        %v8096 = vpop.permute.xlu0 %8095
        %8097 = vrot.lane.b32.xlu0 %v7115, 120
        %v8098 = vpop.permute.xlu0 %8097
        %8099 = vrot.lane.b32.xlu0 %v7124, 120
        %v8100 = vpop.permute.xlu0 %8099
        %8101 = vrot.lane.b32.xlu0 %v7127, 120
        %v8102 = vpop.permute.xlu0 %8101
        %8103 = vrot.lane.b32.xlu0 %v7130, 120
        %v8104 = vpop.permute.xlu0 %8103
        %8105 = vrot.lane.b32.xlu0 %v7133, 120
        %v8106 = vpop.permute.xlu0 %8105
        %8107 = vrot.lane.b32.xlu0 %v7136, 120
        %v8108 = vpop.permute.xlu0 %8107
        %8109 = vrot.lane.b32.xlu0 %v7139, 120
        %v8110 = vpop.permute.xlu0 %8109
        %8111 = vrot.lane.b32.xlu0 %v7142, 120
        %v8112 = vpop.permute.xlu0 %8111
        %8113 = vrot.lane.b32.xlu0 %v7145, 120
        %v8114 = vpop.permute.xlu0 %8113
        %8115 = vrot.lane.b32.xlu0 %v7148, 120
        %v8116 = vpop.permute.xlu0 %8115
        %8117 = vrot.lane.b32.xlu0 %v7151, 120
        %v8118 = vpop.permute.xlu0 %8117
        %8119 = vrot.lane.b32.xlu0 %v7154, 120
        %v8120 = vpop.permute.xlu0 %8119
        %8121 = vrot.lane.b32.xlu0 %v7157, 120
        %v8122 = vpop.permute.xlu0 %8121
        %8123 = vrot.lane.b32.xlu0 %v7160, 120
        %v8124 = vpop.permute.xlu0 %8123
        %v8126 = vsel %vm1329, %v7115, %v7380
        %v8128 = vsel %vm1329, %v7118, %v7382
        %v8130 = vsel %vm1329, %v7121, %v7384
        %v8132 = vsel %vm1329, %v7124, %v7386
        %v8134 = vsel %vm1329, %v7127, %v7388
        %v8136 = vsel %vm1329, %v7130, %v7390
        %v8138 = vsel %vm1329, %v7133, %v7392
        %v8140 = vsel %vm1329, %v7136, %v7394
        %v8142 = vsel %vm1329, %v7139, %v7396
        %v8144 = vsel %vm1329, %v7142, %v7398
        %v8146 = vsel %vm1329, %v7145, %v7400
        %v8148 = vsel %vm1329, %v7148, %v7402
        %v8150 = vsel %vm1329, %v7151, %v7404
        %v8152 = vsel %vm1329, %v7154, %v7406
        %v8154 = vsel %vm1393, %v8126, %v7478
        %v8156 = vsel %vm1393, %v8128, %v7480
        %v8158 = vsel %vm1393, %v8130, %v7482
        %v8160 = vsel %vm1393, %v8132, %v7484
        %v8162 = vsel %vm1393, %v8134, %v7486
        %v8164 = vsel %vm1393, %v8136, %v7488
        %v8166 = vsel %vm1393, %v8138, %v7490
        %v8168 = vsel %vm1393, %v8140, %v7492
        %v8170 = vsel %vm1393, %v8142, %v7494
        %v8172 = vsel %vm1393, %v8144, %v7496
        %v8174 = vsel %vm1393, %v8146, %v7498
        %v8176 = vsel %vm1393, %v8148, %v7500
        %v8178 = vsel %vm1393, %v8150, %v7502
        %v8180 = vsel %vm1393, %v8152, %v7504
        %v8182 = vsel %vm1459, %v8154, %v7632
        %v8184 = vsel %vm1459, %v8156, %v7634
        %v8186 = vsel %vm1459, %v8158, %v7636
        %v8188 = vsel %vm1459, %v8160, %v7638
        %v8190 = vsel %vm1459, %v8162, %v7640
        %v8192 = vsel %vm1459, %v8164, %v7642
        %v8194 = vsel %vm1459, %v8166, %v7644
        %v8196 = vsel %vm1459, %v8168, %v7646
        %v8198 = vsel %vm1459, %v8170, %v7648
        %v8200 = vsel %vm1459, %v8172, %v7650
        %v8202 = vsel %vm1459, %v8174, %v7652
        %v8204 = vsel %vm1459, %v8176, %v7654
        %v8206 = vsel %vm1459, %v8178, %v7656
        %v8208 = vsel %vm1459, %v8180, %v7658
        %v8210 = vsel %vm1523, %v8182, %v7702
        %v8212 = vsel %vm1523, %v8184, %v7704
        %v8214 = vsel %vm1523, %v8186, %v7706
        %v8216 = vsel %vm1523, %v8188, %v7708
        %v8218 = vsel %vm1523, %v8190, %v7710
        %v8220 = vsel %vm1523, %v8192, %v7712
        %v8222 = vsel %vm1523, %v8194, %v7714
        %v8224 = vsel %vm1523, %v8196, %v7716
        %v8226 = vsel %vm1523, %v8198, %v7718
        %v8228 = vsel %vm1523, %v8200, %v7720
        %v8230 = vsel %vm1523, %v8202, %v7722
        %v8232 = vsel %vm1523, %v8204, %v7724
        %v8234 = vsel %vm1523, %v8206, %v7726
        %v8236 = vsel %vm1523, %v8208, %v7728
        %v8238 = vsel %vm3066, %v8210, %v7731
        %v8240 = vsel %vm3066, %v8212, %v7733
        %v8241 = vsel %vm3066, %v8214, %v7731
        %v8243 = vsel %vm3066, %v8212, %v7735
        %v8245 = vsel %vm3066, %v8210, %v7737
        %v8247 = vsel %vm3066, %v8216, %v7739
        %v8249 = vsel %vm3066, %v8218, %v7741
        %v8251 = vsel %vm3066, %v8220, %v7743
        %v8253 = vsel %vm3066, %v8222, %v7745
        %v8255 = vsel %vm3066, %v8224, %v7747
        %v8257 = vsel %vm3066, %v8226, %v7749
        %v8259 = vsel %vm3066, %v8228, %v7751
        %v8261 = vsel %vm3066, %v8230, %v7753
        %v8263 = vsel %vm3066, %v8232, %v7755
        %v8265 = vsel %vm3066, %v8234, %v7757
        %v8267 = vsel %vm3066, %v8236, %v7759
        %v8269 = vsel %vm3099, %v8238, %v7772
        %v8271 = vsel %vm3099, %v8240, %v7774
        %v8272 = vsel %vm3099, %v8241, %v7772
        %v8274 = vsel %vm3099, %v8243, %v7776
        %v8276 = vsel %vm3099, %v8245, %v7778
        %v8278 = vsel %vm3099, %v8247, %v7780
        %v8280 = vsel %vm3099, %v8249, %v7782
        %v8282 = vsel %vm3099, %v8251, %v7784
        %v8284 = vsel %vm3099, %v8253, %v7786
        %v8286 = vsel %vm3099, %v8255, %v7788
        %v8288 = vsel %vm3099, %v8257, %v7790
        %v8290 = vsel %vm3099, %v8259, %v7792
        %v8292 = vsel %vm3099, %v8261, %v7794
        %v8294 = vsel %vm3099, %v8263, %v7796
        %v8296 = vsel %vm3099, %v8265, %v7798
        %v8298 = vsel %vm3099, %v8267, %v7800
        %v8300 = vsel %vm3131, %v8269, %v7806
        %v8302 = vsel %vm3131, %v8271, %v7808
        %v8303 = vsel %vm3131, %v8272, %v7806
        %v8305 = vsel %vm3131, %v8274, %v7810
        %v8307 = vsel %vm3131, %v8276, %v7812
        %v8309 = vsel %vm3131, %v8278, %v7814
        %v8311 = vsel %vm3131, %v8280, %v7816
        %v8313 = vsel %vm3131, %v8282, %v7818
        %v8315 = vsel %vm3131, %v8284, %v7820
        %v8317 = vsel %vm3131, %v8286, %v7822
        %v8319 = vsel %vm3131, %v8288, %v7824
        %v8321 = vsel %vm3131, %v8290, %v7826
        %v8323 = vsel %vm3131, %v8292, %v7828
        %v8325 = vsel %vm3131, %v8294, %v7830
        %v8327 = vsel %vm3131, %v8296, %v7832
        %v8329 = vsel %vm3131, %v8298, %v7834
        %v8331 = vsel %vm3163, %v8300, %v7845
        %v8333 = vsel %vm3163, %v8302, %v7847
        %v8334 = vsel %vm3163, %v8303, %v7845
        %v8336 = vsel %vm3163, %v8305, %v7849
        %v8338 = vsel %vm3163, %v8307, %v7851
        %v8340 = vsel %vm3163, %v8309, %v7853
        %v8342 = vsel %vm3163, %v8311, %v7855
        %v8344 = vsel %vm3163, %v8313, %v7857
        %v8346 = vsel %vm3163, %v8315, %v7859
        %v8348 = vsel %vm3163, %v8317, %v7861
        %v8350 = vsel %vm3163, %v8319, %v7863
        %v8352 = vsel %vm3163, %v8321, %v7865
        %v8354 = vsel %vm3163, %v8323, %v7867
        %v8356 = vsel %vm3163, %v8325, %v7869
        %v8358 = vsel %vm3163, %v8327, %v7871
        %v8360 = vsel %vm3163, %v8329, %v7873
        %v8362 = vsel %vm3235, %v8331, %v7878
        %v8364 = vsel %vm3235, %v8333, %v7880
        %v8365 = vsel %vm3235, %v8334, %v7878
        %v8367 = vsel %vm3235, %v8336, %v7882
        %v8369 = vsel %vm3235, %v8338, %v7884
        %v8371 = vsel %vm3235, %v8340, %v7886
        %v8373 = vsel %vm3235, %v8342, %v7888
        %v8375 = vsel %vm3235, %v8344, %v7890
        %v8377 = vsel %vm3235, %v8346, %v7892
        %v8379 = vsel %vm3235, %v8348, %v7894
        %v8381 = vsel %vm3235, %v8350, %v7896
        %v8383 = vsel %vm3235, %v8352, %v7898
        %v8385 = vsel %vm3235, %v8354, %v7900
        %v8387 = vsel %vm3235, %v8356, %v7902
        %v8389 = vsel %vm3235, %v8358, %v7904
        %v8391 = vsel %vm3235, %v8360, %v7906
        %vm8392 = vcmask 654336
        %v8394 = vsel %vm8392, %v8362, %v7909
        %v8396 = vsel %vm8392, %v8364, %v7911
        %v8398 = vsel %vm8392, %v8365, %v7913
        %v8400 = vsel %vm8392, %v8367, %v7915
        %v8402 = vsel %vm8392, %v8369, %v7917
        %v8404 = vsel %vm8392, %v8371, %v7919
        %v8406 = vsel %vm8392, %v8373, %v7921
        %v8408 = vsel %vm8392, %v8375, %v7923
        %v8410 = vsel %vm8392, %v8377, %v7925
        %v8412 = vsel %vm8392, %v8379, %v7927
        %v8414 = vsel %vm8392, %v8381, %v7929
        %v8416 = vsel %vm8392, %v8383, %v7931
        %v8418 = vsel %vm8392, %v8385, %v7933
        %v8420 = vsel %vm8392, %v8387, %v7935
        %v8422 = vsel %vm8392, %v8389, %v7937
        %v8424 = vsel %vm8392, %v8391, %v7939
        %vm8425 = vcmask 719872
        %v8427 = vsel %vm8425, %v8394, %v7952
        %v8429 = vsel %vm8425, %v8396, %v7954
        %v8431 = vsel %vm8425, %v8398, %v7956
        %v8433 = vsel %vm8425, %v8400, %v7958
        %v8435 = vsel %vm8425, %v8402, %v7960
        %v8437 = vsel %vm8425, %v8404, %v7962
        %v8439 = vsel %vm8425, %v8406, %v7964
        %v8441 = vsel %vm8425, %v8408, %v7966
        %v8443 = vsel %vm8425, %v8410, %v7968
        %v8445 = vsel %vm8425, %v8412, %v7970
        %v8447 = vsel %vm8425, %v8414, %v7972
        %v8449 = vsel %vm8425, %v8416, %v7974
        %v8451 = vsel %vm8425, %v8418, %v7976
        %v8453 = vsel %vm8425, %v8420, %v7978
        %v8455 = vsel %vm8425, %v8422, %v7980
        %v8457 = vsel %vm8425, %v8424, %v7982
        %vm8458 = vcmask 785408
        %v8460 = vsel %vm8458, %v8427, %v7988
        %v8462 = vsel %vm8458, %v8429, %v7990
        %v8464 = vsel %vm8458, %v8431, %v7992
        %v8466 = vsel %vm8458, %v8433, %v7994
        %v8468 = vsel %vm8458, %v8435, %v7996
        %v8470 = vsel %vm8458, %v8437, %v7998
        %v8472 = vsel %vm8458, %v8439, %v8000
        %v8474 = vsel %vm8458, %v8441, %v8002
        %v8476 = vsel %vm8458, %v8443, %v8004
        %v8478 = vsel %vm8458, %v8445, %v8006
        %v8480 = vsel %vm8458, %v8447, %v8008
        %v8482 = vsel %vm8458, %v8449, %v8010
        %v8484 = vsel %vm8458, %v8451, %v8012
        %v8486 = vsel %vm8458, %v8453, %v8014
        %v8488 = vsel %vm8458, %v8455, %v8016
        %v8490 = vsel %vm8458, %v8457, %v8018
        %vm8491 = vcmask 850944
        %v8493 = vsel %vm8491, %v8460, %v8029
        %v8495 = vsel %vm8491, %v8462, %v8031
        %v8497 = vsel %vm8491, %v8464, %v8033
        %v8499 = vsel %vm8491, %v8466, %v8035
        %v8501 = vsel %vm8491, %v8468, %v8037
        %v8503 = vsel %vm8491, %v8470, %v8039
        %v8505 = vsel %vm8491, %v8472, %v8041
        %v8507 = vsel %vm8491, %v8474, %v8043
        %v8509 = vsel %vm8491, %v8476, %v8045
        %v8511 = vsel %vm8491, %v8478, %v8047
        %v8513 = vsel %vm8491, %v8480, %v8049
        %v8515 = vsel %vm8491, %v8482, %v8051
        %v8517 = vsel %vm8491, %v8484, %v8053
        %v8519 = vsel %vm8491, %v8486, %v8055
        %v8521 = vsel %vm8491, %v8488, %v8057
        %v8523 = vsel %vm8491, %v8490, %v8059
        %vm8524 = vcmask 916480
        %v8526 = vsel %vm8524, %v8493, %v8064
        %v8528 = vsel %vm8524, %v8495, %v8066
        %v8530 = vsel %vm8524, %v8497, %v8068
        %v8532 = vsel %vm8524, %v8499, %v8070
        %v8534 = vsel %vm8524, %v8501, %v8072
        %v8536 = vsel %vm8524, %v8503, %v8074
        %v8538 = vsel %vm8524, %v8505, %v8076
        %v8540 = vsel %vm8524, %v8507, %v8078
        %v8542 = vsel %vm8524, %v8509, %v8080
        %v8544 = vsel %vm8524, %v8511, %v8082
        %v8546 = vsel %vm8524, %v8513, %v8084
        %v8548 = vsel %vm8524, %v8515, %v8086
        %v8550 = vsel %vm8524, %v8517, %v8088
        %v8552 = vsel %vm8524, %v8519, %v8090
        %v8554 = vsel %vm8524, %v8521, %v8092
        %v8556 = vsel %vm8524, %v8523, %v8094
        %vm8557 = vcmask 982016
        %v8559 = vsel %vm8557, %v8526, %v8096
        %v8562 = vsel %vm8557, %v8528, %v8098
        %v8565 = vsel %vm8557, %v8530, %v8100
        %v8568 = vsel %vm8557, %v8532, %v8102
        %v8571 = vsel %vm8557, %v8534, %v8104
        %v8574 = vsel %vm8557, %v8536, %v8106
        %v8577 = vsel %vm8557, %v8538, %v8108
        %v8580 = vsel %vm8557, %v8540, %v8110
        %v8583 = vsel %vm8557, %v8542, %v8112
        %v8586 = vsel %vm8557, %v8544, %v8114
        %v8589 = vsel %vm8557, %v8546, %v8116
        %v8592 = vsel %vm8557, %v8548, %v8118
        %v8595 = vsel %vm8557, %v8550, %v8120
        %v8598 = vsel %vm8557, %v8552, %v8122
        %v8601 = vsel %vm8557, %v8554, %v8124
        %v8603 = vsel %vm8557, %v8556, %v8122
        %8605 = vrot.lane.b32.xlu0 %v7517, 8
        %v8606 = vpop.permute.xlu0 %8605
        %8607 = vrot.lane.b32.xlu0 %v7508, 8
        %v8608 = vpop.permute.xlu0 %8607
        %8609 = vrot.lane.b32.xlu0 %v7535, 8
        %v8610 = vpop.permute.xlu0 %8609
        %8611 = vrot.lane.b32.xlu0 %v7544, 8
        %v8612 = vpop.permute.xlu0 %8611
        %8613 = vrot.lane.b32.xlu0 %v7553, 8
        %v8614 = vpop.permute.xlu0 %8613
        %8615 = vrot.lane.b32.xlu0 %v7562, 8
        %v8616 = vpop.permute.xlu0 %8615
        %8617 = vrot.lane.b32.xlu0 %v7571, 8
        %v8618 = vpop.permute.xlu0 %8617
        %8619 = vrot.lane.b32.xlu0 %v7580, 8
        %v8620 = vpop.permute.xlu0 %8619
        %8621 = vrot.lane.b32.xlu0 %v7589, 8
        %v8622 = vpop.permute.xlu0 %8621
        %8623 = vrot.lane.b32.xlu0 %v7598, 8
        %v8624 = vpop.permute.xlu0 %8623
        %8625 = vrot.lane.b32.xlu0 %v7607, 8
        %v8626 = vpop.permute.xlu0 %8625
        %8627 = vrot.lane.b32.xlu0 %v7616, 8
        %v8628 = vpop.permute.xlu0 %8627
        %8629 = vrot.lane.b32.xlu0 %v7625, 8
        %v8630 = vpop.permute.xlu0 %8629
        %8631 = vrot.lane.b32.xlu0 %v7770, 8
        %v8632 = vpop.permute.xlu0 %8631
        %8633 = vrot.lane.b32.xlu0 %v7838, 8
        %v8634 = vpop.permute.xlu0 %8633
        %8635 = vrot.lane.b32.xlu0 %v7950, 8
        %v8636 = vpop.permute.xlu0 %8635
        %8637 = vrot.lane.b32.xlu0 %v8022, 8
        %v8638 = vpop.permute.xlu0 %8637
        %8639 = vrot.lane.b32.xlu0 %v7439, 16
        %v8640 = vpop.permute.xlu0 %8639
        %8641 = vrot.lane.b32.xlu0 %v7436, 16
        %v8642 = vpop.permute.xlu0 %8641
        %8643 = vrot.lane.b32.xlu0 %v7445, 16
        %v8644 = vpop.permute.xlu0 %8643
        %8645 = vrot.lane.b32.xlu0 %v7448, 16
        %v8646 = vpop.permute.xlu0 %8645
        %8647 = vrot.lane.b32.xlu0 %v7451, 16
        %v8648 = vpop.permute.xlu0 %8647
        %8649 = vrot.lane.b32.xlu0 %v7454, 16
        %v8650 = vpop.permute.xlu0 %8649
        %8651 = vrot.lane.b32.xlu0 %v7457, 16
        %v8652 = vpop.permute.xlu0 %8651
        %8653 = vrot.lane.b32.xlu0 %v7460, 16
        %v8654 = vpop.permute.xlu0 %8653
        %8655 = vrot.lane.b32.xlu0 %v7463, 16
        %v8656 = vpop.permute.xlu0 %8655
        %8657 = vrot.lane.b32.xlu0 %v7466, 16
        %v8658 = vpop.permute.xlu0 %8657
        %8659 = vrot.lane.b32.xlu0 %v7469, 16
        %v8660 = vpop.permute.xlu0 %8659
        %8661 = vrot.lane.b32.xlu0 %v7472, 16
        %v8662 = vpop.permute.xlu0 %8661
        %8663 = vrot.lane.b32.xlu0 %v7475, 16
        %v8664 = vpop.permute.xlu0 %8663
        %8665 = vrot.lane.b32.xlu0 %v7804, 16
        %v8666 = vpop.permute.xlu0 %8665
        %8667 = vrot.lane.b32.xlu0 %v7803, 16
        %v8668 = vpop.permute.xlu0 %8667
        %8669 = vrot.lane.b32.xlu0 %v7986, 16
        %v8670 = vpop.permute.xlu0 %8669
        %8671 = vrot.lane.b32.xlu0 %v7985, 16
        %v8672 = vpop.permute.xlu0 %8671
        %8673 = vrot.lane.b32.xlu0 %v7519, 24
        %v8674 = vpop.permute.xlu0 %8673
        %8675 = vrot.lane.b32.xlu0 %v7510, 24
        %v8676 = vpop.permute.xlu0 %8675
        %8677 = vrot.lane.b32.xlu0 %v7537, 24
        %v8678 = vpop.permute.xlu0 %8677
        %8679 = vrot.lane.b32.xlu0 %v7546, 24
        %v8680 = vpop.permute.xlu0 %8679
        %8681 = vrot.lane.b32.xlu0 %v7555, 24
        %v8682 = vpop.permute.xlu0 %8681
        %8683 = vrot.lane.b32.xlu0 %v7564, 24
        %v8684 = vpop.permute.xlu0 %8683
        %8685 = vrot.lane.b32.xlu0 %v7573, 24
        %v8686 = vpop.permute.xlu0 %8685
        %8687 = vrot.lane.b32.xlu0 %v7582, 24
        %v8688 = vpop.permute.xlu0 %8687
        %8689 = vrot.lane.b32.xlu0 %v7591, 24
        %v8690 = vpop.permute.xlu0 %8689
        %8691 = vrot.lane.b32.xlu0 %v7600, 24
        %v8692 = vpop.permute.xlu0 %8691
        %8693 = vrot.lane.b32.xlu0 %v7609, 24
        %v8694 = vpop.permute.xlu0 %8693
        %8695 = vrot.lane.b32.xlu0 %v7618, 24
        %v8696 = vpop.permute.xlu0 %8695
        %8697 = vrot.lane.b32.xlu0 %v7627, 24
        %v8698 = vpop.permute.xlu0 %8697
        %8699 = vrot.lane.b32.xlu0 %v7843, 24
        %v8700 = vpop.permute.xlu0 %8699
        %8701 = vrot.lane.b32.xlu0 %v7840, 24
        %v8702 = vpop.permute.xlu0 %8701
        %8703 = vrot.lane.b32.xlu0 %v8027, 24
        %v8704 = vpop.permute.xlu0 %8703
        %8705 = vrot.lane.b32.xlu0 %v8024, 24
        %v8706 = vpop.permute.xlu0 %8705
        %v8707 = vrot.slane %v7225, 7
        %v8708 = vor.u32 %v8707, %v7227
        %v8709 = vrot.slane %v7258, 7
        %v8710 = vor.u32 %v8709, %v7260
        %v8711 = vrot.slane %v7269, 7
        %v8712 = vor.u32 %v8711, %v7271
        %v8713 = vrot.slane %v7280, 7
        %v8714 = vor.u32 %v8713, %v7282
        %v8715 = vrot.slane %v7291, 7
        %v8716 = vor.u32 %v8715, %v7293
        %v8717 = vrot.slane %v7302, 7
        %v8718 = vor.u32 %v8717, %v7304
        %v8719 = vrot.slane %v7313, 7
        %v8720 = vor.u32 %v8719, %v7315
        %v8721 = vrot.slane %v7324, 7
        %v8722 = vor.u32 %v8721, %v7326
        %v8723 = vrot.slane %v7335, 7
        %v8724 = vor.u32 %v8723, %v7337
        %v8725 = vrot.slane %v7346, 7
        %v8726 = vor.u32 %v8725, %v7348
        %v8727 = vrot.slane %v7357, 7
        %v8728 = vor.u32 %v8727, %v7359
        %v8729 = vrot.slane %v7368, 7
        %v8730 = vor.u32 %v8729, %v7370
        %v8731 = vrot.slane %v7760, 7
        %v8732 = vor.u32 %v8731, %v7762
        %v8733 = vrot.slane %v7940, 7
        %v8734 = vor.u32 %v8733, %v7942
        %8735 = vrot.lane.b32.xlu0 %v8708, 32
        %v8736 = vpop.permute.xlu0 %8735
        %8737 = vrot.lane.b32.xlu0 %v8707, 32
        %v8738 = vpop.permute.xlu0 %8737
        %8739 = vrot.lane.b32.xlu0 %v8710, 32
        %v8740 = vpop.permute.xlu0 %8739
        %8741 = vrot.lane.b32.xlu0 %v8709, 32
        %v8742 = vpop.permute.xlu0 %8741
        %8743 = vrot.lane.b32.xlu0 %v8712, 32
        %v8744 = vpop.permute.xlu0 %8743
        %8745 = vrot.lane.b32.xlu0 %v8711, 32
        %v8746 = vpop.permute.xlu0 %8745
        %8747 = vrot.lane.b32.xlu0 %v8714, 32
        %v8748 = vpop.permute.xlu0 %8747
        %8749 = vrot.lane.b32.xlu0 %v8713, 32
        %v8750 = vpop.permute.xlu0 %8749
        %8751 = vrot.lane.b32.xlu0 %v8716, 32
        %v8752 = vpop.permute.xlu0 %8751
        %8753 = vrot.lane.b32.xlu0 %v8715, 32
        %v8754 = vpop.permute.xlu0 %8753
        %8755 = vrot.lane.b32.xlu0 %v8718, 32
        %v8756 = vpop.permute.xlu0 %8755
        %8757 = vrot.lane.b32.xlu0 %v8717, 32
        %v8758 = vpop.permute.xlu0 %8757
        %8759 = vrot.lane.b32.xlu0 %v8720, 32
        %v8760 = vpop.permute.xlu0 %8759
        %8761 = vrot.lane.b32.xlu0 %v8719, 32
        %v8762 = vpop.permute.xlu0 %8761
        %8763 = vrot.lane.b32.xlu0 %v8722, 32
        %v8764 = vpop.permute.xlu0 %8763
        %8765 = vrot.lane.b32.xlu0 %v8721, 32
        %v8766 = vpop.permute.xlu0 %8765
        %8767 = vrot.lane.b32.xlu0 %v8724, 32
        %v8768 = vpop.permute.xlu0 %8767
        %8769 = vrot.lane.b32.xlu0 %v8723, 32
        %v8770 = vpop.permute.xlu0 %8769
        %8771 = vrot.lane.b32.xlu0 %v8726, 32
        %v8772 = vpop.permute.xlu0 %8771
        %8773 = vrot.lane.b32.xlu0 %v8725, 32
        %v8774 = vpop.permute.xlu0 %8773
        %8775 = vrot.lane.b32.xlu0 %v8728, 32
        %v8776 = vpop.permute.xlu0 %8775
        %8777 = vrot.lane.b32.xlu0 %v8727, 32
        %v8778 = vpop.permute.xlu0 %8777
        %8779 = vrot.lane.b32.xlu0 %v8730, 32
        %v8780 = vpop.permute.xlu0 %8779
        %8781 = vrot.lane.b32.xlu0 %v8729, 32
        %v8782 = vpop.permute.xlu0 %8781
        %8783 = vrot.lane.b32.xlu0 %v8732, 32
        %v8784 = vpop.permute.xlu0 %8783
        %8785 = vrot.lane.b32.xlu0 %v8731, 32
        %v8786 = vpop.permute.xlu0 %8785
        %8787 = vrot.lane.b32.xlu0 %v8734, 32
        %v8788 = vpop.permute.xlu0 %8787
        %8789 = vrot.lane.b32.xlu0 %v8733, 32
        %v8790 = vpop.permute.xlu0 %8789
        %8791 = vrot.lane.b32.xlu0 %v7209, 40
        %v8792 = vpop.permute.xlu0 %8791
        %8793 = vrot.lane.b32.xlu0 %v7212, 40
        %v8794 = vpop.permute.xlu0 %8793
        %8795 = vrot.lane.b32.xlu0 %v7213, 40
        %v8796 = vpop.permute.xlu0 %8795
        %8797 = vrot.lane.b32.xlu0 %v7214, 40
        %v8798 = vpop.permute.xlu0 %8797
        %8799 = vrot.lane.b32.xlu0 %v7215, 40
        %v8800 = vpop.permute.xlu0 %8799
        %8801 = vrot.lane.b32.xlu0 %v7216, 40
        %v8802 = vpop.permute.xlu0 %8801
        %8803 = vrot.lane.b32.xlu0 %v7217, 40
        %v8804 = vpop.permute.xlu0 %8803
        %8805 = vrot.lane.b32.xlu0 %v7218, 40
        %v8806 = vpop.permute.xlu0 %8805
        %8807 = vrot.lane.b32.xlu0 %v7219, 40
        %v8808 = vpop.permute.xlu0 %8807
        %8809 = vrot.lane.b32.xlu0 %v7220, 40
        %v8810 = vpop.permute.xlu0 %8809
        %8811 = vrot.lane.b32.xlu0 %v7221, 40
        %v8812 = vpop.permute.xlu0 %8811
        %8813 = vrot.lane.b32.xlu0 %v7222, 40
        %v8814 = vpop.permute.xlu0 %8813
        %8815 = vrot.lane.b32.xlu0 %v7223, 40
        %v8816 = vpop.permute.xlu0 %8815
        %8817 = vrot.lane.b32.xlu0 %v7160, 40
        %v8818 = vpop.permute.xlu0 %8817
        %8819 = vrot.lane.b32.xlu0 %v7224, 40
        %v8820 = vpop.permute.xlu0 %8819
        %8821 = vrot.lane.b32.xlu0 %v7508, 48
        %v8822 = vpop.permute.xlu0 %8821
        %8823 = vrot.lane.b32.xlu0 %v7535, 48
        %v8824 = vpop.permute.xlu0 %8823
        %8825 = vrot.lane.b32.xlu0 %v7544, 48
        %v8826 = vpop.permute.xlu0 %8825
        %8827 = vrot.lane.b32.xlu0 %v7553, 48
        %v8828 = vpop.permute.xlu0 %8827
        %8829 = vrot.lane.b32.xlu0 %v7562, 48
        %v8830 = vpop.permute.xlu0 %8829
        %8831 = vrot.lane.b32.xlu0 %v7571, 48
        %v8832 = vpop.permute.xlu0 %8831
        %8833 = vrot.lane.b32.xlu0 %v7580, 48
        %v8834 = vpop.permute.xlu0 %8833
        %8835 = vrot.lane.b32.xlu0 %v7589, 48
        %v8836 = vpop.permute.xlu0 %8835
        %8837 = vrot.lane.b32.xlu0 %v7598, 48
        %v8838 = vpop.permute.xlu0 %8837
        %8839 = vrot.lane.b32.xlu0 %v7607, 48
        %v8840 = vpop.permute.xlu0 %8839
        %8841 = vrot.lane.b32.xlu0 %v7616, 48
        %v8842 = vpop.permute.xlu0 %8841
        %8843 = vrot.lane.b32.xlu0 %v7625, 48
        %v8844 = vpop.permute.xlu0 %8843
        %8845 = vrot.lane.b32.xlu0 %v7838, 48
        %v8846 = vpop.permute.xlu0 %8845
        %8847 = vrot.lane.b32.xlu0 %v7950, 48
        %v8848 = vpop.permute.xlu0 %8847
        %8849 = vrot.lane.b32.xlu0 %v8022, 48
        %v8850 = vpop.permute.xlu0 %8849
        %8851 = vrot.lane.b32.xlu0 %v7436, 56
        %v8852 = vpop.permute.xlu0 %8851
        %8853 = vrot.lane.b32.xlu0 %v7445, 56
        %v8854 = vpop.permute.xlu0 %8853
        %8855 = vrot.lane.b32.xlu0 %v7448, 56
        %v8856 = vpop.permute.xlu0 %8855
        %8857 = vrot.lane.b32.xlu0 %v7451, 56
        %v8858 = vpop.permute.xlu0 %8857
        %8859 = vrot.lane.b32.xlu0 %v7454, 56
        %v8860 = vpop.permute.xlu0 %8859
        %8861 = vrot.lane.b32.xlu0 %v7457, 56
        %v8862 = vpop.permute.xlu0 %8861
        %8863 = vrot.lane.b32.xlu0 %v7460, 56
        %v8864 = vpop.permute.xlu0 %8863
        %8865 = vrot.lane.b32.xlu0 %v7463, 56
        %v8866 = vpop.permute.xlu0 %8865
        %8867 = vrot.lane.b32.xlu0 %v7466, 56
        %v8868 = vpop.permute.xlu0 %8867
        %8869 = vrot.lane.b32.xlu0 %v7469, 56
        %v8870 = vpop.permute.xlu0 %8869
        %8871 = vrot.lane.b32.xlu0 %v7472, 56
        %v8872 = vpop.permute.xlu0 %8871
        %8873 = vrot.lane.b32.xlu0 %v7475, 56
        %v8874 = vpop.permute.xlu0 %8873
        %8875 = vrot.lane.b32.xlu0 %v7803, 56
        %v8876 = vpop.permute.xlu0 %8875
        %8877 = vrot.lane.b32.xlu0 %v7986, 56
        %v8878 = vpop.permute.xlu0 %8877
        %8879 = vrot.lane.b32.xlu0 %v7985, 56
        %v8880 = vpop.permute.xlu0 %8879
        %8881 = vrot.lane.b32.xlu0 %v7510, 64
        %v8882 = vpop.permute.xlu0 %8881
        %8883 = vrot.lane.b32.xlu0 %v7537, 64
        %v8884 = vpop.permute.xlu0 %8883
        %8885 = vrot.lane.b32.xlu0 %v7546, 64
        %v8886 = vpop.permute.xlu0 %8885
        %8887 = vrot.lane.b32.xlu0 %v7555, 64
        %v8888 = vpop.permute.xlu0 %8887
        %8889 = vrot.lane.b32.xlu0 %v7564, 64
        %v8890 = vpop.permute.xlu0 %8889
        %8891 = vrot.lane.b32.xlu0 %v7573, 64
        %v8892 = vpop.permute.xlu0 %8891
        %8893 = vrot.lane.b32.xlu0 %v7582, 64
        %v8894 = vpop.permute.xlu0 %8893
        %8895 = vrot.lane.b32.xlu0 %v7591, 64
        %v8896 = vpop.permute.xlu0 %8895
        %8897 = vrot.lane.b32.xlu0 %v7600, 64
        %v8898 = vpop.permute.xlu0 %8897
        %8899 = vrot.lane.b32.xlu0 %v7609, 64
        %v8900 = vpop.permute.xlu0 %8899
        %8901 = vrot.lane.b32.xlu0 %v7618, 64
        %v8902 = vpop.permute.xlu0 %8901
        %8903 = vrot.lane.b32.xlu0 %v7627, 64
        %v8904 = vpop.permute.xlu0 %8903
        %8905 = vrot.lane.b32.xlu0 %v7840, 64
        %v8906 = vpop.permute.xlu0 %8905
        %8907 = vrot.lane.b32.xlu0 %v8027, 64
        %v8908 = vpop.permute.xlu0 %8907
        %8909 = vrot.lane.b32.xlu0 %v8024, 64
        %v8910 = vpop.permute.xlu0 %8909
        %v8912 = vsel %vm1329, %v7210, %v8606
        %v8914 = vsel %vm1329, %v7209, %v8608
        %v8916 = vsel %vm1329, %v7212, %v8610
        %v8918 = vsel %vm1329, %v7213, %v8612
        %v8920 = vsel %vm1329, %v7214, %v8614
        %v8922 = vsel %vm1329, %v7215, %v8616
        %v8924 = vsel %vm1329, %v7216, %v8618
        %v8926 = vsel %vm1329, %v7217, %v8620
        %v8928 = vsel %vm1329, %v7218, %v8622
        %v8930 = vsel %vm1329, %v7219, %v8624
        %v8932 = vsel %vm1329, %v7220, %v8626
        %v8934 = vsel %vm1329, %v7221, %v8628
        %v8936 = vsel %vm1329, %v7222, %v8630
        %v8938 = vsel %vm1329, %v7157, %v8632
        %v8940 = vsel %vm1329, %v7223, %v8634
        %v8942 = vsel %vm1329, %v7160, %v8636
        %v8944 = vsel %vm1329, %v7224, %v8638
        %v8946 = vsel %vm1393, %v8912, %v8640
        %v8948 = vsel %vm1393, %v8914, %v8642
        %v8950 = vsel %vm1393, %v8916, %v8644
        %v8952 = vsel %vm1393, %v8918, %v8646
        %v8954 = vsel %vm1393, %v8920, %v8648
        %v8956 = vsel %vm1393, %v8922, %v8650
        %v8958 = vsel %vm1393, %v8924, %v8652
        %v8960 = vsel %vm1393, %v8926, %v8654
        %v8962 = vsel %vm1393, %v8928, %v8656
        %v8964 = vsel %vm1393, %v8930, %v8658
        %v8966 = vsel %vm1393, %v8932, %v8660
        %v8968 = vsel %vm1393, %v8934, %v8662
        %v8970 = vsel %vm1393, %v8936, %v8664
        %v8972 = vsel %vm1393, %v8938, %v8666
        %v8974 = vsel %vm1393, %v8940, %v8668
        %v8976 = vsel %vm1393, %v8942, %v8670
        %v8978 = vsel %vm1393, %v8944, %v8672
        %v8980 = vsel %vm1459, %v8946, %v8674
        %v8982 = vsel %vm1459, %v8948, %v8676
        %v8984 = vsel %vm1459, %v8950, %v8678
        %v8986 = vsel %vm1459, %v8952, %v8680
        %v8988 = vsel %vm1459, %v8954, %v8682
        %v8990 = vsel %vm1459, %v8956, %v8684
        %v8992 = vsel %vm1459, %v8958, %v8686
        %v8994 = vsel %vm1459, %v8960, %v8688
        %v8996 = vsel %vm1459, %v8962, %v8690
        %v8998 = vsel %vm1459, %v8964, %v8692
        %v9000 = vsel %vm1459, %v8966, %v8694
        %v9002 = vsel %vm1459, %v8968, %v8696
        %v9004 = vsel %vm1459, %v8970, %v8698
        %v9006 = vsel %vm1459, %v8972, %v8700
        %v9008 = vsel %vm1459, %v8974, %v8702
        %v9010 = vsel %vm1459, %v8976, %v8704
        %v9012 = vsel %vm1459, %v8978, %v8706
        %v9014 = vsel %vm1523, %v8184, %v8736
        %v9016 = vsel %vm1523, %v8980, %v8738
        %v9018 = vsel %vm1523, %v8182, %v8740
        %v9020 = vsel %vm1523, %v8982, %v8742
        %v9022 = vsel %vm1523, %v8188, %v8744
        %v9024 = vsel %vm1523, %v8984, %v8746
        %v9026 = vsel %vm1523, %v8190, %v8748
        %v9028 = vsel %vm1523, %v8986, %v8750
        %v9030 = vsel %vm1523, %v8192, %v8752
        %v9032 = vsel %vm1523, %v8988, %v8754
        %v9034 = vsel %vm1523, %v8194, %v8756
        %v9036 = vsel %vm1523, %v8990, %v8758
        %v9038 = vsel %vm1523, %v8196, %v8760
        %v9040 = vsel %vm1523, %v8992, %v8762
        %v9042 = vsel %vm1523, %v8198, %v8764
        %v9044 = vsel %vm1523, %v8994, %v8766
        %v9046 = vsel %vm1523, %v8200, %v8768
        %v9048 = vsel %vm1523, %v8996, %v8770
        %v9050 = vsel %vm1523, %v8202, %v8772
        %v9052 = vsel %vm1523, %v8998, %v8774
        %v9054 = vsel %vm1523, %v8204, %v8776
        %v9056 = vsel %vm1523, %v9000, %v8778
        %v9058 = vsel %vm1523, %v8206, %v8780
        %v9060 = vsel %vm1523, %v9002, %v8782
        %v9062 = vsel %vm1523, %v8208, %v8784
        %v9064 = vsel %vm1523, %v9004, %v8786
        %v9066 = vsel %vm1523, %v9006, %v8788
        %v9068 = vsel %vm1523, %v9008, %v8790
        %v9069 = vsel %vm1523, %v9010, %v8784
        %v9070 = vsel %vm1523, %v9012, %v8786
        %v9071 = vsel %vm1523, %v9006, %v8780
        %v9072 = vsel %vm1523, %v9008, %v8782
        %v9073 = vsel %vm3066, %v9014, %v7735
        %v9075 = vsel %vm3066, %v9016, %v8792
        %v9076 = vsel %vm3066, %v9018, %v7737
        %v9078 = vsel %vm3066, %v9020, %v8794
        %v9079 = vsel %vm3066, %v9022, %v7739
        %v9081 = vsel %vm3066, %v9024, %v8796
        %v9082 = vsel %vm3066, %v9026, %v7741
        %v9084 = vsel %vm3066, %v9028, %v8798
        %v9085 = vsel %vm3066, %v9030, %v7743
        %v9087 = vsel %vm3066, %v9032, %v8800
        %v9088 = vsel %vm3066, %v9034, %v7745
        %v9090 = vsel %vm3066, %v9036, %v8802
        %v9091 = vsel %vm3066, %v9038, %v7747
        %v9093 = vsel %vm3066, %v9040, %v8804
        %v9094 = vsel %vm3066, %v9042, %v7749
        %v9096 = vsel %vm3066, %v9044, %v8806
        %v9097 = vsel %vm3066, %v9046, %v7751
        %v9099 = vsel %vm3066, %v9048, %v8808
        %v9100 = vsel %vm3066, %v9050, %v7753
        %v9102 = vsel %vm3066, %v9052, %v8810
        %v9103 = vsel %vm3066, %v9054, %v7755
        %v9105 = vsel %vm3066, %v9056, %v8812
        %v9106 = vsel %vm3066, %v9058, %v7757
        %v9108 = vsel %vm3066, %v9060, %v8814
        %v9109 = vsel %vm3066, %v9062, %v7759
        %v9111 = vsel %vm3066, %v9064, %v8816
        %v9113 = vsel %vm3066, %v9066, %v8818
        %v9115 = vsel %vm3066, %v9068, %v8820
        %v9116 = vsel %vm3066, %v9069, %v7759
        %v9117 = vsel %vm3066, %v9070, %v8816
        %v9118 = vsel %vm3066, %v9071, %v7757
        %v9119 = vsel %vm3066, %v9072, %v8814
        %v9120 = vsel %vm3099, %v9073, %v7776
        %v9122 = vsel %vm3099, %v9075, %v8822
        %v9123 = vsel %vm3099, %v9076, %v7778
        %v9125 = vsel %vm3099, %v9078, %v8824
        %v9126 = vsel %vm3099, %v9079, %v7780
        %v9128 = vsel %vm3099, %v9081, %v8826
        %v9129 = vsel %vm3099, %v9082, %v7782
        %v9131 = vsel %vm3099, %v9084, %v8828
        %v9132 = vsel %vm3099, %v9085, %v7784
        %v9134 = vsel %vm3099, %v9087, %v8830
        %v9135 = vsel %vm3099, %v9088, %v7786
        %v9137 = vsel %vm3099, %v9090, %v8832
        %v9138 = vsel %vm3099, %v9091, %v7788
        %v9140 = vsel %vm3099, %v9093, %v8834
        %v9141 = vsel %vm3099, %v9094, %v7790
        %v9143 = vsel %vm3099, %v9096, %v8836
        %v9144 = vsel %vm3099, %v9097, %v7792
        %v9146 = vsel %vm3099, %v9099, %v8838
        %v9147 = vsel %vm3099, %v9100, %v7794
        %v9149 = vsel %vm3099, %v9102, %v8840
        %v9150 = vsel %vm3099, %v9103, %v7796
        %v9152 = vsel %vm3099, %v9105, %v8842
        %v9153 = vsel %vm3099, %v9106, %v7798
        %v9155 = vsel %vm3099, %v9108, %v8844
        %v9156 = vsel %vm3099, %v9109, %v7800
        %v9158 = vsel %vm3099, %v9111, %v8846
        %v9160 = vsel %vm3099, %v9113, %v8848
        %v9162 = vsel %vm3099, %v9115, %v8850
        %v9163 = vsel %vm3099, %v9116, %v7800
        %v9164 = vsel %vm3099, %v9117, %v8846
        %v9165 = vsel %vm3099, %v9118, %v7798
        %v9166 = vsel %vm3099, %v9119, %v8844
        %v9167 = vsel %vm3131, %v9120, %v7810
        %v9169 = vsel %vm3131, %v9122, %v8852
        %v9170 = vsel %vm3131, %v9123, %v7812
        %v9172 = vsel %vm3131, %v9125, %v8854
        %v9173 = vsel %vm3131, %v9126, %v7814
        %v9175 = vsel %vm3131, %v9128, %v8856
        %v9176 = vsel %vm3131, %v9129, %v7816
        %v9178 = vsel %vm3131, %v9131, %v8858
        %v9179 = vsel %vm3131, %v9132, %v7818
        %v9181 = vsel %vm3131, %v9134, %v8860
        %v9182 = vsel %vm3131, %v9135, %v7820
        %v9184 = vsel %vm3131, %v9137, %v8862
        %v9185 = vsel %vm3131, %v9138, %v7822
        %v9187 = vsel %vm3131, %v9140, %v8864
        %v9188 = vsel %vm3131, %v9141, %v7824
        %v9190 = vsel %vm3131, %v9143, %v8866
        %v9191 = vsel %vm3131, %v9144, %v7826
        %v9193 = vsel %vm3131, %v9146, %v8868
        %v9194 = vsel %vm3131, %v9147, %v7828
        %v9196 = vsel %vm3131, %v9149, %v8870
        %v9197 = vsel %vm3131, %v9150, %v7830
        %v9199 = vsel %vm3131, %v9152, %v8872
        %v9200 = vsel %vm3131, %v9153, %v7832
        %v9202 = vsel %vm3131, %v9155, %v8874
        %v9203 = vsel %vm3131, %v9156, %v7834
        %v9205 = vsel %vm3131, %v9158, %v8876
        %v9207 = vsel %vm3131, %v9160, %v8878
        %v9209 = vsel %vm3131, %v9162, %v8880
        %v9210 = vsel %vm3131, %v9163, %v7834
        %v9211 = vsel %vm3131, %v9164, %v8876
        %v9212 = vsel %vm3131, %v9165, %v7832
        %v9213 = vsel %vm3131, %v9166, %v8874
        %v9214 = vsel %vm3163, %v9167, %v7849
        %v9216 = vsel %vm3163, %v9169, %v8882
        %v9217 = vsel %vm3163, %v9170, %v7851
        %v9219 = vsel %vm3163, %v9172, %v8884
        %v9220 = vsel %vm3163, %v9173, %v7853
        %v9222 = vsel %vm3163, %v9175, %v8886
        %v9223 = vsel %vm3163, %v9176, %v7855
        %v9225 = vsel %vm3163, %v9178, %v8888
        %v9226 = vsel %vm3163, %v9179, %v7857
        %v9228 = vsel %vm3163, %v9181, %v8890
        %v9229 = vsel %vm3163, %v9182, %v7859
        %v9231 = vsel %vm3163, %v9184, %v8892
        %v9232 = vsel %vm3163, %v9185, %v7861
        %v9234 = vsel %vm3163, %v9187, %v8894
        %v9235 = vsel %vm3163, %v9188, %v7863
        %v9237 = vsel %vm3163, %v9190, %v8896
        %v9238 = vsel %vm3163, %v9191, %v7865
        %v9240 = vsel %vm3163, %v9193, %v8898
        %v9241 = vsel %vm3163, %v9194, %v7867
        %v9243 = vsel %vm3163, %v9196, %v8900
        %v9244 = vsel %vm3163, %v9197, %v7869
        %v9246 = vsel %vm3163, %v9199, %v8902
        %v9247 = vsel %vm3163, %v9200, %v7871
        %v9249 = vsel %vm3163, %v9202, %v8904
        %v9250 = vsel %vm3163, %v9203, %v7873
        %v9252 = vsel %vm3163, %v9205, %v8906
        %v9254 = vsel %vm3163, %v9207, %v8908
        %v9256 = vsel %vm3163, %v9209, %v8910
        %v9257 = vsel %vm3163, %v9210, %v7873
        %v9258 = vsel %vm3163, %v9211, %v8906
        %v9259 = vsel %vm3163, %v9212, %v7871
        %v9260 = vsel %vm3163, %v9213, %v8904
        %v9261 = vshrl.u32 %v9214, 16
        %v9263 = vshll.u32 %v9214, 16
        %v9265 = vrot.slane %v9263, 1
        %v9266 = vor.u32 %v9261, %v9265
        %v9267 = vshll.u32 %v9216, 16
        %v9269 = vrot.slane %v9267, 1
        %v9270 = vsel %vm778, %v9266, %v9269
        %v9271 = vshrl.u32 %v9217, 16
        %v9273 = vshll.u32 %v9217, 16
        %v9275 = vrot.slane %v9273, 1
        %v9276 = vor.u32 %v9271, %v9275
        %v9277 = vshll.u32 %v9219, 16
        %v9279 = vrot.slane %v9277, 1
        %v9280 = vsel %vm778, %v9276, %v9279
        %v9281 = vshrl.u32 %v9220, 16
        %v9283 = vshll.u32 %v9220, 16
        %v9285 = vrot.slane %v9283, 1
        %v9286 = vor.u32 %v9281, %v9285
        %v9287 = vshll.u32 %v9222, 16
        %v9289 = vrot.slane %v9287, 1
        %v9290 = vsel %vm778, %v9286, %v9289
        %v9291 = vshrl.u32 %v9223, 16
        %v9293 = vshll.u32 %v9223, 16
        %v9295 = vrot.slane %v9293, 1
        %v9296 = vor.u32 %v9291, %v9295
        %v9297 = vshll.u32 %v9225, 16
        %v9299 = vrot.slane %v9297, 1
        %v9300 = vsel %vm778, %v9296, %v9299
        %v9301 = vshrl.u32 %v9226, 16
        %v9303 = vshll.u32 %v9226, 16
        %v9305 = vrot.slane %v9303, 1
        %v9306 = vor.u32 %v9301, %v9305
        %v9307 = vshll.u32 %v9228, 16
        %v9309 = vrot.slane %v9307, 1
        %v9310 = vsel %vm778, %v9306, %v9309
        %v9311 = vshrl.u32 %v9229, 16
        %v9313 = vshll.u32 %v9229, 16
        %v9315 = vrot.slane %v9313, 1
        %v9316 = vor.u32 %v9311, %v9315
        %v9317 = vshll.u32 %v9231, 16
        %v9319 = vrot.slane %v9317, 1
        %v9320 = vsel %vm778, %v9316, %v9319
        %v9321 = vshrl.u32 %v9232, 16
        %v9323 = vshll.u32 %v9232, 16
        %v9325 = vrot.slane %v9323, 1
        %v9326 = vor.u32 %v9321, %v9325
        %v9327 = vshll.u32 %v9234, 16
        %v9329 = vrot.slane %v9327, 1
        %v9330 = vsel %vm778, %v9326, %v9329
        %v9331 = vshrl.u32 %v9235, 16
        %v9333 = vshll.u32 %v9235, 16
        %v9335 = vrot.slane %v9333, 1
        %v9336 = vor.u32 %v9331, %v9335
        %v9337 = vshll.u32 %v9237, 16
        %v9339 = vrot.slane %v9337, 1
        %v9340 = vsel %vm778, %v9336, %v9339
        %v9341 = vshrl.u32 %v9238, 16
        %v9343 = vshll.u32 %v9238, 16
        %v9345 = vrot.slane %v9343, 1
        %v9346 = vor.u32 %v9341, %v9345
        %v9347 = vshll.u32 %v9240, 16
        %v9349 = vrot.slane %v9347, 1
        %v9350 = vsel %vm778, %v9346, %v9349
        %v9351 = vshrl.u32 %v9241, 16
        %v9353 = vshll.u32 %v9241, 16
        %v9355 = vrot.slane %v9353, 1
        %v9356 = vor.u32 %v9351, %v9355
        %v9357 = vshll.u32 %v9243, 16
        %v9359 = vrot.slane %v9357, 1
        %v9360 = vsel %vm778, %v9356, %v9359
        %v9361 = vshrl.u32 %v9244, 16
        %v9363 = vshll.u32 %v9244, 16
        %v9365 = vrot.slane %v9363, 1
        %v9366 = vor.u32 %v9361, %v9365
        %v9367 = vshll.u32 %v9246, 16
        %v9369 = vrot.slane %v9367, 1
        %v9370 = vsel %vm778, %v9366, %v9369
        %v9371 = vshrl.u32 %v9247, 16
        %v9373 = vshll.u32 %v9247, 16
        %v9375 = vrot.slane %v9373, 1
        %v9376 = vor.u32 %v9371, %v9375
        %v9377 = vshll.u32 %v9249, 16
        %v9379 = vrot.slane %v9377, 1
        %v9380 = vsel %vm778, %v9376, %v9379
        %v9381 = vshrl.u32 %v9250, 16
        %v9383 = vshll.u32 %v9250, 16
        %v9385 = vrot.slane %v9383, 1
        %v9386 = vor.u32 %v9381, %v9385
        %v9387 = vshll.u32 %v9252, 16
        %v9389 = vrot.slane %v9387, 1
        %v9390 = vsel %vm778, %v9386, %v9389
        %v9391 = vshrl.u32 %v9254, 16
        %v9393 = vshll.u32 %v9254, 16
        %v9395 = vrot.slane %v9393, 1
        %v9396 = vor.u32 %v9391, %v9395
        %v9397 = vshll.u32 %v9256, 16
        %v9399 = vrot.slane %v9397, 1
        %v9400 = vsel %vm778, %v9396, %v9399
        %v9401 = vshrl.u32 %v9257, 16
        %v9403 = vshll.u32 %v9257, 16
        %v9405 = vrot.slane %v9403, 1
        %v9406 = vor.u32 %v9401, %v9405
        %v9407 = vshll.u32 %v9258, 16
        %v9409 = vrot.slane %v9407, 1
        %v9410 = vsel %vm778, %v9406, %v9409
        %v9411 = vshrl.u32 %v9259, 16
        %v9413 = vshll.u32 %v9259, 16
        %v9415 = vrot.slane %v9413, 1
        %v9416 = vor.u32 %v9411, %v9415
        %v9417 = vshll.u32 %v9260, 16
        %v9419 = vrot.slane %v9417, 1
        %v9420 = vsel %vm778, %v9416, %v9419
        %v9421 = vld [vmem:[%s4] sm:$0xf]
        %v9422 = vld [vmem:[%s4 + $0x4] sm:$0xf]
        %v9423 = vld [vmem:[%s4 + $0x8] sm:$0xf]
        %v9424 = vld [vmem:[%s4 + $0xc] sm:$0xf]
        %v9425 = vld [vmem:[%s4 + $0x10] sm:$0xf]
        %v9426 = vld [vmem:[%s4 + $0x14] sm:$0xf]
        %v9427 = vld [vmem:[%s4 + $0x18] sm:$0xf]
        %v9428 = vld [vmem:[%s4 + $0x1c] sm:$0xf]
        %v9429 = vld [vmem:[%s4 + $0x20] sm:$0xf]
        %v9430 = vld [vmem:[%s4 + $0x24] sm:$0xf]
        %v9431 = vld [vmem:[%s4 + $0x28] sm:$0xf]
        %v9432 = vld [vmem:[%s4 + $0x2c] sm:$0xf]
        %v9433 = vld [vmem:[%s4 + $0x30] sm:$0xf]
        %v9434 = vld [vmem:[%s4 + $0x34] sm:$0xf]
        %v9435 = vld [vmem:[%s4 + $0x38] sm:$0xf]
        %v9436 = vld [vmem:[%s4 + $0x3c] sm:$0xf]
        %v9437 = vld [vmem:[%s4 + $0x40] sm:$0xf]
        %v9438 = vld [vmem:[%s4 + $0x44] sm:$0xf]
        %v9439 = vld [vmem:[%s4 + $0x48] sm:$0xf]
        %v9440 = vld [vmem:[%s4 + $0x4c] sm:$0xf]
        %v9441 = vld [vmem:[%s4 + $0x50] sm:$0xf]
        %v9442 = vld [vmem:[%s4 + $0x54] sm:$0xf]
        %v9443 = vld [vmem:[%s4 + $0x58] sm:$0xf]
        %v9444 = vld [vmem:[%s4 + $0x5c] sm:$0xf]
        %v9445 = vld [vmem:[%s4 + $0x60] sm:$0xf]
        %v9446 = vlaneseq
        %v9447 = vshrl.u32 %v9446, 7
        %v9448 = vsub.s32 1, %v9447
        %v9449 = vrot.slane %v338, %v9448
        %v9475 = vunpack.c.l.b16 %v9421
        %v9476 = vunpack.c.l.b16 %v9422
        %v9477 = vunpack.c.l.b16 %v9423
        %v9478 = vunpack.c.l.b16 %v9424
        %v9479 = vunpack.c.l.b16 %v9425
        %v9480 = vunpack.c.l.b16 %v9426
        %v9481 = vunpack.c.l.b16 %v9427
        %v9482 = vunpack.c.l.b16 %v9428
        %v9483 = vunpack.c.l.b16 %v9429
        %v9484 = vunpack.c.l.b16 %v9430
        %v9485 = vunpack.c.l.b16 %v9431
        %v9486 = vunpack.c.l.b16 %v9432
        %v9487 = vunpack.c.l.b16 %v9433
        %v9488 = vunpack.c.l.b16 %v9434
        %v9489 = vunpack.c.l.b16 %v9435
        %v9490 = vunpack.c.l.b16 %v9436
        %v9491 = vunpack.c.l.b16 %v9437
        %v9492 = vunpack.c.l.b16 %v9438
        %v9493 = vunpack.c.l.b16 %v9439
        %v9494 = vunpack.c.l.b16 %v9440
        %v9495 = vunpack.c.l.b16 %v9441
        %v9496 = vunpack.c.l.b16 %v9442
        %v9497 = vunpack.c.l.b16 %v9443
        %v9498 = vunpack.c.l.b16 %v9444
        %v9499 = vunpack.c.l.b16 %v9445
        %v9500 = vpack.c.b16 %v9476, %v9475
        %v9501 = vpack.c.b16 %v9478, %v9477
        %v9502 = vpack.c.b16 %v9480, %v9479
        %v9503 = vpack.c.b16 %v9482, %v9481
        %v9504 = vpack.c.b16 %v9484, %v9483
        %v9505 = vpack.c.b16 %v9486, %v9485
        %v9506 = vpack.c.b16 %v9488, %v9487
        %v9507 = vpack.c.b16 %v9490, %v9489
        %v9508 = vpack.c.b16 %v9492, %v9491
        %v9509 = vpack.c.b16 %v9494, %v9493
        %v9510 = vpack.c.b16 %v9496, %v9495
        %v9511 = vpack.c.b16 %v9498, %v9497
        %v9512 = vpack.c.b16 %v9499, %v9499
        %v9526 = vsel %vm3235, %v9270, 0
        %v9529 = vsel %vm3235, %v9280, 0
        %v9532 = vsel %vm3235, %v9290, 0
        %v9535 = vsel %vm3235, %v9300, 0
        %v9538 = vsel %vm3235, %v9310, 0
        %v9541 = vsel %vm3235, %v9320, 0
        %v9544 = vsel %vm3235, %v9330, 0
        %v9547 = vsel %vm3235, %v9340, 0
        %v9550 = vsel %vm3235, %v9350, 0
        %v9553 = vsel %vm3235, %v9360, 0
        %v9556 = vsel %vm3235, %v9370, 0
        %v9559 = vsel %vm3235, %v9380, 0
        %v9562 = vsel %vm3235, %v9390, 0
        %v9565 = vsel %vm3235, %v9400, 0
        %v9568 = vsel %vm3235, %v9410, 0
        %v9571 = vsel %vm3235, %v9420, 0
        %v9574 = vsel %vm3268, %v9512, 0
        %9576 = vmatprep.subr.bf16.mxu0 0
        %9577 = vmatpush1.bf16.msra.mxu0 %v9500
        %9578 = vmatprep.subr.bf16.mxu0 0
        %9579 = vmatpush1.bf16.msra.mxu0 %v9501
        %9580 = vmatprep.subr.bf16.mxu0 0
        %9581 = vmatpush1.bf16.msra.mxu0 %v9502
        %9582 = vmatprep.subr.bf16.mxu0 0
        %9583 = vmatpush1.bf16.msra.mxu0 %v9503
        %9584 = vmatprep.subr.bf16.mxu0 0
        %9585 = vmatpush1.bf16.msra.mxu0 %v9504
        %9586 = vmatprep.subr.bf16.mxu0 0
        %9587 = vmatpush1.bf16.msra.mxu0 %v9505
        %9588 = vmatprep.subr.bf16.mxu0 0
        %9589 = vmatpush1.bf16.msra.mxu0 %v9506
        %9590 = vmatprep.subr.bf16.mxu0 0
        %9591 = vmatpush1.bf16.msra.mxu0 %v9507
        %9592 = vmatprep.subr.bf16.mxu0 0
        %9593 = vmatpush1.bf16.msra.mxu0 %v9508
        %9594 = vmatprep.subr.bf16.mxu0 0
        %9595 = vmatpush1.bf16.msra.mxu0 %v9509
        %9596 = vmatprep.subr.bf16.mxu0 0
        %9597 = vmatpush1.bf16.msra.mxu0 %v9510
        %9598 = vmatprep.subr.bf16.mxu0 0
        %9599 = vmatpush1.bf16.msra.mxu0 %v9511
        %9600 = vmatprep.subr.bf16.mxu0 0
        %9601 = vmatpush1.bf16.msra.mxu0 %v9574
        %9602 = vmatprep.subr.bf16.mxu0 0
        %9603 = vmatpush1.bf16.msra.mxu0 0
        %9604 = vmatprep.subr.bf16.mxu0 0
        %9605 = vmatpush1.bf16.msra.mxu0 0
        %9606 = vmatprep.subr.bf16.mxu0 0
        %9607 = vmatpush1.bf16.msra.mxu0 0
        %9608 = vmatprep.mubr.bf16.mxu0 %v9526
        %9609 = vmatmul.mubr.bf16.gmra.mrb[0].mxu0 %v8559
        %v9610 = vpop.f32.mrb[0].mxu0
        %v9611 = vadd.f32 %v9449, %v9610
        %v9612 = vpop.f32.mrb[0].mxu0
        %v9613 = vpop.f32.mrb[0].mxu0
        %v9614 = vadd.f32 %v9449, %v9613
        %v9615 = vpop.f32.mrb[0].mxu0
        %9616 = vmatprep.mubr.bf16.mxu0 %v9529
        %9617 = vmatmul.mubr.bf16.gmra.mrb[0].mxu0 %v8562
        %v9618 = vpop.f32.mrb[0].mxu0
        %v9619 = vadd.f32 %v9449, %v9618
        %v9620 = vpop.f32.mrb[0].mxu0
        %v9621 = vpop.f32.mrb[0].mxu0
        %v9622 = vadd.f32 %v9449, %v9621
        %v9623 = vpop.f32.mrb[0].mxu0
        %9624 = vmatprep.mubr.bf16.mxu0 %v9532
        %9625 = vmatmul.mubr.bf16.gmra.mrb[0].mxu0 %v8565
        %v9626 = vpop.f32.mrb[0].mxu0
        %v9627 = vadd.f32 %v9449, %v9626
        %v9628 = vpop.f32.mrb[0].mxu0
        %v9629 = vpop.f32.mrb[0].mxu0
        %v9630 = vadd.f32 %v9449, %v9629
        %v9631 = vpop.f32.mrb[0].mxu0
        %9632 = vmatprep.mubr.bf16.mxu0 %v9535
        %9633 = vmatmul.mubr.bf16.gmra.mrb[0].mxu0 %v8568
        %v9634 = vpop.f32.mrb[0].mxu0
        %v9635 = vadd.f32 %v9449, %v9634
        %v9636 = vpop.f32.mrb[0].mxu0
        %v9637 = vpop.f32.mrb[0].mxu0
        %v9638 = vadd.f32 %v9449, %v9637
        %v9639 = vpop.f32.mrb[0].mxu0
        %9640 = vmatprep.mubr.bf16.mxu0 %v9538
        %9641 = vmatmul.mubr.bf16.gmra.mrb[0].mxu0 %v8571
        %v9642 = vpop.f32.mrb[0].mxu0
        %v9643 = vadd.f32 %v9449, %v9642
        %v9644 = vpop.f32.mrb[0].mxu0
        %v9645 = vpop.f32.mrb[0].mxu0
        %v9646 = vadd.f32 %v9449, %v9645
        %v9647 = vpop.f32.mrb[0].mxu0
        %9648 = vmatprep.mubr.bf16.mxu0 %v9541
        %9649 = vmatmul.mubr.bf16.gmra.mrb[0].mxu0 %v8574
        %v9650 = vpop.f32.mrb[0].mxu0
        %v9651 = vadd.f32 %v9449, %v9650
        %v9652 = vpop.f32.mrb[0].mxu0
        %v9653 = vpop.f32.mrb[0].mxu0
        %v9654 = vadd.f32 %v9449, %v9653
        %v9655 = vpop.f32.mrb[0].mxu0
        %9656 = vmatprep.mubr.bf16.mxu0 %v9544
        %9657 = vmatmul.mubr.bf16.gmra.mrb[0].mxu0 %v8577
        %v9658 = vpop.f32.mrb[0].mxu0
        %v9659 = vadd.f32 %v9449, %v9658
        %v9660 = vpop.f32.mrb[0].mxu0
        %v9661 = vpop.f32.mrb[0].mxu0
        %v9662 = vadd.f32 %v9449, %v9661
        %v9663 = vpop.f32.mrb[0].mxu0
        %9664 = vmatprep.mubr.bf16.mxu0 %v9547
        %9665 = vmatmul.mubr.bf16.gmra.mrb[0].mxu0 %v8580
        %v9666 = vpop.f32.mrb[0].mxu0
        %v9667 = vadd.f32 %v9449, %v9666
        %v9668 = vpop.f32.mrb[0].mxu0
        %v9669 = vpop.f32.mrb[0].mxu0
        %v9670 = vadd.f32 %v9449, %v9669
        %v9671 = vpop.f32.mrb[0].mxu0
        %9672 = vmatprep.mubr.bf16.mxu0 %v9550
        %9673 = vmatmul.mubr.bf16.gmra.mrb[0].mxu0 %v8583
        %v9674 = vpop.f32.mrb[0].mxu0
        %v9675 = vadd.f32 %v9449, %v9674
        %v9676 = vpop.f32.mrb[0].mxu0
        %v9677 = vpop.f32.mrb[0].mxu0
        %v9678 = vadd.f32 %v9449, %v9677
        %v9679 = vpop.f32.mrb[0].mxu0
        %9680 = vmatprep.mubr.bf16.mxu0 %v9553
        %9681 = vmatmul.mubr.bf16.gmra.mrb[0].mxu0 %v8586
        %v9682 = vpop.f32.mrb[0].mxu0
        %v9683 = vadd.f32 %v9449, %v9682
        %v9684 = vpop.f32.mrb[0].mxu0
        %v9685 = vpop.f32.mrb[0].mxu0
        %v9686 = vadd.f32 %v9449, %v9685
        %v9687 = vpop.f32.mrb[0].mxu0
        %9688 = vmatprep.mubr.bf16.mxu0 %v9556
        %9689 = vmatmul.mubr.bf16.gmra.mrb[0].mxu0 %v8589
        %v9690 = vpop.f32.mrb[0].mxu0
        %v9691 = vadd.f32 %v9449, %v9690
        %v9692 = vpop.f32.mrb[0].mxu0
        %v9693 = vpop.f32.mrb[0].mxu0
        %v9694 = vadd.f32 %v9449, %v9693
        %v9695 = vpop.f32.mrb[0].mxu0
        %9696 = vmatprep.mubr.bf16.mxu0 %v9559
        %9697 = vmatmul.mubr.bf16.gmra.mrb[0].mxu0 %v8592
        %v9698 = vpop.f32.mrb[0].mxu0
        %v9699 = vadd.f32 %v9449, %v9698
        %v9700 = vpop.f32.mrb[0].mxu0
        %v9701 = vpop.f32.mrb[0].mxu0
        %v9702 = vadd.f32 %v9449, %v9701
        %v9703 = vpop.f32.mrb[0].mxu0
        %9704 = vmatprep.mubr.bf16.mxu0 %v9562
        %9705 = vmatmul.mubr.bf16.gmra.mrb[0].mxu0 %v8595
        %v9706 = vpop.f32.mrb[0].mxu0
        %v9707 = vadd.f32 %v9449, %v9706
        %v9708 = vpop.f32.mrb[0].mxu0
        %v9709 = vpop.f32.mrb[0].mxu0
        %v9710 = vadd.f32 %v9449, %v9709
        %v9711 = vpop.f32.mrb[0].mxu0
        %9712 = vmatprep.mubr.bf16.mxu0 %v9565
        %9713 = vmatmul.mubr.bf16.gmra.mrb[0].mxu0 %v8598
        %v9714 = vpop.f32.mrb[0].mxu0
        %v9715 = vadd.f32 %v9449, %v9714
        %v9716 = vpop.f32.mrb[0].mxu0
        %v9717 = vpop.f32.mrb[0].mxu0
        %v9718 = vadd.f32 %v9449, %v9717
        %v9719 = vpop.f32.mrb[0].mxu0
        %9720 = vmatprep.mubr.bf16.mxu0 %v9568
        %9721 = vmatmul.mubr.bf16.gmra.mrb[0].mxu0 %v8601
        %v9722 = vpop.f32.mrb[0].mxu0
        %v9723 = vadd.f32 %v9449, %v9722
        %v9724 = vpop.f32.mrb[0].mxu0
        %v9725 = vpop.f32.mrb[0].mxu0
        %v9726 = vadd.f32 %v9449, %v9725
        %v9727 = vpop.f32.mrb[0].mxu0
        %9728 = vmatprep.mubr.bf16.mxu0 %v9571
        %9729 = vmatmul.mubr.bf16.gmra.mrb[0].mxu0 %v8603
        %v9730 = vpop.f32.mrb[0].mxu0
        %v9731 = vadd.f32 %v9449, %v9730
        %v9732 = vpop.f32.mrb[0].mxu0
        %v9733 = vpop.f32.mrb[0].mxu0
        %v9734 = vadd.f32 %v9449, %v9733
        %v9735 = vpop.f32.mrb[0].mxu0
        %9736 = vdwg.mxu0
        %v9737 = vsel %vm1329, %v9611, 0.0
        %v9738 = vsel %vm1329, %v9614, 0.0
        %v9739 = vadd.f32 %v9737, %v9738
        %v9740 = vsel %vm1329, %v9619, 0.0
        %v9741 = vadd.f32 %v9739, %v9740
        %v9742 = vsel %vm1329, %v9622, 0.0
        %v9743 = vadd.f32 %v9741, %v9742
        %v9744 = vsel %vm1329, %v9627, 0.0
        %v9745 = vadd.f32 %v9743, %v9744
        %v9746 = vsel %vm1329, %v9630, 0.0
        %v9747 = vadd.f32 %v9745, %v9746
        %v9748 = vsel %vm1329, %v9635, 0.0
        %v9749 = vadd.f32 %v9747, %v9748
        %v9750 = vsel %vm1329, %v9638, 0.0
        %v9751 = vadd.f32 %v9749, %v9750
        %v9752 = vsel %vm1329, %v9643, 0.0
        %v9753 = vadd.f32 %v9751, %v9752
        %v9754 = vsel %vm1329, %v9646, 0.0
        %v9755 = vadd.f32 %v9753, %v9754
        %v9756 = vsel %vm1329, %v9651, 0.0
        %v9757 = vadd.f32 %v9755, %v9756
        %v9758 = vsel %vm1329, %v9654, 0.0
        %v9759 = vadd.f32 %v9757, %v9758
        %v9760 = vsel %vm1329, %v9659, 0.0
        %v9761 = vadd.f32 %v9759, %v9760
        %v9762 = vsel %vm1329, %v9662, 0.0
        %v9763 = vadd.f32 %v9761, %v9762
        %v9764 = vsel %vm1329, %v9667, 0.0
        %v9765 = vadd.f32 %v9763, %v9764
        %v9766 = vsel %vm1329, %v9670, 0.0
        %v9767 = vadd.f32 %v9765, %v9766
        %v9768 = vsel %vm1329, %v9675, 0.0
        %v9769 = vadd.f32 %v9767, %v9768
        %v9770 = vsel %vm1329, %v9678, 0.0
        %v9771 = vadd.f32 %v9769, %v9770
        %v9772 = vsel %vm1329, %v9683, 0.0
        %v9773 = vadd.f32 %v9771, %v9772
        %v9774 = vsel %vm1329, %v9686, 0.0
        %v9775 = vadd.f32 %v9773, %v9774
        %v9776 = vsel %vm1329, %v9691, 0.0
        %v9777 = vadd.f32 %v9775, %v9776
        %v9778 = vsel %vm1329, %v9694, 0.0
        %v9779 = vadd.f32 %v9777, %v9778
        %v9780 = vsel %vm1329, %v9699, 0.0
        %v9781 = vadd.f32 %v9779, %v9780
        %v9782 = vsel %vm1329, %v9702, 0.0
        %v9783 = vadd.f32 %v9781, %v9782
        %v9784 = vsel %vm1329, %v9707, 0.0
        %v9785 = vadd.f32 %v9783, %v9784
        %v9786 = vsel %vm1329, %v9710, 0.0
        %v9787 = vadd.f32 %v9785, %v9786
        %v9788 = vsel %vm1329, %v9715, 0.0
        %v9789 = vadd.f32 %v9787, %v9788
        %v9790 = vsel %vm1329, %v9718, 0.0
        %v9791 = vadd.f32 %v9789, %v9790
        %v9792 = vsel %vm1329, %v9723, 0.0
        %v9793 = vadd.f32 %v9791, %v9792
        %v9794 = vsel %vm1329, %v9726, 0.0
        %v9795 = vadd.f32 %v9793, %v9794
        %v9796 = vsel %vm1329, %v9731, 0.0
        %v9797 = vadd.f32 %v9795, %v9796
        %v9798 = vsel %vm1329, %v9734, 0.0
        %v9799 = vadd.f32 %v9797, %v9798
        %v9800 = vrot.slane %v9799, 4
        %v9801 = vadd.f32 %v9799, %v9800
        %v9802 = vrot.slane %v9801, 2
        %v9803 = vadd.f32 %v9801, %v9802
        %v9804 = vrot.slane %v9803, 1
        %v9805 = vadd.f32 %v9803, %v9804
        %v9806 = vmul.f32 %v9805, %v1846
        %v9807 = vsub.f32 %v9611, %v9806
        %v9808 = vsub.f32 %v9614, %v9806
        %v9809 = vsub.f32 %v9619, %v9806
        %v9810 = vsub.f32 %v9622, %v9806
        %v9811 = vsub.f32 %v9627, %v9806
        %v9812 = vsub.f32 %v9630, %v9806
        %v9813 = vsub.f32 %v9635, %v9806
        %v9814 = vsub.f32 %v9638, %v9806
        %v9815 = vsub.f32 %v9643, %v9806
        %v9816 = vsub.f32 %v9646, %v9806
        %v9817 = vsub.f32 %v9651, %v9806
        %v9818 = vsub.f32 %v9654, %v9806
        %v9819 = vsub.f32 %v9659, %v9806
        %v9820 = vsub.f32 %v9662, %v9806
        %v9821 = vsub.f32 %v9667, %v9806
        %v9822 = vsub.f32 %v9670, %v9806
        %v9823 = vsub.f32 %v9675, %v9806
        %v9824 = vsub.f32 %v9678, %v9806
        %v9825 = vsub.f32 %v9683, %v9806
        %v9826 = vsub.f32 %v9686, %v9806
        %v9827 = vsub.f32 %v9691, %v9806
        %v9828 = vsub.f32 %v9694, %v9806
        %v9829 = vsub.f32 %v9699, %v9806
        %v9830 = vsub.f32 %v9702, %v9806
        %v9831 = vsub.f32 %v9707, %v9806
        %v9832 = vsub.f32 %v9710, %v9806
        %v9833 = vsub.f32 %v9715, %v9806
        %v9834 = vsub.f32 %v9718, %v9806
        %v9835 = vsub.f32 %v9723, %v9806
        %v9836 = vsub.f32 %v9726, %v9806
        %v9837 = vsub.f32 %v9731, %v9806
        %v9838 = vsub.f32 %v9734, %v9806
        %v9839 = vmul.f32 %v9807, %v9807
        %v9840 = vmul.f32 %v9808, %v9808
        %v9841 = vmul.f32 %v9809, %v9809
        %v9842 = vmul.f32 %v9810, %v9810
        %v9843 = vmul.f32 %v9811, %v9811
        %v9844 = vmul.f32 %v9812, %v9812
        %v9845 = vmul.f32 %v9813, %v9813
        %v9846 = vmul.f32 %v9814, %v9814
        %v9847 = vmul.f32 %v9815, %v9815
        %v9848 = vmul.f32 %v9816, %v9816
        %v9849 = vmul.f32 %v9817, %v9817
        %v9850 = vmul.f32 %v9818, %v9818
        %v9851 = vmul.f32 %v9819, %v9819
        %v9852 = vmul.f32 %v9820, %v9820
        %v9853 = vmul.f32 %v9821, %v9821
        %v9854 = vmul.f32 %v9822, %v9822
        %v9855 = vmul.f32 %v9823, %v9823
        %v9856 = vmul.f32 %v9824, %v9824
        %v9857 = vmul.f32 %v9825, %v9825
        %v9858 = vmul.f32 %v9826, %v9826
        %v9859 = vmul.f32 %v9827, %v9827
        %v9860 = vmul.f32 %v9828, %v9828
        %v9861 = vmul.f32 %v9829, %v9829
        %v9862 = vmul.f32 %v9830, %v9830
        %v9863 = vmul.f32 %v9831, %v9831
        %v9864 = vmul.f32 %v9832, %v9832
        %v9865 = vmul.f32 %v9833, %v9833
        %v9866 = vmul.f32 %v9834, %v9834
        %v9867 = vmul.f32 %v9835, %v9835
        %v9868 = vmul.f32 %v9836, %v9836
        %v9869 = vmul.f32 %v9837, %v9837
        %v9870 = vmul.f32 %v9838, %v9838
        %v9871 = vsel %vm1329, %v9839, 0.0
        %v9872 = vsel %vm1329, %v9840, 0.0
        %v9873 = vadd.f32 %v9871, %v9872
        %v9874 = vsel %vm1329, %v9841, 0.0
        %v9875 = vadd.f32 %v9873, %v9874
        %v9876 = vsel %vm1329, %v9842, 0.0
        %v9877 = vadd.f32 %v9875, %v9876
        %v9878 = vsel %vm1329, %v9843, 0.0
        %v9879 = vadd.f32 %v9877, %v9878
        %v9880 = vsel %vm1329, %v9844, 0.0
        %v9881 = vadd.f32 %v9879, %v9880
        %v9882 = vsel %vm1329, %v9845, 0.0
        %v9883 = vadd.f32 %v9881, %v9882
        %v9884 = vsel %vm1329, %v9846, 0.0
        %v9885 = vadd.f32 %v9883, %v9884
        %v9886 = vsel %vm1329, %v9847, 0.0
        %v9887 = vadd.f32 %v9885, %v9886
        %v9888 = vsel %vm1329, %v9848, 0.0
        %v9889 = vadd.f32 %v9887, %v9888
        %v9890 = vsel %vm1329, %v9849, 0.0
        %v9891 = vadd.f32 %v9889, %v9890
        %v9892 = vsel %vm1329, %v9850, 0.0
        %v9893 = vadd.f32 %v9891, %v9892
        %v9894 = vsel %vm1329, %v9851, 0.0
        %v9895 = vadd.f32 %v9893, %v9894
        %v9896 = vsel %vm1329, %v9852, 0.0
        %v9897 = vadd.f32 %v9895, %v9896
        %v9898 = vsel %vm1329, %v9853, 0.0
        %v9899 = vadd.f32 %v9897, %v9898
        %v9900 = vsel %vm1329, %v9854, 0.0
        %v9901 = vadd.f32 %v9899, %v9900
        %v9902 = vsel %vm1329, %v9855, 0.0
        %v9903 = vadd.f32 %v9901, %v9902
        %v9904 = vsel %vm1329, %v9856, 0.0
        %v9905 = vadd.f32 %v9903, %v9904
        %v9906 = vsel %vm1329, %v9857, 0.0
        %v9907 = vadd.f32 %v9905, %v9906
        %v9908 = vsel %vm1329, %v9858, 0.0
        %v9909 = vadd.f32 %v9907, %v9908
        %v9910 = vsel %vm1329, %v9859, 0.0
        %v9911 = vadd.f32 %v9909, %v9910
        %v9912 = vsel %vm1329, %v9860, 0.0
        %v9913 = vadd.f32 %v9911, %v9912
        %v9914 = vsel %vm1329, %v9861, 0.0
        %v9915 = vadd.f32 %v9913, %v9914
        %v9916 = vsel %vm1329, %v9862, 0.0
        %v9917 = vadd.f32 %v9915, %v9916
        %v9918 = vsel %vm1329, %v9863, 0.0
        %v9919 = vadd.f32 %v9917, %v9918
        %v9920 = vsel %vm1329, %v9864, 0.0
        %v9921 = vadd.f32 %v9919, %v9920
        %v9922 = vsel %vm1329, %v9865, 0.0
        %v9923 = vadd.f32 %v9921, %v9922
        %v9924 = vsel %vm1329, %v9866, 0.0
        %v9925 = vadd.f32 %v9923, %v9924
        %v9926 = vsel %vm1329, %v9867, 0.0
        %v9927 = vadd.f32 %v9925, %v9926
        %v9928 = vsel %vm1329, %v9868, 0.0
        %v9929 = vadd.f32 %v9927, %v9928
        %v9930 = vsel %vm1329, %v9869, 0.0
        %v9931 = vadd.f32 %v9929, %v9930
        %v9932 = vsel %vm1329, %v9870, 0.0
        %v9933 = vadd.f32 %v9931, %v9932
        %v9934 = vrot.slane %v9933, 4
        %v9935 = vadd.f32 %v9933, %v9934
        %v9936 = vrot.slane %v9935, 2
        %v9937 = vadd.f32 %v9935, %v9936
        %v9938 = vrot.slane %v9937, 1
        %v9939 = vadd.f32 %v9937, %v9938
        %v9940 = vmul.f32 %v9939, %v1846
        %v9941 = vadd.f32 %v9940, 1e-05
        %v9942 = vrsqrt.pop %v9941
        %v9943 = vmul.f32 %v9807, %v9942
        %v9944 = vmul.f32 %v9808, %v9942
        %v9945 = vmul.f32 %v9809, %v9942
        %v9946 = vmul.f32 %v9810, %v9942
        %v9947 = vmul.f32 %v9811, %v9942
        %v9948 = vmul.f32 %v9812, %v9942
        %v9949 = vmul.f32 %v9813, %v9942
        %v9950 = vmul.f32 %v9814, %v9942
        %v9951 = vmul.f32 %v9815, %v9942
        %v9952 = vmul.f32 %v9816, %v9942
        %v9953 = vmul.f32 %v9817, %v9942
        %v9954 = vmul.f32 %v9818, %v9942
        %v9955 = vmul.f32 %v9819, %v9942
        %v9956 = vmul.f32 %v9820, %v9942
        %v9957 = vmul.f32 %v9821, %v9942
        %v9958 = vmul.f32 %v9822, %v9942
        %v9959 = vmul.f32 %v9823, %v9942
        %v9960 = vmul.f32 %v9824, %v9942
        %v9961 = vmul.f32 %v9825, %v9942
        %v9962 = vmul.f32 %v9826, %v9942
        %v9963 = vmul.f32 %v9827, %v9942
        %v9964 = vmul.f32 %v9828, %v9942
        %v9965 = vmul.f32 %v9829, %v9942
        %v9966 = vmul.f32 %v9830, %v9942
        %v9967 = vmul.f32 %v9831, %v9942
        %v9968 = vmul.f32 %v9832, %v9942
        %v9969 = vmul.f32 %v9833, %v9942
        %v9970 = vmul.f32 %v9834, %v9942
        %v9971 = vmul.f32 %v9835, %v9942
        %v9972 = vmul.f32 %v9836, %v9942
        %v9973 = vmul.f32 %v9837, %v9942
        %v9974 = vmul.f32 %v9838, %v9942
        %v9975 = vlaneseq
        %v9976 = vshrl.u32 %v9975, 7
        %v9977 = vsub.s32 1, %v9976
        %v9978 = vrot.slane %v340, %v9977
        %v9979 = vmul.f32 %v9943, %v9978
        %v9980 = vmul.f32 %v9944, %v9978
        %v9981 = vmul.f32 %v9945, %v9978
        %v9982 = vmul.f32 %v9946, %v9978
        %v9983 = vmul.f32 %v9947, %v9978
        %v9984 = vmul.f32 %v9948, %v9978
        %v9985 = vmul.f32 %v9949, %v9978
        %v9986 = vmul.f32 %v9950, %v9978
        %v9987 = vmul.f32 %v9951, %v9978
        %v9988 = vmul.f32 %v9952, %v9978
        %v9989 = vmul.f32 %v9953, %v9978
        %v9990 = vmul.f32 %v9954, %v9978
        %v9991 = vmul.f32 %v9955, %v9978
        %v9992 = vmul.f32 %v9956, %v9978
        %v9993 = vmul.f32 %v9957, %v9978
        %v9994 = vmul.f32 %v9958, %v9978
        %v9995 = vmul.f32 %v9959, %v9978
        %v9996 = vmul.f32 %v9960, %v9978
        %v9997 = vmul.f32 %v9961, %v9978
        %v9998 = vmul.f32 %v9962, %v9978
        %v9999 = vmul.f32 %v9963, %v9978
        %v10000 = vmul.f32 %v9964, %v9978
        %v10001 = vmul.f32 %v9965, %v9978
        %v10002 = vmul.f32 %v9966, %v9978
        %v10003 = vmul.f32 %v9967, %v9978
        %v10004 = vmul.f32 %v9968, %v9978
        %v10005 = vmul.f32 %v9969, %v9978
        %v10006 = vmul.f32 %v9970, %v9978
        %v10007 = vmul.f32 %v9971, %v9978
        %v10008 = vmul.f32 %v9972, %v9978
        %v10009 = vmul.f32 %v9973, %v9978
        %v10010 = vmul.f32 %v9974, %v9978
        %v10011 = vlaneseq
        %v10012 = vshrl.u32 %v10011, 7
        %v10013 = vsub.s32 1, %v10012
        %v10014 = vrot.slane %v342, %v10013
        %v10015 = vadd.f32 %v9979, %v10014
        %v10016 = vadd.f32 %v9980, %v10014
        %v10017 = vadd.f32 %v9981, %v10014
        %v10018 = vadd.f32 %v9982, %v10014
        %v10019 = vadd.f32 %v9983, %v10014
        %v10020 = vadd.f32 %v9984, %v10014
        %v10021 = vadd.f32 %v9985, %v10014
        %v10022 = vadd.f32 %v9986, %v10014
        %v10023 = vadd.f32 %v9987, %v10014
        %v10024 = vadd.f32 %v9988, %v10014
        %v10025 = vadd.f32 %v9989, %v10014
        %v10026 = vadd.f32 %v9990, %v10014
        %v10027 = vadd.f32 %v9991, %v10014
        %v10028 = vadd.f32 %v9992, %v10014
        %v10029 = vadd.f32 %v9993, %v10014
        %v10030 = vadd.f32 %v9994, %v10014
        %v10031 = vadd.f32 %v9995, %v10014
        %v10032 = vadd.f32 %v9996, %v10014
        %v10033 = vadd.f32 %v9997, %v10014
        %v10034 = vadd.f32 %v9998, %v10014
        %v10035 = vadd.f32 %v9999, %v10014
        %v10036 = vadd.f32 %v10000, %v10014
        %v10037 = vadd.f32 %v10001, %v10014
        %v10038 = vadd.f32 %v10002, %v10014
        %v10039 = vadd.f32 %v10003, %v10014
        %v10040 = vadd.f32 %v10004, %v10014
        %v10041 = vadd.f32 %v10005, %v10014
        %v10042 = vadd.f32 %v10006, %v10014
        %v10043 = vadd.f32 %v10007, %v10014
        %v10044 = vadd.f32 %v10008, %v10014
        %v10045 = vadd.f32 %v10009, %v10014
        %v10046 = vadd.f32 %v10010, %v10014
        %vm10047 = vcmp.ge.f32.partialorder %v10015, 0.0
        %vm10048 = vcmp.ge.f32.partialorder %v10016, 0.0
        %vm10049 = vcmp.ge.f32.partialorder %v10017, 0.0
        %vm10050 = vcmp.ge.f32.partialorder %v10018, 0.0
        %vm10051 = vcmp.ge.f32.partialorder %v10019, 0.0
        %vm10052 = vcmp.ge.f32.partialorder %v10020, 0.0
        %vm10053 = vcmp.ge.f32.partialorder %v10021, 0.0
        %vm10054 = vcmp.ge.f32.partialorder %v10022, 0.0
        %vm10055 = vcmp.ge.f32.partialorder %v10023, 0.0
        %vm10056 = vcmp.ge.f32.partialorder %v10024, 0.0
        %vm10057 = vcmp.ge.f32.partialorder %v10025, 0.0
        %vm10058 = vcmp.ge.f32.partialorder %v10026, 0.0
        %vm10059 = vcmp.ge.f32.partialorder %v10027, 0.0
        %vm10060 = vcmp.ge.f32.partialorder %v10028, 0.0
        %vm10061 = vcmp.ge.f32.partialorder %v10029, 0.0
        %vm10062 = vcmp.ge.f32.partialorder %v10030, 0.0
        %vm10063 = vcmp.ge.f32.partialorder %v10031, 0.0
        %vm10064 = vcmp.ge.f32.partialorder %v10032, 0.0
        %vm10065 = vcmp.ge.f32.partialorder %v10033, 0.0
        %vm10066 = vcmp.ge.f32.partialorder %v10034, 0.0
        %vm10067 = vcmp.ge.f32.partialorder %v10035, 0.0
        %vm10068 = vcmp.ge.f32.partialorder %v10036, 0.0
        %vm10069 = vcmp.ge.f32.partialorder %v10037, 0.0
        %vm10070 = vcmp.ge.f32.partialorder %v10038, 0.0
        %vm10071 = vcmp.ge.f32.partialorder %v10039, 0.0
        %vm10072 = vcmp.ge.f32.partialorder %v10040, 0.0
        %vm10073 = vcmp.ge.f32.partialorder %v10041, 0.0
        %vm10074 = vcmp.ge.f32.partialorder %v10042, 0.0
        %vm10075 = vcmp.ge.f32.partialorder %v10043, 0.0
        %vm10076 = vcmp.ge.f32.partialorder %v10044, 0.0
        %vm10077 = vcmp.ge.f32.partialorder %v10045, 0.0
        %vm10078 = vcmp.ge.f32.partialorder %v10046, 0.0
        %v10079 = vmul.f32 %v10015, 0.2
        %v10080 = vmul.f32 %v10016, 0.2
        %v10081 = vmul.f32 %v10017, 0.2
        %v10082 = vmul.f32 %v10018, 0.2
        %v10083 = vmul.f32 %v10019, 0.2
        %v10084 = vmul.f32 %v10020, 0.2
        %v10085 = vmul.f32 %v10021, 0.2
        %v10086 = vmul.f32 %v10022, 0.2
        %v10087 = vmul.f32 %v10023, 0.2
        %v10088 = vmul.f32 %v10024, 0.2
        %v10089 = vmul.f32 %v10025, 0.2
        %v10090 = vmul.f32 %v10026, 0.2
        %v10091 = vmul.f32 %v10027, 0.2
        %v10092 = vmul.f32 %v10028, 0.2
        %v10093 = vmul.f32 %v10029, 0.2
        %v10094 = vmul.f32 %v10030, 0.2
        %v10095 = vmul.f32 %v10031, 0.2
        %v10096 = vmul.f32 %v10032, 0.2
        %v10097 = vmul.f32 %v10033, 0.2
        %v10098 = vmul.f32 %v10034, 0.2
        %v10099 = vmul.f32 %v10035, 0.2
        %v10100 = vmul.f32 %v10036, 0.2
        %v10101 = vmul.f32 %v10037, 0.2
        %v10102 = vmul.f32 %v10038, 0.2
        %v10103 = vmul.f32 %v10039, 0.2
        %v10104 = vmul.f32 %v10040, 0.2
        %v10105 = vmul.f32 %v10041, 0.2
        %v10106 = vmul.f32 %v10042, 0.2
        %v10107 = vmul.f32 %v10043, 0.2
        %v10108 = vmul.f32 %v10044, 0.2
        %v10109 = vmul.f32 %v10045, 0.2
        %v10110 = vmul.f32 %v10046, 0.2
        %v10111 = vsel %vm10047, %v10015, %v10079
        %v10112 = vsel %vm10048, %v10016, %v10080
        %v10113 = vsel %vm10049, %v10017, %v10081
        %v10114 = vsel %vm10050, %v10018, %v10082
        %v10115 = vsel %vm10051, %v10019, %v10083
        %v10116 = vsel %vm10052, %v10020, %v10084
        %v10117 = vsel %vm10053, %v10021, %v10085
        %v10118 = vsel %vm10054, %v10022, %v10086
        %v10119 = vsel %vm10055, %v10023, %v10087
        %v10120 = vsel %vm10056, %v10024, %v10088
        %v10121 = vsel %vm10057, %v10025, %v10089
        %v10122 = vsel %vm10058, %v10026, %v10090
        %v10123 = vsel %vm10059, %v10027, %v10091
        %v10124 = vsel %vm10060, %v10028, %v10092
        %v10125 = vsel %vm10061, %v10029, %v10093
        %v10126 = vsel %vm10062, %v10030, %v10094
        %v10127 = vsel %vm10063, %v10031, %v10095
        %v10128 = vsel %vm10064, %v10032, %v10096
        %v10129 = vsel %vm10065, %v10033, %v10097
        %v10130 = vsel %vm10066, %v10034, %v10098
        %v10131 = vsel %vm10067, %v10035, %v10099
        %v10132 = vsel %vm10068, %v10036, %v10100
        %v10133 = vsel %vm10069, %v10037, %v10101
        %v10134 = vsel %vm10070, %v10038, %v10102
        %v10135 = vsel %vm10071, %v10039, %v10103
        %v10136 = vsel %vm10072, %v10040, %v10104
        %v10137 = vsel %vm10073, %v10041, %v10105
        %v10138 = vsel %vm10074, %v10042, %v10106
        %v10139 = vsel %vm10075, %v10043, %v10107
        %v10140 = vsel %vm10076, %v10044, %v10108
        %v10141 = vsel %vm10077, %v10045, %v10109
        %v10142 = vsel %vm10078, %v10046, %v10110
        %10175 = vrot.lane.b32.xlu0 %v10111, 8
        %v10176 = vpop.permute.xlu0 %10175
        %10177 = vrot.lane.b32.xlu0 %v10112, 8
        %v10178 = vpop.permute.xlu0 %10177
        %10179 = vrot.lane.b32.xlu0 %v10113, 8
        %v10180 = vpop.permute.xlu0 %10179
        %10181 = vrot.lane.b32.xlu0 %v10114, 8
        %v10182 = vpop.permute.xlu0 %10181
        %10183 = vrot.lane.b32.xlu0 %v10115, 8
        %v10184 = vpop.permute.xlu0 %10183
        %10185 = vrot.lane.b32.xlu0 %v10116, 8
        %v10186 = vpop.permute.xlu0 %10185
        %10187 = vrot.lane.b32.xlu0 %v10117, 8
        %v10188 = vpop.permute.xlu0 %10187
        %10189 = vrot.lane.b32.xlu0 %v10118, 8
        %v10190 = vpop.permute.xlu0 %10189
        %10191 = vrot.lane.b32.xlu0 %v10119, 8
        %v10192 = vpop.permute.xlu0 %10191
        %10193 = vrot.lane.b32.xlu0 %v10120, 8
        %v10194 = vpop.permute.xlu0 %10193
        %10195 = vrot.lane.b32.xlu0 %v10121, 8
        %v10196 = vpop.permute.xlu0 %10195
        %10197 = vrot.lane.b32.xlu0 %v10122, 8
        %v10198 = vpop.permute.xlu0 %10197
        %10199 = vrot.lane.b32.xlu0 %v10123, 8
        %v10200 = vpop.permute.xlu0 %10199
        %10201 = vrot.lane.b32.xlu0 %v10124, 8
        %v10202 = vpop.permute.xlu0 %10201
        %10203 = vrot.lane.b32.xlu0 %v10125, 8
        %v10204 = vpop.permute.xlu0 %10203
        %10205 = vrot.lane.b32.xlu0 %v10126, 8
        %v10206 = vpop.permute.xlu0 %10205
        %10207 = vrot.lane.b32.xlu0 %v10127, 8
        %v10208 = vpop.permute.xlu0 %10207
        %10209 = vrot.lane.b32.xlu0 %v10128, 8
        %v10210 = vpop.permute.xlu0 %10209
        %10211 = vrot.lane.b32.xlu0 %v10129, 8
        %v10212 = vpop.permute.xlu0 %10211
        %10213 = vrot.lane.b32.xlu0 %v10130, 8
        %v10214 = vpop.permute.xlu0 %10213
        %10215 = vrot.lane.b32.xlu0 %v10131, 8
        %v10216 = vpop.permute.xlu0 %10215
        %10217 = vrot.lane.b32.xlu0 %v10132, 8
        %v10218 = vpop.permute.xlu0 %10217
        %10219 = vrot.lane.b32.xlu0 %v10133, 8
        %v10220 = vpop.permute.xlu0 %10219
        %10221 = vrot.lane.b32.xlu0 %v10134, 8
        %v10222 = vpop.permute.xlu0 %10221
        %10223 = vrot.lane.b32.xlu0 %v10135, 8
        %v10224 = vpop.permute.xlu0 %10223
        %10225 = vrot.lane.b32.xlu0 %v10136, 8
        %v10226 = vpop.permute.xlu0 %10225
        %10227 = vrot.lane.b32.xlu0 %v10137, 8
        %v10228 = vpop.permute.xlu0 %10227
        %10229 = vrot.lane.b32.xlu0 %v10138, 8
        %v10230 = vpop.permute.xlu0 %10229
        %10231 = vrot.lane.b32.xlu0 %v10139, 8
        %v10232 = vpop.permute.xlu0 %10231
        %10233 = vrot.lane.b32.xlu0 %v10140, 8
        %v10234 = vpop.permute.xlu0 %10233
        %10235 = vrot.lane.b32.xlu0 %v10141, 8
        %v10236 = vpop.permute.xlu0 %10235
        %10237 = vrot.lane.b32.xlu0 %v10142, 8
        %v10238 = vpop.permute.xlu0 %10237
        %v10271 = vsel %vm1329, %v3807, %v10176
        %v10272 = vsel %vm1329, %v3808, %v10178
        %v10273 = vsel %vm1329, %v3809, %v10180
        %v10274 = vsel %vm1329, %v3810, %v10182
        %v10275 = vsel %vm1329, %v3811, %v10184
        %v10276 = vsel %vm1329, %v3812, %v10186
        %v10277 = vsel %vm1329, %v3813, %v10188
        %v10278 = vsel %vm1329, %v3814, %v10190
        %v10279 = vsel %vm1329, %v3815, %v10192
        %v10280 = vsel %vm1329, %v3816, %v10194
        %v10281 = vsel %vm1329, %v3817, %v10196
        %v10282 = vsel %vm1329, %v3818, %v10198
        %v10283 = vsel %vm1329, %v3819, %v10200
        %v10284 = vsel %vm1329, %v3820, %v10202
        %v10285 = vsel %vm1329, %v3821, %v10204
        %v10286 = vsel %vm1329, %v3822, %v10206
        %v10287 = vsel %vm1329, %v3823, %v10208
        %v10288 = vsel %vm1329, %v3824, %v10210
        %v10289 = vsel %vm1329, %v3825, %v10212
        %v10290 = vsel %vm1329, %v3826, %v10214
        %v10291 = vsel %vm1329, %v3827, %v10216
        %v10292 = vsel %vm1329, %v3828, %v10218
        %v10293 = vsel %vm1329, %v3829, %v10220
        %v10294 = vsel %vm1329, %v3830, %v10222
        %v10295 = vsel %vm1329, %v3831, %v10224
        %v10296 = vsel %vm1329, %v3832, %v10226
        %v10297 = vsel %vm1329, %v3833, %v10228
        %v10298 = vsel %vm1329, %v3834, %v10230
        %v10299 = vsel %vm1329, %v3835, %v10232
        %v10300 = vsel %vm1329, %v3836, %v10234
        %v10301 = vsel %vm1329, %v3837, %v10236
        %v10302 = vsel %vm1329, %v3838, %v10238
        %10303 = vst.msk [vmem:[%s298] sm:$0xff] %vm1393, %v10271
        %10304 = vst.msk [vmem:[%s298 + $0x8] sm:$0xff] %vm1393, %v10272
        %10305 = vst.msk [vmem:[%s298 + $0x10] sm:$0xff] %vm1393, %v10273
        %10306 = vst.msk [vmem:[%s298 + $0x18] sm:$0xff] %vm1393, %v10274
        %10307 = vst.msk [vmem:[%s298 + $0x20] sm:$0xff] %vm1393, %v10275
        %10308 = vst.msk [vmem:[%s298 + $0x28] sm:$0xff] %vm1393, %v10276
        %10309 = vst.msk [vmem:[%s298 + $0x30] sm:$0xff] %vm1393, %v10277
        %10310 = vst.msk [vmem:[%s298 + $0x38] sm:$0xff] %vm1393, %v10278
        %10311 = vst.msk [vmem:[%s298 + $0x40] sm:$0xff] %vm1393, %v10279
        %10312 = vst.msk [vmem:[%s298 + $0x48] sm:$0xff] %vm1393, %v10280
        %10313 = vst.msk [vmem:[%s298 + $0x50] sm:$0xff] %vm1393, %v10281
        %10314 = vst.msk [vmem:[%s298 + $0x58] sm:$0xff] %vm1393, %v10282
        %10315 = vst.msk [vmem:[%s298 + $0x60] sm:$0xff] %vm1393, %v10283
        %10316 = vst.msk [vmem:[%s298 + $0x68] sm:$0xff] %vm1393, %v10284
        %10317 = vst.msk [vmem:[%s298 + $0x70] sm:$0xff] %vm1393, %v10285
        %10318 = vst.msk [vmem:[%s298 + $0x78] sm:$0xff] %vm1393, %v10286
        %10319 = vst.msk [vmem:[%s298 + $0x80] sm:$0xff] %vm1393, %v10287
        %10320 = vst.msk [vmem:[%s298 + $0x88] sm:$0xff] %vm1393, %v10288
        %10321 = vst.msk [vmem:[%s298 + $0x90] sm:$0xff] %vm1393, %v10289
        %10322 = vst.msk [vmem:[%s298 + $0x98] sm:$0xff] %vm1393, %v10290
        %10323 = vst.msk [vmem:[%s298 + $0xa0] sm:$0xff] %vm1393, %v10291
        %10324 = vst.msk [vmem:[%s298 + $0xa8] sm:$0xff] %vm1393, %v10292
        %10325 = vst.msk [vmem:[%s298 + $0xb0] sm:$0xff] %vm1393, %v10293
        %10326 = vst.msk [vmem:[%s298 + $0xb8] sm:$0xff] %vm1393, %v10294
        %10327 = vst.msk [vmem:[%s298 + $0xc0] sm:$0xff] %vm1393, %v10295
        %10328 = vst.msk [vmem:[%s298 + $0xc8] sm:$0xff] %vm1393, %v10296
        %10329 = vst.msk [vmem:[%s298 + $0xd0] sm:$0xff] %vm1393, %v10297
        %10330 = vst.msk [vmem:[%s298 + $0xd8] sm:$0xff] %vm1393, %v10298
        %10331 = vst.msk [vmem:[%s298 + $0xe0] sm:$0xff] %vm1393, %v10299
        %10332 = vst.msk [vmem:[%s298 + $0xe8] sm:$0xff] %vm1393, %v10300
        %10333 = vst.msk [vmem:[%s298 + $0xf0] sm:$0xff] %vm1393, %v10301
        %10334 = vst.msk [vmem:[%s298 + $0xf8] sm:$0xff] %vm1393, %v10302
        %s10335 = sand.u32 %s203, 1
        %s10336 = scalar_lea.sflag [#allocation3], %s10335
        %s10337 = sand.u32 %s203, 1
        %s10338 = smul.addr %s10337, 256
        %s10339 = scalar_lea.vmem [#allocation2], %s10338
        // Predicated region
        $region53: #{tpu_custom_call.1} parent=51 // pred_check
          %p10340 = pneg %p213
        $region54: #{tpu_custom_call.1} parent=51 // pred_check_branch
          %10342 = sbr.rel (%p10340) target = $region56
        $region55: #{tpu_custom_call.1} parent=51 // pred_region
          %s10344 = ssub.s32 4096, 4096
          %10345 = vsyncadd %s10336, %s10344
          %s10346 = smul.addr %s22, 32
          %s10347 = smul.addr %s10346, 128
          %s10348 = scalar_lea.hbm %s8, %s10347
          %s10349 = sshll.u32 %s10339, 4
          %s10350 = int_to_ptr.vmem [resolvable:$true] %s10349
          %10355 = dma.vmem_to_hbm [thread:$0]  %s10350, 4096, %s10348, %s10336, 128, 128, 8
        $region56: #{tpu_custom_call.1} parent=51 // pred_fallthru
          _
      $region52: #{tpu_custom_call.1} parent=5 // pred_fallthru
        _
      %p10356 = scmp.le.s32.totalorder 2, %s17
      // Predicated region
      $region57: #{tpu_custom_call.1} parent=5 // pred_check
        %p10357 = pneg %p10356
      $region58: #{tpu_custom_call.1} parent=5 // pred_check_branch
        %10359 = sbr.rel (%p10357) target = $region60
      $region59: #{tpu_custom_call.1} parent=5 // pred_region
        %s10360 = ssub.s32 %s17, 2
        // Predicated region
        $region61: #{tpu_custom_call.1} parent=59 // pred_check
          %p10361 = pneg %p219
        $region62: #{tpu_custom_call.1} parent=59 // pred_check_branch
          %10363 = sbr.rel (%p10361) target = $region64
        $region63: #{tpu_custom_call.1} parent=59 // pred_region
          %s10364 = sand.u32 %s204, 1
          %s10365 = scalar_lea.sflag [#allocation3], %s10364
          %s10366 = sand.u32 %s204, 1
          %s10367 = smul.addr %s10366, 256
          %s10368 = scalar_lea.vmem [#allocation2], %s10367
          %10369 = dma.done %s10365, 4096
        $region64: #{tpu_custom_call.1} parent=59 // pred_fallthru
          _
      $region60: #{tpu_custom_call.1} parent=5 // pred_fallthru
        _
    $region6: #{tpu_custom_call.1} parent=1 // loop_footer
      %s21 = sadd.s32 1, %s17
    $region7: #{tpu_custom_call.1} parent=1 // loop_footer_branch
      %16 = sbr.rel target = $region3
    $region8: #{tpu_custom_call.1} parent=1 // loop_exit
      _
    %10370 = vsyncpa [#allocation3], 1
    %s10371 = scalar_lea.sflag [#allocation3], 1
    %10372 = vsyncpa %s10371, 1

</llo_original>
